<compile_context>
chip_gen: v7x
topology: tpu7x:2x2x1
jax: 0.10.0
libtpu: 0.0.40
codegen_flags: <defaults>
</compile_context>

<pallas_src>
import functools

import jax
import jax.numpy as jnp
from jax import lax
from jax.experimental import pallas as pl
from jax.experimental.pallas import tpu as pltpu

INPUT_SIZE = 1636  # fixed by nn.LSTM(input_size=1636, ...)


def _round_up(x, m):
    return (x + m - 1) // m * m


def _tensorcores_per_chip():
    """Best-effort TensorCore count per JAX device (v7x / megacore chips = 2)."""
    try:
        kind = jax.devices()[0].device_kind.lower()
    except Exception:
        return 1
    if ("v7" in kind) or ("v4" in kind) or ("v5p" in kind):
        return 2
    return 1


# --------------------------------------------------------------------------
# Stage 1: input projection, written directly in time-major order.
#   x_ref: (BB1, TT1, in_dim) float32  (cast to MXU dtype in-register)
#   w_ref: (in_dim, 4H) compute dtype, b_ref: (1, 4H) float32
#   o_ref: (TT1, BB1, 4H) gates dtype (bf16 by default)
# --------------------------------------------------------------------------
def _input_proj_kernel(x_ref, w_ref, b_ref, o_ref):
    tt = o_ref.shape[0]           # static
    cd = w_ref.dtype
    w = w_ref[...]
    b = b_ref[...]
    # Static per-timestep loop (bounded <= 64 by the wrapper).  Each step does
    # one (BB1, in_dim) x (in_dim, 4H) MXU matmul and stores the (BB1, 4H)
    # result at leading index t of the time-major output block — this is where
    # the batch-major -> time-major transpose is absorbed, for free, instead of
    # an extra HBM read+write pass in the wrapper.
    for t in range(tt):
        xt = x_ref[:, t, :].astype(cd)                               # (BB1, in)
        g = jnp.dot(xt, w, preferred_element_type=jnp.float32) + b   # (BB1, 4H)
        o_ref[t] = g.astype(o_ref.dtype)


# --------------------------------------------------------------------------
# Stage 2: fused LSTM recurrence (pre-projected gates) + fc3/ReLU/fc4 head.
#   grid = (batch_blocks [parallel], time_blocks [arbitrary])
# --------------------------------------------------------------------------
def _lstm_recurrent_kernel(gx_ref, whh_ref, w3_ref, b3_ref, w4_ref, b4_ref,
                           y_ref, h_scr, c_scr, *, seq_len):
    t_blk = pl.program_id(1)
    H = h_scr.shape[1]
    tile_t = gx_ref.shape[0]                    # static
    needs_mask = (seq_len % tile_t) != 0        # static python bool

    @pl.when(t_blk == 0)
    def _():
        h_scr[...] = jnp.zeros_like(h_scr)
        c_scr[...] = jnp.zeros_like(c_scr)

    t0 = t_blk * tile_t

    def step(t, carry):
        h, c = carry
        # Per-step matmul is only (BB, H) @ (H, 4H); the 1636-wide projection
        # was hoisted into Stage 1.
        gates = gx_ref[t].astype(jnp.float32) + jnp.dot(
            h.astype(whh_ref.dtype), whh_ref[...],
            preferred_element_type=jnp.float32)
        # PyTorch gate ordering: i, f, g, o
        i_g = jax.nn.sigmoid(gates[:, 0 * H:1 * H])
        f_g = jax.nn.sigmoid(gates[:, 1 * H:2 * H])
        g_g = jnp.tanh(gates[:, 2 * H:3 * H])
        o_g = jax.nn.sigmoid(gates[:, 3 * H:4 * H])
        c_new = f_g * c + i_g * g_g
        h_new = o_g * jnp.tanh(c_new)
        if needs_mask:  # only emitted when T is not divisible by TILE_T
            valid = (t0 + t) < seq_len
            h_new = jnp.where(valid, h_new, h)
            c_new = jnp.where(valid, c_new, c)
        return h_new, c_new

    # Partial unroll (<=8) keeps LLO scheduling visibility while bounding the
    # number of live (BB, 4H) gate values (vreg pressure / spills).
    h, c = lax.fori_loop(0, tile_t, step, (h_scr[...], c_scr[...]),
                         unroll=min(tile_t, 8))
    h_scr[...] = h
    c_scr[...] = c

    # Head only at the last time chunk (lane-dense padded output).
    @pl.when(t_blk == pl.num_programs(1) - 1)
    def _():
        hid = jnp.dot(h.astype(w3_ref.dtype), w3_ref[...],
                      preferred_element_type=jnp.float32) + b3_ref[...]
        hid = jnp.maximum(hid, 0.0)
        y = jnp.dot(hid.astype(w4_ref.dtype), w4_ref[...],
                    preferred_element_type=jnp.float32) + b4_ref[...]
        y_ref[...] = y.astype(y_ref.dtype)


@functools.partial(
    jax.jit,
    static_argnames=("seq_len", "hidden_dim", "num_classes", "compute_dtype",
                     "batch_shards"))
def lstm_nn_vision_forward(x, params, *, seq_len, hidden_dim, num_classes,
                           compute_dtype=jnp.bfloat16, batch_shards=None):
    """x: (batch*seq_len, 1636). Returns (y_pred, current_batch)."""
    in_dim = x.shape[1]
    current_batch = x.shape[0] // seq_len
    B, T, H = current_batch, seq_len, hidden_dim
    H4 = 4 * H
    cd = compute_dtype
    gates_dtype = cd

    # Weights pre-transposed to (in, out); bf16 by default, f32 accumulation.
    wih_T = params["w_ih"].T.astype(cd)                          # (in_dim, 4H)
    whh_T = params["w_hh"].T.astype(cd)                          # (H, 4H)
    b_lstm = (params["b_ih"] + params["b_hh"]).astype(jnp.float32).reshape(1, H4)
    w3_T = params["w3"].T.astype(cd)                             # (H, 256)
    b3 = params["b3"].astype(jnp.float32).reshape(1, 256)
    Cpad = _round_up(num_classes, 128)                           # lane-dense out
    w4_T = jnp.pad(params["w4"].T.astype(cd),
                   ((0, 0), (0, Cpad - num_classes)))            # (256, Cpad)
    b4 = jnp.pad(params["b4"].astype(jnp.float32).reshape(1, num_classes),
                 ((0, 0), (0, Cpad - num_classes)))              # (1, Cpad)

    # ---- Stage 1: gates_x written time-major (T, B, 4H) --------------------
    x3 = x.reshape(B, T, in_dim)          # free view; x stays float32 in HBM

    # Keep the double-buffered float32 x block around ~4 MiB per buffer
    # (fits comfortably inside v7x's smaller VMEM; ~85% of HBM roofline zone).
    ROWS = max(8, (4 * 1024 * 1024) // (in_dim * 4))             # ~640 rows
    if B <= ROWS:
        BB1 = B
        max_tt = max(1, ROWS // B)
        if T <= min(max_tt, 64):
            TT1 = T                                              # == full T
        else:
            TT1 = max(8, (min(max_tt, 64) // 8) * 8)             # multiple of 8
    else:
        BB1 = (ROWS // 8) * 8                                    # multiple of 8
        TT1 = T if T < 8 else 8
    NB1 = pl.cdiv(B, BB1)
    NT1 = pl.cdiv(T, TT1)

    gates_tm = pl.pallas_call(
        _input_proj_kernel,
        out_shape=jax.ShapeDtypeStruct((T, B, H4), gates_dtype),
        grid_spec=pltpu.PrefetchScalarGridSpec(
            num_scalar_prefetch=0,
            grid=(NB1, NT1),
            in_specs=[
                pl.BlockSpec((BB1, TT1, in_dim), lambda b, t: (b, t, 0)),  # x
                pl.BlockSpec((in_dim, H4), lambda b, t: (0, 0)),           # W_ih^T
                pl.BlockSpec((1, H4), lambda b, t: (0, 0)),                # bias
            ],
            out_specs=pl.BlockSpec((TT1, BB1, H4), lambda b, t: (t, b, 0)),
        ),
        compiler_params=pltpu.CompilerParams(
            dimension_semantics=("parallel", "parallel")),
    )(x3, wih_T, b_lstm)

    # ---- Stage 2: recurrence + head ----------------------------------------
    # Batch split only pays off with >1 TensorCore (v7x / megacore); on a
    # single-TC v5e/v6e it just doubles the serial grid steps, so keep NB=1.
    req = _tensorcores_per_chip() if batch_shards is None else int(batch_shards)
    NB = 1
    if req >= 2 and B % req == 0 and (B // req) % 8 == 0:
        NB = req
    BB = B // NB

    # Time chunk: up to 32 steps per grid step; trailing steps masked when T
    # is not divisible (no degradation to TILE_T=1 for awkward T).  Keep the
    # double-buffered gates block under ~8 MiB so it fits v7x's 64 MiB VMEM
    # with headroom for the resident weights.
    gbytes = jnp.dtype(gates_dtype).itemsize
    max_tile_t = max(1, (8 * 1024 * 1024) // max(1, 2 * BB * H4 * gbytes))
    TILE_T = max(1, min(32, T, max_tile_t))
    NT2 = pl.cdiv(T, TILE_T)

    y_pad = pl.pallas_call(
        functools.partial(_lstm_recurrent_kernel, seq_len=T),
        out_shape=jax.ShapeDtypeStruct((B, Cpad), jnp.float32),
        grid_spec=pltpu.PrefetchScalarGridSpec(
            num_scalar_prefetch=0,
            grid=(NB, NT2),
            in_specs=[
                pl.BlockSpec((TILE_T, BB, H4), lambda b, t: (t, b, 0)),  # gates
                pl.BlockSpec((H, H4), lambda b, t: (0, 0)),              # W_hh^T
                pl.BlockSpec((H, 256), lambda b, t: (0, 0)),             # fc3 W^T
                pl.BlockSpec((1, 256), lambda b, t: (0, 0)),             # fc3 b
                pl.BlockSpec((256, Cpad), lambda b, t: (0, 0)),          # fc4 W^T
                pl.BlockSpec((1, Cpad), lambda b, t: (0, 0)),            # fc4 b
            ],
            out_specs=pl.BlockSpec((BB, Cpad), lambda b, t: (b, 0)),
            scratch_shapes=[
                pltpu.VMEM((BB, H), jnp.float32),   # h state
                pltpu.VMEM((BB, H), jnp.float32),   # c state
            ],
        ),
        compiler_params=pltpu.CompilerParams(
            dimension_semantics=("parallel", "arbitrary")),
    )(gates_tm, whh_T, w3_T, b3, w4_T, b4)

    return y_pad[:, :num_classes], current_batch


# --------------------------------------------------------------------------
# Pure-JAX reference (mirrors the kernel's cast points for bf16 checks)
# --------------------------------------------------------------------------
def _reference_forward(x, params, *, seq_len, hidden_dim, num_classes,
                       compute_dtype=jnp.bfloat16):
    B = x.shape[0] // seq_len
    H = hidden_dim
    cd = compute_dtype
    xs = x.reshape(B, seq_len, x.shape[1])
    wih_T = params["w_ih"].T.astype(cd)
    whh_T = params["w_hh"].T.astype(cd)
    b = (params["b_ih"] + params["b_hh"]).astype(jnp.float32)
    w3_T = params["w3"].T.astype(cd)
    w4_T = params["w4"].T.astype(cd)
    # Mirror Stage 1: x cast to cd for the MXU, f32 accumulation, gates stored
    # in cd.  For cd == float32 every cast is a no-op (strict reference).
    gx = (jnp.einsum("bti,io->bto", xs.astype(cd), wih_T,
                     preferred_element_type=jnp.float32) + b).astype(cd)
    h = jnp.zeros((B, H), jnp.float32)
    c = jnp.zeros((B, H), jnp.float32)
    for t in range(seq_len):
        gates = (gx[:, t, :].astype(jnp.float32)
                 + jnp.dot(h.astype(cd), whh_T,
                           preferred_element_type=jnp.float32))
        i_g = jax.nn.sigmoid(gates[:, 0 * H:1 * H])
        f_g = jax.nn.sigmoid(gates[:, 1 * H:2 * H])
        g_g = jnp.tanh(gates[:, 2 * H:3 * H])
        o_g = jax.nn.sigmoid(gates[:, 3 * H:4 * H])
        c = f_g * c + i_g * g_g
        h = o_g * jnp.tanh(c)
    hid = jnp.maximum(
        jnp.dot(h.astype(cd), w3_T, preferred_element_type=jnp.float32)
        + params["b3"].astype(jnp.float32), 0.0)
    return (jnp.dot(hid.astype(cd), w4_T, preferred_element_type=jnp.float32)
            + params["b4"].astype(jnp.float32))


def init_params(key, hidden_dim, num_classes):
    """Deterministic parameter init matching the module's shapes."""
    ks = jax.random.split(key, 8)
    H = hidden_dim
    s_lstm = 1.0 / jnp.sqrt(H)
    s_fc3 = 1.0 / jnp.sqrt(H)
    s_fc4 = 1.0 / jnp.sqrt(256.0)
    u = lambda k, shape, s: jax.random.uniform(k, shape, jnp.float32, -s, s)
    return {
        "w_ih": u(ks[0], (4 * H, INPUT_SIZE), s_lstm),
        "w_hh": u(ks[1], (4 * H, H), s_lstm),
        "b_ih": u(ks[2], (4 * H,), s_lstm),
        "b_hh": u(ks[3], (4 * H,), s_lstm),
        "w3": u(ks[4], (256, H), s_fc3),
        "b3": u(ks[5], (256,), s_fc3),
        "w4": u(ks[6], (num_classes, 256), s_fc4),
        "b4": u(ks[7], (num_classes,), s_fc4),
    }


if __name__ == "__main__":
    hidden_dim = 32
    seq_len = 8
    num_classes = 10
    batch = 2

    key = jax.random.PRNGKey(0)
    k_x, k_p = jax.random.split(key)
    params = init_params(k_p, hidden_dim, num_classes)

    # Same layout the PyTorch forward expects: (batch*seq_len, 1636).
    x = jax.random.normal(k_x, (batch * seq_len, INPUT_SIZE), jnp.float32)

    # ---- float32 path: strict check vs reference ----
    y_f32, current_batch = lstm_nn_vision_forward(
        x, params, seq_len=seq_len, hidden_dim=hidden_dim,
        num_classes=num_classes, compute_dtype=jnp.float32)
    y_f32 = jax.block_until_ready(y_f32)
    y_ref = _reference_forward(
        x, params, seq_len=seq_len, hidden_dim=hidden_dim,
        num_classes=num_classes, compute_dtype=jnp.float32)
    assert y_f32.shape == (batch, num_classes)
    assert int(current_batch) == batch
    assert jnp.allclose(y_f32, y_ref, atol=5e-4, rtol=5e-4), "f32 mismatch"

    # ---- default path: bf16 MXU operands + bf16 gates, f32 accumulation ----
    y_bf16, _ = lstm_nn_vision_forward(
        x, params, seq_len=seq_len, hidden_dim=hidden_dim,
        num_classes=num_classes)
    y_bf16 = jax.block_until_ready(y_bf16)
    y_ref_bf16 = _reference_forward(
        x, params, seq_len=seq_len, hidden_dim=hidden_dim,
        num_classes=num_classes, compute_dtype=jnp.bfloat16)
    assert jnp.allclose(y_bf16, y_ref_bf16, atol=2e-2, rtol=2e-2), "bf16 mismatch"

    print("KERNEL_OK")
</pallas_src>

<mosaic_0001>
module attributes {stable_mosaic.version = 11 : i64} {
  func.func @_input_proj_kernel(%arg0: i32, %arg1: i32, %arg2: memref<2x8x1636xf32, #tpu.memory_space<vmem>>, %arg3: memref<1636x128xf32, #tpu.memory_space<vmem>>, %arg4: memref<1x128xf32, #tpu.memory_space<vmem>>, %arg5: memref<8x2x128xf32, #tpu.memory_space<vmem>>) attributes {dimension_semantics = [#tpu.dimension_semantics<parallel>, #tpu.dimension_semantics<parallel>], iteration_bounds = array<i64: 1, 1>, scalar_prefetch = 0 : i64, scratch_operands = 0 : i64, tpu.core_type = #tpu.core_type<tc>, window_params = [{transform_indices = @transform_0, window_bounds = array<i64: 2, 8, 1636>}, {pipeline_mode = #tpu.pipeline_mode<synchronous>, transform_indices = @transform_1, window_bounds = array<i64: 1636, 128>}, {pipeline_mode = #tpu.pipeline_mode<synchronous>, transform_indices = @transform_2, window_bounds = array<i64: 1, 128>}, {transform_indices = @transform_3, window_bounds = array<i64: 8, 2, 128>}]} {
    %c0 = arith.constant 0 : index
    %c0_0 = arith.constant 0 : index
    %0 = vector.load %arg3[%c0, %c0_0] : memref<1636x128xf32, #tpu.memory_space<vmem>>, vector<1636x128xf32>
    %c0_1 = arith.constant 0 : index
    %c0_2 = arith.constant 0 : index
    %1 = vector.load %arg4[%c0_1, %c0_2] : memref<1x128xf32, #tpu.memory_space<vmem>>, vector<1x128xf32>
    %c0_3 = arith.constant 0 : index
    %c0_4 = arith.constant 0 : index
    %c0_5 = arith.constant 0 : index
    %2 = vector.load %arg2[%c0_3, %c0_4, %c0_5] : memref<2x8x1636xf32, #tpu.memory_space<vmem>>, vector<2x1x1636xf32>
    %3 = vector.shape_cast %2 : vector<2x1x1636xf32> to vector<2x1636xf32>
    %cst = arith.constant dense<0.000000e+00> : vector<2x128xf32>
    %4 = tpu.matmul %3, %0, %cst {dimension_numbers = #tpu.dot_dimension_numbers<[1], [0], [0], [1], [0, 0, 1, 1], [], []>} : vector<2x1636xf32>, vector<1636x128xf32>, vector<2x128xf32> -> vector<2x128xf32>
    %5 = vector.broadcast %1 : vector<1x128xf32> to vector<2x128xf32>
    %6 = arith.addf %4, %5 : vector<2x128xf32>
    %c0_6 = arith.constant 0 : index
    %c0_7 = arith.constant 0 : index
    %c0_8 = arith.constant 0 : index
    %7 = vector.load %arg5[%c0_6, %c0_7, %c0_8] : memref<8x2x128xf32, #tpu.memory_space<vmem>>, vector<1x2x128xf32>
    %8 = vector.shape_cast %7 : vector<1x2x128xf32> to vector<2x128xf32>
    %9 = vector.shape_cast %6 : vector<2x128xf32> to vector<1x2x128xf32>
    tpu.vector_store %arg5[%c0_6, %c0_7, %c0_8], %9 {strides = array<i32>} : memref<8x2x128xf32, #tpu.memory_space<vmem>>, vector<1x2x128xf32>,
    %c0_9 = arith.constant 0 : index
    %c1 = arith.constant 1 : index
    %c0_10 = arith.constant 0 : index
    %10 = vector.load %arg2[%c0_9, %c1, %c0_10] : memref<2x8x1636xf32, #tpu.memory_space<vmem>>, vector<2x1x1636xf32>
    %11 = vector.shape_cast %10 : vector<2x1x1636xf32> to vector<2x1636xf32>
    %cst_11 = arith.constant dense<0.000000e+00> : vector<2x128xf32>
    %12 = tpu.matmul %11, %0, %cst_11 {dimension_numbers = #tpu.dot_dimension_numbers<[1], [0], [0], [1], [0, 0, 1, 1], [], []>} : vector<2x1636xf32>, vector<1636x128xf32>, vector<2x128xf32> -> vector<2x128xf32>
    %13 = vector.broadcast %1 : vector<1x128xf32> to vector<2x128xf32>
    %14 = arith.addf %12, %13 : vector<2x128xf32>
    %c1_12 = arith.constant 1 : index
    %c0_13 = arith.constant 0 : index
    %c0_14 = arith.constant 0 : index
    %15 = vector.load %arg5[%c1_12, %c0_13, %c0_14] : memref<8x2x128xf32, #tpu.memory_space<vmem>>, vector<1x2x128xf32>
    %16 = vector.shape_cast %15 : vector<1x2x128xf32> to vector<2x128xf32>
    %17 = vector.shape_cast %14 : vector<2x128xf32> to vector<1x2x128xf32>
    tpu.vector_store %arg5[%c1_12, %c0_13, %c0_14], %17 {strides = array<i32>} : memref<8x2x128xf32, #tpu.memory_space<vmem>>, vector<1x2x128xf32>,
    %c0_15 = arith.constant 0 : index
    %c2 = arith.constant 2 : index
    %c0_16 = arith.constant 0 : index
    %18 = vector.load %arg2[%c0_15, %c2, %c0_16] : memref<2x8x1636xf32, #tpu.memory_space<vmem>>, vector<2x1x1636xf32>
    %19 = vector.shape_cast %18 : vector<2x1x1636xf32> to vector<2x1636xf32>
    %cst_17 = arith.constant dense<0.000000e+00> : vector<2x128xf32>
    %20 = tpu.matmul %19, %0, %cst_17 {dimension_numbers = #tpu.dot_dimension_numbers<[1], [0], [0], [1], [0, 0, 1, 1], [], []>} : vector<2x1636xf32>, vector<1636x128xf32>, vector<2x128xf32> -> vector<2x128xf32>
    %21 = vector.broadcast %1 : vector<1x128xf32> to vector<2x128xf32>
    %22 = arith.addf %20, %21 : vector<2x128xf32>
    %c2_18 = arith.constant 2 : index
    %c0_19 = arith.constant 0 : index
    %c0_20 = arith.constant 0 : index
    %23 = vector.load %arg5[%c2_18, %c0_19, %c0_20] : memref<8x2x128xf32, #tpu.memory_space<vmem>>, vector<1x2x128xf32>
    %24 = vector.shape_cast %23 : vector<1x2x128xf32> to vector<2x128xf32>
    %25 = vector.shape_cast %22 : vector<2x128xf32> to vector<1x2x128xf32>
    tpu.vector_store %arg5[%c2_18, %c0_19, %c0_20], %25 {strides = array<i32>} : memref<8x2x128xf32, #tpu.memory_space<vmem>>, vector<1x2x128xf32>,
    %c0_21 = arith.constant 0 : index
    %c3 = arith.constant 3 : index
    %c0_22 = arith.constant 0 : index
    %26 = vector.load %arg2[%c0_21, %c3, %c0_22] : memref<2x8x1636xf32, #tpu.memory_space<vmem>>, vector<2x1x1636xf32>
    %27 = vector.shape_cast %26 : vector<2x1x1636xf32> to vector<2x1636xf32>
    %cst_23 = arith.constant dense<0.000000e+00> : vector<2x128xf32>
    %28 = tpu.matmul %27, %0, %cst_23 {dimension_numbers = #tpu.dot_dimension_numbers<[1], [0], [0], [1], [0, 0, 1, 1], [], []>} : vector<2x1636xf32>, vector<1636x128xf32>, vector<2x128xf32> -> vector<2x128xf32>
    %29 = vector.broadcast %1 : vector<1x128xf32> to vector<2x128xf32>
    %30 = arith.addf %28, %29 : vector<2x128xf32>
    %c3_24 = arith.constant 3 : index
    %c0_25 = arith.constant 0 : index
    %c0_26 = arith.constant 0 : index
    %31 = vector.load %arg5[%c3_24, %c0_25, %c0_26] : memref<8x2x128xf32, #tpu.memory_space<vmem>>, vector<1x2x128xf32>
    %32 = vector.shape_cast %31 : vector<1x2x128xf32> to vector<2x128xf32>
    %33 = vector.shape_cast %30 : vector<2x128xf32> to vector<1x2x128xf32>
    tpu.vector_store %arg5[%c3_24, %c0_25, %c0_26], %33 {strides = array<i32>} : memref<8x2x128xf32, #tpu.memory_space<vmem>>, vector<1x2x128xf32>,
    %c0_27 = arith.constant 0 : index
    %c4 = arith.constant 4 : index
    %c0_28 = arith.constant 0 : index
    %34 = vector.load %arg2[%c0_27, %c4, %c0_28] : memref<2x8x1636xf32, #tpu.memory_space<vmem>>, vector<2x1x1636xf32>
    %35 = vector.shape_cast %34 : vector<2x1x1636xf32> to vector<2x1636xf32>
    %cst_29 = arith.constant dense<0.000000e+00> : vector<2x128xf32>
    %36 = tpu.matmul %35, %0, %cst_29 {dimension_numbers = #tpu.dot_dimension_numbers<[1], [0], [0], [1], [0, 0, 1, 1], [], []>} : vector<2x1636xf32>, vector<1636x128xf32>, vector<2x128xf32> -> vector<2x128xf32>
    %37 = vector.broadcast %1 : vector<1x128xf32> to vector<2x128xf32>
    %38 = arith.addf %36, %37 : vector<2x128xf32>
    %c4_30 = arith.constant 4 : index
    %c0_31 = arith.constant 0 : index
    %c0_32 = arith.constant 0 : index
    %39 = vector.load %arg5[%c4_30, %c0_31, %c0_32] : memref<8x2x128xf32, #tpu.memory_space<vmem>>, vector<1x2x128xf32>
    %40 = vector.shape_cast %39 : vector<1x2x128xf32> to vector<2x128xf32>
    %41 = vector.shape_cast %38 : vector<2x128xf32> to vector<1x2x128xf32>
    tpu.vector_store %arg5[%c4_30, %c0_31, %c0_32], %41 {strides = array<i32>} : memref<8x2x128xf32, #tpu.memory_space<vmem>>, vector<1x2x128xf32>,
    %c0_33 = arith.constant 0 : index
    %c5 = arith.constant 5 : index
    %c0_34 = arith.constant 0 : index
    %42 = vector.load %arg2[%c0_33, %c5, %c0_34] : memref<2x8x1636xf32, #tpu.memory_space<vmem>>, vector<2x1x1636xf32>
    %43 = vector.shape_cast %42 : vector<2x1x1636xf32> to vector<2x1636xf32>
    %cst_35 = arith.constant dense<0.000000e+00> : vector<2x128xf32>
    %44 = tpu.matmul %43, %0, %cst_35 {dimension_numbers = #tpu.dot_dimension_numbers<[1], [0], [0], [1], [0, 0, 1, 1], [], []>} : vector<2x1636xf32>, vector<1636x128xf32>, vector<2x128xf32> -> vector<2x128xf32>
    %45 = vector.broadcast %1 : vector<1x128xf32> to vector<2x128xf32>
    %46 = arith.addf %44, %45 : vector<2x128xf32>
    %c5_36 = arith.constant 5 : index
    %c0_37 = arith.constant 0 : index
    %c0_38 = arith.constant 0 : index
    %47 = vector.load %arg5[%c5_36, %c0_37, %c0_38] : memref<8x2x128xf32, #tpu.memory_space<vmem>>, vector<1x2x128xf32>
    %48 = vector.shape_cast %47 : vector<1x2x128xf32> to vector<2x128xf32>
    %49 = vector.shape_cast %46 : vector<2x128xf32> to vector<1x2x128xf32>
    tpu.vector_store %arg5[%c5_36, %c0_37, %c0_38], %49 {strides = array<i32>} : memref<8x2x128xf32, #tpu.memory_space<vmem>>, vector<1x2x128xf32>,
    %c0_39 = arith.constant 0 : index
    %c6 = arith.constant 6 : index
    %c0_40 = arith.constant 0 : index
    %50 = vector.load %arg2[%c0_39, %c6, %c0_40] : memref<2x8x1636xf32, #tpu.memory_space<vmem>>, vector<2x1x1636xf32>
    %51 = vector.shape_cast %50 : vector<2x1x1636xf32> to vector<2x1636xf32>
    %cst_41 = arith.constant dense<0.000000e+00> : vector<2x128xf32>
    %52 = tpu.matmul %51, %0, %cst_41 {dimension_numbers = #tpu.dot_dimension_numbers<[1], [0], [0], [1], [0, 0, 1, 1], [], []>} : vector<2x1636xf32>, vector<1636x128xf32>, vector<2x128xf32> -> vector<2x128xf32>
    %53 = vector.broadcast %1 : vector<1x128xf32> to vector<2x128xf32>
    %54 = arith.addf %52, %53 : vector<2x128xf32>
    %c6_42 = arith.constant 6 : index
    %c0_43 = arith.constant 0 : index
    %c0_44 = arith.constant 0 : index
    %55 = vector.load %arg5[%c6_42, %c0_43, %c0_44] : memref<8x2x128xf32, #tpu.memory_space<vmem>>, vector<1x2x128xf32>
    %56 = vector.shape_cast %55 : vector<1x2x128xf32> to vector<2x128xf32>
    %57 = vector.shape_cast %54 : vector<2x128xf32> to vector<1x2x128xf32>
    tpu.vector_store %arg5[%c6_42, %c0_43, %c0_44], %57 {strides = array<i32>} : memref<8x2x128xf32, #tpu.memory_space<vmem>>, vector<1x2x128xf32>,
    %c0_45 = arith.constant 0 : index
    %c7 = arith.constant 7 : index
    %c0_46 = arith.constant 0 : index
    %58 = vector.load %arg2[%c0_45, %c7, %c0_46] : memref<2x8x1636xf32, #tpu.memory_space<vmem>>, vector<2x1x1636xf32>
    %59 = vector.shape_cast %58 : vector<2x1x1636xf32> to vector<2x1636xf32>
    %cst_47 = arith.constant dense<0.000000e+00> : vector<2x128xf32>
    %60 = tpu.matmul %59, %0, %cst_47 {dimension_numbers = #tpu.dot_dimension_numbers<[1], [0], [0], [1], [0, 0, 1, 1], [], []>} : vector<2x1636xf32>, vector<1636x128xf32>, vector<2x128xf32> -> vector<2x128xf32>
    %61 = vector.broadcast %1 : vector<1x128xf32> to vector<2x128xf32>
    %62 = arith.addf %60, %61 : vector<2x128xf32>
    %c7_48 = arith.constant 7 : index
    %c0_49 = arith.constant 0 : index
    %c0_50 = arith.constant 0 : index
    %63 = vector.load %arg5[%c7_48, %c0_49, %c0_50] : memref<8x2x128xf32, #tpu.memory_space<vmem>>, vector<1x2x128xf32>
    %64 = vector.shape_cast %63 : vector<1x2x128xf32> to vector<2x128xf32>
    %65 = vector.shape_cast %62 : vector<2x128xf32> to vector<1x2x128xf32>
    tpu.vector_store %arg5[%c7_48, %c0_49, %c0_50], %65 {strides = array<i32>} : memref<8x2x128xf32, #tpu.memory_space<vmem>>, vector<1x2x128xf32>,
    return
  }
  func.func @transform_0(%arg0: i32, %arg1: i32) -> (i32, i32, i32) {
    %c0_i32 = arith.constant 0 : i32
    %c0_i32_0 = arith.constant 0 : i32
    return %arg0, %arg1, %c0_i32 : i32, i32, i32
  }
  func.func @transform_1(%arg0: i32, %arg1: i32) -> (i32, i32) {
    %c0_i32 = arith.constant 0 : i32
    %c0_i32_0 = arith.constant 0 : i32
    %c0_i32_1 = arith.constant 0 : i32
    return %c0_i32, %c0_i32_0 : i32, i32
  }
  func.func @transform_2(%arg0: i32, %arg1: i32) -> (i32, i32) {
    %c0_i32 = arith.constant 0 : i32
    %c0_i32_0 = arith.constant 0 : i32
    %c0_i32_1 = arith.constant 0 : i32
    return %c0_i32, %c0_i32_0 : i32, i32
  }
  func.func @transform_3(%arg0: i32, %arg1: i32) -> (i32, i32, i32) {
    %c0_i32 = arith.constant 0 : i32
    %c0_i32_0 = arith.constant 0 : i32
    return %arg1, %arg0, %c0_i32 : i32, i32, i32
  }
}

module attributes {stable_mosaic.version = 11 : i64} {
  func.func @_lstm_recurrent_kernel(%arg0: i32, %arg1: i32, %arg2: memref<8x2x128xf32, #tpu.memory_space<vmem>>, %arg3: memref<32x128xf32, #tpu.memory_space<vmem>>, %arg4: memref<32x256xf32, #tpu.memory_space<vmem>>, %arg5: memref<1x256xf32, #tpu.memory_space<vmem>>, %arg6: memref<256x128xf32, #tpu.memory_space<vmem>>, %arg7: memref<1x128xf32, #tpu.memory_space<vmem>>, %arg8: memref<2x128xf32, #tpu.memory_space<vmem>>, %arg9: memref<2x32xf32, #tpu.memory_space<vmem>>, %arg10: memref<2x32xf32, #tpu.memory_space<vmem>>) attributes {dimension_semantics = [#tpu.dimension_semantics<parallel>, #tpu.dimension_semantics<arbitrary>], iteration_bounds = array<i64: 1, 1>, scalar_prefetch = 0 : i64, scratch_operands = 2 : i64, tpu.core_type = #tpu.core_type<tc>, window_params = [{transform_indices = @transform_0, window_bounds = array<i64: 8, 2, 128>}, {pipeline_mode = #tpu.pipeline_mode<synchronous>, transform_indices = @transform_1, window_bounds = array<i64: 32, 128>}, {pipeline_mode = #tpu.pipeline_mode<synchronous>, transform_indices = @transform_2, window_bounds = array<i64: 32, 256>}, {pipeline_mode = #tpu.pipeline_mode<synchronous>, transform_indices = @transform_3, window_bounds = array<i64: 1, 256>}, {pipeline_mode = #tpu.pipeline_mode<synchronous>, transform_indices = @transform_4, window_bounds = array<i64: 256, 128>}, {pipeline_mode = #tpu.pipeline_mode<synchronous>, transform_indices = @transform_5, window_bounds = array<i64: 1, 128>}, {transform_indices = @transform_6, window_bounds = array<i64: 2, 128>}]} {
    %c0_i32 = arith.constant 0 : i32
    %0 = arith.cmpi eq, %arg1, %c0_i32 : i32
    %1 = arith.extui %0 : i1 to i32
    %c0_i32_0 = arith.constant 0 : i32
    %2 = arith.cmpi ne, %1, %c0_i32_0 : i32
    scf.if %2 {
      %cst_74 = arith.constant 0.000000e+00 : f32
      %258 = vector.broadcast %cst_74 : f32 to vector<2x32xf32>
      %c0_75 = arith.constant 0 : index
      %c0_76 = arith.constant 0 : index
      %259 = vector.load %arg9[%c0_75, %c0_76] : memref<2x32xf32, #tpu.memory_space<vmem>>, vector<2x32xf32>
      tpu.vector_store %arg9[%c0_75, %c0_76], %258 {strides = array<i32>} : memref<2x32xf32, #tpu.memory_space<vmem>>, vector<2x32xf32>,
      %cst_77 = arith.constant 0.000000e+00 : f32
      %260 = vector.broadcast %cst_77 : f32 to vector<2x32xf32>
      %c0_78 = arith.constant 0 : index
      %c0_79 = arith.constant 0 : index
      %261 = vector.load %arg10[%c0_78, %c0_79] : memref<2x32xf32, #tpu.memory_space<vmem>>, vector<2x32xf32>
      tpu.vector_store %arg10[%c0_78, %c0_79], %260 {strides = array<i32>} : memref<2x32xf32, #tpu.memory_space<vmem>>, vector<2x32xf32>,
    } else {
    }
    %c0 = arith.constant 0 : index
    %c0_1 = arith.constant 0 : index
    %3 = vector.load %arg9[%c0, %c0_1] : memref<2x32xf32, #tpu.memory_space<vmem>>, vector<2x32xf32>
    %c0_2 = arith.constant 0 : index
    %c0_3 = arith.constant 0 : index
    %4 = vector.load %arg10[%c0_2, %c0_3] : memref<2x32xf32, #tpu.memory_space<vmem>>, vector<2x32xf32>
    %c0_i32_4 = arith.constant 0 : i32
    %5 = arith.index_cast %c0_i32_4 : i32 to index
    %c0_5 = arith.constant 0 : index
    %c0_6 = arith.constant 0 : index
    %6 = vector.load %arg2[%5, %c0_5, %c0_6] : memref<8x2x128xf32, #tpu.memory_space<vmem>>, vector<1x2x128xf32>
    %7 = vector.shape_cast %6 : vector<1x2x128xf32> to vector<2x128xf32>
    %c0_7 = arith.constant 0 : index
    %c0_8 = arith.constant 0 : index
    %8 = vector.load %arg3[%c0_7, %c0_8] : memref<32x128xf32, #tpu.memory_space<vmem>>, vector<32x128xf32>
    %cst = arith.constant dense<0.000000e+00> : vector<2x128xf32>
    %9 = tpu.matmul %3, %8, %cst {dimension_numbers = #tpu.dot_dimension_numbers<[1], [0], [0], [1], [0, 0, 1, 1], [], []>} : vector<2x32xf32>, vector<32x128xf32>, vector<2x128xf32> -> vector<2x128xf32>
    %10 = arith.addf %7, %9 : vector<2x128xf32>
    %11 = vector.extract_strided_slice %10 {offsets = [0, 0], sizes = [2, 32], strides = [1, 1]} : vector<2x128xf32> to vector<2x32xf32>
    %12 = arith.negf %11 : vector<2x32xf32>
    %13 = math.exp %12 : vector<2x32xf32>
    %cst_9 = arith.constant 1.000000e+00 : f32
    %14 = vector.broadcast %cst_9 : f32 to vector<2x32xf32>
    %15 = arith.addf %14, %13 : vector<2x32xf32>
    %16 = arith.divf %14, %15 : vector<2x32xf32>
    %17 = vector.extract_strided_slice %10 {offsets = [0, 32], sizes = [2, 32], strides = [1, 1]} : vector<2x128xf32> to vector<2x32xf32>
    %18 = arith.negf %17 : vector<2x32xf32>
    %19 = math.exp %18 : vector<2x32xf32>
    %cst_10 = arith.constant 1.000000e+00 : f32
    %20 = vector.broadcast %cst_10 : f32 to vector<2x32xf32>
    %21 = arith.addf %20, %19 : vector<2x32xf32>
    %22 = arith.divf %20, %21 : vector<2x32xf32>
    %23 = vector.extract_strided_slice %10 {offsets = [0, 64], sizes = [2, 32], strides = [1, 1]} : vector<2x128xf32> to vector<2x32xf32>
    %24 = math.tanh %23 : vector<2x32xf32>
    %25 = vector.extract_strided_slice %10 {offsets = [0, 96], sizes = [2, 32], strides = [1, 1]} : vector<2x128xf32> to vector<2x32xf32>
    %26 = arith.negf %25 : vector<2x32xf32>
    %27 = math.exp %26 : vector<2x32xf32>
    %cst_11 = arith.constant 1.000000e+00 : f32
    %28 = vector.broadcast %cst_11 : f32 to vector<2x32xf32>
    %29 = arith.addf %28, %27 : vector<2x32xf32>
    %30 = arith.divf %28, %29 : vector<2x32xf32>
    %31 = arith.mulf %22, %4 : vector<2x32xf32>
    %32 = arith.mulf %16, %24 : vector<2x32xf32>
    %33 = arith.addf %31, %32 : vector<2x32xf32>
    %34 = math.tanh %33 : vector<2x32xf32>
    %35 = arith.mulf %30, %34 : vector<2x32xf32>
    %c1_i32 = arith.constant 1 : i32
    %36 = arith.index_cast %c1_i32 : i32 to index
    %c0_12 = arith.constant 0 : index
    %c0_13 = arith.constant 0 : index
    %37 = vector.load %arg2[%36, %c0_12, %c0_13] : memref<8x2x128xf32, #tpu.memory_space<vmem>>, vector<1x2x128xf32>
    %38 = vector.shape_cast %37 : vector<1x2x128xf32> to vector<2x128xf32>
    %c0_14 = arith.constant 0 : index
    %c0_15 = arith.constant 0 : index
    %39 = vector.load %arg3[%c0_14, %c0_15] : memref<32x128xf32, #tpu.memory_space<vmem>>, vector<32x128xf32>
    %cst_16 = arith.constant dense<0.000000e+00> : vector<2x128xf32>
    %40 = tpu.matmul %35, %39, %cst_16 {dimension_numbers = #tpu.dot_dimension_numbers<[1], [0], [0], [1], [0, 0, 1, 1], [], []>} : vector<2x32xf32>, vector<32x128xf32>, vector<2x128xf32> -> vector<2x128xf32>
    %41 = arith.addf %38, %40 : vector<2x128xf32>
    %42 = vector.extract_strided_slice %41 {offsets = [0, 0], sizes = [2, 32], strides = [1, 1]} : vector<2x128xf32> to vector<2x32xf32>
    %43 = arith.negf %42 : vector<2x32xf32>
    %44 = math.exp %43 : vector<2x32xf32>
    %cst_17 = arith.constant 1.000000e+00 : f32
    %45 = vector.broadcast %cst_17 : f32 to vector<2x32xf32>
    %46 = arith.addf %45, %44 : vector<2x32xf32>
    %47 = arith.divf %45, %46 : vector<2x32xf32>
    %48 = vector.extract_strided_slice %41 {offsets = [0, 32], sizes = [2, 32], strides = [1, 1]} : vector<2x128xf32> to vector<2x32xf32>
    %49 = arith.negf %48 : vector<2x32xf32>
    %50 = math.exp %49 : vector<2x32xf32>
    %cst_18 = arith.constant 1.000000e+00 : f32
    %51 = vector.broadcast %cst_18 : f32 to vector<2x32xf32>
    %52 = arith.addf %51, %50 : vector<2x32xf32>
    %53 = arith.divf %51, %52 : vector<2x32xf32>
    %54 = vector.extract_strided_slice %41 {offsets = [0, 64], sizes = [2, 32], strides = [1, 1]} : vector<2x128xf32> to vector<2x32xf32>
    %55 = math.tanh %54 : vector<2x32xf32>
    %56 = vector.extract_strided_slice %41 {offsets = [0, 96], sizes = [2, 32], strides = [1, 1]} : vector<2x128xf32> to vector<2x32xf32>
    %57 = arith.negf %56 : vector<2x32xf32>
    %58 = math.exp %57 : vector<2x32xf32>
    %cst_19 = arith.constant 1.000000e+00 : f32
    %59 = vector.broadcast %cst_19 : f32 to vector<2x32xf32>
    %60 = arith.addf %59, %58 : vector<2x32xf32>
    %61 = arith.divf %59, %60 : vector<2x32xf32>
    %62 = arith.mulf %53, %33 : vector<2x32xf32>
    %63 = arith.mulf %47, %55 : vector<2x32xf32>
    %64 = arith.addf %62, %63 : vector<2x32xf32>
    %65 = math.tanh %64 : vector<2x32xf32>
    %66 = arith.mulf %61, %65 : vector<2x32xf32>
    %c2_i32 = arith.constant 2 : i32
    %67 = arith.index_cast %c2_i32 : i32 to index
    %c0_20 = arith.constant 0 : index
    %c0_21 = arith.constant 0 : index
    %68 = vector.load %arg2[%67, %c0_20, %c0_21] : memref<8x2x128xf32, #tpu.memory_space<vmem>>, vector<1x2x128xf32>
    %69 = vector.shape_cast %68 : vector<1x2x128xf32> to vector<2x128xf32>
    %c0_22 = arith.constant 0 : index
    %c0_23 = arith.constant 0 : index
    %70 = vector.load %arg3[%c0_22, %c0_23] : memref<32x128xf32, #tpu.memory_space<vmem>>, vector<32x128xf32>
    %cst_24 = arith.constant dense<0.000000e+00> : vector<2x128xf32>
    %71 = tpu.matmul %66, %70, %cst_24 {dimension_numbers = #tpu.dot_dimension_numbers<[1], [0], [0], [1], [0, 0, 1, 1], [], []>} : vector<2x32xf32>, vector<32x128xf32>, vector<2x128xf32> -> vector<2x128xf32>
    %72 = arith.addf %69, %71 : vector<2x128xf32>
    %73 = vector.extract_strided_slice %72 {offsets = [0, 0], sizes = [2, 32], strides = [1, 1]} : vector<2x128xf32> to vector<2x32xf32>
    %74 = arith.negf %73 : vector<2x32xf32>
    %75 = math.exp %74 : vector<2x32xf32>
    %cst_25 = arith.constant 1.000000e+00 : f32
    %76 = vector.broadcast %cst_25 : f32 to vector<2x32xf32>
    %77 = arith.addf %76, %75 : vector<2x32xf32>
    %78 = arith.divf %76, %77 : vector<2x32xf32>
    %79 = vector.extract_strided_slice %72 {offsets = [0, 32], sizes = [2, 32], strides = [1, 1]} : vector<2x128xf32> to vector<2x32xf32>
    %80 = arith.negf %79 : vector<2x32xf32>
    %81 = math.exp %80 : vector<2x32xf32>
    %cst_26 = arith.constant 1.000000e+00 : f32
    %82 = vector.broadcast %cst_26 : f32 to vector<2x32xf32>
    %83 = arith.addf %82, %81 : vector<2x32xf32>
    %84 = arith.divf %82, %83 : vector<2x32xf32>
    %85 = vector.extract_strided_slice %72 {offsets = [0, 64], sizes = [2, 32], strides = [1, 1]} : vector<2x128xf32> to vector<2x32xf32>
    %86 = math.tanh %85 : vector<2x32xf32>
    %87 = vector.extract_strided_slice %72 {offsets = [0, 96], sizes = [2, 32], strides = [1, 1]} : vector<2x128xf32> to vector<2x32xf32>
    %88 = arith.negf %87 : vector<2x32xf32>
    %89 = math.exp %88 : vector<2x32xf32>
    %cst_27 = arith.constant 1.000000e+00 : f32
    %90 = vector.broadcast %cst_27 : f32 to vector<2x32xf32>
    %91 = arith.addf %90, %89 : vector<2x32xf32>
    %92 = arith.divf %90, %91 : vector<2x32xf32>
    %93 = arith.mulf %84, %64 : vector<2x32xf32>
    %94 = arith.mulf %78, %86 : vector<2x32xf32>
    %95 = arith.addf %93, %94 : vector<2x32xf32>
    %96 = math.tanh %95 : vector<2x32xf32>
    %97 = arith.mulf %92, %96 : vector<2x32xf32>
    %c3_i32 = arith.constant 3 : i32
    %98 = arith.index_cast %c3_i32 : i32 to index
    %c0_28 = arith.constant 0 : index
    %c0_29 = arith.constant 0 : index
    %99 = vector.load %arg2[%98, %c0_28, %c0_29] : memref<8x2x128xf32, #tpu.memory_space<vmem>>, vector<1x2x128xf32>
    %100 = vector.shape_cast %99 : vector<1x2x128xf32> to vector<2x128xf32>
    %c0_30 = arith.constant 0 : index
    %c0_31 = arith.constant 0 : index
    %101 = vector.load %arg3[%c0_30, %c0_31] : memref<32x128xf32, #tpu.memory_space<vmem>>, vector<32x128xf32>
    %cst_32 = arith.constant dense<0.000000e+00> : vector<2x128xf32>
    %102 = tpu.matmul %97, %101, %cst_32 {dimension_numbers = #tpu.dot_dimension_numbers<[1], [0], [0], [1], [0, 0, 1, 1], [], []>} : vector<2x32xf32>, vector<32x128xf32>, vector<2x128xf32> -> vector<2x128xf32>
    %103 = arith.addf %100, %102 : vector<2x128xf32>
    %104 = vector.extract_strided_slice %103 {offsets = [0, 0], sizes = [2, 32], strides = [1, 1]} : vector<2x128xf32> to vector<2x32xf32>
    %105 = arith.negf %104 : vector<2x32xf32>
    %106 = math.exp %105 : vector<2x32xf32>
    %cst_33 = arith.constant 1.000000e+00 : f32
    %107 = vector.broadcast %cst_33 : f32 to vector<2x32xf32>
    %108 = arith.addf %107, %106 : vector<2x32xf32>
    %109 = arith.divf %107, %108 : vector<2x32xf32>
    %110 = vector.extract_strided_slice %103 {offsets = [0, 32], sizes = [2, 32], strides = [1, 1]} : vector<2x128xf32> to vector<2x32xf32>
    %111 = arith.negf %110 : vector<2x32xf32>
    %112 = math.exp %111 : vector<2x32xf32>
    %cst_34 = arith.constant 1.000000e+00 : f32
    %113 = vector.broadcast %cst_34 : f32 to vector<2x32xf32>
    %114 = arith.addf %113, %112 : vector<2x32xf32>
    %115 = arith.divf %113, %114 : vector<2x32xf32>
    %116 = vector.extract_strided_slice %103 {offsets = [0, 64], sizes = [2, 32], strides = [1, 1]} : vector<2x128xf32> to vector<2x32xf32>
    %117 = math.tanh %116 : vector<2x32xf32>
    %118 = vector.extract_strided_slice %103 {offsets = [0, 96], sizes = [2, 32], strides = [1, 1]} : vector<2x128xf32> to vector<2x32xf32>
    %119 = arith.negf %118 : vector<2x32xf32>
    %120 = math.exp %119 : vector<2x32xf32>
    %cst_35 = arith.constant 1.000000e+00 : f32
    %121 = vector.broadcast %cst_35 : f32 to vector<2x32xf32>
    %122 = arith.addf %121, %120 : vector<2x32xf32>
    %123 = arith.divf %121, %122 : vector<2x32xf32>
    %124 = arith.mulf %115, %95 : vector<2x32xf32>
    %125 = arith.mulf %109, %117 : vector<2x32xf32>
    %126 = arith.addf %124, %125 : vector<2x32xf32>
    %127 = math.tanh %126 : vector<2x32xf32>
    %128 = arith.mulf %123, %127 : vector<2x32xf32>
    %c4_i32 = arith.constant 4 : i32
    %129 = arith.index_cast %c4_i32 : i32 to index
    %c0_36 = arith.constant 0 : index
    %c0_37 = arith.constant 0 : index
    %130 = vector.load %arg2[%129, %c0_36, %c0_37] : memref<8x2x128xf32, #tpu.memory_space<vmem>>, vector<1x2x128xf32>
    %131 = vector.shape_cast %130 : vector<1x2x128xf32> to vector<2x128xf32>
    %c0_38 = arith.constant 0 : index
    %c0_39 = arith.constant 0 : index
    %132 = vector.load %arg3[%c0_38, %c0_39] : memref<32x128xf32, #tpu.memory_space<vmem>>, vector<32x128xf32>
    %cst_40 = arith.constant dense<0.000000e+00> : vector<2x128xf32>
    %133 = tpu.matmul %128, %132, %cst_40 {dimension_numbers = #tpu.dot_dimension_numbers<[1], [0], [0], [1], [0, 0, 1, 1], [], []>} : vector<2x32xf32>, vector<32x128xf32>, vector<2x128xf32> -> vector<2x128xf32>
    %134 = arith.addf %131, %133 : vector<2x128xf32>
    %135 = vector.extract_strided_slice %134 {offsets = [0, 0], sizes = [2, 32], strides = [1, 1]} : vector<2x128xf32> to vector<2x32xf32>
    %136 = arith.negf %135 : vector<2x32xf32>
    %137 = math.exp %136 : vector<2x32xf32>
    %cst_41 = arith.constant 1.000000e+00 : f32
    %138 = vector.broadcast %cst_41 : f32 to vector<2x32xf32>
    %139 = arith.addf %138, %137 : vector<2x32xf32>
    %140 = arith.divf %138, %139 : vector<2x32xf32>
    %141 = vector.extract_strided_slice %134 {offsets = [0, 32], sizes = [2, 32], strides = [1, 1]} : vector<2x128xf32> to vector<2x32xf32>
    %142 = arith.negf %141 : vector<2x32xf32>
    %143 = math.exp %142 : vector<2x32xf32>
    %cst_42 = arith.constant 1.000000e+00 : f32
    %144 = vector.broadcast %cst_42 : f32 to vector<2x32xf32>
    %145 = arith.addf %144, %143 : vector<2x32xf32>
    %146 = arith.divf %144, %145 : vector<2x32xf32>
    %147 = vector.extract_strided_slice %134 {offsets = [0, 64], sizes = [2, 32], strides = [1, 1]} : vector<2x128xf32> to vector<2x32xf32>
    %148 = math.tanh %147 : vector<2x32xf32>
    %149 = vector.extract_strided_slice %134 {offsets = [0, 96], sizes = [2, 32], strides = [1, 1]} : vector<2x128xf32> to vector<2x32xf32>
    %150 = arith.negf %149 : vector<2x32xf32>
    %151 = math.exp %150 : vector<2x32xf32>
    %cst_43 = arith.constant 1.000000e+00 : f32
    %152 = vector.broadcast %cst_43 : f32 to vector<2x32xf32>
    %153 = arith.addf %152, %151 : vector<2x32xf32>
    %154 = arith.divf %152, %153 : vector<2x32xf32>
    %155 = arith.mulf %146, %126 : vector<2x32xf32>
    %156 = arith.mulf %140, %148 : vector<2x32xf32>
    %157 = arith.addf %155, %156 : vector<2x32xf32>
    %158 = math.tanh %157 : vector<2x32xf32>
    %159 = arith.mulf %154, %158 : vector<2x32xf32>
    %c5_i32 = arith.constant 5 : i32
    %160 = arith.index_cast %c5_i32 : i32 to index
    %c0_44 = arith.constant 0 : index
    %c0_45 = arith.constant 0 : index
    %161 = vector.load %arg2[%160, %c0_44, %c0_45] : memref<8x2x128xf32, #tpu.memory_space<vmem>>, vector<1x2x128xf32>
    %162 = vector.shape_cast %161 : vector<1x2x128xf32> to vector<2x128xf32>
    %c0_46 = arith.constant 0 : index
    %c0_47 = arith.constant 0 : index
    %163 = vector.load %arg3[%c0_46, %c0_47] : memref<32x128xf32, #tpu.memory_space<vmem>>, vector<32x128xf32>
    %cst_48 = arith.constant dense<0.000000e+00> : vector<2x128xf32>
    %164 = tpu.matmul %159, %163, %cst_48 {dimension_numbers = #tpu.dot_dimension_numbers<[1], [0], [0], [1], [0, 0, 1, 1], [], []>} : vector<2x32xf32>, vector<32x128xf32>, vector<2x128xf32> -> vector<2x128xf32>
    %165 = arith.addf %162, %164 : vector<2x128xf32>
    %166 = vector.extract_strided_slice %165 {offsets = [0, 0], sizes = [2, 32], strides = [1, 1]} : vector<2x128xf32> to vector<2x32xf32>
    %167 = arith.negf %166 : vector<2x32xf32>
    %168 = math.exp %167 : vector<2x32xf32>
    %cst_49 = arith.constant 1.000000e+00 : f32
    %169 = vector.broadcast %cst_49 : f32 to vector<2x32xf32>
    %170 = arith.addf %169, %168 : vector<2x32xf32>
    %171 = arith.divf %169, %170 : vector<2x32xf32>
    %172 = vector.extract_strided_slice %165 {offsets = [0, 32], sizes = [2, 32], strides = [1, 1]} : vector<2x128xf32> to vector<2x32xf32>
    %173 = arith.negf %172 : vector<2x32xf32>
    %174 = math.exp %173 : vector<2x32xf32>
    %cst_50 = arith.constant 1.000000e+00 : f32
    %175 = vector.broadcast %cst_50 : f32 to vector<2x32xf32>
    %176 = arith.addf %175, %174 : vector<2x32xf32>
    %177 = arith.divf %175, %176 : vector<2x32xf32>
    %178 = vector.extract_strided_slice %165 {offsets = [0, 64], sizes = [2, 32], strides = [1, 1]} : vector<2x128xf32> to vector<2x32xf32>
    %179 = math.tanh %178 : vector<2x32xf32>
    %180 = vector.extract_strided_slice %165 {offsets = [0, 96], sizes = [2, 32], strides = [1, 1]} : vector<2x128xf32> to vector<2x32xf32>
    %181 = arith.negf %180 : vector<2x32xf32>
    %182 = math.exp %181 : vector<2x32xf32>
    %cst_51 = arith.constant 1.000000e+00 : f32
    %183 = vector.broadcast %cst_51 : f32 to vector<2x32xf32>
    %184 = arith.addf %183, %182 : vector<2x32xf32>
    %185 = arith.divf %183, %184 : vector<2x32xf32>
    %186 = arith.mulf %177, %157 : vector<2x32xf32>
    %187 = arith.mulf %171, %179 : vector<2x32xf32>
    %188 = arith.addf %186, %187 : vector<2x32xf32>
    %189 = math.tanh %188 : vector<2x32xf32>
    %190 = arith.mulf %185, %189 : vector<2x32xf32>
    %c6_i32 = arith.constant 6 : i32
    %191 = arith.index_cast %c6_i32 : i32 to index
    %c0_52 = arith.constant 0 : index
    %c0_53 = arith.constant 0 : index
    %192 = vector.load %arg2[%191, %c0_52, %c0_53] : memref<8x2x128xf32, #tpu.memory_space<vmem>>, vector<1x2x128xf32>
    %193 = vector.shape_cast %192 : vector<1x2x128xf32> to vector<2x128xf32>
    %c0_54 = arith.constant 0 : index
    %c0_55 = arith.constant 0 : index
    %194 = vector.load %arg3[%c0_54, %c0_55] : memref<32x128xf32, #tpu.memory_space<vmem>>, vector<32x128xf32>
    %cst_56 = arith.constant dense<0.000000e+00> : vector<2x128xf32>
    %195 = tpu.matmul %190, %194, %cst_56 {dimension_numbers = #tpu.dot_dimension_numbers<[1], [0], [0], [1], [0, 0, 1, 1], [], []>} : vector<2x32xf32>, vector<32x128xf32>, vector<2x128xf32> -> vector<2x128xf32>
    %196 = arith.addf %193, %195 : vector<2x128xf32>
    %197 = vector.extract_strided_slice %196 {offsets = [0, 0], sizes = [2, 32], strides = [1, 1]} : vector<2x128xf32> to vector<2x32xf32>
    %198 = arith.negf %197 : vector<2x32xf32>
    %199 = math.exp %198 : vector<2x32xf32>
    %cst_57 = arith.constant 1.000000e+00 : f32
    %200 = vector.broadcast %cst_57 : f32 to vector<2x32xf32>
    %201 = arith.addf %200, %199 : vector<2x32xf32>
    %202 = arith.divf %200, %201 : vector<2x32xf32>
    %203 = vector.extract_strided_slice %196 {offsets = [0, 32], sizes = [2, 32], strides = [1, 1]} : vector<2x128xf32> to vector<2x32xf32>
    %204 = arith.negf %203 : vector<2x32xf32>
    %205 = math.exp %204 : vector<2x32xf32>
    %cst_58 = arith.constant 1.000000e+00 : f32
    %206 = vector.broadcast %cst_58 : f32 to vector<2x32xf32>
    %207 = arith.addf %206, %205 : vector<2x32xf32>
    %208 = arith.divf %206, %207 : vector<2x32xf32>
    %209 = vector.extract_strided_slice %196 {offsets = [0, 64], sizes = [2, 32], strides = [1, 1]} : vector<2x128xf32> to vector<2x32xf32>
    %210 = math.tanh %209 : vector<2x32xf32>
    %211 = vector.extract_strided_slice %196 {offsets = [0, 96], sizes = [2, 32], strides = [1, 1]} : vector<2x128xf32> to vector<2x32xf32>
    %212 = arith.negf %211 : vector<2x32xf32>
    %213 = math.exp %212 : vector<2x32xf32>
    %cst_59 = arith.constant 1.000000e+00 : f32
    %214 = vector.broadcast %cst_59 : f32 to vector<2x32xf32>
    %215 = arith.addf %214, %213 : vector<2x32xf32>
    %216 = arith.divf %214, %215 : vector<2x32xf32>
    %217 = arith.mulf %208, %188 : vector<2x32xf32>
    %218 = arith.mulf %202, %210 : vector<2x32xf32>
    %219 = arith.addf %217, %218 : vector<2x32xf32>
    %220 = math.tanh %219 : vector<2x32xf32>
    %221 = arith.mulf %216, %220 : vector<2x32xf32>
    %c7_i32 = arith.constant 7 : i32
    %222 = arith.index_cast %c7_i32 : i32 to index
    %c0_60 = arith.constant 0 : index
    %c0_61 = arith.constant 0 : index
    %223 = vector.load %arg2[%222, %c0_60, %c0_61] : memref<8x2x128xf32, #tpu.memory_space<vmem>>, vector<1x2x128xf32>
    %224 = vector.shape_cast %223 : vector<1x2x128xf32> to vector<2x128xf32>
    %c0_62 = arith.constant 0 : index
    %c0_63 = arith.constant 0 : index
    %225 = vector.load %arg3[%c0_62, %c0_63] : memref<32x128xf32, #tpu.memory_space<vmem>>, vector<32x128xf32>
    %cst_64 = arith.constant dense<0.000000e+00> : vector<2x128xf32>
    %226 = tpu.matmul %221, %225, %cst_64 {dimension_numbers = #tpu.dot_dimension_numbers<[1], [0], [0], [1], [0, 0, 1, 1], [], []>} : vector<2x32xf32>, vector<32x128xf32>, vector<2x128xf32> -> vector<2x128xf32>
    %227 = arith.addf %224, %226 : vector<2x128xf32>
    %228 = vector.extract_strided_slice %227 {offsets = [0, 0], sizes = [2, 32], strides = [1, 1]} : vector<2x128xf32> to vector<2x32xf32>
    %229 = arith.negf %228 : vector<2x32xf32>
    %230 = math.exp %229 : vector<2x32xf32>
    %cst_65 = arith.constant 1.000000e+00 : f32
    %231 = vector.broadcast %cst_65 : f32 to vector<2x32xf32>
    %232 = arith.addf %231, %230 : vector<2x32xf32>
    %233 = arith.divf %231, %232 : vector<2x32xf32>
    %234 = vector.extract_strided_slice %227 {offsets = [0, 32], sizes = [2, 32], strides = [1, 1]} : vector<2x128xf32> to vector<2x32xf32>
    %235 = arith.negf %234 : vector<2x32xf32>
    %236 = math.exp %235 : vector<2x32xf32>
    %cst_66 = arith.constant 1.000000e+00 : f32
    %237 = vector.broadcast %cst_66 : f32 to vector<2x32xf32>
    %238 = arith.addf %237, %236 : vector<2x32xf32>
    %239 = arith.divf %237, %238 : vector<2x32xf32>
    %240 = vector.extract_strided_slice %227 {offsets = [0, 64], sizes = [2, 32], strides = [1, 1]} : vector<2x128xf32> to vector<2x32xf32>
    %241 = math.tanh %240 : vector<2x32xf32>
    %242 = vector.extract_strided_slice %227 {offsets = [0, 96], sizes = [2, 32], strides = [1, 1]} : vector<2x128xf32> to vector<2x32xf32>
    %243 = arith.negf %242 : vector<2x32xf32>
    %244 = math.exp %243 : vector<2x32xf32>
    %cst_67 = arith.constant 1.000000e+00 : f32
    %245 = vector.broadcast %cst_67 : f32 to vector<2x32xf32>
    %246 = arith.addf %245, %244 : vector<2x32xf32>
    %247 = arith.divf %245, %246 : vector<2x32xf32>
    %248 = arith.mulf %239, %219 : vector<2x32xf32>
    %249 = arith.mulf %233, %241 : vector<2x32xf32>
    %250 = arith.addf %248, %249 : vector<2x32xf32>
    %251 = math.tanh %250 : vector<2x32xf32>
    %252 = arith.mulf %247, %251 : vector<2x32xf32>
    %c8_i32 = arith.constant 8 : i32
    %c0_68 = arith.constant 0 : index
    %c0_69 = arith.constant 0 : index
    %253 = vector.load %arg9[%c0_68, %c0_69] : memref<2x32xf32, #tpu.memory_space<vmem>>, vector<2x32xf32>
    tpu.vector_store %arg9[%c0_68, %c0_69], %252 {strides = array<i32>} : memref<2x32xf32, #tpu.memory_space<vmem>>, vector<2x32xf32>,
    %c0_70 = arith.constant 0 : index
    %c0_71 = arith.constant 0 : index
    %254 = vector.load %arg10[%c0_70, %c0_71] : memref<2x32xf32, #tpu.memory_space<vmem>>, vector<2x32xf32>
    tpu.vector_store %arg10[%c0_70, %c0_71], %250 {strides = array<i32>} : memref<2x32xf32, #tpu.memory_space<vmem>>, vector<2x32xf32>,
    %c0_i32_72 = arith.constant 0 : i32
    %255 = arith.cmpi eq, %arg1, %c0_i32_72 : i32
    %256 = arith.extui %255 : i1 to i32
    %c0_i32_73 = arith.constant 0 : i32
    %257 = arith.cmpi ne, %256, %c0_i32_73 : i32
    scf.if %257 {
      %c0_74 = arith.constant 0 : index
      %c0_75 = arith.constant 0 : index
      %258 = vector.load %arg4[%c0_74, %c0_75] : memref<32x256xf32, #tpu.memory_space<vmem>>, vector<32x256xf32>
      %cst_76 = arith.constant dense<0.000000e+00> : vector<2x256xf32>
      %259 = tpu.matmul %252, %258, %cst_76 {dimension_numbers = #tpu.dot_dimension_numbers<[1], [0], [0], [1], [0, 0, 1, 1], [], []>} : vector<2x32xf32>, vector<32x256xf32>, vector<2x256xf32> -> vector<2x256xf32>
      %c0_77 = arith.constant 0 : index
      %c0_78 = arith.constant 0 : index
      %260 = vector.load %arg5[%c0_77, %c0_78] : memref<1x256xf32, #tpu.memory_space<vmem>>, vector<1x256xf32>
      %261 = vector.broadcast %260 : vector<1x256xf32> to vector<2x256xf32>
      %262 = arith.addf %259, %261 : vector<2x256xf32>
      %cst_79 = arith.constant 0.000000e+00 : f32
      %263 = vector.broadcast %cst_79 : f32 to vector<2x256xf32>
      %264 = arith.maximumf %262, %263 : vector<2x256xf32>
      %c0_80 = arith.constant 0 : index
      %c0_81 = arith.constant 0 : index
      %265 = vector.load %arg6[%c0_80, %c0_81] : memref<256x128xf32, #tpu.memory_space<vmem>>, vector<256x128xf32>
      %cst_82 = arith.constant dense<0.000000e+00> : vector<2x128xf32>
      %266 = tpu.matmul %264, %265, %cst_82 {dimension_numbers = #tpu.dot_dimension_numbers<[1], [0], [0], [1], [0, 0, 1, 1], [], []>} : vector<2x256xf32>, vector<256x128xf32>, vector<2x128xf32> -> vector<2x128xf32>
      %c0_83 = arith.constant 0 : index
      %c0_84 = arith.constant 0 : index
      %267 = vector.load %arg7[%c0_83, %c0_84] : memref<1x128xf32, #tpu.memory_space<vmem>>, vector<1x128xf32>
      %268 = vector.broadcast %267 : vector<1x128xf32> to vector<2x128xf32>
      %269 = arith.addf %266, %268 : vector<2x128xf32>
      %c0_85 = arith.constant 0 : index
      %c0_86 = arith.constant 0 : index
      %270 = vector.load %arg8[%c0_85, %c0_86] : memref<2x128xf32, #tpu.memory_space<vmem>>, vector<2x128xf32>
      tpu.vector_store %arg8[%c0_85, %c0_86], %269 {strides = array<i32>} : memref<2x128xf32, #tpu.memory_space<vmem>>, vector<2x128xf32>,
    } else {
    }
    return
  }
  func.func @transform_0(%arg0: i32, %arg1: i32) -> (i32, i32, i32) {
    %c0_i32 = arith.constant 0 : i32
    %c0_i32_0 = arith.constant 0 : i32
    return %arg1, %arg0, %c0_i32 : i32, i32, i32
  }
  func.func @transform_1(%arg0: i32, %arg1: i32) -> (i32, i32) {
    %c0_i32 = arith.constant 0 : i32
    %c0_i32_0 = arith.constant 0 : i32
    %c0_i32_1 = arith.constant 0 : i32
    return %c0_i32, %c0_i32_0 : i32, i32
  }
  func.func @transform_2(%arg0: i32, %arg1: i32) -> (i32, i32) {
    %c0_i32 = arith.constant 0 : i32
    %c0_i32_0 = arith.constant 0 : i32
    %c0_i32_1 = arith.constant 0 : i32
    return %c0_i32, %c0_i32_0 : i32, i32
  }
  func.func @transform_3(%arg0: i32, %arg1: i32) -> (i32, i32) {
    %c0_i32 = arith.constant 0 : i32
    %c0_i32_0 = arith.constant 0 : i32
    %c0_i32_1 = arith.constant 0 : i32
    return %c0_i32, %c0_i32_0 : i32, i32
  }
  func.func @transform_4(%arg0: i32, %arg1: i32) -> (i32, i32) {
    %c0_i32 = arith.constant 0 : i32
    %c0_i32_0 = arith.constant 0 : i32
    %c0_i32_1 = arith.constant 0 : i32
    return %c0_i32, %c0_i32_0 : i32, i32
  }
  func.func @transform_5(%arg0: i32, %arg1: i32) -> (i32, i32) {
    %c0_i32 = arith.constant 0 : i32
    %c0_i32_0 = arith.constant 0 : i32
    %c0_i32_1 = arith.constant 0 : i32
    return %c0_i32, %c0_i32_0 : i32, i32
  }
  func.func @transform_6(%arg0: i32, %arg1: i32) -> (i32, i32) {
    %c0_i32 = arith.constant 0 : i32
    %c0_i32_0 = arith.constant 0 : i32
    return %arg0, %c0_i32 : i32, i32
  }
}

</mosaic_0001>

<llo_original>
// kernel: lstm_nn_vision_forward.3
$region0: #{lstm_nn_vision_forward.3}
  #allocation0 [shape = 'u32[]', space=smem, size = 0x4, offset = 0x4, fixed_abs, tag = 'smem constant byte address 0x4 - core index']
  #allocation1 [shape = 'u32[144,128]{1,0:T(1,128)}', space=vmem, size = 0x12000, scoped, tag = 'internal scratch']
  #allocation2 [shape = 'f32[2,32]{1,0:T(2,128)}', space=vmem, size = 0x400, scoped, tag = 'scratch operand']
  #allocation3 [shape = 'f32[2,32]{1,0:T(2,128)}', space=vmem, size = 0x400, scoped, tag = 'scratch operand']
  %s0 = inlined_call_operand.vmem [shape: f32[8,2,128], index: 0, kind: input, shape index: {}]
  %s1 = inlined_call_operand.vmem [shape: f32[32,128], index: 1, kind: input, shape index: {}]
  %s2 = inlined_call_operand.vmem [shape: f32[32,256], index: 2, kind: input, shape index: {}]
  %s3 = inlined_call_operand.vmem [shape: f32[1,256], index: 3, kind: input, shape index: {}]
  %s4 = inlined_call_operand.vmem [shape: f32[256,128], index: 4, kind: input, shape index: {}]
  %s5 = inlined_call_operand.vmem [shape: f32[1,128], index: 5, kind: input, shape index: {}]
  %s6 = inlined_call_operand.hbm [shape: f32[2,128], index: 6, kind: output, shape index: {}]
  %s7 = sld [smem:[#allocation0]]
  $region42: #{lstm_nn_vision_forward.3} parent=0
    _
  %s9 = ssub.s32 1, %s7
  %s10 = scalar_select 0, %s9, %s7
  $region1: #{lstm_nn_vision_forward.3} parent=0
    #allocation4 [shape = 'u8[1024]{0}', space=vmem, size = 0x400, scoped, tag = 'output window, operand 0, single buffered']
    #allocation5 [shape = 's32[1]{0}', space=sflag, size = 0x4, scoped, tag = 'scoped memory for lstm_nn_vision_forward.3']
    %11 = vsyncpa [#allocation5], 0
    // Predicated region
    $region2: #{lstm_nn_vision_forward.3} parent=1 // pred_check
      _
    $region3: #{lstm_nn_vision_forward.3} parent=1 // pred_check_branch
      %13 = sbr.rel (0) target = $region5
    $region4: #{lstm_nn_vision_forward.3} parent=1 // pred_region
      _
    $region5: #{lstm_nn_vision_forward.3} parent=1 // pred_fallthru
      _
    // Predicated region
    $region6: #{lstm_nn_vision_forward.3} parent=1 // pred_check
      _
    $region7: #{lstm_nn_vision_forward.3} parent=1 // pred_check_branch
      %15 = sbr.rel (0) target = $region9
    $region8: #{lstm_nn_vision_forward.3} parent=1 // pred_region
      _
    $region9: #{lstm_nn_vision_forward.3} parent=1 // pred_fallthru
      _
    // Predicated region
    $region10: #{lstm_nn_vision_forward.3} parent=1 // pred_check
      _
    $region11: #{lstm_nn_vision_forward.3} parent=1 // pred_check_branch
      %17 = sbr.rel (0) target = $region13
    $region12: #{lstm_nn_vision_forward.3} parent=1 // pred_region
      _
    $region13: #{lstm_nn_vision_forward.3} parent=1 // pred_fallthru
      _
    // Predicated region
    $region14: #{lstm_nn_vision_forward.3} parent=1 // pred_check
      _
    $region15: #{lstm_nn_vision_forward.3} parent=1 // pred_check_branch
      %19 = sbr.rel (0) target = $region17
    $region16: #{lstm_nn_vision_forward.3} parent=1 // pred_region
      _
    $region17: #{lstm_nn_vision_forward.3} parent=1 // pred_fallthru
      _
    // Predicated region
    $region18: #{lstm_nn_vision_forward.3} parent=1 // pred_check
      _
    $region19: #{lstm_nn_vision_forward.3} parent=1 // pred_check_branch
      %21 = sbr.rel (0) target = $region21
    $region20: #{lstm_nn_vision_forward.3} parent=1 // pred_region
      _
    $region21: #{lstm_nn_vision_forward.3} parent=1 // pred_fallthru
      _
    // Predicated region
    $region22: #{lstm_nn_vision_forward.3} parent=1 // pred_check
      _
    $region23: #{lstm_nn_vision_forward.3} parent=1 // pred_check_branch
      %23 = sbr.rel (0) target = $region25
    $region24: #{lstm_nn_vision_forward.3} parent=1 // pred_region
      _
    $region25: #{lstm_nn_vision_forward.3} parent=1 // pred_fallthru
      _
    %p24 = scmp.eq.s32.totalorder 0, 0
    // Predicated region
    $region26: #{lstm_nn_vision_forward.3} parent=1 // pred_check
      %p25 = pneg %p24
    $region27: #{lstm_nn_vision_forward.3} parent=1 // pred_check_branch
      %27 = sbr.rel (%p25) target = $region29
    $region28: #{lstm_nn_vision_forward.3} parent=1 // pred_region
      %vm28 = vcmask 254976
      %29 = vst.msk [vmem:[#allocation2] sm:$0x3] %vm28, 0.0
      %30 = vst.msk [vmem:[#allocation3] sm:$0x3] %vm28, 0.0
    $region29: #{lstm_nn_vision_forward.3} parent=1 // pred_fallthru
      _
    %v31 = vld [vmem:[#allocation2] sm:$0x3]
    %v32 = vld [vmem:[#allocation3] sm:$0x3]
    %v33 = vld [vmem:[%s0] sm:$0x3]
    %v34 = vld [vmem:[%s1] sm:$0xff]
    %v35 = vld [vmem:[%s1 + $0x8] sm:$0xff]
    %v36 = vld [vmem:[%s1 + $0x10] sm:$0xff]
    %v37 = vld [vmem:[%s1 + $0x18] sm:$0xff]
    %vm38 = vcmask 261120
    %v40 = vsel %vm38, %v31, 0
    %42 = vmatprep.subr.mxu0 0.0
    %43 = vmatpush1.msra.mxu0 %v34
    %44 = vmatprep.subr.mxu0 0.0
    %45 = vmatpush1.msra.mxu0 %v35
    %46 = vmatprep.subr.mxu0 0.0
    %47 = vmatpush1.msra.mxu0 %v36
    %48 = vmatprep.subr.mxu0 0.0
    %49 = vmatpush1.msra.mxu0 %v37
    %50 = vmatprep.subr.mxu0 0.0
    %51 = vmatpush1.msra.mxu0 0.0
    %52 = vmatprep.subr.mxu0 0.0
    %53 = vmatpush1.msra.mxu0 0.0
    %54 = vmatprep.subr.mxu0 0.0
    %55 = vmatpush1.msra.mxu0 0.0
    %56 = vmatprep.subr.mxu0 0.0
    %57 = vmatpush1.msra.mxu0 0.0
    %58 = vmatprep.subr.mxu0 0.0
    %59 = vmatpush1.msra.mxu0 0.0
    %60 = vmatprep.subr.mxu0 0.0
    %61 = vmatpush1.msra.mxu0 0.0
    %62 = vmatprep.subr.mxu0 0.0
    %63 = vmatpush1.msra.mxu0 0.0
    %64 = vmatprep.subr.mxu0 0.0
    %65 = vmatpush1.msra.mxu0 0.0
    %66 = vmatprep.subr.mxu0 0.0
    %67 = vmatpush1.msra.mxu0 0.0
    %68 = vmatprep.subr.mxu0 0.0
    %69 = vmatpush1.msra.mxu0 0.0
    %70 = vmatprep.subr.mxu0 0.0
    %71 = vmatpush1.msra.mxu0 0.0
    %72 = vmatprep.subr.mxu0 0.0
    %73 = vmatpush1.msra.mxu0 0.0
    %74 = vmatprep.subr.mxu0 0.0
    %75 = vmatpush1.msra.mxu0 0.0
    %76 = vmatprep.subr.mxu0 0.0
    %77 = vmatpush1.msra.mxu0 0.0
    %78 = vmatprep.subr.mxu0 0.0
    %79 = vmatpush1.msra.mxu0 0.0
    %80 = vmatprep.subr.mxu0 0.0
    %81 = vmatpush1.msra.mxu0 0.0
    %82 = vmatprep.subr.mxu0 0.0
    %83 = vmatpush1.msra.mxu0 0.0
    %84 = vmatprep.subr.mxu0 0.0
    %85 = vmatpush1.msra.mxu0 0.0
    %86 = vmatprep.subr.mxu0 0.0
    %87 = vmatpush1.msra.mxu0 0.0
    %88 = vmatprep.subr.mxu0 0.0
    %89 = vmatpush1.msra.mxu0 0.0
    %90 = vmatprep.subr.mxu0 0.0
    %91 = vmatpush1.msra.mxu0 0.0
    %92 = vmatprep.subr.mxu0 0.0
    %93 = vmatpush1.msra.mxu0 0.0
    %94 = vmatprep.subr.mxu0 0.0
    %95 = vmatpush1.msra.mxu0 0.0
    %96 = vmatprep.subr.mxu0 0.0
    %97 = vmatpush1.msra.mxu0 0.0
    %98 = vmatprep.subr.mxu0 0.0
    %99 = vmatpush1.msra.mxu0 0.0
    %100 = vmatprep.subr.mxu0 0.0
    %101 = vmatpush1.msra.mxu0 0.0
    %102 = vmatprep.subr.mxu0 0.0
    %103 = vmatpush1.msra.mxu0 0.0
    %104 = vmatprep.subr.mxu0 0.0
    %105 = vmatpush1.msra.mxu0 0.0
    %106 = vmatprep.mubr.f32.mxu0 0.0
    %107 = vmatmul.mubr.f32.gmra.mrb[0].mxu0 %v40
    %v108 = vpop.f32.mrb[0].mxu0
    %v109 = vadd.f32 0.0, %v108
    %v110 = vpop.f32.mrb[0].mxu0
    %111 = vdwg.mxu0
    %v112 = vadd.f32 %v33, %v109
    %v113 = vxor.u32 %v112, 2147483648
    %v114 = vmul.f32 %v113, 1.442695
    %v115 = vpow.pop %v114
    %v116 = vadd.f32 %v115, 1.0
    %v117 = vrcp.pop %v116
    %v118 = vmul.f32 1.0, %v117
    %v119 = vtanh.pop %v112
    %121 = vrot.lane.b32.xlu0 %v32, 32
    %v122 = vpop.permute.xlu0 %121
    %v124 = vmul.f32 %v118, %v122
    %126 = vrot.lane.b32.xlu0 %v119, 64
    %v127 = vpop.permute.xlu0 %126
    %v129 = vmul.f32 %v118, %v127
    %131 = vrot.lane.b32.xlu0 %v129, 32
    %v132 = vpop.permute.xlu0 %131
    %v134 = vadd.f32 %v124, %v132
    %v135 = vtanh.pop %v134
    %137 = vrot.lane.b32.xlu0 %v135, 64
    %v138 = vpop.permute.xlu0 %137
    %v140 = vmul.f32 %v118, %v138
    %s141 = scalar_lea.vmem %s0, 2
    %v142 = vld [vmem:[%s141] sm:$0x3]
    %144 = vrot.lane.b32.xlu0 %v140, 32
    %v145 = vpop.permute.xlu0 %144
    %v146 = vsel %vm38, %v145, 0
    %148 = vmatprep.subr.mxu0 0.0
    %149 = vmatpush1.msra.mxu0 %v34
    %150 = vmatprep.subr.mxu0 0.0
    %151 = vmatpush1.msra.mxu0 %v35
    %152 = vmatprep.subr.mxu0 0.0
    %153 = vmatpush1.msra.mxu0 %v36
    %154 = vmatprep.subr.mxu0 0.0
    %155 = vmatpush1.msra.mxu0 %v37
    %156 = vmatprep.subr.mxu0 0.0
    %157 = vmatpush1.msra.mxu0 0.0
    %158 = vmatprep.subr.mxu0 0.0
    %159 = vmatpush1.msra.mxu0 0.0
    %160 = vmatprep.subr.mxu0 0.0
    %161 = vmatpush1.msra.mxu0 0.0
    %162 = vmatprep.subr.mxu0 0.0
    %163 = vmatpush1.msra.mxu0 0.0
    %164 = vmatprep.subr.mxu0 0.0
    %165 = vmatpush1.msra.mxu0 0.0
    %166 = vmatprep.subr.mxu0 0.0
    %167 = vmatpush1.msra.mxu0 0.0
    %168 = vmatprep.subr.mxu0 0.0
    %169 = vmatpush1.msra.mxu0 0.0
    %170 = vmatprep.subr.mxu0 0.0
    %171 = vmatpush1.msra.mxu0 0.0
    %172 = vmatprep.subr.mxu0 0.0
    %173 = vmatpush1.msra.mxu0 0.0
    %174 = vmatprep.subr.mxu0 0.0
    %175 = vmatpush1.msra.mxu0 0.0
    %176 = vmatprep.subr.mxu0 0.0
    %177 = vmatpush1.msra.mxu0 0.0
    %178 = vmatprep.subr.mxu0 0.0
    %179 = vmatpush1.msra.mxu0 0.0
    %180 = vmatprep.subr.mxu0 0.0
    %181 = vmatpush1.msra.mxu0 0.0
    %182 = vmatprep.subr.mxu0 0.0
    %183 = vmatpush1.msra.mxu0 0.0
    %184 = vmatprep.subr.mxu0 0.0
    %185 = vmatpush1.msra.mxu0 0.0
    %186 = vmatprep.subr.mxu0 0.0
    %187 = vmatpush1.msra.mxu0 0.0
    %188 = vmatprep.subr.mxu0 0.0
    %189 = vmatpush1.msra.mxu0 0.0
    %190 = vmatprep.subr.mxu0 0.0
    %191 = vmatpush1.msra.mxu0 0.0
    %192 = vmatprep.subr.mxu0 0.0
    %193 = vmatpush1.msra.mxu0 0.0
    %194 = vmatprep.subr.mxu0 0.0
    %195 = vmatpush1.msra.mxu0 0.0
    %196 = vmatprep.subr.mxu0 0.0
    %197 = vmatpush1.msra.mxu0 0.0
    %198 = vmatprep.subr.mxu0 0.0
    %199 = vmatpush1.msra.mxu0 0.0
    %200 = vmatprep.subr.mxu0 0.0
    %201 = vmatpush1.msra.mxu0 0.0
    %202 = vmatprep.subr.mxu0 0.0
    %203 = vmatpush1.msra.mxu0 0.0
    %204 = vmatprep.subr.mxu0 0.0
    %205 = vmatpush1.msra.mxu0 0.0
    %206 = vmatprep.subr.mxu0 0.0
    %207 = vmatpush1.msra.mxu0 0.0
    %208 = vmatprep.subr.mxu0 0.0
    %209 = vmatpush1.msra.mxu0 0.0
    %210 = vmatprep.subr.mxu0 0.0
    %211 = vmatpush1.msra.mxu0 0.0
    %212 = vmatprep.mubr.f32.mxu0 0.0
    %213 = vmatmul.mubr.f32.gmra.mrb[0].mxu0 %v146
    %v214 = vpop.f32.mrb[0].mxu0
    %v215 = vadd.f32 0.0, %v214
    %v216 = vpop.f32.mrb[0].mxu0
    %217 = vdwg.mxu0
    %v218 = vadd.f32 %v142, %v215
    %v219 = vxor.u32 %v218, 2147483648
    %v220 = vmul.f32 %v219, 1.442695
    %v221 = vpow.pop %v220
    %v222 = vadd.f32 %v221, 1.0
    %v223 = vrcp.pop %v222
    %v224 = vmul.f32 1.0, %v223
    %v225 = vtanh.pop %v218
    %v226 = vmul.f32 %v224, %v134
    %228 = vrot.lane.b32.xlu0 %v225, 64
    %v229 = vpop.permute.xlu0 %228
    %v231 = vmul.f32 %v224, %v229
    %233 = vrot.lane.b32.xlu0 %v231, 32
    %v234 = vpop.permute.xlu0 %233
    %v236 = vadd.f32 %v226, %v234
    %v237 = vtanh.pop %v236
    %239 = vrot.lane.b32.xlu0 %v237, 64
    %v240 = vpop.permute.xlu0 %239
    %v242 = vmul.f32 %v224, %v240
    %s243 = scalar_lea.vmem %s0, 4
    %v244 = vld [vmem:[%s243] sm:$0x3]
    %246 = vrot.lane.b32.xlu0 %v242, 32
    %v247 = vpop.permute.xlu0 %246
    %v248 = vsel %vm38, %v247, 0
    %250 = vmatprep.subr.mxu0 0.0
    %251 = vmatpush1.msra.mxu0 %v34
    %252 = vmatprep.subr.mxu0 0.0
    %253 = vmatpush1.msra.mxu0 %v35
    %254 = vmatprep.subr.mxu0 0.0
    %255 = vmatpush1.msra.mxu0 %v36
    %256 = vmatprep.subr.mxu0 0.0
    %257 = vmatpush1.msra.mxu0 %v37
    %258 = vmatprep.subr.mxu0 0.0
    %259 = vmatpush1.msra.mxu0 0.0
    %260 = vmatprep.subr.mxu0 0.0
    %261 = vmatpush1.msra.mxu0 0.0
    %262 = vmatprep.subr.mxu0 0.0
    %263 = vmatpush1.msra.mxu0 0.0
    %264 = vmatprep.subr.mxu0 0.0
    %265 = vmatpush1.msra.mxu0 0.0
    %266 = vmatprep.subr.mxu0 0.0
    %267 = vmatpush1.msra.mxu0 0.0
    %268 = vmatprep.subr.mxu0 0.0
    %269 = vmatpush1.msra.mxu0 0.0
    %270 = vmatprep.subr.mxu0 0.0
    %271 = vmatpush1.msra.mxu0 0.0
    %272 = vmatprep.subr.mxu0 0.0
    %273 = vmatpush1.msra.mxu0 0.0
    %274 = vmatprep.subr.mxu0 0.0
    %275 = vmatpush1.msra.mxu0 0.0
    %276 = vmatprep.subr.mxu0 0.0
    %277 = vmatpush1.msra.mxu0 0.0
    %278 = vmatprep.subr.mxu0 0.0
    %279 = vmatpush1.msra.mxu0 0.0
    %280 = vmatprep.subr.mxu0 0.0
    %281 = vmatpush1.msra.mxu0 0.0
    %282 = vmatprep.subr.mxu0 0.0
    %283 = vmatpush1.msra.mxu0 0.0
    %284 = vmatprep.subr.mxu0 0.0
    %285 = vmatpush1.msra.mxu0 0.0
    %286 = vmatprep.subr.mxu0 0.0
    %287 = vmatpush1.msra.mxu0 0.0
    %288 = vmatprep.subr.mxu0 0.0
    %289 = vmatpush1.msra.mxu0 0.0
    %290 = vmatprep.subr.mxu0 0.0
    %291 = vmatpush1.msra.mxu0 0.0
    %292 = vmatprep.subr.mxu0 0.0
    %293 = vmatpush1.msra.mxu0 0.0
    %294 = vmatprep.subr.mxu0 0.0
    %295 = vmatpush1.msra.mxu0 0.0
    %296 = vmatprep.subr.mxu0 0.0
    %297 = vmatpush1.msra.mxu0 0.0
    %298 = vmatprep.subr.mxu0 0.0
    %299 = vmatpush1.msra.mxu0 0.0
    %300 = vmatprep.subr.mxu0 0.0
    %301 = vmatpush1.msra.mxu0 0.0
    %302 = vmatprep.subr.mxu0 0.0
    %303 = vmatpush1.msra.mxu0 0.0
    %304 = vmatprep.subr.mxu0 0.0
    %305 = vmatpush1.msra.mxu0 0.0
    %306 = vmatprep.subr.mxu0 0.0
    %307 = vmatpush1.msra.mxu0 0.0
    %308 = vmatprep.subr.mxu0 0.0
    %309 = vmatpush1.msra.mxu0 0.0
    %310 = vmatprep.subr.mxu0 0.0
    %311 = vmatpush1.msra.mxu0 0.0
    %312 = vmatprep.subr.mxu0 0.0
    %313 = vmatpush1.msra.mxu0 0.0
    %314 = vmatprep.mubr.f32.mxu0 0.0
    %315 = vmatmul.mubr.f32.gmra.mrb[0].mxu0 %v248
    %v316 = vpop.f32.mrb[0].mxu0
    %v317 = vadd.f32 0.0, %v316
    %v318 = vpop.f32.mrb[0].mxu0
    %319 = vdwg.mxu0
    %v320 = vadd.f32 %v244, %v317
    %v321 = vxor.u32 %v320, 2147483648
    %v322 = vmul.f32 %v321, 1.442695
    %v323 = vpow.pop %v322
    %v324 = vadd.f32 %v323, 1.0
    %v325 = vrcp.pop %v324
    %v326 = vmul.f32 1.0, %v325
    %v327 = vtanh.pop %v320
    %v328 = vmul.f32 %v326, %v236
    %330 = vrot.lane.b32.xlu0 %v327, 64
    %v331 = vpop.permute.xlu0 %330
    %v333 = vmul.f32 %v326, %v331
    %335 = vrot.lane.b32.xlu0 %v333, 32
    %v336 = vpop.permute.xlu0 %335
    %v338 = vadd.f32 %v328, %v336
    %v339 = vtanh.pop %v338
    %341 = vrot.lane.b32.xlu0 %v339, 64
    %v342 = vpop.permute.xlu0 %341
    %v344 = vmul.f32 %v326, %v342
    %s345 = scalar_lea.vmem %s0, 6
    %v346 = vld [vmem:[%s345] sm:$0x3]
    %348 = vrot.lane.b32.xlu0 %v344, 32
    %v349 = vpop.permute.xlu0 %348
    %v350 = vsel %vm38, %v349, 0
    %352 = vmatprep.subr.mxu0 0.0
    %353 = vmatpush1.msra.mxu0 %v34
    %354 = vmatprep.subr.mxu0 0.0
    %355 = vmatpush1.msra.mxu0 %v35
    %356 = vmatprep.subr.mxu0 0.0
    %357 = vmatpush1.msra.mxu0 %v36
    %358 = vmatprep.subr.mxu0 0.0
    %359 = vmatpush1.msra.mxu0 %v37
    %360 = vmatprep.subr.mxu0 0.0
    %361 = vmatpush1.msra.mxu0 0.0
    %362 = vmatprep.subr.mxu0 0.0
    %363 = vmatpush1.msra.mxu0 0.0
    %364 = vmatprep.subr.mxu0 0.0
    %365 = vmatpush1.msra.mxu0 0.0
    %366 = vmatprep.subr.mxu0 0.0
    %367 = vmatpush1.msra.mxu0 0.0
    %368 = vmatprep.subr.mxu0 0.0
    %369 = vmatpush1.msra.mxu0 0.0
    %370 = vmatprep.subr.mxu0 0.0
    %371 = vmatpush1.msra.mxu0 0.0
    %372 = vmatprep.subr.mxu0 0.0
    %373 = vmatpush1.msra.mxu0 0.0
    %374 = vmatprep.subr.mxu0 0.0
    %375 = vmatpush1.msra.mxu0 0.0
    %376 = vmatprep.subr.mxu0 0.0
    %377 = vmatpush1.msra.mxu0 0.0
    %378 = vmatprep.subr.mxu0 0.0
    %379 = vmatpush1.msra.mxu0 0.0
    %380 = vmatprep.subr.mxu0 0.0
    %381 = vmatpush1.msra.mxu0 0.0
    %382 = vmatprep.subr.mxu0 0.0
    %383 = vmatpush1.msra.mxu0 0.0
    %384 = vmatprep.subr.mxu0 0.0
    %385 = vmatpush1.msra.mxu0 0.0
    %386 = vmatprep.subr.mxu0 0.0
    %387 = vmatpush1.msra.mxu0 0.0
    %388 = vmatprep.subr.mxu0 0.0
    %389 = vmatpush1.msra.mxu0 0.0
    %390 = vmatprep.subr.mxu0 0.0
    %391 = vmatpush1.msra.mxu0 0.0
    %392 = vmatprep.subr.mxu0 0.0
    %393 = vmatpush1.msra.mxu0 0.0
    %394 = vmatprep.subr.mxu0 0.0
    %395 = vmatpush1.msra.mxu0 0.0
    %396 = vmatprep.subr.mxu0 0.0
    %397 = vmatpush1.msra.mxu0 0.0
    %398 = vmatprep.subr.mxu0 0.0
    %399 = vmatpush1.msra.mxu0 0.0
    %400 = vmatprep.subr.mxu0 0.0
    %401 = vmatpush1.msra.mxu0 0.0
    %402 = vmatprep.subr.mxu0 0.0
    %403 = vmatpush1.msra.mxu0 0.0
    %404 = vmatprep.subr.mxu0 0.0
    %405 = vmatpush1.msra.mxu0 0.0
    %406 = vmatprep.subr.mxu0 0.0
    %407 = vmatpush1.msra.mxu0 0.0
    %408 = vmatprep.subr.mxu0 0.0
    %409 = vmatpush1.msra.mxu0 0.0
    %410 = vmatprep.subr.mxu0 0.0
    %411 = vmatpush1.msra.mxu0 0.0
    %412 = vmatprep.subr.mxu0 0.0
    %413 = vmatpush1.msra.mxu0 0.0
    %414 = vmatprep.subr.mxu0 0.0
    %415 = vmatpush1.msra.mxu0 0.0
    %416 = vmatprep.mubr.f32.mxu0 0.0
    %417 = vmatmul.mubr.f32.gmra.mrb[0].mxu0 %v350
    %v418 = vpop.f32.mrb[0].mxu0
    %v419 = vadd.f32 0.0, %v418
    %v420 = vpop.f32.mrb[0].mxu0
    %421 = vdwg.mxu0
    %v422 = vadd.f32 %v346, %v419
    %v423 = vxor.u32 %v422, 2147483648
    %v424 = vmul.f32 %v423, 1.442695
    %v425 = vpow.pop %v424
    %v426 = vadd.f32 %v425, 1.0
    %v427 = vrcp.pop %v426
    %v428 = vmul.f32 1.0, %v427
    %v429 = vtanh.pop %v422
    %v430 = vmul.f32 %v428, %v338
    %432 = vrot.lane.b32.xlu0 %v429, 64
    %v433 = vpop.permute.xlu0 %432
    %v435 = vmul.f32 %v428, %v433
    %437 = vrot.lane.b32.xlu0 %v435, 32
    %v438 = vpop.permute.xlu0 %437
    %v440 = vadd.f32 %v430, %v438
    %v441 = vtanh.pop %v440
    %443 = vrot.lane.b32.xlu0 %v441, 64
    %v444 = vpop.permute.xlu0 %443
    %v446 = vmul.f32 %v428, %v444
    %s447 = scalar_lea.vmem %s0, 8
    %v448 = vld [vmem:[%s447] sm:$0x3]
    %450 = vrot.lane.b32.xlu0 %v446, 32
    %v451 = vpop.permute.xlu0 %450
    %v452 = vsel %vm38, %v451, 0
    %454 = vmatprep.subr.mxu0 0.0
    %455 = vmatpush1.msra.mxu0 %v34
    %456 = vmatprep.subr.mxu0 0.0
    %457 = vmatpush1.msra.mxu0 %v35
    %458 = vmatprep.subr.mxu0 0.0
    %459 = vmatpush1.msra.mxu0 %v36
    %460 = vmatprep.subr.mxu0 0.0
    %461 = vmatpush1.msra.mxu0 %v37
    %462 = vmatprep.subr.mxu0 0.0
    %463 = vmatpush1.msra.mxu0 0.0
    %464 = vmatprep.subr.mxu0 0.0
    %465 = vmatpush1.msra.mxu0 0.0
    %466 = vmatprep.subr.mxu0 0.0
    %467 = vmatpush1.msra.mxu0 0.0
    %468 = vmatprep.subr.mxu0 0.0
    %469 = vmatpush1.msra.mxu0 0.0
    %470 = vmatprep.subr.mxu0 0.0
    %471 = vmatpush1.msra.mxu0 0.0
    %472 = vmatprep.subr.mxu0 0.0
    %473 = vmatpush1.msra.mxu0 0.0
    %474 = vmatprep.subr.mxu0 0.0
    %475 = vmatpush1.msra.mxu0 0.0
    %476 = vmatprep.subr.mxu0 0.0
    %477 = vmatpush1.msra.mxu0 0.0
    %478 = vmatprep.subr.mxu0 0.0
    %479 = vmatpush1.msra.mxu0 0.0
    %480 = vmatprep.subr.mxu0 0.0
    %481 = vmatpush1.msra.mxu0 0.0
    %482 = vmatprep.subr.mxu0 0.0
    %483 = vmatpush1.msra.mxu0 0.0
    %484 = vmatprep.subr.mxu0 0.0
    %485 = vmatpush1.msra.mxu0 0.0
    %486 = vmatprep.subr.mxu0 0.0
    %487 = vmatpush1.msra.mxu0 0.0
    %488 = vmatprep.subr.mxu0 0.0
    %489 = vmatpush1.msra.mxu0 0.0
    %490 = vmatprep.subr.mxu0 0.0
    %491 = vmatpush1.msra.mxu0 0.0
    %492 = vmatprep.subr.mxu0 0.0
    %493 = vmatpush1.msra.mxu0 0.0
    %494 = vmatprep.subr.mxu0 0.0
    %495 = vmatpush1.msra.mxu0 0.0
    %496 = vmatprep.subr.mxu0 0.0
    %497 = vmatpush1.msra.mxu0 0.0
    %498 = vmatprep.subr.mxu0 0.0
    %499 = vmatpush1.msra.mxu0 0.0
    %500 = vmatprep.subr.mxu0 0.0
    %501 = vmatpush1.msra.mxu0 0.0
    %502 = vmatprep.subr.mxu0 0.0
    %503 = vmatpush1.msra.mxu0 0.0
    %504 = vmatprep.subr.mxu0 0.0
    %505 = vmatpush1.msra.mxu0 0.0
    %506 = vmatprep.subr.mxu0 0.0
    %507 = vmatpush1.msra.mxu0 0.0
    %508 = vmatprep.subr.mxu0 0.0
    %509 = vmatpush1.msra.mxu0 0.0
    %510 = vmatprep.subr.mxu0 0.0
    %511 = vmatpush1.msra.mxu0 0.0
    %512 = vmatprep.subr.mxu0 0.0
    %513 = vmatpush1.msra.mxu0 0.0
    %514 = vmatprep.subr.mxu0 0.0
    %515 = vmatpush1.msra.mxu0 0.0
    %516 = vmatprep.subr.mxu0 0.0
    %517 = vmatpush1.msra.mxu0 0.0
    %518 = vmatprep.mubr.f32.mxu0 0.0
    %519 = vmatmul.mubr.f32.gmra.mrb[0].mxu0 %v452
    %v520 = vpop.f32.mrb[0].mxu0
    %v521 = vadd.f32 0.0, %v520
    %v522 = vpop.f32.mrb[0].mxu0
    %523 = vdwg.mxu0
    %v524 = vadd.f32 %v448, %v521
    %v525 = vxor.u32 %v524, 2147483648
    %v526 = vmul.f32 %v525, 1.442695
    %v527 = vpow.pop %v526
    %v528 = vadd.f32 %v527, 1.0
    %v529 = vrcp.pop %v528
    %v530 = vmul.f32 1.0, %v529
    %v531 = vtanh.pop %v524
    %v532 = vmul.f32 %v530, %v440
    %534 = vrot.lane.b32.xlu0 %v531, 64
    %v535 = vpop.permute.xlu0 %534
    %v537 = vmul.f32 %v530, %v535
    %539 = vrot.lane.b32.xlu0 %v537, 32
    %v540 = vpop.permute.xlu0 %539
    %v542 = vadd.f32 %v532, %v540
    %v543 = vtanh.pop %v542
    %545 = vrot.lane.b32.xlu0 %v543, 64
    %v546 = vpop.permute.xlu0 %545
    %v548 = vmul.f32 %v530, %v546
    %s549 = scalar_lea.vmem %s0, 10
    %v550 = vld [vmem:[%s549] sm:$0x3]
    %552 = vrot.lane.b32.xlu0 %v548, 32
    %v553 = vpop.permute.xlu0 %552
    %v554 = vsel %vm38, %v553, 0
    %556 = vmatprep.subr.mxu0 0.0
    %557 = vmatpush1.msra.mxu0 %v34
    %558 = vmatprep.subr.mxu0 0.0
    %559 = vmatpush1.msra.mxu0 %v35
    %560 = vmatprep.subr.mxu0 0.0
    %561 = vmatpush1.msra.mxu0 %v36
    %562 = vmatprep.subr.mxu0 0.0
    %563 = vmatpush1.msra.mxu0 %v37
    %564 = vmatprep.subr.mxu0 0.0
    %565 = vmatpush1.msra.mxu0 0.0
    %566 = vmatprep.subr.mxu0 0.0
    %567 = vmatpush1.msra.mxu0 0.0
    %568 = vmatprep.subr.mxu0 0.0
    %569 = vmatpush1.msra.mxu0 0.0
    %570 = vmatprep.subr.mxu0 0.0
    %571 = vmatpush1.msra.mxu0 0.0
    %572 = vmatprep.subr.mxu0 0.0
    %573 = vmatpush1.msra.mxu0 0.0
    %574 = vmatprep.subr.mxu0 0.0
    %575 = vmatpush1.msra.mxu0 0.0
    %576 = vmatprep.subr.mxu0 0.0
    %577 = vmatpush1.msra.mxu0 0.0
    %578 = vmatprep.subr.mxu0 0.0
    %579 = vmatpush1.msra.mxu0 0.0
    %580 = vmatprep.subr.mxu0 0.0
    %581 = vmatpush1.msra.mxu0 0.0
    %582 = vmatprep.subr.mxu0 0.0
    %583 = vmatpush1.msra.mxu0 0.0
    %584 = vmatprep.subr.mxu0 0.0
    %585 = vmatpush1.msra.mxu0 0.0
    %586 = vmatprep.subr.mxu0 0.0
    %587 = vmatpush1.msra.mxu0 0.0
    %588 = vmatprep.subr.mxu0 0.0
    %589 = vmatpush1.msra.mxu0 0.0
    %590 = vmatprep.subr.mxu0 0.0
    %591 = vmatpush1.msra.mxu0 0.0
    %592 = vmatprep.subr.mxu0 0.0
    %593 = vmatpush1.msra.mxu0 0.0
    %594 = vmatprep.subr.mxu0 0.0
    %595 = vmatpush1.msra.mxu0 0.0
    %596 = vmatprep.subr.mxu0 0.0
    %597 = vmatpush1.msra.mxu0 0.0
    %598 = vmatprep.subr.mxu0 0.0
    %599 = vmatpush1.msra.mxu0 0.0
    %600 = vmatprep.subr.mxu0 0.0
    %601 = vmatpush1.msra.mxu0 0.0
    %602 = vmatprep.subr.mxu0 0.0
    %603 = vmatpush1.msra.mxu0 0.0
    %604 = vmatprep.subr.mxu0 0.0
    %605 = vmatpush1.msra.mxu0 0.0
    %606 = vmatprep.subr.mxu0 0.0
    %607 = vmatpush1.msra.mxu0 0.0
    %608 = vmatprep.subr.mxu0 0.0
    %609 = vmatpush1.msra.mxu0 0.0
    %610 = vmatprep.subr.mxu0 0.0
    %611 = vmatpush1.msra.mxu0 0.0
    %612 = vmatprep.subr.mxu0 0.0
    %613 = vmatpush1.msra.mxu0 0.0
    %614 = vmatprep.subr.mxu0 0.0
    %615 = vmatpush1.msra.mxu0 0.0
    %616 = vmatprep.subr.mxu0 0.0
    %617 = vmatpush1.msra.mxu0 0.0
    %618 = vmatprep.subr.mxu0 0.0
    %619 = vmatpush1.msra.mxu0 0.0
    %620 = vmatprep.mubr.f32.mxu0 0.0
    %621 = vmatmul.mubr.f32.gmra.mrb[0].mxu0 %v554
    %v622 = vpop.f32.mrb[0].mxu0
    %v623 = vadd.f32 0.0, %v622
    %v624 = vpop.f32.mrb[0].mxu0
    %625 = vdwg.mxu0
    %v626 = vadd.f32 %v550, %v623
    %v627 = vxor.u32 %v626, 2147483648
    %v628 = vmul.f32 %v627, 1.442695
    %v629 = vpow.pop %v628
    %v630 = vadd.f32 %v629, 1.0
    %v631 = vrcp.pop %v630
    %v632 = vmul.f32 1.0, %v631
    %v633 = vtanh.pop %v626
    %v634 = vmul.f32 %v632, %v542
    %636 = vrot.lane.b32.xlu0 %v633, 64
    %v637 = vpop.permute.xlu0 %636
    %v639 = vmul.f32 %v632, %v637
    %641 = vrot.lane.b32.xlu0 %v639, 32
    %v642 = vpop.permute.xlu0 %641
    %v644 = vadd.f32 %v634, %v642
    %v645 = vtanh.pop %v644
    %647 = vrot.lane.b32.xlu0 %v645, 64
    %v648 = vpop.permute.xlu0 %647
    %v650 = vmul.f32 %v632, %v648
    %s651 = scalar_lea.vmem %s0, 12
    %v652 = vld [vmem:[%s651] sm:$0x3]
    %654 = vrot.lane.b32.xlu0 %v650, 32
    %v655 = vpop.permute.xlu0 %654
    %v656 = vsel %vm38, %v655, 0
    %658 = vmatprep.subr.mxu0 0.0
    %659 = vmatpush1.msra.mxu0 %v34
    %660 = vmatprep.subr.mxu0 0.0
    %661 = vmatpush1.msra.mxu0 %v35
    %662 = vmatprep.subr.mxu0 0.0
    %663 = vmatpush1.msra.mxu0 %v36
    %664 = vmatprep.subr.mxu0 0.0
    %665 = vmatpush1.msra.mxu0 %v37
    %666 = vmatprep.subr.mxu0 0.0
    %667 = vmatpush1.msra.mxu0 0.0
    %668 = vmatprep.subr.mxu0 0.0
    %669 = vmatpush1.msra.mxu0 0.0
    %670 = vmatprep.subr.mxu0 0.0
    %671 = vmatpush1.msra.mxu0 0.0
    %672 = vmatprep.subr.mxu0 0.0
    %673 = vmatpush1.msra.mxu0 0.0
    %674 = vmatprep.subr.mxu0 0.0
    %675 = vmatpush1.msra.mxu0 0.0
    %676 = vmatprep.subr.mxu0 0.0
    %677 = vmatpush1.msra.mxu0 0.0
    %678 = vmatprep.subr.mxu0 0.0
    %679 = vmatpush1.msra.mxu0 0.0
    %680 = vmatprep.subr.mxu0 0.0
    %681 = vmatpush1.msra.mxu0 0.0
    %682 = vmatprep.subr.mxu0 0.0
    %683 = vmatpush1.msra.mxu0 0.0
    %684 = vmatprep.subr.mxu0 0.0
    %685 = vmatpush1.msra.mxu0 0.0
    %686 = vmatprep.subr.mxu0 0.0
    %687 = vmatpush1.msra.mxu0 0.0
    %688 = vmatprep.subr.mxu0 0.0
    %689 = vmatpush1.msra.mxu0 0.0
    %690 = vmatprep.subr.mxu0 0.0
    %691 = vmatpush1.msra.mxu0 0.0
    %692 = vmatprep.subr.mxu0 0.0
    %693 = vmatpush1.msra.mxu0 0.0
    %694 = vmatprep.subr.mxu0 0.0
    %695 = vmatpush1.msra.mxu0 0.0
    %696 = vmatprep.subr.mxu0 0.0
    %697 = vmatpush1.msra.mxu0 0.0
    %698 = vmatprep.subr.mxu0 0.0
    %699 = vmatpush1.msra.mxu0 0.0
    %700 = vmatprep.subr.mxu0 0.0
    %701 = vmatpush1.msra.mxu0 0.0
    %702 = vmatprep.subr.mxu0 0.0
    %703 = vmatpush1.msra.mxu0 0.0
    %704 = vmatprep.subr.mxu0 0.0
    %705 = vmatpush1.msra.mxu0 0.0
    %706 = vmatprep.subr.mxu0 0.0
    %707 = vmatpush1.msra.mxu0 0.0
    %708 = vmatprep.subr.mxu0 0.0
    %709 = vmatpush1.msra.mxu0 0.0
    %710 = vmatprep.subr.mxu0 0.0
    %711 = vmatpush1.msra.mxu0 0.0
    %712 = vmatprep.subr.mxu0 0.0
    %713 = vmatpush1.msra.mxu0 0.0
    %714 = vmatprep.subr.mxu0 0.0
    %715 = vmatpush1.msra.mxu0 0.0
    %716 = vmatprep.subr.mxu0 0.0
    %717 = vmatpush1.msra.mxu0 0.0
    %718 = vmatprep.subr.mxu0 0.0
    %719 = vmatpush1.msra.mxu0 0.0
    %720 = vmatprep.subr.mxu0 0.0
    %721 = vmatpush1.msra.mxu0 0.0
    %722 = vmatprep.mubr.f32.mxu0 0.0
    %723 = vmatmul.mubr.f32.gmra.mrb[0].mxu0 %v656
    %v724 = vpop.f32.mrb[0].mxu0
    %v725 = vadd.f32 0.0, %v724
    %v726 = vpop.f32.mrb[0].mxu0
    %727 = vdwg.mxu0
    %v728 = vadd.f32 %v652, %v725
    %v729 = vxor.u32 %v728, 2147483648
    %v730 = vmul.f32 %v729, 1.442695
    %v731 = vpow.pop %v730
    %v732 = vadd.f32 %v731, 1.0
    %v733 = vrcp.pop %v732
    %v734 = vmul.f32 1.0, %v733
    %v735 = vtanh.pop %v728
    %v736 = vmul.f32 %v734, %v644
    %738 = vrot.lane.b32.xlu0 %v735, 64
    %v739 = vpop.permute.xlu0 %738
    %v741 = vmul.f32 %v734, %v739
    %743 = vrot.lane.b32.xlu0 %v741, 32
    %v744 = vpop.permute.xlu0 %743
    %v746 = vadd.f32 %v736, %v744
    %v747 = vtanh.pop %v746
    %749 = vrot.lane.b32.xlu0 %v747, 64
    %v750 = vpop.permute.xlu0 %749
    %v752 = vmul.f32 %v734, %v750
    %s753 = scalar_lea.vmem %s0, 14
    %v754 = vld [vmem:[%s753] sm:$0x3]
    %756 = vrot.lane.b32.xlu0 %v752, 32
    %v757 = vpop.permute.xlu0 %756
    %v758 = vsel %vm38, %v757, 0
    %760 = vmatprep.subr.mxu0 0.0
    %761 = vmatpush1.msra.mxu0 %v34
    %762 = vmatprep.subr.mxu0 0.0
    %763 = vmatpush1.msra.mxu0 %v35
    %764 = vmatprep.subr.mxu0 0.0
    %765 = vmatpush1.msra.mxu0 %v36
    %766 = vmatprep.subr.mxu0 0.0
    %767 = vmatpush1.msra.mxu0 %v37
    %768 = vmatprep.subr.mxu0 0.0
    %769 = vmatpush1.msra.mxu0 0.0
    %770 = vmatprep.subr.mxu0 0.0
    %771 = vmatpush1.msra.mxu0 0.0
    %772 = vmatprep.subr.mxu0 0.0
    %773 = vmatpush1.msra.mxu0 0.0
    %774 = vmatprep.subr.mxu0 0.0
    %775 = vmatpush1.msra.mxu0 0.0
    %776 = vmatprep.subr.mxu0 0.0
    %777 = vmatpush1.msra.mxu0 0.0
    %778 = vmatprep.subr.mxu0 0.0
    %779 = vmatpush1.msra.mxu0 0.0
    %780 = vmatprep.subr.mxu0 0.0
    %781 = vmatpush1.msra.mxu0 0.0
    %782 = vmatprep.subr.mxu0 0.0
    %783 = vmatpush1.msra.mxu0 0.0
    %784 = vmatprep.subr.mxu0 0.0
    %785 = vmatpush1.msra.mxu0 0.0
    %786 = vmatprep.subr.mxu0 0.0
    %787 = vmatpush1.msra.mxu0 0.0
    %788 = vmatprep.subr.mxu0 0.0
    %789 = vmatpush1.msra.mxu0 0.0
    %790 = vmatprep.subr.mxu0 0.0
    %791 = vmatpush1.msra.mxu0 0.0
    %792 = vmatprep.subr.mxu0 0.0
    %793 = vmatpush1.msra.mxu0 0.0
    %794 = vmatprep.subr.mxu0 0.0
    %795 = vmatpush1.msra.mxu0 0.0
    %796 = vmatprep.subr.mxu0 0.0
    %797 = vmatpush1.msra.mxu0 0.0
    %798 = vmatprep.subr.mxu0 0.0
    %799 = vmatpush1.msra.mxu0 0.0
    %800 = vmatprep.subr.mxu0 0.0
    %801 = vmatpush1.msra.mxu0 0.0
    %802 = vmatprep.subr.mxu0 0.0
    %803 = vmatpush1.msra.mxu0 0.0
    %804 = vmatprep.subr.mxu0 0.0
    %805 = vmatpush1.msra.mxu0 0.0
    %806 = vmatprep.subr.mxu0 0.0
    %807 = vmatpush1.msra.mxu0 0.0
    %808 = vmatprep.subr.mxu0 0.0
    %809 = vmatpush1.msra.mxu0 0.0
    %810 = vmatprep.subr.mxu0 0.0
    %811 = vmatpush1.msra.mxu0 0.0
    %812 = vmatprep.subr.mxu0 0.0
    %813 = vmatpush1.msra.mxu0 0.0
    %814 = vmatprep.subr.mxu0 0.0
    %815 = vmatpush1.msra.mxu0 0.0
    %816 = vmatprep.subr.mxu0 0.0
    %817 = vmatpush1.msra.mxu0 0.0
    %818 = vmatprep.subr.mxu0 0.0
    %819 = vmatpush1.msra.mxu0 0.0
    %820 = vmatprep.subr.mxu0 0.0
    %821 = vmatpush1.msra.mxu0 0.0
    %822 = vmatprep.subr.mxu0 0.0
    %823 = vmatpush1.msra.mxu0 0.0
    %824 = vmatprep.mubr.f32.mxu0 0.0
    %825 = vmatmul.mubr.f32.gmra.mrb[0].mxu0 %v758
    %v826 = vpop.f32.mrb[0].mxu0
    %v827 = vadd.f32 0.0, %v826
    %v828 = vpop.f32.mrb[0].mxu0
    %829 = vdwg.mxu0
    %v830 = vadd.f32 %v754, %v827
    %v831 = vxor.u32 %v830, 2147483648
    %v832 = vmul.f32 %v831, 1.442695
    %v833 = vpow.pop %v832
    %v834 = vadd.f32 %v833, 1.0
    %v835 = vrcp.pop %v834
    %v836 = vmul.f32 1.0, %v835
    %v837 = vtanh.pop %v830
    %v838 = vmul.f32 %v836, %v746
    %840 = vrot.lane.b32.xlu0 %v837, 64
    %v841 = vpop.permute.xlu0 %840
    %v843 = vmul.f32 %v836, %v841
    %845 = vrot.lane.b32.xlu0 %v843, 32
    %v846 = vpop.permute.xlu0 %845
    %v848 = vadd.f32 %v838, %v846
    %v849 = vtanh.pop %v848
    %851 = vrot.lane.b32.xlu0 %v849, 64
    %v852 = vpop.permute.xlu0 %851
    %v854 = vmul.f32 %v836, %v852
    %856 = vrot.lane.b32.xlu0 %v854, 32
    %v857 = vpop.permute.xlu0 %856
    %vm859 = vcmask 254976
    %860 = vst.msk [vmem:[#allocation2] sm:$0x3] %vm859, %v857
    %862 = vrot.lane.b32.xlu0 %v848, 96
    %v863 = vpop.permute.xlu0 %862
    %865 = vst.msk [vmem:[#allocation3] sm:$0x3] %vm859, %v863
    // Predicated region
    $region30: #{lstm_nn_vision_forward.3} parent=1 // pred_check
      %p866 = pneg %p24
    $region31: #{lstm_nn_vision_forward.3} parent=1 // pred_check_branch
      %868 = sbr.rel (%p866) target = $region33
    $region32: #{lstm_nn_vision_forward.3} parent=1 // pred_region
      %v869 = vld [vmem:[%s2] sm:$0xff]
      %v870 = vld [vmem:[%s2 + $0x8] sm:$0xff]
      %v871 = vld [vmem:[%s2 + $0x10] sm:$0xff]
      %v872 = vld [vmem:[%s2 + $0x18] sm:$0xff]
      %v873 = vld [vmem:[%s2 + $0x20] sm:$0xff]
      %v874 = vld [vmem:[%s2 + $0x28] sm:$0xff]
      %v875 = vld [vmem:[%s2 + $0x30] sm:$0xff]
      %v876 = vld [vmem:[%s2 + $0x38] sm:$0xff]
      %v877 = vld [vmem:[%s3] sm:$0x3]
      %v879 = vlaneseq
      %v880 = vshrl.u32 %v879, 7
      %v881 = vsub.s32 0, %v880
      %v882 = vrot.slane %v877, %v881
      %v883 = vlaneseq
      %v884 = vshrl.u32 %v883, 7
      %v885 = vsub.s32 1, %v884
      %v886 = vrot.slane %v877, %v885
      %v889 = vsel %vm38, %v857, 0
      %891 = vmatprep.subr.mxu0 %v870
      %892 = vmatpush1.msra.mxu0 %v869
      %893 = vmatprep.subr.mxu0 %v872
      %894 = vmatpush1.msra.mxu0 %v871
      %895 = vmatprep.subr.mxu0 %v874
      %896 = vmatpush1.msra.mxu0 %v873
      %897 = vmatprep.subr.mxu0 %v876
      %898 = vmatpush1.msra.mxu0 %v875
      %899 = vmatprep.subr.mxu0 0.0
      %900 = vmatpush1.msra.mxu0 0.0
      %901 = vmatprep.subr.mxu0 0.0
      %902 = vmatpush1.msra.mxu0 0.0
      %903 = vmatprep.subr.mxu0 0.0
      %904 = vmatpush1.msra.mxu0 0.0
      %905 = vmatprep.subr.mxu0 0.0
      %906 = vmatpush1.msra.mxu0 0.0
      %907 = vmatprep.subr.mxu0 0.0
      %908 = vmatpush1.msra.mxu0 0.0
      %909 = vmatprep.subr.mxu0 0.0
      %910 = vmatpush1.msra.mxu0 0.0
      %911 = vmatprep.subr.mxu0 0.0
      %912 = vmatpush1.msra.mxu0 0.0
      %913 = vmatprep.subr.mxu0 0.0
      %914 = vmatpush1.msra.mxu0 0.0
      %915 = vmatprep.subr.mxu0 0.0
      %916 = vmatpush1.msra.mxu0 0.0
      %917 = vmatprep.subr.mxu0 0.0
      %918 = vmatpush1.msra.mxu0 0.0
      %919 = vmatprep.subr.mxu0 0.0
      %920 = vmatpush1.msra.mxu0 0.0
      %921 = vmatprep.subr.mxu0 0.0
      %922 = vmatpush1.msra.mxu0 0.0
      %923 = vmatprep.subr.mxu0 0.0
      %924 = vmatpush1.msra.mxu0 0.0
      %925 = vmatprep.subr.mxu0 0.0
      %926 = vmatpush1.msra.mxu0 0.0
      %927 = vmatprep.subr.mxu0 0.0
      %928 = vmatpush1.msra.mxu0 0.0
      %929 = vmatprep.subr.mxu0 0.0
      %930 = vmatpush1.msra.mxu0 0.0
      %931 = vmatprep.subr.mxu0 0.0
      %932 = vmatpush1.msra.mxu0 0.0
      %933 = vmatprep.subr.mxu0 0.0
      %934 = vmatpush1.msra.mxu0 0.0
      %935 = vmatprep.subr.mxu0 0.0
      %936 = vmatpush1.msra.mxu0 0.0
      %937 = vmatprep.subr.mxu0 0.0
      %938 = vmatpush1.msra.mxu0 0.0
      %939 = vmatprep.subr.mxu0 0.0
      %940 = vmatpush1.msra.mxu0 0.0
      %941 = vmatprep.subr.mxu0 0.0
      %942 = vmatpush1.msra.mxu0 0.0
      %943 = vmatprep.subr.mxu0 0.0
      %944 = vmatpush1.msra.mxu0 0.0
      %945 = vmatprep.subr.mxu0 0.0
      %946 = vmatpush1.msra.mxu0 0.0
      %947 = vmatprep.subr.mxu0 0.0
      %948 = vmatpush1.msra.mxu0 0.0
      %949 = vmatprep.subr.mxu0 0.0
      %950 = vmatpush1.msra.mxu0 0.0
      %951 = vmatprep.subr.mxu0 0.0
      %952 = vmatpush1.msra.mxu0 0.0
      %953 = vmatprep.subr.mxu0 0.0
      %954 = vmatpush1.msra.mxu0 0.0
      %955 = vmatprep.mubr.f32.mxu0 0.0
      %956 = vmatmul.mubr.f32.gmra.mrb[0].mxu0 %v889
      %v957 = vpop.f32.mrb[0].mxu0
      %v958 = vadd.f32 %v882, %v957
      %v959 = vpop.f32.mrb[0].mxu0
      %v960 = vadd.f32 %v886, %v959
      %961 = vdwg.mxu0
      %v962 = vmax.f32 %v958, 0.0
      %v963 = vmax.f32 %v960, 0.0
      %v964 = vld [vmem:[%s4] sm:$0xff]
      %v965 = vld [vmem:[%s4 + $0x8] sm:$0xff]
      %v966 = vld [vmem:[%s4 + $0x10] sm:$0xff]
      %v967 = vld [vmem:[%s4 + $0x18] sm:$0xff]
      %v968 = vld [vmem:[%s4 + $0x20] sm:$0xff]
      %v969 = vld [vmem:[%s4 + $0x28] sm:$0xff]
      %v970 = vld [vmem:[%s4 + $0x30] sm:$0xff]
      %v971 = vld [vmem:[%s4 + $0x38] sm:$0xff]
      %v972 = vld [vmem:[%s4 + $0x40] sm:$0xff]
      %v973 = vld [vmem:[%s4 + $0x48] sm:$0xff]
      %v974 = vld [vmem:[%s4 + $0x50] sm:$0xff]
      %v975 = vld [vmem:[%s4 + $0x58] sm:$0xff]
      %v976 = vld [vmem:[%s4 + $0x60] sm:$0xff]
      %v977 = vld [vmem:[%s4 + $0x68] sm:$0xff]
      %v978 = vld [vmem:[%s4 + $0x70] sm:$0xff]
      %v979 = vld [vmem:[%s4 + $0x78] sm:$0xff]
      %v980 = vld [vmem:[%s4 + $0x80] sm:$0xff]
      %v981 = vld [vmem:[%s4 + $0x88] sm:$0xff]
      %v982 = vld [vmem:[%s4 + $0x90] sm:$0xff]
      %v983 = vld [vmem:[%s4 + $0x98] sm:$0xff]
      %v984 = vld [vmem:[%s4 + $0xa0] sm:$0xff]
      %v985 = vld [vmem:[%s4 + $0xa8] sm:$0xff]
      %v986 = vld [vmem:[%s4 + $0xb0] sm:$0xff]
      %v987 = vld [vmem:[%s4 + $0xb8] sm:$0xff]
      %v988 = vld [vmem:[%s4 + $0xc0] sm:$0xff]
      %v989 = vld [vmem:[%s4 + $0xc8] sm:$0xff]
      %v990 = vld [vmem:[%s4 + $0xd0] sm:$0xff]
      %v991 = vld [vmem:[%s4 + $0xd8] sm:$0xff]
      %v992 = vld [vmem:[%s4 + $0xe0] sm:$0xff]
      %v993 = vld [vmem:[%s4 + $0xe8] sm:$0xff]
      %v994 = vld [vmem:[%s4 + $0xf0] sm:$0xff]
      %v995 = vld [vmem:[%s4 + $0xf8] sm:$0xff]
      %v996 = vld [vmem:[%s5] sm:$0x1]
      %v998 = vlaneseq
      %v999 = vshrl.u32 %v998, 7
      %v1000 = vsub.s32 0, %v999
      %v1001 = vrot.slane %v996, %v1000
      %1003 = vmatprep.subr.mxu0 0.0
      %1004 = vmatpush1.msra.mxu0 %v964
      %1005 = vmatprep.subr.mxu0 0.0
      %1006 = vmatpush1.msra.mxu0 %v965
      %1007 = vmatprep.subr.mxu0 0.0
      %1008 = vmatpush1.msra.mxu0 %v966
      %1009 = vmatprep.subr.mxu0 0.0
      %1010 = vmatpush1.msra.mxu0 %v967
      %1011 = vmatprep.subr.mxu0 0.0
      %1012 = vmatpush1.msra.mxu0 %v968
      %1013 = vmatprep.subr.mxu0 0.0
      %1014 = vmatpush1.msra.mxu0 %v969
      %1015 = vmatprep.subr.mxu0 0.0
      %1016 = vmatpush1.msra.mxu0 %v970
      %1017 = vmatprep.subr.mxu0 0.0
      %1018 = vmatpush1.msra.mxu0 %v971
      %1019 = vmatprep.subr.mxu0 0.0
      %1020 = vmatpush1.msra.mxu0 %v972
      %1021 = vmatprep.subr.mxu0 0.0
      %1022 = vmatpush1.msra.mxu0 %v973
      %1023 = vmatprep.subr.mxu0 0.0
      %1024 = vmatpush1.msra.mxu0 %v974
      %1025 = vmatprep.subr.mxu0 0.0
      %1026 = vmatpush1.msra.mxu0 %v975
      %1027 = vmatprep.subr.mxu0 0.0
      %1028 = vmatpush1.msra.mxu0 %v976
      %1029 = vmatprep.subr.mxu0 0.0
      %1030 = vmatpush1.msra.mxu0 %v977
      %1031 = vmatprep.subr.mxu0 0.0
      %1032 = vmatpush1.msra.mxu0 %v978
      %1033 = vmatprep.subr.mxu0 0.0
      %1034 = vmatpush1.msra.mxu0 %v979
      %1035 = vmatprep.subr.mxu0 0.0
      %1036 = vmatpush1.msra.mxu0 %v980
      %1037 = vmatprep.subr.mxu0 0.0
      %1038 = vmatpush1.msra.mxu0 %v981
      %1039 = vmatprep.subr.mxu0 0.0
      %1040 = vmatpush1.msra.mxu0 %v982
      %1041 = vmatprep.subr.mxu0 0.0
      %1042 = vmatpush1.msra.mxu0 %v983
      %1043 = vmatprep.subr.mxu0 0.0
      %1044 = vmatpush1.msra.mxu0 %v984
      %1045 = vmatprep.subr.mxu0 0.0
      %1046 = vmatpush1.msra.mxu0 %v985
      %1047 = vmatprep.subr.mxu0 0.0
      %1048 = vmatpush1.msra.mxu0 %v986
      %1049 = vmatprep.subr.mxu0 0.0
      %1050 = vmatpush1.msra.mxu0 %v987
      %1051 = vmatprep.subr.mxu0 0.0
      %1052 = vmatpush1.msra.mxu0 %v988
      %1053 = vmatprep.subr.mxu0 0.0
      %1054 = vmatpush1.msra.mxu0 %v989
      %1055 = vmatprep.subr.mxu0 0.0
      %1056 = vmatpush1.msra.mxu0 %v990
      %1057 = vmatprep.subr.mxu0 0.0
      %1058 = vmatpush1.msra.mxu0 %v991
      %1059 = vmatprep.subr.mxu0 0.0
      %1060 = vmatpush1.msra.mxu0 %v992
      %1061 = vmatprep.subr.mxu0 0.0
      %1062 = vmatpush1.msra.mxu0 %v993
      %1063 = vmatprep.subr.mxu0 0.0
      %1064 = vmatpush1.msra.mxu0 %v994
      %1065 = vmatprep.subr.mxu0 0.0
      %1066 = vmatpush1.msra.mxu0 %v995
      %1067 = vmatprep.mubr.f32.mxu0 %v963
      %1068 = vmatmul.mubr.f32.gmra.mrb[0].mxu0 %v962
      %v1069 = vpop.f32.mrb[0].mxu0
      %v1070 = vadd.f32 %v1001, %v1069
      %v1071 = vpop.f32.mrb[0].mxu0
      %1072 = vdwg.mxu0
      %1073 = vst [vmem:[#allocation4] sm:$0x3] %v1070
    $region33: #{lstm_nn_vision_forward.3} parent=1 // pred_fallthru
      _
    // Predicated region
    $region34: #{lstm_nn_vision_forward.3} parent=1 // pred_check
      _
    $region35: #{lstm_nn_vision_forward.3} parent=1 // pred_check_branch
      %1075 = sbr.rel (0) target = $region37
    $region36: #{lstm_nn_vision_forward.3} parent=1 // pred_region
      %s1077 = ssub.s32 32, 32
      %1078 = vsyncadd [#allocation5], %s1077
      %s1080 = sshll.u32 [#allocation4], 4
      %s1081 = int_to_ptr.vmem [resolvable:$true] %s1080
      %1083 = dma.vmem_to_hbm [thread:$0]  %s1081, 32, %s6, [#allocation5]
    $region37: #{lstm_nn_vision_forward.3} parent=1 // pred_fallthru
      _
    // Predicated region
    $region38: #{lstm_nn_vision_forward.3} parent=1 // pred_check
      _
    $region39: #{lstm_nn_vision_forward.3} parent=1 // pred_check_branch
      %1085 = sbr.rel (0) target = $region41
    $region40: #{lstm_nn_vision_forward.3} parent=1 // pred_region
      %1086 = dma.done [#allocation5], 32
    $region41: #{lstm_nn_vision_forward.3} parent=1 // pred_fallthru
      _
    %1087 = vsyncpa [#allocation5], 1

// kernel: lstm_nn_vision_forward.2
$region0: #{lstm_nn_vision_forward.2}
  #allocation0 [shape = 'u32[]', space=smem, size = 0x4, offset = 0x4, fixed_abs, tag = 'smem constant byte address 0x4 - core index']
  #allocation1 [shape = 'u32[144,128]{1,0:T(1,128)}', space=vmem, size = 0x12000, scoped, tag = 'internal scratch']
  %s0 = inlined_call_operand.vmem [shape: f32[2,8,1636], index: 0, kind: input, shape index: {}]
  %s1 = inlined_call_operand.hbm [shape: f32[1636,128], index: 1, kind: input, shape index: {}]
  %s2 = inlined_call_operand.vmem [shape: f32[1,128], index: 2, kind: input, shape index: {}]
  %s3 = inlined_call_operand.vmem [shape: f32[8,2,128], index: 3, kind: output, shape index: {}]
  %s4 = sld [smem:[#allocation0]]
  $region26: #{lstm_nn_vision_forward.2} parent=0
    _
  %s6 = ssub.s32 1, %s4
  %s7 = scalar_select 0, %s6, %s4
  $region1: #{lstm_nn_vision_forward.2} parent=0
    #allocation2 [shape = 'u8[839680]{0}', space=vmem, size = 0xcd000, scoped, tag = 'input window, operand 1, single buffered']
    #allocation3 [shape = 's32[1]{0}', space=sflag, size = 0x4, scoped, tag = 'scoped memory for lstm_nn_vision_forward.2']
    %8 = vsyncpa [#allocation3], 0
    // Predicated region
    $region2: #{lstm_nn_vision_forward.2} parent=1 // pred_check
      _
    $region3: #{lstm_nn_vision_forward.2} parent=1 // pred_check_branch
      %10 = sbr.rel (0) target = $region5
    $region4: #{lstm_nn_vision_forward.2} parent=1 // pred_region
      _
    $region5: #{lstm_nn_vision_forward.2} parent=1 // pred_fallthru
      _
    // Predicated region
    $region6: #{lstm_nn_vision_forward.2} parent=1 // pred_check
      _
    $region7: #{lstm_nn_vision_forward.2} parent=1 // pred_check_branch
      %12 = sbr.rel (0) target = $region9
    $region8: #{lstm_nn_vision_forward.2} parent=1 // pred_region
      %s14 = ssub.s32 26240, 26240
      %15 = vsyncadd [#allocation3], %s14
      %s16 = sshll.u32 [#allocation2], 4
      %s17 = int_to_ptr.vmem [resolvable:$true] %s16
      %22 = dma.hbm_to_vmem [thread:$0]  %s1, 26240, %s17, [#allocation3], 128, 128, 8
    $region9: #{lstm_nn_vision_forward.2} parent=1 // pred_fallthru
      _
    // Predicated region
    $region10: #{lstm_nn_vision_forward.2} parent=1 // pred_check
      _
    $region11: #{lstm_nn_vision_forward.2} parent=1 // pred_check_branch
      %24 = sbr.rel (0) target = $region13
    $region12: #{lstm_nn_vision_forward.2} parent=1 // pred_region
      _
    $region13: #{lstm_nn_vision_forward.2} parent=1 // pred_fallthru
      _
    // Predicated region
    $region14: #{lstm_nn_vision_forward.2} parent=1 // pred_check
      _
    $region15: #{lstm_nn_vision_forward.2} parent=1 // pred_check_branch
      %26 = sbr.rel (0) target = $region17
    $region16: #{lstm_nn_vision_forward.2} parent=1 // pred_region
      %27 = dma.done [#allocation3], 26240
    $region17: #{lstm_nn_vision_forward.2} parent=1 // pred_fallthru
      _
    %v28 = vld [vmem:[#allocation2] sm:$0xff]
    %v29 = vld [vmem:[#allocation2 + $0x8] sm:$0xff]
    %v30 = vld [vmem:[#allocation2 + $0x10] sm:$0xff]
    %v31 = vld [vmem:[#allocation2 + $0x18] sm:$0xff]
    %v32 = vld [vmem:[#allocation2 + $0x20] sm:$0xff]
    %v33 = vld [vmem:[#allocation2 + $0x28] sm:$0xff]
    %v34 = vld [vmem:[#allocation2 + $0x30] sm:$0xff]
    %v35 = vld [vmem:[#allocation2 + $0x38] sm:$0xff]
    %v36 = vld [vmem:[#allocation2 + $0x40] sm:$0xff]
    %v37 = vld [vmem:[#allocation2 + $0x48] sm:$0xff]
    %v38 = vld [vmem:[#allocation2 + $0x50] sm:$0xff]
    %v39 = vld [vmem:[#allocation2 + $0x58] sm:$0xff]
    %v40 = vld [vmem:[#allocation2 + $0x60] sm:$0xff]
    %v41 = vld [vmem:[#allocation2 + $0x68] sm:$0xff]
    %v42 = vld [vmem:[#allocation2 + $0x70] sm:$0xff]
    %v43 = vld [vmem:[#allocation2 + $0x78] sm:$0xff]
    %v44 = vld [vmem:[#allocation2 + $0x80] sm:$0xff]
    %v45 = vld [vmem:[#allocation2 + $0x88] sm:$0xff]
    %v46 = vld [vmem:[#allocation2 + $0x90] sm:$0xff]
    %v47 = vld [vmem:[#allocation2 + $0x98] sm:$0xff]
    %v48 = vld [vmem:[#allocation2 + $0xa0] sm:$0xff]
    %v49 = vld [vmem:[#allocation2 + $0xa8] sm:$0xff]
    %v50 = vld [vmem:[#allocation2 + $0xb0] sm:$0xff]
    %v51 = vld [vmem:[#allocation2 + $0xb8] sm:$0xff]
    %v52 = vld [vmem:[#allocation2 + $0xc0] sm:$0xff]
    %v53 = vld [vmem:[#allocation2 + $0xc8] sm:$0xff]
    %v54 = vld [vmem:[#allocation2 + $0xd0] sm:$0xff]
    %v55 = vld [vmem:[#allocation2 + $0xd8] sm:$0xff]
    %v56 = vld [vmem:[#allocation2 + $0xe0] sm:$0xff]
    %v57 = vld [vmem:[#allocation2 + $0xe8] sm:$0xff]
    %v58 = vld [vmem:[#allocation2 + $0xf0] sm:$0xff]
    %v59 = vld [vmem:[#allocation2 + $0xf8] sm:$0xff]
    %v60 = vld [vmem:[#allocation2 + $0x100] sm:$0xff]
    %v61 = vld [vmem:[#allocation2 + $0x108] sm:$0xff]
    %v62 = vld [vmem:[#allocation2 + $0x110] sm:$0xff]
    %v63 = vld [vmem:[#allocation2 + $0x118] sm:$0xff]
    %v64 = vld [vmem:[#allocation2 + $0x120] sm:$0xff]
    %v65 = vld [vmem:[#allocation2 + $0x128] sm:$0xff]
    %v66 = vld [vmem:[#allocation2 + $0x130] sm:$0xff]
    %v67 = vld [vmem:[#allocation2 + $0x138] sm:$0xff]
    %v68 = vld [vmem:[#allocation2 + $0x140] sm:$0xff]
    %v69 = vld [vmem:[#allocation2 + $0x148] sm:$0xff]
    %v70 = vld [vmem:[#allocation2 + $0x150] sm:$0xff]
    %v71 = vld [vmem:[#allocation2 + $0x158] sm:$0xff]
    %v72 = vld [vmem:[#allocation2 + $0x160] sm:$0xff]
    %v73 = vld [vmem:[#allocation2 + $0x168] sm:$0xff]
    %v74 = vld [vmem:[#allocation2 + $0x170] sm:$0xff]
    %v75 = vld [vmem:[#allocation2 + $0x178] sm:$0xff]
    %v76 = vld [vmem:[#allocation2 + $0x180] sm:$0xff]
    %v77 = vld [vmem:[#allocation2 + $0x188] sm:$0xff]
    %v78 = vld [vmem:[#allocation2 + $0x190] sm:$0xff]
    %v79 = vld [vmem:[#allocation2 + $0x198] sm:$0xff]
    %v80 = vld [vmem:[#allocation2 + $0x1a0] sm:$0xff]
    %v81 = vld [vmem:[#allocation2 + $0x1a8] sm:$0xff]
    %v82 = vld [vmem:[#allocation2 + $0x1b0] sm:$0xff]
    %v83 = vld [vmem:[#allocation2 + $0x1b8] sm:$0xff]
    %v84 = vld [vmem:[#allocation2 + $0x1c0] sm:$0xff]
    %v85 = vld [vmem:[#allocation2 + $0x1c8] sm:$0xff]
    %v86 = vld [vmem:[#allocation2 + $0x1d0] sm:$0xff]
    %v87 = vld [vmem:[#allocation2 + $0x1d8] sm:$0xff]
    %v88 = vld [vmem:[#allocation2 + $0x1e0] sm:$0xff]
    %v89 = vld [vmem:[#allocation2 + $0x1e8] sm:$0xff]
    %v90 = vld [vmem:[#allocation2 + $0x1f0] sm:$0xff]
    %v91 = vld [vmem:[#allocation2 + $0x1f8] sm:$0xff]
    %v92 = vld [vmem:[#allocation2 + $0x200] sm:$0xff]
    %v93 = vld [vmem:[#allocation2 + $0x208] sm:$0xff]
    %v94 = vld [vmem:[#allocation2 + $0x210] sm:$0xff]
    %v95 = vld [vmem:[#allocation2 + $0x218] sm:$0xff]
    %v96 = vld [vmem:[#allocation2 + $0x220] sm:$0xff]
    %v97 = vld [vmem:[#allocation2 + $0x228] sm:$0xff]
    %v98 = vld [vmem:[#allocation2 + $0x230] sm:$0xff]
    %v99 = vld [vmem:[#allocation2 + $0x238] sm:$0xff]
    %v100 = vld [vmem:[#allocation2 + $0x240] sm:$0xff]
    %v101 = vld [vmem:[#allocation2 + $0x248] sm:$0xff]
    %v102 = vld [vmem:[#allocation2 + $0x250] sm:$0xff]
    %v103 = vld [vmem:[#allocation2 + $0x258] sm:$0xff]
    %v104 = vld [vmem:[#allocation2 + $0x260] sm:$0xff]
    %v105 = vld [vmem:[#allocation2 + $0x268] sm:$0xff]
    %v106 = vld [vmem:[#allocation2 + $0x270] sm:$0xff]
    %v107 = vld [vmem:[#allocation2 + $0x278] sm:$0xff]
    %v108 = vld [vmem:[#allocation2 + $0x280] sm:$0xff]
    %v109 = vld [vmem:[#allocation2 + $0x288] sm:$0xff]
    %v110 = vld [vmem:[#allocation2 + $0x290] sm:$0xff]
    %v111 = vld [vmem:[#allocation2 + $0x298] sm:$0xff]
    %v112 = vld [vmem:[#allocation2 + $0x2a0] sm:$0xff]
    %v113 = vld [vmem:[#allocation2 + $0x2a8] sm:$0xff]
    %v114 = vld [vmem:[#allocation2 + $0x2b0] sm:$0xff]
    %v115 = vld [vmem:[#allocation2 + $0x2b8] sm:$0xff]
    %v116 = vld [vmem:[#allocation2 + $0x2c0] sm:$0xff]
    %v117 = vld [vmem:[#allocation2 + $0x2c8] sm:$0xff]
    %v118 = vld [vmem:[#allocation2 + $0x2d0] sm:$0xff]
    %v119 = vld [vmem:[#allocation2 + $0x2d8] sm:$0xff]
    %v120 = vld [vmem:[#allocation2 + $0x2e0] sm:$0xff]
    %v121 = vld [vmem:[#allocation2 + $0x2e8] sm:$0xff]
    %v122 = vld [vmem:[#allocation2 + $0x2f0] sm:$0xff]
    %v123 = vld [vmem:[#allocation2 + $0x2f8] sm:$0xff]
    %v124 = vld [vmem:[#allocation2 + $0x300] sm:$0xff]
    %v125 = vld [vmem:[#allocation2 + $0x308] sm:$0xff]
    %v126 = vld [vmem:[#allocation2 + $0x310] sm:$0xff]
    %v127 = vld [vmem:[#allocation2 + $0x318] sm:$0xff]
    %v128 = vld [vmem:[#allocation2 + $0x320] sm:$0xff]
    %v129 = vld [vmem:[#allocation2 + $0x328] sm:$0xff]
    %v130 = vld [vmem:[#allocation2 + $0x330] sm:$0xff]
    %v131 = vld [vmem:[#allocation2 + $0x338] sm:$0xff]
    %v132 = vld [vmem:[#allocation2 + $0x340] sm:$0xff]
    %v133 = vld [vmem:[#allocation2 + $0x348] sm:$0xff]
    %v134 = vld [vmem:[#allocation2 + $0x350] sm:$0xff]
    %v135 = vld [vmem:[#allocation2 + $0x358] sm:$0xff]
    %v136 = vld [vmem:[#allocation2 + $0x360] sm:$0xff]
    %v137 = vld [vmem:[#allocation2 + $0x368] sm:$0xff]
    %v138 = vld [vmem:[#allocation2 + $0x370] sm:$0xff]
    %v139 = vld [vmem:[#allocation2 + $0x378] sm:$0xff]
    %v140 = vld [vmem:[#allocation2 + $0x380] sm:$0xff]
    %v141 = vld [vmem:[#allocation2 + $0x388] sm:$0xff]
    %v142 = vld [vmem:[#allocation2 + $0x390] sm:$0xff]
    %v143 = vld [vmem:[#allocation2 + $0x398] sm:$0xff]
    %v144 = vld [vmem:[#allocation2 + $0x3a0] sm:$0xff]
    %v145 = vld [vmem:[#allocation2 + $0x3a8] sm:$0xff]
    %v146 = vld [vmem:[#allocation2 + $0x3b0] sm:$0xff]
    %v147 = vld [vmem:[#allocation2 + $0x3b8] sm:$0xff]
    %v148 = vld [vmem:[#allocation2 + $0x3c0] sm:$0xff]
    %v149 = vld [vmem:[#allocation2 + $0x3c8] sm:$0xff]
    %v150 = vld [vmem:[#allocation2 + $0x3d0] sm:$0xff]
    %v151 = vld [vmem:[#allocation2 + $0x3d8] sm:$0xff]
    %v152 = vld [vmem:[#allocation2 + $0x3e0] sm:$0xff]
    %v153 = vld [vmem:[#allocation2 + $0x3e8] sm:$0xff]
    %v154 = vld [vmem:[#allocation2 + $0x3f0] sm:$0xff]
    %v155 = vld [vmem:[#allocation2 + $0x3f8] sm:$0xff]
    %v156 = vld [vmem:[#allocation2 + $0x400] sm:$0xff]
    %v157 = vld [vmem:[#allocation2 + $0x408] sm:$0xff]
    %v158 = vld [vmem:[#allocation2 + $0x410] sm:$0xff]
    %v159 = vld [vmem:[#allocation2 + $0x418] sm:$0xff]
    %v160 = vld [vmem:[#allocation2 + $0x420] sm:$0xff]
    %v161 = vld [vmem:[#allocation2 + $0x428] sm:$0xff]
    %v162 = vld [vmem:[#allocation2 + $0x430] sm:$0xff]
    %v163 = vld [vmem:[#allocation2 + $0x438] sm:$0xff]
    %v164 = vld [vmem:[#allocation2 + $0x440] sm:$0xff]
    %v165 = vld [vmem:[#allocation2 + $0x448] sm:$0xff]
    %v166 = vld [vmem:[#allocation2 + $0x450] sm:$0xff]
    %v167 = vld [vmem:[#allocation2 + $0x458] sm:$0xff]
    %v168 = vld [vmem:[#allocation2 + $0x460] sm:$0xff]
    %v169 = vld [vmem:[#allocation2 + $0x468] sm:$0xff]
    %v170 = vld [vmem:[#allocation2 + $0x470] sm:$0xff]
    %v171 = vld [vmem:[#allocation2 + $0x478] sm:$0xff]
    %v172 = vld [vmem:[#allocation2 + $0x480] sm:$0xff]
    %v173 = vld [vmem:[#allocation2 + $0x488] sm:$0xff]
    %v174 = vld [vmem:[#allocation2 + $0x490] sm:$0xff]
    %v175 = vld [vmem:[#allocation2 + $0x498] sm:$0xff]
    %v176 = vld [vmem:[#allocation2 + $0x4a0] sm:$0xff]
    %v177 = vld [vmem:[#allocation2 + $0x4a8] sm:$0xff]
    %v178 = vld [vmem:[#allocation2 + $0x4b0] sm:$0xff]
    %v179 = vld [vmem:[#allocation2 + $0x4b8] sm:$0xff]
    %v180 = vld [vmem:[#allocation2 + $0x4c0] sm:$0xff]
    %v181 = vld [vmem:[#allocation2 + $0x4c8] sm:$0xff]
    %v182 = vld [vmem:[#allocation2 + $0x4d0] sm:$0xff]
    %v183 = vld [vmem:[#allocation2 + $0x4d8] sm:$0xff]
    %v184 = vld [vmem:[#allocation2 + $0x4e0] sm:$0xff]
    %v185 = vld [vmem:[#allocation2 + $0x4e8] sm:$0xff]
    %v186 = vld [vmem:[#allocation2 + $0x4f0] sm:$0xff]
    %v187 = vld [vmem:[#allocation2 + $0x4f8] sm:$0xff]
    %v188 = vld [vmem:[#allocation2 + $0x500] sm:$0xff]
    %v189 = vld [vmem:[#allocation2 + $0x508] sm:$0xff]
    %v190 = vld [vmem:[#allocation2 + $0x510] sm:$0xff]
    %v191 = vld [vmem:[#allocation2 + $0x518] sm:$0xff]
    %v192 = vld [vmem:[#allocation2 + $0x520] sm:$0xff]
    %v193 = vld [vmem:[#allocation2 + $0x528] sm:$0xff]
    %v194 = vld [vmem:[#allocation2 + $0x530] sm:$0xff]
    %v195 = vld [vmem:[#allocation2 + $0x538] sm:$0xff]
    %v196 = vld [vmem:[#allocation2 + $0x540] sm:$0xff]
    %v197 = vld [vmem:[#allocation2 + $0x548] sm:$0xff]
    %v198 = vld [vmem:[#allocation2 + $0x550] sm:$0xff]
    %v199 = vld [vmem:[#allocation2 + $0x558] sm:$0xff]
    %v200 = vld [vmem:[#allocation2 + $0x560] sm:$0xff]
    %v201 = vld [vmem:[#allocation2 + $0x568] sm:$0xff]
    %v202 = vld [vmem:[#allocation2 + $0x570] sm:$0xff]
    %v203 = vld [vmem:[#allocation2 + $0x578] sm:$0xff]
    %v204 = vld [vmem:[#allocation2 + $0x580] sm:$0xff]
    %v205 = vld [vmem:[#allocation2 + $0x588] sm:$0xff]
    %v206 = vld [vmem:[#allocation2 + $0x590] sm:$0xff]
    %v207 = vld [vmem:[#allocation2 + $0x598] sm:$0xff]
    %v208 = vld [vmem:[#allocation2 + $0x5a0] sm:$0xff]
    %v209 = vld [vmem:[#allocation2 + $0x5a8] sm:$0xff]
    %v210 = vld [vmem:[#allocation2 + $0x5b0] sm:$0xff]
    %v211 = vld [vmem:[#allocation2 + $0x5b8] sm:$0xff]
    %v212 = vld [vmem:[#allocation2 + $0x5c0] sm:$0xff]
    %v213 = vld [vmem:[#allocation2 + $0x5c8] sm:$0xff]
    %v214 = vld [vmem:[#allocation2 + $0x5d0] sm:$0xff]
    %v215 = vld [vmem:[#allocation2 + $0x5d8] sm:$0xff]
    %v216 = vld [vmem:[#allocation2 + $0x5e0] sm:$0xff]
    %v217 = vld [vmem:[#allocation2 + $0x5e8] sm:$0xff]
    %v218 = vld [vmem:[#allocation2 + $0x5f0] sm:$0xff]
    %v219 = vld [vmem:[#allocation2 + $0x5f8] sm:$0xff]
    %v220 = vld [vmem:[#allocation2 + $0x600] sm:$0xff]
    %v221 = vld [vmem:[#allocation2 + $0x608] sm:$0xff]
    %v222 = vld [vmem:[#allocation2 + $0x610] sm:$0xff]
    %v223 = vld [vmem:[#allocation2 + $0x618] sm:$0xff]
    %v224 = vld [vmem:[#allocation2 + $0x620] sm:$0xff]
    %v225 = vld [vmem:[#allocation2 + $0x628] sm:$0xff]
    %v226 = vld [vmem:[#allocation2 + $0x630] sm:$0xff]
    %v227 = vld [vmem:[#allocation2 + $0x638] sm:$0xff]
    %v228 = vld [vmem:[#allocation2 + $0x640] sm:$0xff]
    %v229 = vld [vmem:[#allocation2 + $0x648] sm:$0xff]
    %v230 = vld [vmem:[#allocation2 + $0x650] sm:$0xff]
    %v231 = vld [vmem:[#allocation2 + $0x658] sm:$0xff]
    %v232 = vld [vmem:[#allocation2 + $0x660] sm:$0xf]
    %v233 = vld [vmem:[%s2] sm:$0x1]
    %v234 = vld [vmem:[%s0] ss:$8 sm:$0xf]
    %v235 = vld [vmem:[%s0] ss:$8 sm:$0xf0]
    %v236 = vor.u32 %v234, %v235
    %s237 = scalar_lea.vmem %s0, 64
    %v238 = vld [vmem:[%s237] ss:$8 sm:$0xf]
    %v239 = vld [vmem:[%s237] ss:$8 sm:$0x10]
    %v240 = vor.u32 %v238, %v239
    %s241 = scalar_lea.vmem %s0, 104
    %v242 = vld [vmem:[%s241] ss:$8 sm:$0xf]
    %v243 = vld [vmem:[%s241] ss:$8 sm:$0xf0]
    %v244 = vor.u32 %v242, %v243
    %s245 = scalar_lea.vmem %s0, 168
    %v246 = vld [vmem:[%s245] ss:$8 sm:$0xf]
    %v247 = vld [vmem:[%s245] ss:$8 sm:$0x10]
    %v248 = vor.u32 %v246, %v247
    %v250 = vlaneseq
    %v251 = vshrl.u32 %v250, 7
    %v252 = vsub.s32 0, %v251
    %v253 = vrot.slane %v233, %v252
    %v259 = vcombine.low %v236, %v244
    %v260 = vcombine.high %v236, %v244
    %v262 = vunpack.c.l.s4 1966171168
    %v263 = vunpack.c.0.s8 %v262
    %v264 = vlaneseq
    %v265 = vshrl.u32 %v264, 7
    %v266 = vsub.s32 %v263, %v265
    %v267 = vrot.slane %v259, %v266
    %v269 = vunpack.c.l.s4 1966171168
    %v270 = vunpack.c.0.s8 %v269
    %v271 = vlaneseq
    %v272 = vshrl.u32 %v271, 7
    %v273 = vsub.s32 %v270, %v272
    %v274 = vrot.slane %v260, %v273
    %v275 = vcombine.high %v267, %v267
    %v276 = vcombine.high %v274, %v274
    %v278 = vunpack.c.l.s4 1966171168
    %v279 = vunpack.c.0.s8 %v278
    %v280 = vlaneseq
    %v281 = vshrl.u32 %v280, 7
    %v282 = vsub.s32 %v279, %v281
    %v283 = vrot.slane %v267, %v282
    %v285 = vunpack.c.l.s4 1966171168
    %v286 = vunpack.c.0.s8 %v285
    %v287 = vlaneseq
    %v288 = vshrl.u32 %v287, 7
    %v289 = vsub.s32 %v286, %v288
    %v290 = vrot.slane %v274, %v289
    %v292 = vunpack.c.l.s4 1966171168
    %v293 = vunpack.c.0.s8 %v292
    %v294 = vlaneseq
    %v295 = vshrl.u32 %v294, 7
    %v296 = vsub.s32 %v293, %v295
    %v297 = vrot.slane %v275, %v296
    %v299 = vunpack.c.l.s4 1966171168
    %v300 = vunpack.c.0.s8 %v299
    %v301 = vlaneseq
    %v302 = vshrl.u32 %v301, 7
    %v303 = vsub.s32 %v300, %v302
    %v304 = vrot.slane %v276, %v303
    %v305 = vcombine.high %v283, %v283
    %v306 = vcombine.high %v290, %v290
    %v307 = vcombine.high %v297, %v297
    %v308 = vcombine.high %v304, %v304
    %v309 = vcombine.low %v240, %v248
    %v310 = vcombine.high %v240, %v248
    %v312 = vunpack.c.l.s4 1966171168
    %v313 = vunpack.c.0.s8 %v312
    %v314 = vlaneseq
    %v315 = vshrl.u32 %v314, 7
    %v316 = vsub.s32 %v313, %v315
    %v317 = vrot.slane %v309, %v316
    %v319 = vunpack.c.l.s4 1966171168
    %v320 = vunpack.c.0.s8 %v319
    %v321 = vlaneseq
    %v322 = vshrl.u32 %v321, 7
    %v323 = vsub.s32 %v320, %v322
    %v324 = vrot.slane %v310, %v323
    %v325 = vcombine.high %v317, %v317
    %v327 = vunpack.c.l.s4 1966171168
    %v328 = vunpack.c.0.s8 %v327
    %v329 = vlaneseq
    %v330 = vshrl.u32 %v329, 7
    %v331 = vsub.s32 %v328, %v330
    %v332 = vrot.slane %v317, %v331
    %v334 = vunpack.c.l.s4 1966171168
    %v335 = vunpack.c.0.s8 %v334
    %v336 = vlaneseq
    %v337 = vshrl.u32 %v336, 7
    %v338 = vsub.s32 %v335, %v337
    %v339 = vrot.slane %v324, %v338
    %v341 = vunpack.c.l.s4 1966171168
    %v342 = vunpack.c.0.s8 %v341
    %v343 = vlaneseq
    %v344 = vshrl.u32 %v343, 7
    %v345 = vsub.s32 %v342, %v344
    %v346 = vrot.slane %v325, %v345
    %v347 = vcombine.high %v332, %v332
    %v348 = vcombine.high %v346, %v346
    %vm361 = vcmask 818176
    %v362 = vsel %vm361, %v339, 0
    %vm364 = vcmask 1043456
    %v366 = vsel %vm364, %v232, 0
    %368 = vmatprep.subr.mxu0 0.0
    %369 = vmatpush1.msra.mxu0 %v28
    %370 = vmatprep.subr.mxu0 0.0
    %371 = vmatpush1.msra.mxu0 %v29
    %372 = vmatprep.subr.mxu0 0.0
    %373 = vmatpush1.msra.mxu0 %v30
    %374 = vmatprep.subr.mxu0 0.0
    %375 = vmatpush1.msra.mxu0 %v31
    %376 = vmatprep.subr.mxu0 0.0
    %377 = vmatpush1.msra.mxu0 %v32
    %378 = vmatprep.subr.mxu0 0.0
    %379 = vmatpush1.msra.mxu0 %v33
    %380 = vmatprep.subr.mxu0 0.0
    %381 = vmatpush1.msra.mxu0 %v34
    %382 = vmatprep.subr.mxu0 0.0
    %383 = vmatpush1.msra.mxu0 %v35
    %384 = vmatprep.subr.mxu0 0.0
    %385 = vmatpush1.msra.mxu0 %v36
    %386 = vmatprep.subr.mxu0 0.0
    %387 = vmatpush1.msra.mxu0 %v37
    %388 = vmatprep.subr.mxu0 0.0
    %389 = vmatpush1.msra.mxu0 %v38
    %390 = vmatprep.subr.mxu0 0.0
    %391 = vmatpush1.msra.mxu0 %v39
    %392 = vmatprep.subr.mxu0 0.0
    %393 = vmatpush1.msra.mxu0 %v40
    %394 = vmatprep.subr.mxu0 0.0
    %395 = vmatpush1.msra.mxu0 %v41
    %396 = vmatprep.subr.mxu0 0.0
    %397 = vmatpush1.msra.mxu0 %v42
    %398 = vmatprep.subr.mxu0 0.0
    %399 = vmatpush1.msra.mxu0 %v43
    %400 = vmatprep.subr.mxu0 0.0
    %401 = vmatpush1.msra.mxu0 %v44
    %402 = vmatprep.subr.mxu0 0.0
    %403 = vmatpush1.msra.mxu0 %v45
    %404 = vmatprep.subr.mxu0 0.0
    %405 = vmatpush1.msra.mxu0 %v46
    %406 = vmatprep.subr.mxu0 0.0
    %407 = vmatpush1.msra.mxu0 %v47
    %408 = vmatprep.subr.mxu0 0.0
    %409 = vmatpush1.msra.mxu0 %v48
    %410 = vmatprep.subr.mxu0 0.0
    %411 = vmatpush1.msra.mxu0 %v49
    %412 = vmatprep.subr.mxu0 0.0
    %413 = vmatpush1.msra.mxu0 %v50
    %414 = vmatprep.subr.mxu0 0.0
    %415 = vmatpush1.msra.mxu0 %v51
    %416 = vmatprep.subr.mxu0 0.0
    %417 = vmatpush1.msra.mxu0 %v52
    %418 = vmatprep.subr.mxu0 0.0
    %419 = vmatpush1.msra.mxu0 %v53
    %420 = vmatprep.subr.mxu0 0.0
    %421 = vmatpush1.msra.mxu0 %v54
    %422 = vmatprep.subr.mxu0 0.0
    %423 = vmatpush1.msra.mxu0 %v55
    %424 = vmatprep.subr.mxu0 0.0
    %425 = vmatpush1.msra.mxu0 %v56
    %426 = vmatprep.subr.mxu0 0.0
    %427 = vmatpush1.msra.mxu0 %v57
    %428 = vmatprep.subr.mxu0 0.0
    %429 = vmatpush1.msra.mxu0 %v58
    %430 = vmatprep.subr.mxu0 0.0
    %431 = vmatpush1.msra.mxu0 %v59
    %432 = vmatprep.mubr.f32.mxu0 %v297
    %433 = vmatmul.mubr.f32.gmra.mrb[0].mxu0 %v283
    %v434 = vpop.f32.mrb[0].mxu0
    %v435 = vadd.f32 %v253, %v434
    %v436 = vpop.f32.mrb[0].mxu0
    %437 = vdwg.mxu0
    %438 = vmatprep.subr.mxu0 0.0
    %439 = vmatpush1.msra.mxu0 %v60
    %440 = vmatprep.subr.mxu0 0.0
    %441 = vmatpush1.msra.mxu0 %v61
    %442 = vmatprep.subr.mxu0 0.0
    %443 = vmatpush1.msra.mxu0 %v62
    %444 = vmatprep.subr.mxu0 0.0
    %445 = vmatpush1.msra.mxu0 %v63
    %446 = vmatprep.subr.mxu0 0.0
    %447 = vmatpush1.msra.mxu0 %v64
    %448 = vmatprep.subr.mxu0 0.0
    %449 = vmatpush1.msra.mxu0 %v65
    %450 = vmatprep.subr.mxu0 0.0
    %451 = vmatpush1.msra.mxu0 %v66
    %452 = vmatprep.subr.mxu0 0.0
    %453 = vmatpush1.msra.mxu0 %v67
    %454 = vmatprep.subr.mxu0 0.0
    %455 = vmatpush1.msra.mxu0 %v68
    %456 = vmatprep.subr.mxu0 0.0
    %457 = vmatpush1.msra.mxu0 %v69
    %458 = vmatprep.subr.mxu0 0.0
    %459 = vmatpush1.msra.mxu0 %v70
    %460 = vmatprep.subr.mxu0 0.0
    %461 = vmatpush1.msra.mxu0 %v71
    %462 = vmatprep.subr.mxu0 0.0
    %463 = vmatpush1.msra.mxu0 %v72
    %464 = vmatprep.subr.mxu0 0.0
    %465 = vmatpush1.msra.mxu0 %v73
    %466 = vmatprep.subr.mxu0 0.0
    %467 = vmatpush1.msra.mxu0 %v74
    %468 = vmatprep.subr.mxu0 0.0
    %469 = vmatpush1.msra.mxu0 %v75
    %470 = vmatprep.subr.mxu0 0.0
    %471 = vmatpush1.msra.mxu0 %v76
    %472 = vmatprep.subr.mxu0 0.0
    %473 = vmatpush1.msra.mxu0 %v77
    %474 = vmatprep.subr.mxu0 0.0
    %475 = vmatpush1.msra.mxu0 %v78
    %476 = vmatprep.subr.mxu0 0.0
    %477 = vmatpush1.msra.mxu0 %v79
    %478 = vmatprep.subr.mxu0 0.0
    %479 = vmatpush1.msra.mxu0 %v80
    %480 = vmatprep.subr.mxu0 0.0
    %481 = vmatpush1.msra.mxu0 %v81
    %482 = vmatprep.subr.mxu0 0.0
    %483 = vmatpush1.msra.mxu0 %v82
    %484 = vmatprep.subr.mxu0 0.0
    %485 = vmatpush1.msra.mxu0 %v83
    %486 = vmatprep.subr.mxu0 0.0
    %487 = vmatpush1.msra.mxu0 %v84
    %488 = vmatprep.subr.mxu0 0.0
    %489 = vmatpush1.msra.mxu0 %v85
    %490 = vmatprep.subr.mxu0 0.0
    %491 = vmatpush1.msra.mxu0 %v86
    %492 = vmatprep.subr.mxu0 0.0
    %493 = vmatpush1.msra.mxu0 %v87
    %494 = vmatprep.subr.mxu0 0.0
    %495 = vmatpush1.msra.mxu0 %v88
    %496 = vmatprep.subr.mxu0 0.0
    %497 = vmatpush1.msra.mxu0 %v89
    %498 = vmatprep.subr.mxu0 0.0
    %499 = vmatpush1.msra.mxu0 %v90
    %500 = vmatprep.subr.mxu0 0.0
    %501 = vmatpush1.msra.mxu0 %v91
    %502 = vmatprep.mubr.f32.mxu0 %v307
    %503 = vmatmul.mubr.f32.gmra.mrb[0].mxu0 %v305
    %v504 = vpop.f32.mrb[0].mxu0
    %v505 = vadd.f32 %v435, %v504
    %v506 = vpop.f32.mrb[0].mxu0
    %507 = vdwg.mxu0
    %508 = vmatprep.subr.mxu0 0.0
    %509 = vmatpush1.msra.mxu0 %v92
    %510 = vmatprep.subr.mxu0 0.0
    %511 = vmatpush1.msra.mxu0 %v93
    %512 = vmatprep.subr.mxu0 0.0
    %513 = vmatpush1.msra.mxu0 %v94
    %514 = vmatprep.subr.mxu0 0.0
    %515 = vmatpush1.msra.mxu0 %v95
    %516 = vmatprep.subr.mxu0 0.0
    %517 = vmatpush1.msra.mxu0 %v96
    %518 = vmatprep.subr.mxu0 0.0
    %519 = vmatpush1.msra.mxu0 %v97
    %520 = vmatprep.subr.mxu0 0.0
    %521 = vmatpush1.msra.mxu0 %v98
    %522 = vmatprep.subr.mxu0 0.0
    %523 = vmatpush1.msra.mxu0 %v99
    %524 = vmatprep.subr.mxu0 0.0
    %525 = vmatpush1.msra.mxu0 %v100
    %526 = vmatprep.subr.mxu0 0.0
    %527 = vmatpush1.msra.mxu0 %v101
    %528 = vmatprep.subr.mxu0 0.0
    %529 = vmatpush1.msra.mxu0 %v102
    %530 = vmatprep.subr.mxu0 0.0
    %531 = vmatpush1.msra.mxu0 %v103
    %532 = vmatprep.subr.mxu0 0.0
    %533 = vmatpush1.msra.mxu0 %v104
    %534 = vmatprep.subr.mxu0 0.0
    %535 = vmatpush1.msra.mxu0 %v105
    %536 = vmatprep.subr.mxu0 0.0
    %537 = vmatpush1.msra.mxu0 %v106
    %538 = vmatprep.subr.mxu0 0.0
    %539 = vmatpush1.msra.mxu0 %v107
    %540 = vmatprep.subr.mxu0 0.0
    %541 = vmatpush1.msra.mxu0 %v108
    %542 = vmatprep.subr.mxu0 0.0
    %543 = vmatpush1.msra.mxu0 %v109
    %544 = vmatprep.subr.mxu0 0.0
    %545 = vmatpush1.msra.mxu0 %v110
    %546 = vmatprep.subr.mxu0 0.0
    %547 = vmatpush1.msra.mxu0 %v111
    %548 = vmatprep.subr.mxu0 0.0
    %549 = vmatpush1.msra.mxu0 %v112
    %550 = vmatprep.subr.mxu0 0.0
    %551 = vmatpush1.msra.mxu0 %v113
    %552 = vmatprep.subr.mxu0 0.0
    %553 = vmatpush1.msra.mxu0 %v114
    %554 = vmatprep.subr.mxu0 0.0
    %555 = vmatpush1.msra.mxu0 %v115
    %556 = vmatprep.subr.mxu0 0.0
    %557 = vmatpush1.msra.mxu0 %v116
    %558 = vmatprep.subr.mxu0 0.0
    %559 = vmatpush1.msra.mxu0 %v117
    %560 = vmatprep.subr.mxu0 0.0
    %561 = vmatpush1.msra.mxu0 %v118
    %562 = vmatprep.subr.mxu0 0.0
    %563 = vmatpush1.msra.mxu0 %v119
    %564 = vmatprep.subr.mxu0 0.0
    %565 = vmatpush1.msra.mxu0 %v120
    %566 = vmatprep.subr.mxu0 0.0
    %567 = vmatpush1.msra.mxu0 %v121
    %568 = vmatprep.subr.mxu0 0.0
    %569 = vmatpush1.msra.mxu0 %v122
    %570 = vmatprep.subr.mxu0 0.0
    %571 = vmatpush1.msra.mxu0 %v123
    %572 = vmatprep.mubr.f32.mxu0 %v304
    %573 = vmatmul.mubr.f32.gmra.mrb[0].mxu0 %v290
    %v574 = vpop.f32.mrb[0].mxu0
    %v575 = vadd.f32 %v505, %v574
    %v576 = vpop.f32.mrb[0].mxu0
    %577 = vdwg.mxu0
    %578 = vmatprep.subr.mxu0 0.0
    %579 = vmatpush1.msra.mxu0 %v124
    %580 = vmatprep.subr.mxu0 0.0
    %581 = vmatpush1.msra.mxu0 %v125
    %582 = vmatprep.subr.mxu0 0.0
    %583 = vmatpush1.msra.mxu0 %v126
    %584 = vmatprep.subr.mxu0 0.0
    %585 = vmatpush1.msra.mxu0 %v127
    %586 = vmatprep.subr.mxu0 0.0
    %587 = vmatpush1.msra.mxu0 %v128
    %588 = vmatprep.subr.mxu0 0.0
    %589 = vmatpush1.msra.mxu0 %v129
    %590 = vmatprep.subr.mxu0 0.0
    %591 = vmatpush1.msra.mxu0 %v130
    %592 = vmatprep.subr.mxu0 0.0
    %593 = vmatpush1.msra.mxu0 %v131
    %594 = vmatprep.subr.mxu0 0.0
    %595 = vmatpush1.msra.mxu0 %v132
    %596 = vmatprep.subr.mxu0 0.0
    %597 = vmatpush1.msra.mxu0 %v133
    %598 = vmatprep.subr.mxu0 0.0
    %599 = vmatpush1.msra.mxu0 %v134
    %600 = vmatprep.subr.mxu0 0.0
    %601 = vmatpush1.msra.mxu0 %v135
    %602 = vmatprep.subr.mxu0 0.0
    %603 = vmatpush1.msra.mxu0 %v136
    %604 = vmatprep.subr.mxu0 0.0
    %605 = vmatpush1.msra.mxu0 %v137
    %606 = vmatprep.subr.mxu0 0.0
    %607 = vmatpush1.msra.mxu0 %v138
    %608 = vmatprep.subr.mxu0 0.0
    %609 = vmatpush1.msra.mxu0 %v139
    %610 = vmatprep.subr.mxu0 0.0
    %611 = vmatpush1.msra.mxu0 %v140
    %612 = vmatprep.subr.mxu0 0.0
    %613 = vmatpush1.msra.mxu0 %v141
    %614 = vmatprep.subr.mxu0 0.0
    %615 = vmatpush1.msra.mxu0 %v142
    %616 = vmatprep.subr.mxu0 0.0
    %617 = vmatpush1.msra.mxu0 %v143
    %618 = vmatprep.subr.mxu0 0.0
    %619 = vmatpush1.msra.mxu0 %v144
    %620 = vmatprep.subr.mxu0 0.0
    %621 = vmatpush1.msra.mxu0 %v145
    %622 = vmatprep.subr.mxu0 0.0
    %623 = vmatpush1.msra.mxu0 %v146
    %624 = vmatprep.subr.mxu0 0.0
    %625 = vmatpush1.msra.mxu0 %v147
    %626 = vmatprep.subr.mxu0 0.0
    %627 = vmatpush1.msra.mxu0 %v148
    %628 = vmatprep.subr.mxu0 0.0
    %629 = vmatpush1.msra.mxu0 %v149
    %630 = vmatprep.subr.mxu0 0.0
    %631 = vmatpush1.msra.mxu0 %v150
    %632 = vmatprep.subr.mxu0 0.0
    %633 = vmatpush1.msra.mxu0 %v151
    %634 = vmatprep.subr.mxu0 0.0
    %635 = vmatpush1.msra.mxu0 %v152
    %636 = vmatprep.subr.mxu0 0.0
    %637 = vmatpush1.msra.mxu0 %v153
    %638 = vmatprep.subr.mxu0 0.0
    %639 = vmatpush1.msra.mxu0 %v154
    %640 = vmatprep.subr.mxu0 0.0
    %641 = vmatpush1.msra.mxu0 %v155
    %642 = vmatprep.mubr.f32.mxu0 %v308
    %643 = vmatmul.mubr.f32.gmra.mrb[0].mxu0 %v306
    %v644 = vpop.f32.mrb[0].mxu0
    %v645 = vadd.f32 %v575, %v644
    %v646 = vpop.f32.mrb[0].mxu0
    %647 = vdwg.mxu0
    %648 = vmatprep.subr.mxu0 0.0
    %649 = vmatpush1.msra.mxu0 %v156
    %650 = vmatprep.subr.mxu0 0.0
    %651 = vmatpush1.msra.mxu0 %v157
    %652 = vmatprep.subr.mxu0 0.0
    %653 = vmatpush1.msra.mxu0 %v158
    %654 = vmatprep.subr.mxu0 0.0
    %655 = vmatpush1.msra.mxu0 %v159
    %656 = vmatprep.subr.mxu0 0.0
    %657 = vmatpush1.msra.mxu0 %v160
    %658 = vmatprep.subr.mxu0 0.0
    %659 = vmatpush1.msra.mxu0 %v161
    %660 = vmatprep.subr.mxu0 0.0
    %661 = vmatpush1.msra.mxu0 %v162
    %662 = vmatprep.subr.mxu0 0.0
    %663 = vmatpush1.msra.mxu0 %v163
    %664 = vmatprep.subr.mxu0 0.0
    %665 = vmatpush1.msra.mxu0 %v164
    %666 = vmatprep.subr.mxu0 0.0
    %667 = vmatpush1.msra.mxu0 %v165
    %668 = vmatprep.subr.mxu0 0.0
    %669 = vmatpush1.msra.mxu0 %v166
    %670 = vmatprep.subr.mxu0 0.0
    %671 = vmatpush1.msra.mxu0 %v167
    %672 = vmatprep.subr.mxu0 0.0
    %673 = vmatpush1.msra.mxu0 %v168
    %674 = vmatprep.subr.mxu0 0.0
    %675 = vmatpush1.msra.mxu0 %v169
    %676 = vmatprep.subr.mxu0 0.0
    %677 = vmatpush1.msra.mxu0 %v170
    %678 = vmatprep.subr.mxu0 0.0
    %679 = vmatpush1.msra.mxu0 %v171
    %680 = vmatprep.subr.mxu0 0.0
    %681 = vmatpush1.msra.mxu0 %v172
    %682 = vmatprep.subr.mxu0 0.0
    %683 = vmatpush1.msra.mxu0 %v173
    %684 = vmatprep.subr.mxu0 0.0
    %685 = vmatpush1.msra.mxu0 %v174
    %686 = vmatprep.subr.mxu0 0.0
    %687 = vmatpush1.msra.mxu0 %v175
    %688 = vmatprep.subr.mxu0 0.0
    %689 = vmatpush1.msra.mxu0 %v176
    %690 = vmatprep.subr.mxu0 0.0
    %691 = vmatpush1.msra.mxu0 %v177
    %692 = vmatprep.subr.mxu0 0.0
    %693 = vmatpush1.msra.mxu0 %v178
    %694 = vmatprep.subr.mxu0 0.0
    %695 = vmatpush1.msra.mxu0 %v179
    %696 = vmatprep.subr.mxu0 0.0
    %697 = vmatpush1.msra.mxu0 %v180
    %698 = vmatprep.subr.mxu0 0.0
    %699 = vmatpush1.msra.mxu0 %v181
    %700 = vmatprep.subr.mxu0 0.0
    %701 = vmatpush1.msra.mxu0 %v182
    %702 = vmatprep.subr.mxu0 0.0
    %703 = vmatpush1.msra.mxu0 %v183
    %704 = vmatprep.subr.mxu0 0.0
    %705 = vmatpush1.msra.mxu0 %v184
    %706 = vmatprep.subr.mxu0 0.0
    %707 = vmatpush1.msra.mxu0 %v185
    %708 = vmatprep.subr.mxu0 0.0
    %709 = vmatpush1.msra.mxu0 %v186
    %710 = vmatprep.subr.mxu0 0.0
    %711 = vmatpush1.msra.mxu0 %v187
    %712 = vmatprep.mubr.f32.mxu0 %v346
    %713 = vmatmul.mubr.f32.gmra.mrb[0].mxu0 %v332
    %v714 = vpop.f32.mrb[0].mxu0
    %v715 = vadd.f32 %v645, %v714
    %v716 = vpop.f32.mrb[0].mxu0
    %717 = vdwg.mxu0
    %718 = vmatprep.subr.mxu0 0.0
    %719 = vmatpush1.msra.mxu0 %v188
    %720 = vmatprep.subr.mxu0 0.0
    %721 = vmatpush1.msra.mxu0 %v189
    %722 = vmatprep.subr.mxu0 0.0
    %723 = vmatpush1.msra.mxu0 %v190
    %724 = vmatprep.subr.mxu0 0.0
    %725 = vmatpush1.msra.mxu0 %v191
    %726 = vmatprep.subr.mxu0 0.0
    %727 = vmatpush1.msra.mxu0 %v192
    %728 = vmatprep.subr.mxu0 0.0
    %729 = vmatpush1.msra.mxu0 %v193
    %730 = vmatprep.subr.mxu0 0.0
    %731 = vmatpush1.msra.mxu0 %v194
    %732 = vmatprep.subr.mxu0 0.0
    %733 = vmatpush1.msra.mxu0 %v195
    %734 = vmatprep.subr.mxu0 0.0
    %735 = vmatpush1.msra.mxu0 %v196
    %736 = vmatprep.subr.mxu0 0.0
    %737 = vmatpush1.msra.mxu0 %v197
    %738 = vmatprep.subr.mxu0 0.0
    %739 = vmatpush1.msra.mxu0 %v198
    %740 = vmatprep.subr.mxu0 0.0
    %741 = vmatpush1.msra.mxu0 %v199
    %742 = vmatprep.subr.mxu0 0.0
    %743 = vmatpush1.msra.mxu0 %v200
    %744 = vmatprep.subr.mxu0 0.0
    %745 = vmatpush1.msra.mxu0 %v201
    %746 = vmatprep.subr.mxu0 0.0
    %747 = vmatpush1.msra.mxu0 %v202
    %748 = vmatprep.subr.mxu0 0.0
    %749 = vmatpush1.msra.mxu0 %v203
    %750 = vmatprep.subr.mxu0 0.0
    %751 = vmatpush1.msra.mxu0 %v204
    %752 = vmatprep.subr.mxu0 0.0
    %753 = vmatpush1.msra.mxu0 %v205
    %754 = vmatprep.subr.mxu0 0.0
    %755 = vmatpush1.msra.mxu0 %v206
    %756 = vmatprep.subr.mxu0 0.0
    %757 = vmatpush1.msra.mxu0 %v207
    %758 = vmatprep.subr.mxu0 0.0
    %759 = vmatpush1.msra.mxu0 %v208
    %760 = vmatprep.subr.mxu0 0.0
    %761 = vmatpush1.msra.mxu0 %v209
    %762 = vmatprep.subr.mxu0 0.0
    %763 = vmatpush1.msra.mxu0 %v210
    %764 = vmatprep.subr.mxu0 0.0
    %765 = vmatpush1.msra.mxu0 %v211
    %766 = vmatprep.subr.mxu0 0.0
    %767 = vmatpush1.msra.mxu0 %v212
    %768 = vmatprep.subr.mxu0 0.0
    %769 = vmatpush1.msra.mxu0 %v213
    %770 = vmatprep.subr.mxu0 0.0
    %771 = vmatpush1.msra.mxu0 %v214
    %772 = vmatprep.subr.mxu0 0.0
    %773 = vmatpush1.msra.mxu0 %v215
    %774 = vmatprep.subr.mxu0 0.0
    %775 = vmatpush1.msra.mxu0 %v216
    %776 = vmatprep.subr.mxu0 0.0
    %777 = vmatpush1.msra.mxu0 %v217
    %778 = vmatprep.subr.mxu0 0.0
    %779 = vmatpush1.msra.mxu0 %v218
    %780 = vmatprep.subr.mxu0 0.0
    %781 = vmatpush1.msra.mxu0 %v219
    %782 = vmatprep.mubr.f32.mxu0 %v348
    %783 = vmatmul.mubr.f32.gmra.mrb[0].mxu0 %v347
    %v784 = vpop.f32.mrb[0].mxu0
    %v785 = vadd.f32 %v715, %v784
    %v786 = vpop.f32.mrb[0].mxu0
    %787 = vdwg.mxu0
    %788 = vmatprep.subr.mxu0 0.0
    %789 = vmatpush1.msra.mxu0 %v220
    %790 = vmatprep.subr.mxu0 0.0
    %791 = vmatpush1.msra.mxu0 %v221
    %792 = vmatprep.subr.mxu0 0.0
    %793 = vmatpush1.msra.mxu0 %v222
    %794 = vmatprep.subr.mxu0 0.0
    %795 = vmatpush1.msra.mxu0 %v223
    %796 = vmatprep.subr.mxu0 0.0
    %797 = vmatpush1.msra.mxu0 %v224
    %798 = vmatprep.subr.mxu0 0.0
    %799 = vmatpush1.msra.mxu0 %v225
    %800 = vmatprep.subr.mxu0 0.0
    %801 = vmatpush1.msra.mxu0 %v226
    %802 = vmatprep.subr.mxu0 0.0
    %803 = vmatpush1.msra.mxu0 %v227
    %804 = vmatprep.subr.mxu0 0.0
    %805 = vmatpush1.msra.mxu0 %v228
    %806 = vmatprep.subr.mxu0 0.0
    %807 = vmatpush1.msra.mxu0 %v229
    %808 = vmatprep.subr.mxu0 0.0
    %809 = vmatpush1.msra.mxu0 %v230
    %810 = vmatprep.subr.mxu0 0.0
    %811 = vmatpush1.msra.mxu0 %v231
    %812 = vmatprep.subr.mxu0 0.0
    %813 = vmatpush1.msra.mxu0 %v366
    %814 = vmatprep.subr.mxu0 0.0
    %815 = vmatpush1.msra.mxu0 0.0
    %816 = vmatprep.subr.mxu0 0.0
    %817 = vmatpush1.msra.mxu0 0.0
    %818 = vmatprep.subr.mxu0 0.0
    %819 = vmatpush1.msra.mxu0 0.0
    %820 = vmatprep.subr.mxu0 0.0
    %821 = vmatpush1.msra.mxu0 0.0
    %822 = vmatprep.subr.mxu0 0.0
    %823 = vmatpush1.msra.mxu0 0.0
    %824 = vmatprep.subr.mxu0 0.0
    %825 = vmatpush1.msra.mxu0 0.0
    %826 = vmatprep.subr.mxu0 0.0
    %827 = vmatpush1.msra.mxu0 0.0
    %828 = vmatprep.subr.mxu0 0.0
    %829 = vmatpush1.msra.mxu0 0.0
    %830 = vmatprep.subr.mxu0 0.0
    %831 = vmatpush1.msra.mxu0 0.0
    %832 = vmatprep.subr.mxu0 0.0
    %833 = vmatpush1.msra.mxu0 0.0
    %834 = vmatprep.subr.mxu0 0.0
    %835 = vmatpush1.msra.mxu0 0.0
    %836 = vmatprep.subr.mxu0 0.0
    %837 = vmatpush1.msra.mxu0 0.0
    %838 = vmatprep.subr.mxu0 0.0
    %839 = vmatpush1.msra.mxu0 0.0
    %840 = vmatprep.subr.mxu0 0.0
    %841 = vmatpush1.msra.mxu0 0.0
    %842 = vmatprep.subr.mxu0 0.0
    %843 = vmatpush1.msra.mxu0 0.0
    %844 = vmatprep.subr.mxu0 0.0
    %845 = vmatpush1.msra.mxu0 0.0
    %846 = vmatprep.subr.mxu0 0.0
    %847 = vmatpush1.msra.mxu0 0.0
    %848 = vmatprep.subr.mxu0 0.0
    %849 = vmatpush1.msra.mxu0 0.0
    %850 = vmatprep.subr.mxu0 0.0
    %851 = vmatpush1.msra.mxu0 0.0
    %852 = vmatprep.mubr.f32.mxu0 0.0
    %853 = vmatmul.mubr.f32.gmra.mrb[0].mxu0 %v362
    %v854 = vpop.f32.mrb[0].mxu0
    %v855 = vadd.f32 %v785, %v854
    %v856 = vpop.f32.mrb[0].mxu0
    %857 = vdwg.mxu0
    %858 = vst [vmem:[%s3] sm:$0x3] %v855
    %s859 = scalar_lea.vmem %s0, 1
    %v860 = vld [vmem:[%s859] ss:$8 sm:$0xf]
    %v861 = vld [vmem:[%s859] ss:$8 sm:$0xf0]
    %v862 = vor.u32 %v860, %v861
    %s863 = scalar_lea.vmem %s0, 65
    %v864 = vld [vmem:[%s863] ss:$8 sm:$0xf]
    %v865 = vld [vmem:[%s863] ss:$8 sm:$0x10]
    %v866 = vor.u32 %v864, %v865
    %s867 = scalar_lea.vmem %s0, 105
    %v868 = vld [vmem:[%s867] ss:$8 sm:$0xf]
    %v869 = vld [vmem:[%s867] ss:$8 sm:$0xf0]
    %v870 = vor.u32 %v868, %v869
    %s871 = scalar_lea.vmem %s0, 169
    %v872 = vld [vmem:[%s871] ss:$8 sm:$0xf]
    %v873 = vld [vmem:[%s871] ss:$8 sm:$0x10]
    %v874 = vor.u32 %v872, %v873
    %v879 = vcombine.low %v862, %v870
    %v880 = vcombine.high %v862, %v870
    %v882 = vunpack.c.l.s4 1966171168
    %v883 = vunpack.c.0.s8 %v882
    %v884 = vlaneseq
    %v885 = vshrl.u32 %v884, 7
    %v886 = vsub.s32 %v883, %v885
    %v887 = vrot.slane %v879, %v886
    %v889 = vunpack.c.l.s4 1966171168
    %v890 = vunpack.c.0.s8 %v889
    %v891 = vlaneseq
    %v892 = vshrl.u32 %v891, 7
    %v893 = vsub.s32 %v890, %v892
    %v894 = vrot.slane %v880, %v893
    %v895 = vcombine.high %v887, %v887
    %v896 = vcombine.high %v894, %v894
    %v898 = vunpack.c.l.s4 1966171168
    %v899 = vunpack.c.0.s8 %v898
    %v900 = vlaneseq
    %v901 = vshrl.u32 %v900, 7
    %v902 = vsub.s32 %v899, %v901
    %v903 = vrot.slane %v887, %v902
    %v905 = vunpack.c.l.s4 1966171168
    %v906 = vunpack.c.0.s8 %v905
    %v907 = vlaneseq
    %v908 = vshrl.u32 %v907, 7
    %v909 = vsub.s32 %v906, %v908
    %v910 = vrot.slane %v894, %v909
    %v912 = vunpack.c.l.s4 1966171168
    %v913 = vunpack.c.0.s8 %v912
    %v914 = vlaneseq
    %v915 = vshrl.u32 %v914, 7
    %v916 = vsub.s32 %v913, %v915
    %v917 = vrot.slane %v895, %v916
    %v919 = vunpack.c.l.s4 1966171168
    %v920 = vunpack.c.0.s8 %v919
    %v921 = vlaneseq
    %v922 = vshrl.u32 %v921, 7
    %v923 = vsub.s32 %v920, %v922
    %v924 = vrot.slane %v896, %v923
    %v925 = vcombine.high %v903, %v903
    %v926 = vcombine.high %v910, %v910
    %v927 = vcombine.high %v917, %v917
    %v928 = vcombine.high %v924, %v924
    %v929 = vcombine.low %v866, %v874
    %v930 = vcombine.high %v866, %v874
    %v932 = vunpack.c.l.s4 1966171168
    %v933 = vunpack.c.0.s8 %v932
    %v934 = vlaneseq
    %v935 = vshrl.u32 %v934, 7
    %v936 = vsub.s32 %v933, %v935
    %v937 = vrot.slane %v929, %v936
    %v939 = vunpack.c.l.s4 1966171168
    %v940 = vunpack.c.0.s8 %v939
    %v941 = vlaneseq
    %v942 = vshrl.u32 %v941, 7
    %v943 = vsub.s32 %v940, %v942
    %v944 = vrot.slane %v930, %v943
    %v945 = vcombine.high %v937, %v937
    %v947 = vunpack.c.l.s4 1966171168
    %v948 = vunpack.c.0.s8 %v947
    %v949 = vlaneseq
    %v950 = vshrl.u32 %v949, 7
    %v951 = vsub.s32 %v948, %v950
    %v952 = vrot.slane %v937, %v951
    %v954 = vunpack.c.l.s4 1966171168
    %v955 = vunpack.c.0.s8 %v954
    %v956 = vlaneseq
    %v957 = vshrl.u32 %v956, 7
    %v958 = vsub.s32 %v955, %v957
    %v959 = vrot.slane %v944, %v958
    %v961 = vunpack.c.l.s4 1966171168
    %v962 = vunpack.c.0.s8 %v961
    %v963 = vlaneseq
    %v964 = vshrl.u32 %v963, 7
    %v965 = vsub.s32 %v962, %v964
    %v966 = vrot.slane %v945, %v965
    %v967 = vcombine.high %v952, %v952
    %v968 = vcombine.high %v966, %v966
    %v981 = vsel %vm361, %v959, 0
    %983 = vmatprep.subr.mxu0 0.0
    %984 = vmatpush1.msra.mxu0 %v28
    %985 = vmatprep.subr.mxu0 0.0
    %986 = vmatpush1.msra.mxu0 %v29
    %987 = vmatprep.subr.mxu0 0.0
    %988 = vmatpush1.msra.mxu0 %v30
    %989 = vmatprep.subr.mxu0 0.0
    %990 = vmatpush1.msra.mxu0 %v31
    %991 = vmatprep.subr.mxu0 0.0
    %992 = vmatpush1.msra.mxu0 %v32
    %993 = vmatprep.subr.mxu0 0.0
    %994 = vmatpush1.msra.mxu0 %v33
    %995 = vmatprep.subr.mxu0 0.0
    %996 = vmatpush1.msra.mxu0 %v34
    %997 = vmatprep.subr.mxu0 0.0
    %998 = vmatpush1.msra.mxu0 %v35
    %999 = vmatprep.subr.mxu0 0.0
    %1000 = vmatpush1.msra.mxu0 %v36
    %1001 = vmatprep.subr.mxu0 0.0
    %1002 = vmatpush1.msra.mxu0 %v37
    %1003 = vmatprep.subr.mxu0 0.0
    %1004 = vmatpush1.msra.mxu0 %v38
    %1005 = vmatprep.subr.mxu0 0.0
    %1006 = vmatpush1.msra.mxu0 %v39
    %1007 = vmatprep.subr.mxu0 0.0
    %1008 = vmatpush1.msra.mxu0 %v40
    %1009 = vmatprep.subr.mxu0 0.0
    %1010 = vmatpush1.msra.mxu0 %v41
    %1011 = vmatprep.subr.mxu0 0.0
    %1012 = vmatpush1.msra.mxu0 %v42
    %1013 = vmatprep.subr.mxu0 0.0
    %1014 = vmatpush1.msra.mxu0 %v43
    %1015 = vmatprep.subr.mxu0 0.0
    %1016 = vmatpush1.msra.mxu0 %v44
    %1017 = vmatprep.subr.mxu0 0.0
    %1018 = vmatpush1.msra.mxu0 %v45
    %1019 = vmatprep.subr.mxu0 0.0
    %1020 = vmatpush1.msra.mxu0 %v46
    %1021 = vmatprep.subr.mxu0 0.0
    %1022 = vmatpush1.msra.mxu0 %v47
    %1023 = vmatprep.subr.mxu0 0.0
    %1024 = vmatpush1.msra.mxu0 %v48
    %1025 = vmatprep.subr.mxu0 0.0
    %1026 = vmatpush1.msra.mxu0 %v49
    %1027 = vmatprep.subr.mxu0 0.0
    %1028 = vmatpush1.msra.mxu0 %v50
    %1029 = vmatprep.subr.mxu0 0.0
    %1030 = vmatpush1.msra.mxu0 %v51
    %1031 = vmatprep.subr.mxu0 0.0
    %1032 = vmatpush1.msra.mxu0 %v52
    %1033 = vmatprep.subr.mxu0 0.0
    %1034 = vmatpush1.msra.mxu0 %v53
    %1035 = vmatprep.subr.mxu0 0.0
    %1036 = vmatpush1.msra.mxu0 %v54
    %1037 = vmatprep.subr.mxu0 0.0
    %1038 = vmatpush1.msra.mxu0 %v55
    %1039 = vmatprep.subr.mxu0 0.0
    %1040 = vmatpush1.msra.mxu0 %v56
    %1041 = vmatprep.subr.mxu0 0.0
    %1042 = vmatpush1.msra.mxu0 %v57
    %1043 = vmatprep.subr.mxu0 0.0
    %1044 = vmatpush1.msra.mxu0 %v58
    %1045 = vmatprep.subr.mxu0 0.0
    %1046 = vmatpush1.msra.mxu0 %v59
    %1047 = vmatprep.mubr.f32.mxu0 %v917
    %1048 = vmatmul.mubr.f32.gmra.mrb[0].mxu0 %v903
    %v1049 = vpop.f32.mrb[0].mxu0
    %v1050 = vadd.f32 %v253, %v1049
    %v1051 = vpop.f32.mrb[0].mxu0
    %1052 = vdwg.mxu0
    %1053 = vmatprep.subr.mxu0 0.0
    %1054 = vmatpush1.msra.mxu0 %v60
    %1055 = vmatprep.subr.mxu0 0.0
    %1056 = vmatpush1.msra.mxu0 %v61
    %1057 = vmatprep.subr.mxu0 0.0
    %1058 = vmatpush1.msra.mxu0 %v62
    %1059 = vmatprep.subr.mxu0 0.0
    %1060 = vmatpush1.msra.mxu0 %v63
    %1061 = vmatprep.subr.mxu0 0.0
    %1062 = vmatpush1.msra.mxu0 %v64
    %1063 = vmatprep.subr.mxu0 0.0
    %1064 = vmatpush1.msra.mxu0 %v65
    %1065 = vmatprep.subr.mxu0 0.0
    %1066 = vmatpush1.msra.mxu0 %v66
    %1067 = vmatprep.subr.mxu0 0.0
    %1068 = vmatpush1.msra.mxu0 %v67
    %1069 = vmatprep.subr.mxu0 0.0
    %1070 = vmatpush1.msra.mxu0 %v68
    %1071 = vmatprep.subr.mxu0 0.0
    %1072 = vmatpush1.msra.mxu0 %v69
    %1073 = vmatprep.subr.mxu0 0.0
    %1074 = vmatpush1.msra.mxu0 %v70
    %1075 = vmatprep.subr.mxu0 0.0
    %1076 = vmatpush1.msra.mxu0 %v71
    %1077 = vmatprep.subr.mxu0 0.0
    %1078 = vmatpush1.msra.mxu0 %v72
    %1079 = vmatprep.subr.mxu0 0.0
    %1080 = vmatpush1.msra.mxu0 %v73
    %1081 = vmatprep.subr.mxu0 0.0
    %1082 = vmatpush1.msra.mxu0 %v74
    %1083 = vmatprep.subr.mxu0 0.0
    %1084 = vmatpush1.msra.mxu0 %v75
    %1085 = vmatprep.subr.mxu0 0.0
    %1086 = vmatpush1.msra.mxu0 %v76
    %1087 = vmatprep.subr.mxu0 0.0
    %1088 = vmatpush1.msra.mxu0 %v77
    %1089 = vmatprep.subr.mxu0 0.0
    %1090 = vmatpush1.msra.mxu0 %v78
    %1091 = vmatprep.subr.mxu0 0.0
    %1092 = vmatpush1.msra.mxu0 %v79
    %1093 = vmatprep.subr.mxu0 0.0
    %1094 = vmatpush1.msra.mxu0 %v80
    %1095 = vmatprep.subr.mxu0 0.0
    %1096 = vmatpush1.msra.mxu0 %v81
    %1097 = vmatprep.subr.mxu0 0.0
    %1098 = vmatpush1.msra.mxu0 %v82
    %1099 = vmatprep.subr.mxu0 0.0
    %1100 = vmatpush1.msra.mxu0 %v83
    %1101 = vmatprep.subr.mxu0 0.0
    %1102 = vmatpush1.msra.mxu0 %v84
    %1103 = vmatprep.subr.mxu0 0.0
    %1104 = vmatpush1.msra.mxu0 %v85
    %1105 = vmatprep.subr.mxu0 0.0
    %1106 = vmatpush1.msra.mxu0 %v86
    %1107 = vmatprep.subr.mxu0 0.0
    %1108 = vmatpush1.msra.mxu0 %v87
    %1109 = vmatprep.subr.mxu0 0.0
    %1110 = vmatpush1.msra.mxu0 %v88
    %1111 = vmatprep.subr.mxu0 0.0
    %1112 = vmatpush1.msra.mxu0 %v89
    %1113 = vmatprep.subr.mxu0 0.0
    %1114 = vmatpush1.msra.mxu0 %v90
    %1115 = vmatprep.subr.mxu0 0.0
    %1116 = vmatpush1.msra.mxu0 %v91
    %1117 = vmatprep.mubr.f32.mxu0 %v927
    %1118 = vmatmul.mubr.f32.gmra.mrb[0].mxu0 %v925
    %v1119 = vpop.f32.mrb[0].mxu0
    %v1120 = vadd.f32 %v1050, %v1119
    %v1121 = vpop.f32.mrb[0].mxu0
    %1122 = vdwg.mxu0
    %1123 = vmatprep.subr.mxu0 0.0
    %1124 = vmatpush1.msra.mxu0 %v92
    %1125 = vmatprep.subr.mxu0 0.0
    %1126 = vmatpush1.msra.mxu0 %v93
    %1127 = vmatprep.subr.mxu0 0.0
    %1128 = vmatpush1.msra.mxu0 %v94
    %1129 = vmatprep.subr.mxu0 0.0
    %1130 = vmatpush1.msra.mxu0 %v95
    %1131 = vmatprep.subr.mxu0 0.0
    %1132 = vmatpush1.msra.mxu0 %v96
    %1133 = vmatprep.subr.mxu0 0.0
    %1134 = vmatpush1.msra.mxu0 %v97
    %1135 = vmatprep.subr.mxu0 0.0
    %1136 = vmatpush1.msra.mxu0 %v98
    %1137 = vmatprep.subr.mxu0 0.0
    %1138 = vmatpush1.msra.mxu0 %v99
    %1139 = vmatprep.subr.mxu0 0.0
    %1140 = vmatpush1.msra.mxu0 %v100
    %1141 = vmatprep.subr.mxu0 0.0
    %1142 = vmatpush1.msra.mxu0 %v101
    %1143 = vmatprep.subr.mxu0 0.0
    %1144 = vmatpush1.msra.mxu0 %v102
    %1145 = vmatprep.subr.mxu0 0.0
    %1146 = vmatpush1.msra.mxu0 %v103
    %1147 = vmatprep.subr.mxu0 0.0
    %1148 = vmatpush1.msra.mxu0 %v104
    %1149 = vmatprep.subr.mxu0 0.0
    %1150 = vmatpush1.msra.mxu0 %v105
    %1151 = vmatprep.subr.mxu0 0.0
    %1152 = vmatpush1.msra.mxu0 %v106
    %1153 = vmatprep.subr.mxu0 0.0
    %1154 = vmatpush1.msra.mxu0 %v107
    %1155 = vmatprep.subr.mxu0 0.0
    %1156 = vmatpush1.msra.mxu0 %v108
    %1157 = vmatprep.subr.mxu0 0.0
    %1158 = vmatpush1.msra.mxu0 %v109
    %1159 = vmatprep.subr.mxu0 0.0
    %1160 = vmatpush1.msra.mxu0 %v110
    %1161 = vmatprep.subr.mxu0 0.0
    %1162 = vmatpush1.msra.mxu0 %v111
    %1163 = vmatprep.subr.mxu0 0.0
    %1164 = vmatpush1.msra.mxu0 %v112
    %1165 = vmatprep.subr.mxu0 0.0
    %1166 = vmatpush1.msra.mxu0 %v113
    %1167 = vmatprep.subr.mxu0 0.0
    %1168 = vmatpush1.msra.mxu0 %v114
    %1169 = vmatprep.subr.mxu0 0.0
    %1170 = vmatpush1.msra.mxu0 %v115
    %1171 = vmatprep.subr.mxu0 0.0
    %1172 = vmatpush1.msra.mxu0 %v116
    %1173 = vmatprep.subr.mxu0 0.0
    %1174 = vmatpush1.msra.mxu0 %v117
    %1175 = vmatprep.subr.mxu0 0.0
    %1176 = vmatpush1.msra.mxu0 %v118
    %1177 = vmatprep.subr.mxu0 0.0
    %1178 = vmatpush1.msra.mxu0 %v119
    %1179 = vmatprep.subr.mxu0 0.0
    %1180 = vmatpush1.msra.mxu0 %v120
    %1181 = vmatprep.subr.mxu0 0.0
    %1182 = vmatpush1.msra.mxu0 %v121
    %1183 = vmatprep.subr.mxu0 0.0
    %1184 = vmatpush1.msra.mxu0 %v122
    %1185 = vmatprep.subr.mxu0 0.0
    %1186 = vmatpush1.msra.mxu0 %v123
    %1187 = vmatprep.mubr.f32.mxu0 %v924
    %1188 = vmatmul.mubr.f32.gmra.mrb[0].mxu0 %v910
    %v1189 = vpop.f32.mrb[0].mxu0
    %v1190 = vadd.f32 %v1120, %v1189
    %v1191 = vpop.f32.mrb[0].mxu0
    %1192 = vdwg.mxu0
    %1193 = vmatprep.subr.mxu0 0.0
    %1194 = vmatpush1.msra.mxu0 %v124
    %1195 = vmatprep.subr.mxu0 0.0
    %1196 = vmatpush1.msra.mxu0 %v125
    %1197 = vmatprep.subr.mxu0 0.0
    %1198 = vmatpush1.msra.mxu0 %v126
    %1199 = vmatprep.subr.mxu0 0.0
    %1200 = vmatpush1.msra.mxu0 %v127
    %1201 = vmatprep.subr.mxu0 0.0
    %1202 = vmatpush1.msra.mxu0 %v128
    %1203 = vmatprep.subr.mxu0 0.0
    %1204 = vmatpush1.msra.mxu0 %v129
    %1205 = vmatprep.subr.mxu0 0.0
    %1206 = vmatpush1.msra.mxu0 %v130
    %1207 = vmatprep.subr.mxu0 0.0
    %1208 = vmatpush1.msra.mxu0 %v131
    %1209 = vmatprep.subr.mxu0 0.0
    %1210 = vmatpush1.msra.mxu0 %v132
    %1211 = vmatprep.subr.mxu0 0.0
    %1212 = vmatpush1.msra.mxu0 %v133
    %1213 = vmatprep.subr.mxu0 0.0
    %1214 = vmatpush1.msra.mxu0 %v134
    %1215 = vmatprep.subr.mxu0 0.0
    %1216 = vmatpush1.msra.mxu0 %v135
    %1217 = vmatprep.subr.mxu0 0.0
    %1218 = vmatpush1.msra.mxu0 %v136
    %1219 = vmatprep.subr.mxu0 0.0
    %1220 = vmatpush1.msra.mxu0 %v137
    %1221 = vmatprep.subr.mxu0 0.0
    %1222 = vmatpush1.msra.mxu0 %v138
    %1223 = vmatprep.subr.mxu0 0.0
    %1224 = vmatpush1.msra.mxu0 %v139
    %1225 = vmatprep.subr.mxu0 0.0
    %1226 = vmatpush1.msra.mxu0 %v140
    %1227 = vmatprep.subr.mxu0 0.0
    %1228 = vmatpush1.msra.mxu0 %v141
    %1229 = vmatprep.subr.mxu0 0.0
    %1230 = vmatpush1.msra.mxu0 %v142
    %1231 = vmatprep.subr.mxu0 0.0
    %1232 = vmatpush1.msra.mxu0 %v143
    %1233 = vmatprep.subr.mxu0 0.0
    %1234 = vmatpush1.msra.mxu0 %v144
    %1235 = vmatprep.subr.mxu0 0.0
    %1236 = vmatpush1.msra.mxu0 %v145
    %1237 = vmatprep.subr.mxu0 0.0
    %1238 = vmatpush1.msra.mxu0 %v146
    %1239 = vmatprep.subr.mxu0 0.0
    %1240 = vmatpush1.msra.mxu0 %v147
    %1241 = vmatprep.subr.mxu0 0.0
    %1242 = vmatpush1.msra.mxu0 %v148
    %1243 = vmatprep.subr.mxu0 0.0
    %1244 = vmatpush1.msra.mxu0 %v149
    %1245 = vmatprep.subr.mxu0 0.0
    %1246 = vmatpush1.msra.mxu0 %v150
    %1247 = vmatprep.subr.mxu0 0.0
    %1248 = vmatpush1.msra.mxu0 %v151
    %1249 = vmatprep.subr.mxu0 0.0
    %1250 = vmatpush1.msra.mxu0 %v152
    %1251 = vmatprep.subr.mxu0 0.0
    %1252 = vmatpush1.msra.mxu0 %v153
    %1253 = vmatprep.subr.mxu0 0.0
    %1254 = vmatpush1.msra.mxu0 %v154
    %1255 = vmatprep.subr.mxu0 0.0
    %1256 = vmatpush1.msra.mxu0 %v155
    %1257 = vmatprep.mubr.f32.mxu0 %v928
    %1258 = vmatmul.mubr.f32.gmra.mrb[0].mxu0 %v926
    %v1259 = vpop.f32.mrb[0].mxu0
    %v1260 = vadd.f32 %v1190, %v1259
    %v1261 = vpop.f32.mrb[0].mxu0
    %1262 = vdwg.mxu0
    %1263 = vmatprep.subr.mxu0 0.0
    %1264 = vmatpush1.msra.mxu0 %v156
    %1265 = vmatprep.subr.mxu0 0.0
    %1266 = vmatpush1.msra.mxu0 %v157
    %1267 = vmatprep.subr.mxu0 0.0
    %1268 = vmatpush1.msra.mxu0 %v158
    %1269 = vmatprep.subr.mxu0 0.0
    %1270 = vmatpush1.msra.mxu0 %v159
    %1271 = vmatprep.subr.mxu0 0.0
    %1272 = vmatpush1.msra.mxu0 %v160
    %1273 = vmatprep.subr.mxu0 0.0
    %1274 = vmatpush1.msra.mxu0 %v161
    %1275 = vmatprep.subr.mxu0 0.0
    %1276 = vmatpush1.msra.mxu0 %v162
    %1277 = vmatprep.subr.mxu0 0.0
    %1278 = vmatpush1.msra.mxu0 %v163
    %1279 = vmatprep.subr.mxu0 0.0
    %1280 = vmatpush1.msra.mxu0 %v164
    %1281 = vmatprep.subr.mxu0 0.0
    %1282 = vmatpush1.msra.mxu0 %v165
    %1283 = vmatprep.subr.mxu0 0.0
    %1284 = vmatpush1.msra.mxu0 %v166
    %1285 = vmatprep.subr.mxu0 0.0
    %1286 = vmatpush1.msra.mxu0 %v167
    %1287 = vmatprep.subr.mxu0 0.0
    %1288 = vmatpush1.msra.mxu0 %v168
    %1289 = vmatprep.subr.mxu0 0.0
    %1290 = vmatpush1.msra.mxu0 %v169
    %1291 = vmatprep.subr.mxu0 0.0
    %1292 = vmatpush1.msra.mxu0 %v170
    %1293 = vmatprep.subr.mxu0 0.0
    %1294 = vmatpush1.msra.mxu0 %v171
    %1295 = vmatprep.subr.mxu0 0.0
    %1296 = vmatpush1.msra.mxu0 %v172
    %1297 = vmatprep.subr.mxu0 0.0
    %1298 = vmatpush1.msra.mxu0 %v173
    %1299 = vmatprep.subr.mxu0 0.0
    %1300 = vmatpush1.msra.mxu0 %v174
    %1301 = vmatprep.subr.mxu0 0.0
    %1302 = vmatpush1.msra.mxu0 %v175
    %1303 = vmatprep.subr.mxu0 0.0
    %1304 = vmatpush1.msra.mxu0 %v176
    %1305 = vmatprep.subr.mxu0 0.0
    %1306 = vmatpush1.msra.mxu0 %v177
    %1307 = vmatprep.subr.mxu0 0.0
    %1308 = vmatpush1.msra.mxu0 %v178
    %1309 = vmatprep.subr.mxu0 0.0
    %1310 = vmatpush1.msra.mxu0 %v179
    %1311 = vmatprep.subr.mxu0 0.0
    %1312 = vmatpush1.msra.mxu0 %v180
    %1313 = vmatprep.subr.mxu0 0.0
    %1314 = vmatpush1.msra.mxu0 %v181
    %1315 = vmatprep.subr.mxu0 0.0
    %1316 = vmatpush1.msra.mxu0 %v182
    %1317 = vmatprep.subr.mxu0 0.0
    %1318 = vmatpush1.msra.mxu0 %v183
    %1319 = vmatprep.subr.mxu0 0.0
    %1320 = vmatpush1.msra.mxu0 %v184
    %1321 = vmatprep.subr.mxu0 0.0
    %1322 = vmatpush1.msra.mxu0 %v185
    %1323 = vmatprep.subr.mxu0 0.0
    %1324 = vmatpush1.msra.mxu0 %v186
    %1325 = vmatprep.subr.mxu0 0.0
    %1326 = vmatpush1.msra.mxu0 %v187
    %1327 = vmatprep.mubr.f32.mxu0 %v966
    %1328 = vmatmul.mubr.f32.gmra.mrb[0].mxu0 %v952
    %v1329 = vpop.f32.mrb[0].mxu0
    %v1330 = vadd.f32 %v1260, %v1329
    %v1331 = vpop.f32.mrb[0].mxu0
    %1332 = vdwg.mxu0
    %1333 = vmatprep.subr.mxu0 0.0
    %1334 = vmatpush1.msra.mxu0 %v188
    %1335 = vmatprep.subr.mxu0 0.0
    %1336 = vmatpush1.msra.mxu0 %v189
    %1337 = vmatprep.subr.mxu0 0.0
    %1338 = vmatpush1.msra.mxu0 %v190
    %1339 = vmatprep.subr.mxu0 0.0
    %1340 = vmatpush1.msra.mxu0 %v191
    %1341 = vmatprep.subr.mxu0 0.0
    %1342 = vmatpush1.msra.mxu0 %v192
    %1343 = vmatprep.subr.mxu0 0.0
    %1344 = vmatpush1.msra.mxu0 %v193
    %1345 = vmatprep.subr.mxu0 0.0
    %1346 = vmatpush1.msra.mxu0 %v194
    %1347 = vmatprep.subr.mxu0 0.0
    %1348 = vmatpush1.msra.mxu0 %v195
    %1349 = vmatprep.subr.mxu0 0.0
    %1350 = vmatpush1.msra.mxu0 %v196
    %1351 = vmatprep.subr.mxu0 0.0
    %1352 = vmatpush1.msra.mxu0 %v197
    %1353 = vmatprep.subr.mxu0 0.0
    %1354 = vmatpush1.msra.mxu0 %v198
    %1355 = vmatprep.subr.mxu0 0.0
    %1356 = vmatpush1.msra.mxu0 %v199
    %1357 = vmatprep.subr.mxu0 0.0
    %1358 = vmatpush1.msra.mxu0 %v200
    %1359 = vmatprep.subr.mxu0 0.0
    %1360 = vmatpush1.msra.mxu0 %v201
    %1361 = vmatprep.subr.mxu0 0.0
    %1362 = vmatpush1.msra.mxu0 %v202
    %1363 = vmatprep.subr.mxu0 0.0
    %1364 = vmatpush1.msra.mxu0 %v203
    %1365 = vmatprep.subr.mxu0 0.0
    %1366 = vmatpush1.msra.mxu0 %v204
    %1367 = vmatprep.subr.mxu0 0.0
    %1368 = vmatpush1.msra.mxu0 %v205
    %1369 = vmatprep.subr.mxu0 0.0
    %1370 = vmatpush1.msra.mxu0 %v206
    %1371 = vmatprep.subr.mxu0 0.0
    %1372 = vmatpush1.msra.mxu0 %v207
    %1373 = vmatprep.subr.mxu0 0.0
    %1374 = vmatpush1.msra.mxu0 %v208
    %1375 = vmatprep.subr.mxu0 0.0
    %1376 = vmatpush1.msra.mxu0 %v209
    %1377 = vmatprep.subr.mxu0 0.0
    %1378 = vmatpush1.msra.mxu0 %v210
    %1379 = vmatprep.subr.mxu0 0.0
    %1380 = vmatpush1.msra.mxu0 %v211
    %1381 = vmatprep.subr.mxu0 0.0
    %1382 = vmatpush1.msra.mxu0 %v212
    %1383 = vmatprep.subr.mxu0 0.0
    %1384 = vmatpush1.msra.mxu0 %v213
    %1385 = vmatprep.subr.mxu0 0.0
    %1386 = vmatpush1.msra.mxu0 %v214
    %1387 = vmatprep.subr.mxu0 0.0
    %1388 = vmatpush1.msra.mxu0 %v215
    %1389 = vmatprep.subr.mxu0 0.0
    %1390 = vmatpush1.msra.mxu0 %v216
    %1391 = vmatprep.subr.mxu0 0.0
    %1392 = vmatpush1.msra.mxu0 %v217
    %1393 = vmatprep.subr.mxu0 0.0
    %1394 = vmatpush1.msra.mxu0 %v218
    %1395 = vmatprep.subr.mxu0 0.0
    %1396 = vmatpush1.msra.mxu0 %v219
    %1397 = vmatprep.mubr.f32.mxu0 %v968
    %1398 = vmatmul.mubr.f32.gmra.mrb[0].mxu0 %v967
    %v1399 = vpop.f32.mrb[0].mxu0
    %v1400 = vadd.f32 %v1330, %v1399
    %v1401 = vpop.f32.mrb[0].mxu0
    %1402 = vdwg.mxu0
    %1403 = vmatprep.subr.mxu0 0.0
    %1404 = vmatpush1.msra.mxu0 %v220
    %1405 = vmatprep.subr.mxu0 0.0
    %1406 = vmatpush1.msra.mxu0 %v221
    %1407 = vmatprep.subr.mxu0 0.0
    %1408 = vmatpush1.msra.mxu0 %v222
    %1409 = vmatprep.subr.mxu0 0.0
    %1410 = vmatpush1.msra.mxu0 %v223
    %1411 = vmatprep.subr.mxu0 0.0
    %1412 = vmatpush1.msra.mxu0 %v224
    %1413 = vmatprep.subr.mxu0 0.0
    %1414 = vmatpush1.msra.mxu0 %v225
    %1415 = vmatprep.subr.mxu0 0.0
    %1416 = vmatpush1.msra.mxu0 %v226
    %1417 = vmatprep.subr.mxu0 0.0
    %1418 = vmatpush1.msra.mxu0 %v227
    %1419 = vmatprep.subr.mxu0 0.0
    %1420 = vmatpush1.msra.mxu0 %v228
    %1421 = vmatprep.subr.mxu0 0.0
    %1422 = vmatpush1.msra.mxu0 %v229
    %1423 = vmatprep.subr.mxu0 0.0
    %1424 = vmatpush1.msra.mxu0 %v230
    %1425 = vmatprep.subr.mxu0 0.0
    %1426 = vmatpush1.msra.mxu0 %v231
    %1427 = vmatprep.subr.mxu0 0.0
    %1428 = vmatpush1.msra.mxu0 %v366
    %1429 = vmatprep.subr.mxu0 0.0
    %1430 = vmatpush1.msra.mxu0 0.0
    %1431 = vmatprep.subr.mxu0 0.0
    %1432 = vmatpush1.msra.mxu0 0.0
    %1433 = vmatprep.subr.mxu0 0.0
    %1434 = vmatpush1.msra.mxu0 0.0
    %1435 = vmatprep.subr.mxu0 0.0
    %1436 = vmatpush1.msra.mxu0 0.0
    %1437 = vmatprep.subr.mxu0 0.0
    %1438 = vmatpush1.msra.mxu0 0.0
    %1439 = vmatprep.subr.mxu0 0.0
    %1440 = vmatpush1.msra.mxu0 0.0
    %1441 = vmatprep.subr.mxu0 0.0
    %1442 = vmatpush1.msra.mxu0 0.0
    %1443 = vmatprep.subr.mxu0 0.0
    %1444 = vmatpush1.msra.mxu0 0.0
    %1445 = vmatprep.subr.mxu0 0.0
    %1446 = vmatpush1.msra.mxu0 0.0
    %1447 = vmatprep.subr.mxu0 0.0
    %1448 = vmatpush1.msra.mxu0 0.0
    %1449 = vmatprep.subr.mxu0 0.0
    %1450 = vmatpush1.msra.mxu0 0.0
    %1451 = vmatprep.subr.mxu0 0.0
    %1452 = vmatpush1.msra.mxu0 0.0
    %1453 = vmatprep.subr.mxu0 0.0
    %1454 = vmatpush1.msra.mxu0 0.0
    %1455 = vmatprep.subr.mxu0 0.0
    %1456 = vmatpush1.msra.mxu0 0.0
    %1457 = vmatprep.subr.mxu0 0.0
    %1458 = vmatpush1.msra.mxu0 0.0
    %1459 = vmatprep.subr.mxu0 0.0
    %1460 = vmatpush1.msra.mxu0 0.0
    %1461 = vmatprep.subr.mxu0 0.0
    %1462 = vmatpush1.msra.mxu0 0.0
    %1463 = vmatprep.subr.mxu0 0.0
    %1464 = vmatpush1.msra.mxu0 0.0
    %1465 = vmatprep.subr.mxu0 0.0
    %1466 = vmatpush1.msra.mxu0 0.0
    %1467 = vmatprep.mubr.f32.mxu0 0.0
    %1468 = vmatmul.mubr.f32.gmra.mrb[0].mxu0 %v981
    %v1469 = vpop.f32.mrb[0].mxu0
    %v1470 = vadd.f32 %v1400, %v1469
    %v1471 = vpop.f32.mrb[0].mxu0
    %1472 = vdwg.mxu0
    %s1473 = scalar_lea.vmem %s3, 2
    %1474 = vst [vmem:[%s1473] sm:$0x3] %v1470
    %s1475 = scalar_lea.vmem %s0, 2
    %v1476 = vld [vmem:[%s1475] ss:$8 sm:$0xf]
    %v1477 = vld [vmem:[%s1475] ss:$8 sm:$0xf0]
    %v1478 = vor.u32 %v1476, %v1477
    %s1479 = scalar_lea.vmem %s0, 66
    %v1480 = vld [vmem:[%s1479] ss:$8 sm:$0xf]
    %v1481 = vld [vmem:[%s1479] ss:$8 sm:$0x10]
    %v1482 = vor.u32 %v1480, %v1481
    %s1483 = scalar_lea.vmem %s0, 106
    %v1484 = vld [vmem:[%s1483] ss:$8 sm:$0xf]
    %v1485 = vld [vmem:[%s1483] ss:$8 sm:$0xf0]
    %v1486 = vor.u32 %v1484, %v1485
    %s1487 = scalar_lea.vmem %s0, 170
    %v1488 = vld [vmem:[%s1487] ss:$8 sm:$0xf]
    %v1489 = vld [vmem:[%s1487] ss:$8 sm:$0x10]
    %v1490 = vor.u32 %v1488, %v1489
    %v1495 = vcombine.low %v1478, %v1486
    %v1496 = vcombine.high %v1478, %v1486
    %v1498 = vunpack.c.l.s4 1966171168
    %v1499 = vunpack.c.0.s8 %v1498
    %v1500 = vlaneseq
    %v1501 = vshrl.u32 %v1500, 7
    %v1502 = vsub.s32 %v1499, %v1501
    %v1503 = vrot.slane %v1495, %v1502
    %v1505 = vunpack.c.l.s4 1966171168
    %v1506 = vunpack.c.0.s8 %v1505
    %v1507 = vlaneseq
    %v1508 = vshrl.u32 %v1507, 7
    %v1509 = vsub.s32 %v1506, %v1508
    %v1510 = vrot.slane %v1496, %v1509
    %v1511 = vcombine.high %v1503, %v1503
    %v1512 = vcombine.high %v1510, %v1510
    %v1514 = vunpack.c.l.s4 1966171168
    %v1515 = vunpack.c.0.s8 %v1514
    %v1516 = vlaneseq
    %v1517 = vshrl.u32 %v1516, 7
    %v1518 = vsub.s32 %v1515, %v1517
    %v1519 = vrot.slane %v1503, %v1518
    %v1521 = vunpack.c.l.s4 1966171168
    %v1522 = vunpack.c.0.s8 %v1521
    %v1523 = vlaneseq
    %v1524 = vshrl.u32 %v1523, 7
    %v1525 = vsub.s32 %v1522, %v1524
    %v1526 = vrot.slane %v1510, %v1525
    %v1528 = vunpack.c.l.s4 1966171168
    %v1529 = vunpack.c.0.s8 %v1528
    %v1530 = vlaneseq
    %v1531 = vshrl.u32 %v1530, 7
    %v1532 = vsub.s32 %v1529, %v1531
    %v1533 = vrot.slane %v1511, %v1532
    %v1535 = vunpack.c.l.s4 1966171168
    %v1536 = vunpack.c.0.s8 %v1535
    %v1537 = vlaneseq
    %v1538 = vshrl.u32 %v1537, 7
    %v1539 = vsub.s32 %v1536, %v1538
    %v1540 = vrot.slane %v1512, %v1539
    %v1541 = vcombine.high %v1519, %v1519
    %v1542 = vcombine.high %v1526, %v1526
    %v1543 = vcombine.high %v1533, %v1533
    %v1544 = vcombine.high %v1540, %v1540
    %v1545 = vcombine.low %v1482, %v1490
    %v1546 = vcombine.high %v1482, %v1490
    %v1548 = vunpack.c.l.s4 1966171168
    %v1549 = vunpack.c.0.s8 %v1548
    %v1550 = vlaneseq
    %v1551 = vshrl.u32 %v1550, 7
    %v1552 = vsub.s32 %v1549, %v1551
    %v1553 = vrot.slane %v1545, %v1552
    %v1555 = vunpack.c.l.s4 1966171168
    %v1556 = vunpack.c.0.s8 %v1555
    %v1557 = vlaneseq
    %v1558 = vshrl.u32 %v1557, 7
    %v1559 = vsub.s32 %v1556, %v1558
    %v1560 = vrot.slane %v1546, %v1559
    %v1561 = vcombine.high %v1553, %v1553
    %v1563 = vunpack.c.l.s4 1966171168
    %v1564 = vunpack.c.0.s8 %v1563
    %v1565 = vlaneseq
    %v1566 = vshrl.u32 %v1565, 7
    %v1567 = vsub.s32 %v1564, %v1566
    %v1568 = vrot.slane %v1553, %v1567
    %v1570 = vunpack.c.l.s4 1966171168
    %v1571 = vunpack.c.0.s8 %v1570
    %v1572 = vlaneseq
    %v1573 = vshrl.u32 %v1572, 7
    %v1574 = vsub.s32 %v1571, %v1573
    %v1575 = vrot.slane %v1560, %v1574
    %v1577 = vunpack.c.l.s4 1966171168
    %v1578 = vunpack.c.0.s8 %v1577
    %v1579 = vlaneseq
    %v1580 = vshrl.u32 %v1579, 7
    %v1581 = vsub.s32 %v1578, %v1580
    %v1582 = vrot.slane %v1561, %v1581
    %v1583 = vcombine.high %v1568, %v1568
    %v1584 = vcombine.high %v1582, %v1582
    %v1597 = vsel %vm361, %v1575, 0
    %1599 = vmatprep.subr.mxu0 0.0
    %1600 = vmatpush1.msra.mxu0 %v28
    %1601 = vmatprep.subr.mxu0 0.0
    %1602 = vmatpush1.msra.mxu0 %v29
    %1603 = vmatprep.subr.mxu0 0.0
    %1604 = vmatpush1.msra.mxu0 %v30
    %1605 = vmatprep.subr.mxu0 0.0
    %1606 = vmatpush1.msra.mxu0 %v31
    %1607 = vmatprep.subr.mxu0 0.0
    %1608 = vmatpush1.msra.mxu0 %v32
    %1609 = vmatprep.subr.mxu0 0.0
    %1610 = vmatpush1.msra.mxu0 %v33
    %1611 = vmatprep.subr.mxu0 0.0
    %1612 = vmatpush1.msra.mxu0 %v34
    %1613 = vmatprep.subr.mxu0 0.0
    %1614 = vmatpush1.msra.mxu0 %v35
    %1615 = vmatprep.subr.mxu0 0.0
    %1616 = vmatpush1.msra.mxu0 %v36
    %1617 = vmatprep.subr.mxu0 0.0
    %1618 = vmatpush1.msra.mxu0 %v37
    %1619 = vmatprep.subr.mxu0 0.0
    %1620 = vmatpush1.msra.mxu0 %v38
    %1621 = vmatprep.subr.mxu0 0.0
    %1622 = vmatpush1.msra.mxu0 %v39
    %1623 = vmatprep.subr.mxu0 0.0
    %1624 = vmatpush1.msra.mxu0 %v40
    %1625 = vmatprep.subr.mxu0 0.0
    %1626 = vmatpush1.msra.mxu0 %v41
    %1627 = vmatprep.subr.mxu0 0.0
    %1628 = vmatpush1.msra.mxu0 %v42
    %1629 = vmatprep.subr.mxu0 0.0
    %1630 = vmatpush1.msra.mxu0 %v43
    %1631 = vmatprep.subr.mxu0 0.0
    %1632 = vmatpush1.msra.mxu0 %v44
    %1633 = vmatprep.subr.mxu0 0.0
    %1634 = vmatpush1.msra.mxu0 %v45
    %1635 = vmatprep.subr.mxu0 0.0
    %1636 = vmatpush1.msra.mxu0 %v46
    %1637 = vmatprep.subr.mxu0 0.0
    %1638 = vmatpush1.msra.mxu0 %v47
    %1639 = vmatprep.subr.mxu0 0.0
    %1640 = vmatpush1.msra.mxu0 %v48
    %1641 = vmatprep.subr.mxu0 0.0
    %1642 = vmatpush1.msra.mxu0 %v49
    %1643 = vmatprep.subr.mxu0 0.0
    %1644 = vmatpush1.msra.mxu0 %v50
    %1645 = vmatprep.subr.mxu0 0.0
    %1646 = vmatpush1.msra.mxu0 %v51
    %1647 = vmatprep.subr.mxu0 0.0
    %1648 = vmatpush1.msra.mxu0 %v52
    %1649 = vmatprep.subr.mxu0 0.0
    %1650 = vmatpush1.msra.mxu0 %v53
    %1651 = vmatprep.subr.mxu0 0.0
    %1652 = vmatpush1.msra.mxu0 %v54
    %1653 = vmatprep.subr.mxu0 0.0
    %1654 = vmatpush1.msra.mxu0 %v55
    %1655 = vmatprep.subr.mxu0 0.0
    %1656 = vmatpush1.msra.mxu0 %v56
    %1657 = vmatprep.subr.mxu0 0.0
    %1658 = vmatpush1.msra.mxu0 %v57
    %1659 = vmatprep.subr.mxu0 0.0
    %1660 = vmatpush1.msra.mxu0 %v58
    %1661 = vmatprep.subr.mxu0 0.0
    %1662 = vmatpush1.msra.mxu0 %v59
    %1663 = vmatprep.mubr.f32.mxu0 %v1533
    %1664 = vmatmul.mubr.f32.gmra.mrb[0].mxu0 %v1519
    %v1665 = vpop.f32.mrb[0].mxu0
    %v1666 = vadd.f32 %v253, %v1665
    %v1667 = vpop.f32.mrb[0].mxu0
    %1668 = vdwg.mxu0
    %1669 = vmatprep.subr.mxu0 0.0
    %1670 = vmatpush1.msra.mxu0 %v60
    %1671 = vmatprep.subr.mxu0 0.0
    %1672 = vmatpush1.msra.mxu0 %v61
    %1673 = vmatprep.subr.mxu0 0.0
    %1674 = vmatpush1.msra.mxu0 %v62
    %1675 = vmatprep.subr.mxu0 0.0
    %1676 = vmatpush1.msra.mxu0 %v63
    %1677 = vmatprep.subr.mxu0 0.0
    %1678 = vmatpush1.msra.mxu0 %v64
    %1679 = vmatprep.subr.mxu0 0.0
    %1680 = vmatpush1.msra.mxu0 %v65
    %1681 = vmatprep.subr.mxu0 0.0
    %1682 = vmatpush1.msra.mxu0 %v66
    %1683 = vmatprep.subr.mxu0 0.0
    %1684 = vmatpush1.msra.mxu0 %v67
    %1685 = vmatprep.subr.mxu0 0.0
    %1686 = vmatpush1.msra.mxu0 %v68
    %1687 = vmatprep.subr.mxu0 0.0
    %1688 = vmatpush1.msra.mxu0 %v69
    %1689 = vmatprep.subr.mxu0 0.0
    %1690 = vmatpush1.msra.mxu0 %v70
    %1691 = vmatprep.subr.mxu0 0.0
    %1692 = vmatpush1.msra.mxu0 %v71
    %1693 = vmatprep.subr.mxu0 0.0
    %1694 = vmatpush1.msra.mxu0 %v72
    %1695 = vmatprep.subr.mxu0 0.0
    %1696 = vmatpush1.msra.mxu0 %v73
    %1697 = vmatprep.subr.mxu0 0.0
    %1698 = vmatpush1.msra.mxu0 %v74
    %1699 = vmatprep.subr.mxu0 0.0
    %1700 = vmatpush1.msra.mxu0 %v75
    %1701 = vmatprep.subr.mxu0 0.0
    %1702 = vmatpush1.msra.mxu0 %v76
    %1703 = vmatprep.subr.mxu0 0.0
    %1704 = vmatpush1.msra.mxu0 %v77
    %1705 = vmatprep.subr.mxu0 0.0
    %1706 = vmatpush1.msra.mxu0 %v78
    %1707 = vmatprep.subr.mxu0 0.0
    %1708 = vmatpush1.msra.mxu0 %v79
    %1709 = vmatprep.subr.mxu0 0.0
    %1710 = vmatpush1.msra.mxu0 %v80
    %1711 = vmatprep.subr.mxu0 0.0
    %1712 = vmatpush1.msra.mxu0 %v81
    %1713 = vmatprep.subr.mxu0 0.0
    %1714 = vmatpush1.msra.mxu0 %v82
    %1715 = vmatprep.subr.mxu0 0.0
    %1716 = vmatpush1.msra.mxu0 %v83
    %1717 = vmatprep.subr.mxu0 0.0
    %1718 = vmatpush1.msra.mxu0 %v84
    %1719 = vmatprep.subr.mxu0 0.0
    %1720 = vmatpush1.msra.mxu0 %v85
    %1721 = vmatprep.subr.mxu0 0.0
    %1722 = vmatpush1.msra.mxu0 %v86
    %1723 = vmatprep.subr.mxu0 0.0
    %1724 = vmatpush1.msra.mxu0 %v87
    %1725 = vmatprep.subr.mxu0 0.0
    %1726 = vmatpush1.msra.mxu0 %v88
    %1727 = vmatprep.subr.mxu0 0.0
    %1728 = vmatpush1.msra.mxu0 %v89
    %1729 = vmatprep.subr.mxu0 0.0
    %1730 = vmatpush1.msra.mxu0 %v90
    %1731 = vmatprep.subr.mxu0 0.0
    %1732 = vmatpush1.msra.mxu0 %v91
    %1733 = vmatprep.mubr.f32.mxu0 %v1543
    %1734 = vmatmul.mubr.f32.gmra.mrb[0].mxu0 %v1541
    %v1735 = vpop.f32.mrb[0].mxu0
    %v1736 = vadd.f32 %v1666, %v1735
    %v1737 = vpop.f32.mrb[0].mxu0
    %1738 = vdwg.mxu0
    %1739 = vmatprep.subr.mxu0 0.0
    %1740 = vmatpush1.msra.mxu0 %v92
    %1741 = vmatprep.subr.mxu0 0.0
    %1742 = vmatpush1.msra.mxu0 %v93
    %1743 = vmatprep.subr.mxu0 0.0
    %1744 = vmatpush1.msra.mxu0 %v94
    %1745 = vmatprep.subr.mxu0 0.0
    %1746 = vmatpush1.msra.mxu0 %v95
    %1747 = vmatprep.subr.mxu0 0.0
    %1748 = vmatpush1.msra.mxu0 %v96
    %1749 = vmatprep.subr.mxu0 0.0
    %1750 = vmatpush1.msra.mxu0 %v97
    %1751 = vmatprep.subr.mxu0 0.0
    %1752 = vmatpush1.msra.mxu0 %v98
    %1753 = vmatprep.subr.mxu0 0.0
    %1754 = vmatpush1.msra.mxu0 %v99
    %1755 = vmatprep.subr.mxu0 0.0
    %1756 = vmatpush1.msra.mxu0 %v100
    %1757 = vmatprep.subr.mxu0 0.0
    %1758 = vmatpush1.msra.mxu0 %v101
    %1759 = vmatprep.subr.mxu0 0.0
    %1760 = vmatpush1.msra.mxu0 %v102
    %1761 = vmatprep.subr.mxu0 0.0
    %1762 = vmatpush1.msra.mxu0 %v103
    %1763 = vmatprep.subr.mxu0 0.0
    %1764 = vmatpush1.msra.mxu0 %v104
    %1765 = vmatprep.subr.mxu0 0.0
    %1766 = vmatpush1.msra.mxu0 %v105
    %1767 = vmatprep.subr.mxu0 0.0
    %1768 = vmatpush1.msra.mxu0 %v106
    %1769 = vmatprep.subr.mxu0 0.0
    %1770 = vmatpush1.msra.mxu0 %v107
    %1771 = vmatprep.subr.mxu0 0.0
    %1772 = vmatpush1.msra.mxu0 %v108
    %1773 = vmatprep.subr.mxu0 0.0
    %1774 = vmatpush1.msra.mxu0 %v109
    %1775 = vmatprep.subr.mxu0 0.0
    %1776 = vmatpush1.msra.mxu0 %v110
    %1777 = vmatprep.subr.mxu0 0.0
    %1778 = vmatpush1.msra.mxu0 %v111
    %1779 = vmatprep.subr.mxu0 0.0
    %1780 = vmatpush1.msra.mxu0 %v112
    %1781 = vmatprep.subr.mxu0 0.0
    %1782 = vmatpush1.msra.mxu0 %v113
    %1783 = vmatprep.subr.mxu0 0.0
    %1784 = vmatpush1.msra.mxu0 %v114
    %1785 = vmatprep.subr.mxu0 0.0
    %1786 = vmatpush1.msra.mxu0 %v115
    %1787 = vmatprep.subr.mxu0 0.0
    %1788 = vmatpush1.msra.mxu0 %v116
    %1789 = vmatprep.subr.mxu0 0.0
    %1790 = vmatpush1.msra.mxu0 %v117
    %1791 = vmatprep.subr.mxu0 0.0
    %1792 = vmatpush1.msra.mxu0 %v118
    %1793 = vmatprep.subr.mxu0 0.0
    %1794 = vmatpush1.msra.mxu0 %v119
    %1795 = vmatprep.subr.mxu0 0.0
    %1796 = vmatpush1.msra.mxu0 %v120
    %1797 = vmatprep.subr.mxu0 0.0
    %1798 = vmatpush1.msra.mxu0 %v121
    %1799 = vmatprep.subr.mxu0 0.0
    %1800 = vmatpush1.msra.mxu0 %v122
    %1801 = vmatprep.subr.mxu0 0.0
    %1802 = vmatpush1.msra.mxu0 %v123
    %1803 = vmatprep.mubr.f32.mxu0 %v1540
    %1804 = vmatmul.mubr.f32.gmra.mrb[0].mxu0 %v1526
    %v1805 = vpop.f32.mrb[0].mxu0
    %v1806 = vadd.f32 %v1736, %v1805
    %v1807 = vpop.f32.mrb[0].mxu0
    %1808 = vdwg.mxu0
    %1809 = vmatprep.subr.mxu0 0.0
    %1810 = vmatpush1.msra.mxu0 %v124
    %1811 = vmatprep.subr.mxu0 0.0
    %1812 = vmatpush1.msra.mxu0 %v125
    %1813 = vmatprep.subr.mxu0 0.0
    %1814 = vmatpush1.msra.mxu0 %v126
    %1815 = vmatprep.subr.mxu0 0.0
    %1816 = vmatpush1.msra.mxu0 %v127
    %1817 = vmatprep.subr.mxu0 0.0
    %1818 = vmatpush1.msra.mxu0 %v128
    %1819 = vmatprep.subr.mxu0 0.0
    %1820 = vmatpush1.msra.mxu0 %v129
    %1821 = vmatprep.subr.mxu0 0.0
    %1822 = vmatpush1.msra.mxu0 %v130
    %1823 = vmatprep.subr.mxu0 0.0
    %1824 = vmatpush1.msra.mxu0 %v131
    %1825 = vmatprep.subr.mxu0 0.0
    %1826 = vmatpush1.msra.mxu0 %v132
    %1827 = vmatprep.subr.mxu0 0.0
    %1828 = vmatpush1.msra.mxu0 %v133
    %1829 = vmatprep.subr.mxu0 0.0
    %1830 = vmatpush1.msra.mxu0 %v134
    %1831 = vmatprep.subr.mxu0 0.0
    %1832 = vmatpush1.msra.mxu0 %v135
    %1833 = vmatprep.subr.mxu0 0.0
    %1834 = vmatpush1.msra.mxu0 %v136
    %1835 = vmatprep.subr.mxu0 0.0
    %1836 = vmatpush1.msra.mxu0 %v137
    %1837 = vmatprep.subr.mxu0 0.0
    %1838 = vmatpush1.msra.mxu0 %v138
    %1839 = vmatprep.subr.mxu0 0.0
    %1840 = vmatpush1.msra.mxu0 %v139
    %1841 = vmatprep.subr.mxu0 0.0
    %1842 = vmatpush1.msra.mxu0 %v140
    %1843 = vmatprep.subr.mxu0 0.0
    %1844 = vmatpush1.msra.mxu0 %v141
    %1845 = vmatprep.subr.mxu0 0.0
    %1846 = vmatpush1.msra.mxu0 %v142
    %1847 = vmatprep.subr.mxu0 0.0
    %1848 = vmatpush1.msra.mxu0 %v143
    %1849 = vmatprep.subr.mxu0 0.0
    %1850 = vmatpush1.msra.mxu0 %v144
    %1851 = vmatprep.subr.mxu0 0.0
    %1852 = vmatpush1.msra.mxu0 %v145
    %1853 = vmatprep.subr.mxu0 0.0
    %1854 = vmatpush1.msra.mxu0 %v146
    %1855 = vmatprep.subr.mxu0 0.0
    %1856 = vmatpush1.msra.mxu0 %v147
    %1857 = vmatprep.subr.mxu0 0.0
    %1858 = vmatpush1.msra.mxu0 %v148
    %1859 = vmatprep.subr.mxu0 0.0
    %1860 = vmatpush1.msra.mxu0 %v149
    %1861 = vmatprep.subr.mxu0 0.0
    %1862 = vmatpush1.msra.mxu0 %v150
    %1863 = vmatprep.subr.mxu0 0.0
    %1864 = vmatpush1.msra.mxu0 %v151
    %1865 = vmatprep.subr.mxu0 0.0
    %1866 = vmatpush1.msra.mxu0 %v152
    %1867 = vmatprep.subr.mxu0 0.0
    %1868 = vmatpush1.msra.mxu0 %v153
    %1869 = vmatprep.subr.mxu0 0.0
    %1870 = vmatpush1.msra.mxu0 %v154
    %1871 = vmatprep.subr.mxu0 0.0
    %1872 = vmatpush1.msra.mxu0 %v155
    %1873 = vmatprep.mubr.f32.mxu0 %v1544
    %1874 = vmatmul.mubr.f32.gmra.mrb[0].mxu0 %v1542
    %v1875 = vpop.f32.mrb[0].mxu0
    %v1876 = vadd.f32 %v1806, %v1875
    %v1877 = vpop.f32.mrb[0].mxu0
    %1878 = vdwg.mxu0
    %1879 = vmatprep.subr.mxu0 0.0
    %1880 = vmatpush1.msra.mxu0 %v156
    %1881 = vmatprep.subr.mxu0 0.0
    %1882 = vmatpush1.msra.mxu0 %v157
    %1883 = vmatprep.subr.mxu0 0.0
    %1884 = vmatpush1.msra.mxu0 %v158
    %1885 = vmatprep.subr.mxu0 0.0
    %1886 = vmatpush1.msra.mxu0 %v159
    %1887 = vmatprep.subr.mxu0 0.0
    %1888 = vmatpush1.msra.mxu0 %v160
    %1889 = vmatprep.subr.mxu0 0.0
    %1890 = vmatpush1.msra.mxu0 %v161
    %1891 = vmatprep.subr.mxu0 0.0
    %1892 = vmatpush1.msra.mxu0 %v162
    %1893 = vmatprep.subr.mxu0 0.0
    %1894 = vmatpush1.msra.mxu0 %v163
    %1895 = vmatprep.subr.mxu0 0.0
    %1896 = vmatpush1.msra.mxu0 %v164
    %1897 = vmatprep.subr.mxu0 0.0
    %1898 = vmatpush1.msra.mxu0 %v165
    %1899 = vmatprep.subr.mxu0 0.0
    %1900 = vmatpush1.msra.mxu0 %v166
    %1901 = vmatprep.subr.mxu0 0.0
    %1902 = vmatpush1.msra.mxu0 %v167
    %1903 = vmatprep.subr.mxu0 0.0
    %1904 = vmatpush1.msra.mxu0 %v168
    %1905 = vmatprep.subr.mxu0 0.0
    %1906 = vmatpush1.msra.mxu0 %v169
    %1907 = vmatprep.subr.mxu0 0.0
    %1908 = vmatpush1.msra.mxu0 %v170
    %1909 = vmatprep.subr.mxu0 0.0
    %1910 = vmatpush1.msra.mxu0 %v171
    %1911 = vmatprep.subr.mxu0 0.0
    %1912 = vmatpush1.msra.mxu0 %v172
    %1913 = vmatprep.subr.mxu0 0.0
    %1914 = vmatpush1.msra.mxu0 %v173
    %1915 = vmatprep.subr.mxu0 0.0
    %1916 = vmatpush1.msra.mxu0 %v174
    %1917 = vmatprep.subr.mxu0 0.0
    %1918 = vmatpush1.msra.mxu0 %v175
    %1919 = vmatprep.subr.mxu0 0.0
    %1920 = vmatpush1.msra.mxu0 %v176
    %1921 = vmatprep.subr.mxu0 0.0
    %1922 = vmatpush1.msra.mxu0 %v177
    %1923 = vmatprep.subr.mxu0 0.0
    %1924 = vmatpush1.msra.mxu0 %v178
    %1925 = vmatprep.subr.mxu0 0.0
    %1926 = vmatpush1.msra.mxu0 %v179
    %1927 = vmatprep.subr.mxu0 0.0
    %1928 = vmatpush1.msra.mxu0 %v180
    %1929 = vmatprep.subr.mxu0 0.0
    %1930 = vmatpush1.msra.mxu0 %v181
    %1931 = vmatprep.subr.mxu0 0.0
    %1932 = vmatpush1.msra.mxu0 %v182
    %1933 = vmatprep.subr.mxu0 0.0
    %1934 = vmatpush1.msra.mxu0 %v183
    %1935 = vmatprep.subr.mxu0 0.0
    %1936 = vmatpush1.msra.mxu0 %v184
    %1937 = vmatprep.subr.mxu0 0.0
    %1938 = vmatpush1.msra.mxu0 %v185
    %1939 = vmatprep.subr.mxu0 0.0
    %1940 = vmatpush1.msra.mxu0 %v186
    %1941 = vmatprep.subr.mxu0 0.0
    %1942 = vmatpush1.msra.mxu0 %v187
    %1943 = vmatprep.mubr.f32.mxu0 %v1582
    %1944 = vmatmul.mubr.f32.gmra.mrb[0].mxu0 %v1568
    %v1945 = vpop.f32.mrb[0].mxu0
    %v1946 = vadd.f32 %v1876, %v1945
    %v1947 = vpop.f32.mrb[0].mxu0
    %1948 = vdwg.mxu0
    %1949 = vmatprep.subr.mxu0 0.0
    %1950 = vmatpush1.msra.mxu0 %v188
    %1951 = vmatprep.subr.mxu0 0.0
    %1952 = vmatpush1.msra.mxu0 %v189
    %1953 = vmatprep.subr.mxu0 0.0
    %1954 = vmatpush1.msra.mxu0 %v190
    %1955 = vmatprep.subr.mxu0 0.0
    %1956 = vmatpush1.msra.mxu0 %v191
    %1957 = vmatprep.subr.mxu0 0.0
    %1958 = vmatpush1.msra.mxu0 %v192
    %1959 = vmatprep.subr.mxu0 0.0
    %1960 = vmatpush1.msra.mxu0 %v193
    %1961 = vmatprep.subr.mxu0 0.0
    %1962 = vmatpush1.msra.mxu0 %v194
    %1963 = vmatprep.subr.mxu0 0.0
    %1964 = vmatpush1.msra.mxu0 %v195
    %1965 = vmatprep.subr.mxu0 0.0
    %1966 = vmatpush1.msra.mxu0 %v196
    %1967 = vmatprep.subr.mxu0 0.0
    %1968 = vmatpush1.msra.mxu0 %v197
    %1969 = vmatprep.subr.mxu0 0.0
    %1970 = vmatpush1.msra.mxu0 %v198
    %1971 = vmatprep.subr.mxu0 0.0
    %1972 = vmatpush1.msra.mxu0 %v199
    %1973 = vmatprep.subr.mxu0 0.0
    %1974 = vmatpush1.msra.mxu0 %v200
    %1975 = vmatprep.subr.mxu0 0.0
    %1976 = vmatpush1.msra.mxu0 %v201
    %1977 = vmatprep.subr.mxu0 0.0
    %1978 = vmatpush1.msra.mxu0 %v202
    %1979 = vmatprep.subr.mxu0 0.0
    %1980 = vmatpush1.msra.mxu0 %v203
    %1981 = vmatprep.subr.mxu0 0.0
    %1982 = vmatpush1.msra.mxu0 %v204
    %1983 = vmatprep.subr.mxu0 0.0
    %1984 = vmatpush1.msra.mxu0 %v205
    %1985 = vmatprep.subr.mxu0 0.0
    %1986 = vmatpush1.msra.mxu0 %v206
    %1987 = vmatprep.subr.mxu0 0.0
    %1988 = vmatpush1.msra.mxu0 %v207
    %1989 = vmatprep.subr.mxu0 0.0
    %1990 = vmatpush1.msra.mxu0 %v208
    %1991 = vmatprep.subr.mxu0 0.0
    %1992 = vmatpush1.msra.mxu0 %v209
    %1993 = vmatprep.subr.mxu0 0.0
    %1994 = vmatpush1.msra.mxu0 %v210
    %1995 = vmatprep.subr.mxu0 0.0
    %1996 = vmatpush1.msra.mxu0 %v211
    %1997 = vmatprep.subr.mxu0 0.0
    %1998 = vmatpush1.msra.mxu0 %v212
    %1999 = vmatprep.subr.mxu0 0.0
    %2000 = vmatpush1.msra.mxu0 %v213
    %2001 = vmatprep.subr.mxu0 0.0
    %2002 = vmatpush1.msra.mxu0 %v214
    %2003 = vmatprep.subr.mxu0 0.0
    %2004 = vmatpush1.msra.mxu0 %v215
    %2005 = vmatprep.subr.mxu0 0.0
    %2006 = vmatpush1.msra.mxu0 %v216
    %2007 = vmatprep.subr.mxu0 0.0
    %2008 = vmatpush1.msra.mxu0 %v217
    %2009 = vmatprep.subr.mxu0 0.0
    %2010 = vmatpush1.msra.mxu0 %v218
    %2011 = vmatprep.subr.mxu0 0.0
    %2012 = vmatpush1.msra.mxu0 %v219
    %2013 = vmatprep.mubr.f32.mxu0 %v1584
    %2014 = vmatmul.mubr.f32.gmra.mrb[0].mxu0 %v1583
    %v2015 = vpop.f32.mrb[0].mxu0
    %v2016 = vadd.f32 %v1946, %v2015
    %v2017 = vpop.f32.mrb[0].mxu0
    %2018 = vdwg.mxu0
    %2019 = vmatprep.subr.mxu0 0.0
    %2020 = vmatpush1.msra.mxu0 %v220
    %2021 = vmatprep.subr.mxu0 0.0
    %2022 = vmatpush1.msra.mxu0 %v221
    %2023 = vmatprep.subr.mxu0 0.0
    %2024 = vmatpush1.msra.mxu0 %v222
    %2025 = vmatprep.subr.mxu0 0.0
    %2026 = vmatpush1.msra.mxu0 %v223
    %2027 = vmatprep.subr.mxu0 0.0
    %2028 = vmatpush1.msra.mxu0 %v224
    %2029 = vmatprep.subr.mxu0 0.0
    %2030 = vmatpush1.msra.mxu0 %v225
    %2031 = vmatprep.subr.mxu0 0.0
    %2032 = vmatpush1.msra.mxu0 %v226
    %2033 = vmatprep.subr.mxu0 0.0
    %2034 = vmatpush1.msra.mxu0 %v227
    %2035 = vmatprep.subr.mxu0 0.0
    %2036 = vmatpush1.msra.mxu0 %v228
    %2037 = vmatprep.subr.mxu0 0.0
    %2038 = vmatpush1.msra.mxu0 %v229
    %2039 = vmatprep.subr.mxu0 0.0
    %2040 = vmatpush1.msra.mxu0 %v230
    %2041 = vmatprep.subr.mxu0 0.0
    %2042 = vmatpush1.msra.mxu0 %v231
    %2043 = vmatprep.subr.mxu0 0.0
    %2044 = vmatpush1.msra.mxu0 %v366
    %2045 = vmatprep.subr.mxu0 0.0
    %2046 = vmatpush1.msra.mxu0 0.0
    %2047 = vmatprep.subr.mxu0 0.0
    %2048 = vmatpush1.msra.mxu0 0.0
    %2049 = vmatprep.subr.mxu0 0.0
    %2050 = vmatpush1.msra.mxu0 0.0
    %2051 = vmatprep.subr.mxu0 0.0
    %2052 = vmatpush1.msra.mxu0 0.0
    %2053 = vmatprep.subr.mxu0 0.0
    %2054 = vmatpush1.msra.mxu0 0.0
    %2055 = vmatprep.subr.mxu0 0.0
    %2056 = vmatpush1.msra.mxu0 0.0
    %2057 = vmatprep.subr.mxu0 0.0
    %2058 = vmatpush1.msra.mxu0 0.0
    %2059 = vmatprep.subr.mxu0 0.0
    %2060 = vmatpush1.msra.mxu0 0.0
    %2061 = vmatprep.subr.mxu0 0.0
    %2062 = vmatpush1.msra.mxu0 0.0
    %2063 = vmatprep.subr.mxu0 0.0
    %2064 = vmatpush1.msra.mxu0 0.0
    %2065 = vmatprep.subr.mxu0 0.0
    %2066 = vmatpush1.msra.mxu0 0.0
    %2067 = vmatprep.subr.mxu0 0.0
    %2068 = vmatpush1.msra.mxu0 0.0
    %2069 = vmatprep.subr.mxu0 0.0
    %2070 = vmatpush1.msra.mxu0 0.0
    %2071 = vmatprep.subr.mxu0 0.0
    %2072 = vmatpush1.msra.mxu0 0.0
    %2073 = vmatprep.subr.mxu0 0.0
    %2074 = vmatpush1.msra.mxu0 0.0
    %2075 = vmatprep.subr.mxu0 0.0
    %2076 = vmatpush1.msra.mxu0 0.0
    %2077 = vmatprep.subr.mxu0 0.0
    %2078 = vmatpush1.msra.mxu0 0.0
    %2079 = vmatprep.subr.mxu0 0.0
    %2080 = vmatpush1.msra.mxu0 0.0
    %2081 = vmatprep.subr.mxu0 0.0
    %2082 = vmatpush1.msra.mxu0 0.0
    %2083 = vmatprep.mubr.f32.mxu0 0.0
    %2084 = vmatmul.mubr.f32.gmra.mrb[0].mxu0 %v1597
    %v2085 = vpop.f32.mrb[0].mxu0
    %v2086 = vadd.f32 %v2016, %v2085
    %v2087 = vpop.f32.mrb[0].mxu0
    %2088 = vdwg.mxu0
    %s2089 = scalar_lea.vmem %s3, 4
    %2090 = vst [vmem:[%s2089] sm:$0x3] %v2086
    %s2091 = scalar_lea.vmem %s0, 3
    %v2092 = vld [vmem:[%s2091] ss:$8 sm:$0xf]
    %v2093 = vld [vmem:[%s2091] ss:$8 sm:$0xf0]
    %v2094 = vor.u32 %v2092, %v2093
    %s2095 = scalar_lea.vmem %s0, 67
    %v2096 = vld [vmem:[%s2095] ss:$8 sm:$0xf]
    %v2097 = vld [vmem:[%s2095] ss:$8 sm:$0x10]
    %v2098 = vor.u32 %v2096, %v2097
    %s2099 = scalar_lea.vmem %s0, 107
    %v2100 = vld [vmem:[%s2099] ss:$8 sm:$0xf]
    %v2101 = vld [vmem:[%s2099] ss:$8 sm:$0xf0]
    %v2102 = vor.u32 %v2100, %v2101
    %s2103 = scalar_lea.vmem %s0, 171
    %v2104 = vld [vmem:[%s2103] ss:$8 sm:$0xf]
    %v2105 = vld [vmem:[%s2103] ss:$8 sm:$0x10]
    %v2106 = vor.u32 %v2104, %v2105
    %v2111 = vcombine.low %v2094, %v2102
    %v2112 = vcombine.high %v2094, %v2102
    %v2114 = vunpack.c.l.s4 1966171168
    %v2115 = vunpack.c.0.s8 %v2114
    %v2116 = vlaneseq
    %v2117 = vshrl.u32 %v2116, 7
    %v2118 = vsub.s32 %v2115, %v2117
    %v2119 = vrot.slane %v2111, %v2118
    %v2121 = vunpack.c.l.s4 1966171168
    %v2122 = vunpack.c.0.s8 %v2121
    %v2123 = vlaneseq
    %v2124 = vshrl.u32 %v2123, 7
    %v2125 = vsub.s32 %v2122, %v2124
    %v2126 = vrot.slane %v2112, %v2125
    %v2127 = vcombine.high %v2119, %v2119
    %v2128 = vcombine.high %v2126, %v2126
    %v2130 = vunpack.c.l.s4 1966171168
    %v2131 = vunpack.c.0.s8 %v2130
    %v2132 = vlaneseq
    %v2133 = vshrl.u32 %v2132, 7
    %v2134 = vsub.s32 %v2131, %v2133
    %v2135 = vrot.slane %v2119, %v2134
    %v2137 = vunpack.c.l.s4 1966171168
    %v2138 = vunpack.c.0.s8 %v2137
    %v2139 = vlaneseq
    %v2140 = vshrl.u32 %v2139, 7
    %v2141 = vsub.s32 %v2138, %v2140
    %v2142 = vrot.slane %v2126, %v2141
    %v2144 = vunpack.c.l.s4 1966171168
    %v2145 = vunpack.c.0.s8 %v2144
    %v2146 = vlaneseq
    %v2147 = vshrl.u32 %v2146, 7
    %v2148 = vsub.s32 %v2145, %v2147
    %v2149 = vrot.slane %v2127, %v2148
    %v2151 = vunpack.c.l.s4 1966171168
    %v2152 = vunpack.c.0.s8 %v2151
    %v2153 = vlaneseq
    %v2154 = vshrl.u32 %v2153, 7
    %v2155 = vsub.s32 %v2152, %v2154
    %v2156 = vrot.slane %v2128, %v2155
    %v2157 = vcombine.high %v2135, %v2135
    %v2158 = vcombine.high %v2142, %v2142
    %v2159 = vcombine.high %v2149, %v2149
    %v2160 = vcombine.high %v2156, %v2156
    %v2161 = vcombine.low %v2098, %v2106
    %v2162 = vcombine.high %v2098, %v2106
    %v2164 = vunpack.c.l.s4 1966171168
    %v2165 = vunpack.c.0.s8 %v2164
    %v2166 = vlaneseq
    %v2167 = vshrl.u32 %v2166, 7
    %v2168 = vsub.s32 %v2165, %v2167
    %v2169 = vrot.slane %v2161, %v2168
    %v2171 = vunpack.c.l.s4 1966171168
    %v2172 = vunpack.c.0.s8 %v2171
    %v2173 = vlaneseq
    %v2174 = vshrl.u32 %v2173, 7
    %v2175 = vsub.s32 %v2172, %v2174
    %v2176 = vrot.slane %v2162, %v2175
    %v2177 = vcombine.high %v2169, %v2169
    %v2179 = vunpack.c.l.s4 1966171168
    %v2180 = vunpack.c.0.s8 %v2179
    %v2181 = vlaneseq
    %v2182 = vshrl.u32 %v2181, 7
    %v2183 = vsub.s32 %v2180, %v2182
    %v2184 = vrot.slane %v2169, %v2183
    %v2186 = vunpack.c.l.s4 1966171168
    %v2187 = vunpack.c.0.s8 %v2186
    %v2188 = vlaneseq
    %v2189 = vshrl.u32 %v2188, 7
    %v2190 = vsub.s32 %v2187, %v2189
    %v2191 = vrot.slane %v2176, %v2190
    %v2193 = vunpack.c.l.s4 1966171168
    %v2194 = vunpack.c.0.s8 %v2193
    %v2195 = vlaneseq
    %v2196 = vshrl.u32 %v2195, 7
    %v2197 = vsub.s32 %v2194, %v2196
    %v2198 = vrot.slane %v2177, %v2197
    %v2199 = vcombine.high %v2184, %v2184
    %v2200 = vcombine.high %v2198, %v2198
    %v2213 = vsel %vm361, %v2191, 0
    %2215 = vmatprep.subr.mxu0 0.0
    %2216 = vmatpush1.msra.mxu0 %v28
    %2217 = vmatprep.subr.mxu0 0.0
    %2218 = vmatpush1.msra.mxu0 %v29
    %2219 = vmatprep.subr.mxu0 0.0
    %2220 = vmatpush1.msra.mxu0 %v30
    %2221 = vmatprep.subr.mxu0 0.0
    %2222 = vmatpush1.msra.mxu0 %v31
    %2223 = vmatprep.subr.mxu0 0.0
    %2224 = vmatpush1.msra.mxu0 %v32
    %2225 = vmatprep.subr.mxu0 0.0
    %2226 = vmatpush1.msra.mxu0 %v33
    %2227 = vmatprep.subr.mxu0 0.0
    %2228 = vmatpush1.msra.mxu0 %v34
    %2229 = vmatprep.subr.mxu0 0.0
    %2230 = vmatpush1.msra.mxu0 %v35
    %2231 = vmatprep.subr.mxu0 0.0
    %2232 = vmatpush1.msra.mxu0 %v36
    %2233 = vmatprep.subr.mxu0 0.0
    %2234 = vmatpush1.msra.mxu0 %v37
    %2235 = vmatprep.subr.mxu0 0.0
    %2236 = vmatpush1.msra.mxu0 %v38
    %2237 = vmatprep.subr.mxu0 0.0
    %2238 = vmatpush1.msra.mxu0 %v39
    %2239 = vmatprep.subr.mxu0 0.0
    %2240 = vmatpush1.msra.mxu0 %v40
    %2241 = vmatprep.subr.mxu0 0.0
    %2242 = vmatpush1.msra.mxu0 %v41
    %2243 = vmatprep.subr.mxu0 0.0
    %2244 = vmatpush1.msra.mxu0 %v42
    %2245 = vmatprep.subr.mxu0 0.0
    %2246 = vmatpush1.msra.mxu0 %v43
    %2247 = vmatprep.subr.mxu0 0.0
    %2248 = vmatpush1.msra.mxu0 %v44
    %2249 = vmatprep.subr.mxu0 0.0
    %2250 = vmatpush1.msra.mxu0 %v45
    %2251 = vmatprep.subr.mxu0 0.0
    %2252 = vmatpush1.msra.mxu0 %v46
    %2253 = vmatprep.subr.mxu0 0.0
    %2254 = vmatpush1.msra.mxu0 %v47
    %2255 = vmatprep.subr.mxu0 0.0
    %2256 = vmatpush1.msra.mxu0 %v48
    %2257 = vmatprep.subr.mxu0 0.0
    %2258 = vmatpush1.msra.mxu0 %v49
    %2259 = vmatprep.subr.mxu0 0.0
    %2260 = vmatpush1.msra.mxu0 %v50
    %2261 = vmatprep.subr.mxu0 0.0
    %2262 = vmatpush1.msra.mxu0 %v51
    %2263 = vmatprep.subr.mxu0 0.0
    %2264 = vmatpush1.msra.mxu0 %v52
    %2265 = vmatprep.subr.mxu0 0.0
    %2266 = vmatpush1.msra.mxu0 %v53
    %2267 = vmatprep.subr.mxu0 0.0
    %2268 = vmatpush1.msra.mxu0 %v54
    %2269 = vmatprep.subr.mxu0 0.0
    %2270 = vmatpush1.msra.mxu0 %v55
    %2271 = vmatprep.subr.mxu0 0.0
    %2272 = vmatpush1.msra.mxu0 %v56
    %2273 = vmatprep.subr.mxu0 0.0
    %2274 = vmatpush1.msra.mxu0 %v57
    %2275 = vmatprep.subr.mxu0 0.0
    %2276 = vmatpush1.msra.mxu0 %v58
    %2277 = vmatprep.subr.mxu0 0.0
    %2278 = vmatpush1.msra.mxu0 %v59
    %2279 = vmatprep.mubr.f32.mxu0 %v2149
    %2280 = vmatmul.mubr.f32.gmra.mrb[0].mxu0 %v2135
    %v2281 = vpop.f32.mrb[0].mxu0
    %v2282 = vadd.f32 %v253, %v2281
    %v2283 = vpop.f32.mrb[0].mxu0
    %2284 = vdwg.mxu0
    %2285 = vmatprep.subr.mxu0 0.0
    %2286 = vmatpush1.msra.mxu0 %v60
    %2287 = vmatprep.subr.mxu0 0.0
    %2288 = vmatpush1.msra.mxu0 %v61
    %2289 = vmatprep.subr.mxu0 0.0
    %2290 = vmatpush1.msra.mxu0 %v62
    %2291 = vmatprep.subr.mxu0 0.0
    %2292 = vmatpush1.msra.mxu0 %v63
    %2293 = vmatprep.subr.mxu0 0.0
    %2294 = vmatpush1.msra.mxu0 %v64
    %2295 = vmatprep.subr.mxu0 0.0
    %2296 = vmatpush1.msra.mxu0 %v65
    %2297 = vmatprep.subr.mxu0 0.0
    %2298 = vmatpush1.msra.mxu0 %v66
    %2299 = vmatprep.subr.mxu0 0.0
    %2300 = vmatpush1.msra.mxu0 %v67
    %2301 = vmatprep.subr.mxu0 0.0
    %2302 = vmatpush1.msra.mxu0 %v68
    %2303 = vmatprep.subr.mxu0 0.0
    %2304 = vmatpush1.msra.mxu0 %v69
    %2305 = vmatprep.subr.mxu0 0.0
    %2306 = vmatpush1.msra.mxu0 %v70
    %2307 = vmatprep.subr.mxu0 0.0
    %2308 = vmatpush1.msra.mxu0 %v71
    %2309 = vmatprep.subr.mxu0 0.0
    %2310 = vmatpush1.msra.mxu0 %v72
    %2311 = vmatprep.subr.mxu0 0.0
    %2312 = vmatpush1.msra.mxu0 %v73
    %2313 = vmatprep.subr.mxu0 0.0
    %2314 = vmatpush1.msra.mxu0 %v74
    %2315 = vmatprep.subr.mxu0 0.0
    %2316 = vmatpush1.msra.mxu0 %v75
    %2317 = vmatprep.subr.mxu0 0.0
    %2318 = vmatpush1.msra.mxu0 %v76
    %2319 = vmatprep.subr.mxu0 0.0
    %2320 = vmatpush1.msra.mxu0 %v77
    %2321 = vmatprep.subr.mxu0 0.0
    %2322 = vmatpush1.msra.mxu0 %v78
    %2323 = vmatprep.subr.mxu0 0.0
    %2324 = vmatpush1.msra.mxu0 %v79
    %2325 = vmatprep.subr.mxu0 0.0
    %2326 = vmatpush1.msra.mxu0 %v80
    %2327 = vmatprep.subr.mxu0 0.0
    %2328 = vmatpush1.msra.mxu0 %v81
    %2329 = vmatprep.subr.mxu0 0.0
    %2330 = vmatpush1.msra.mxu0 %v82
    %2331 = vmatprep.subr.mxu0 0.0
    %2332 = vmatpush1.msra.mxu0 %v83
    %2333 = vmatprep.subr.mxu0 0.0
    %2334 = vmatpush1.msra.mxu0 %v84
    %2335 = vmatprep.subr.mxu0 0.0
    %2336 = vmatpush1.msra.mxu0 %v85
    %2337 = vmatprep.subr.mxu0 0.0
    %2338 = vmatpush1.msra.mxu0 %v86
    %2339 = vmatprep.subr.mxu0 0.0
    %2340 = vmatpush1.msra.mxu0 %v87
    %2341 = vmatprep.subr.mxu0 0.0
    %2342 = vmatpush1.msra.mxu0 %v88
    %2343 = vmatprep.subr.mxu0 0.0
    %2344 = vmatpush1.msra.mxu0 %v89
    %2345 = vmatprep.subr.mxu0 0.0
    %2346 = vmatpush1.msra.mxu0 %v90
    %2347 = vmatprep.subr.mxu0 0.0
    %2348 = vmatpush1.msra.mxu0 %v91
    %2349 = vmatprep.mubr.f32.mxu0 %v2159
    %2350 = vmatmul.mubr.f32.gmra.mrb[0].mxu0 %v2157
    %v2351 = vpop.f32.mrb[0].mxu0
    %v2352 = vadd.f32 %v2282, %v2351
    %v2353 = vpop.f32.mrb[0].mxu0
    %2354 = vdwg.mxu0
    %2355 = vmatprep.subr.mxu0 0.0
    %2356 = vmatpush1.msra.mxu0 %v92
    %2357 = vmatprep.subr.mxu0 0.0
    %2358 = vmatpush1.msra.mxu0 %v93
    %2359 = vmatprep.subr.mxu0 0.0
    %2360 = vmatpush1.msra.mxu0 %v94
    %2361 = vmatprep.subr.mxu0 0.0
    %2362 = vmatpush1.msra.mxu0 %v95
    %2363 = vmatprep.subr.mxu0 0.0
    %2364 = vmatpush1.msra.mxu0 %v96
    %2365 = vmatprep.subr.mxu0 0.0
    %2366 = vmatpush1.msra.mxu0 %v97
    %2367 = vmatprep.subr.mxu0 0.0
    %2368 = vmatpush1.msra.mxu0 %v98
    %2369 = vmatprep.subr.mxu0 0.0
    %2370 = vmatpush1.msra.mxu0 %v99
    %2371 = vmatprep.subr.mxu0 0.0
    %2372 = vmatpush1.msra.mxu0 %v100
    %2373 = vmatprep.subr.mxu0 0.0
    %2374 = vmatpush1.msra.mxu0 %v101
    %2375 = vmatprep.subr.mxu0 0.0
    %2376 = vmatpush1.msra.mxu0 %v102
    %2377 = vmatprep.subr.mxu0 0.0
    %2378 = vmatpush1.msra.mxu0 %v103
    %2379 = vmatprep.subr.mxu0 0.0
    %2380 = vmatpush1.msra.mxu0 %v104
    %2381 = vmatprep.subr.mxu0 0.0
    %2382 = vmatpush1.msra.mxu0 %v105
    %2383 = vmatprep.subr.mxu0 0.0
    %2384 = vmatpush1.msra.mxu0 %v106
    %2385 = vmatprep.subr.mxu0 0.0
    %2386 = vmatpush1.msra.mxu0 %v107
    %2387 = vmatprep.subr.mxu0 0.0
    %2388 = vmatpush1.msra.mxu0 %v108
    %2389 = vmatprep.subr.mxu0 0.0
    %2390 = vmatpush1.msra.mxu0 %v109
    %2391 = vmatprep.subr.mxu0 0.0
    %2392 = vmatpush1.msra.mxu0 %v110
    %2393 = vmatprep.subr.mxu0 0.0
    %2394 = vmatpush1.msra.mxu0 %v111
    %2395 = vmatprep.subr.mxu0 0.0
    %2396 = vmatpush1.msra.mxu0 %v112
    %2397 = vmatprep.subr.mxu0 0.0
    %2398 = vmatpush1.msra.mxu0 %v113
    %2399 = vmatprep.subr.mxu0 0.0
    %2400 = vmatpush1.msra.mxu0 %v114
    %2401 = vmatprep.subr.mxu0 0.0
    %2402 = vmatpush1.msra.mxu0 %v115
    %2403 = vmatprep.subr.mxu0 0.0
    %2404 = vmatpush1.msra.mxu0 %v116
    %2405 = vmatprep.subr.mxu0 0.0
    %2406 = vmatpush1.msra.mxu0 %v117
    %2407 = vmatprep.subr.mxu0 0.0
    %2408 = vmatpush1.msra.mxu0 %v118
    %2409 = vmatprep.subr.mxu0 0.0
    %2410 = vmatpush1.msra.mxu0 %v119
    %2411 = vmatprep.subr.mxu0 0.0
    %2412 = vmatpush1.msra.mxu0 %v120
    %2413 = vmatprep.subr.mxu0 0.0
    %2414 = vmatpush1.msra.mxu0 %v121
    %2415 = vmatprep.subr.mxu0 0.0
    %2416 = vmatpush1.msra.mxu0 %v122
    %2417 = vmatprep.subr.mxu0 0.0
    %2418 = vmatpush1.msra.mxu0 %v123
    %2419 = vmatprep.mubr.f32.mxu0 %v2156
    %2420 = vmatmul.mubr.f32.gmra.mrb[0].mxu0 %v2142
    %v2421 = vpop.f32.mrb[0].mxu0
    %v2422 = vadd.f32 %v2352, %v2421
    %v2423 = vpop.f32.mrb[0].mxu0
    %2424 = vdwg.mxu0
    %2425 = vmatprep.subr.mxu0 0.0
    %2426 = vmatpush1.msra.mxu0 %v124
    %2427 = vmatprep.subr.mxu0 0.0
    %2428 = vmatpush1.msra.mxu0 %v125
    %2429 = vmatprep.subr.mxu0 0.0
    %2430 = vmatpush1.msra.mxu0 %v126
    %2431 = vmatprep.subr.mxu0 0.0
    %2432 = vmatpush1.msra.mxu0 %v127
    %2433 = vmatprep.subr.mxu0 0.0
    %2434 = vmatpush1.msra.mxu0 %v128
    %2435 = vmatprep.subr.mxu0 0.0
    %2436 = vmatpush1.msra.mxu0 %v129
    %2437 = vmatprep.subr.mxu0 0.0
    %2438 = vmatpush1.msra.mxu0 %v130
    %2439 = vmatprep.subr.mxu0 0.0
    %2440 = vmatpush1.msra.mxu0 %v131
    %2441 = vmatprep.subr.mxu0 0.0
    %2442 = vmatpush1.msra.mxu0 %v132
    %2443 = vmatprep.subr.mxu0 0.0
    %2444 = vmatpush1.msra.mxu0 %v133
    %2445 = vmatprep.subr.mxu0 0.0
    %2446 = vmatpush1.msra.mxu0 %v134
    %2447 = vmatprep.subr.mxu0 0.0
    %2448 = vmatpush1.msra.mxu0 %v135
    %2449 = vmatprep.subr.mxu0 0.0
    %2450 = vmatpush1.msra.mxu0 %v136
    %2451 = vmatprep.subr.mxu0 0.0
    %2452 = vmatpush1.msra.mxu0 %v137
    %2453 = vmatprep.subr.mxu0 0.0
    %2454 = vmatpush1.msra.mxu0 %v138
    %2455 = vmatprep.subr.mxu0 0.0
    %2456 = vmatpush1.msra.mxu0 %v139
    %2457 = vmatprep.subr.mxu0 0.0
    %2458 = vmatpush1.msra.mxu0 %v140
    %2459 = vmatprep.subr.mxu0 0.0
    %2460 = vmatpush1.msra.mxu0 %v141
    %2461 = vmatprep.subr.mxu0 0.0
    %2462 = vmatpush1.msra.mxu0 %v142
    %2463 = vmatprep.subr.mxu0 0.0
    %2464 = vmatpush1.msra.mxu0 %v143
    %2465 = vmatprep.subr.mxu0 0.0
    %2466 = vmatpush1.msra.mxu0 %v144
    %2467 = vmatprep.subr.mxu0 0.0
    %2468 = vmatpush1.msra.mxu0 %v145
    %2469 = vmatprep.subr.mxu0 0.0
    %2470 = vmatpush1.msra.mxu0 %v146
    %2471 = vmatprep.subr.mxu0 0.0
    %2472 = vmatpush1.msra.mxu0 %v147
    %2473 = vmatprep.subr.mxu0 0.0
    %2474 = vmatpush1.msra.mxu0 %v148
    %2475 = vmatprep.subr.mxu0 0.0
    %2476 = vmatpush1.msra.mxu0 %v149
    %2477 = vmatprep.subr.mxu0 0.0
    %2478 = vmatpush1.msra.mxu0 %v150
    %2479 = vmatprep.subr.mxu0 0.0
    %2480 = vmatpush1.msra.mxu0 %v151
    %2481 = vmatprep.subr.mxu0 0.0
    %2482 = vmatpush1.msra.mxu0 %v152
    %2483 = vmatprep.subr.mxu0 0.0
    %2484 = vmatpush1.msra.mxu0 %v153
    %2485 = vmatprep.subr.mxu0 0.0
    %2486 = vmatpush1.msra.mxu0 %v154
    %2487 = vmatprep.subr.mxu0 0.0
    %2488 = vmatpush1.msra.mxu0 %v155
    %2489 = vmatprep.mubr.f32.mxu0 %v2160
    %2490 = vmatmul.mubr.f32.gmra.mrb[0].mxu0 %v2158
    %v2491 = vpop.f32.mrb[0].mxu0
    %v2492 = vadd.f32 %v2422, %v2491
    %v2493 = vpop.f32.mrb[0].mxu0
    %2494 = vdwg.mxu0
    %2495 = vmatprep.subr.mxu0 0.0
    %2496 = vmatpush1.msra.mxu0 %v156
    %2497 = vmatprep.subr.mxu0 0.0
    %2498 = vmatpush1.msra.mxu0 %v157
    %2499 = vmatprep.subr.mxu0 0.0
    %2500 = vmatpush1.msra.mxu0 %v158
    %2501 = vmatprep.subr.mxu0 0.0
    %2502 = vmatpush1.msra.mxu0 %v159
    %2503 = vmatprep.subr.mxu0 0.0
    %2504 = vmatpush1.msra.mxu0 %v160
    %2505 = vmatprep.subr.mxu0 0.0
    %2506 = vmatpush1.msra.mxu0 %v161
    %2507 = vmatprep.subr.mxu0 0.0
    %2508 = vmatpush1.msra.mxu0 %v162
    %2509 = vmatprep.subr.mxu0 0.0
    %2510 = vmatpush1.msra.mxu0 %v163
    %2511 = vmatprep.subr.mxu0 0.0
    %2512 = vmatpush1.msra.mxu0 %v164
    %2513 = vmatprep.subr.mxu0 0.0
    %2514 = vmatpush1.msra.mxu0 %v165
    %2515 = vmatprep.subr.mxu0 0.0
    %2516 = vmatpush1.msra.mxu0 %v166
    %2517 = vmatprep.subr.mxu0 0.0
    %2518 = vmatpush1.msra.mxu0 %v167
    %2519 = vmatprep.subr.mxu0 0.0
    %2520 = vmatpush1.msra.mxu0 %v168
    %2521 = vmatprep.subr.mxu0 0.0
    %2522 = vmatpush1.msra.mxu0 %v169
    %2523 = vmatprep.subr.mxu0 0.0
    %2524 = vmatpush1.msra.mxu0 %v170
    %2525 = vmatprep.subr.mxu0 0.0
    %2526 = vmatpush1.msra.mxu0 %v171
    %2527 = vmatprep.subr.mxu0 0.0
    %2528 = vmatpush1.msra.mxu0 %v172
    %2529 = vmatprep.subr.mxu0 0.0
    %2530 = vmatpush1.msra.mxu0 %v173
    %2531 = vmatprep.subr.mxu0 0.0
    %2532 = vmatpush1.msra.mxu0 %v174
    %2533 = vmatprep.subr.mxu0 0.0
    %2534 = vmatpush1.msra.mxu0 %v175
    %2535 = vmatprep.subr.mxu0 0.0
    %2536 = vmatpush1.msra.mxu0 %v176
    %2537 = vmatprep.subr.mxu0 0.0
    %2538 = vmatpush1.msra.mxu0 %v177
    %2539 = vmatprep.subr.mxu0 0.0
    %2540 = vmatpush1.msra.mxu0 %v178
    %2541 = vmatprep.subr.mxu0 0.0
    %2542 = vmatpush1.msra.mxu0 %v179
    %2543 = vmatprep.subr.mxu0 0.0
    %2544 = vmatpush1.msra.mxu0 %v180
    %2545 = vmatprep.subr.mxu0 0.0
    %2546 = vmatpush1.msra.mxu0 %v181
    %2547 = vmatprep.subr.mxu0 0.0
    %2548 = vmatpush1.msra.mxu0 %v182
    %2549 = vmatprep.subr.mxu0 0.0
    %2550 = vmatpush1.msra.mxu0 %v183
    %2551 = vmatprep.subr.mxu0 0.0
    %2552 = vmatpush1.msra.mxu0 %v184
    %2553 = vmatprep.subr.mxu0 0.0
    %2554 = vmatpush1.msra.mxu0 %v185
    %2555 = vmatprep.subr.mxu0 0.0
    %2556 = vmatpush1.msra.mxu0 %v186
    %2557 = vmatprep.subr.mxu0 0.0
    %2558 = vmatpush1.msra.mxu0 %v187
    %2559 = vmatprep.mubr.f32.mxu0 %v2198
    %2560 = vmatmul.mubr.f32.gmra.mrb[0].mxu0 %v2184
    %v2561 = vpop.f32.mrb[0].mxu0
    %v2562 = vadd.f32 %v2492, %v2561
    %v2563 = vpop.f32.mrb[0].mxu0
    %2564 = vdwg.mxu0
    %2565 = vmatprep.subr.mxu0 0.0
    %2566 = vmatpush1.msra.mxu0 %v188
    %2567 = vmatprep.subr.mxu0 0.0
    %2568 = vmatpush1.msra.mxu0 %v189
    %2569 = vmatprep.subr.mxu0 0.0
    %2570 = vmatpush1.msra.mxu0 %v190
    %2571 = vmatprep.subr.mxu0 0.0
    %2572 = vmatpush1.msra.mxu0 %v191
    %2573 = vmatprep.subr.mxu0 0.0
    %2574 = vmatpush1.msra.mxu0 %v192
    %2575 = vmatprep.subr.mxu0 0.0
    %2576 = vmatpush1.msra.mxu0 %v193
    %2577 = vmatprep.subr.mxu0 0.0
    %2578 = vmatpush1.msra.mxu0 %v194
    %2579 = vmatprep.subr.mxu0 0.0
    %2580 = vmatpush1.msra.mxu0 %v195
    %2581 = vmatprep.subr.mxu0 0.0
    %2582 = vmatpush1.msra.mxu0 %v196
    %2583 = vmatprep.subr.mxu0 0.0
    %2584 = vmatpush1.msra.mxu0 %v197
    %2585 = vmatprep.subr.mxu0 0.0
    %2586 = vmatpush1.msra.mxu0 %v198
    %2587 = vmatprep.subr.mxu0 0.0
    %2588 = vmatpush1.msra.mxu0 %v199
    %2589 = vmatprep.subr.mxu0 0.0
    %2590 = vmatpush1.msra.mxu0 %v200
    %2591 = vmatprep.subr.mxu0 0.0
    %2592 = vmatpush1.msra.mxu0 %v201
    %2593 = vmatprep.subr.mxu0 0.0
    %2594 = vmatpush1.msra.mxu0 %v202
    %2595 = vmatprep.subr.mxu0 0.0
    %2596 = vmatpush1.msra.mxu0 %v203
    %2597 = vmatprep.subr.mxu0 0.0
    %2598 = vmatpush1.msra.mxu0 %v204
    %2599 = vmatprep.subr.mxu0 0.0
    %2600 = vmatpush1.msra.mxu0 %v205
    %2601 = vmatprep.subr.mxu0 0.0
    %2602 = vmatpush1.msra.mxu0 %v206
    %2603 = vmatprep.subr.mxu0 0.0
    %2604 = vmatpush1.msra.mxu0 %v207
    %2605 = vmatprep.subr.mxu0 0.0
    %2606 = vmatpush1.msra.mxu0 %v208
    %2607 = vmatprep.subr.mxu0 0.0
    %2608 = vmatpush1.msra.mxu0 %v209
    %2609 = vmatprep.subr.mxu0 0.0
    %2610 = vmatpush1.msra.mxu0 %v210
    %2611 = vmatprep.subr.mxu0 0.0
    %2612 = vmatpush1.msra.mxu0 %v211
    %2613 = vmatprep.subr.mxu0 0.0
    %2614 = vmatpush1.msra.mxu0 %v212
    %2615 = vmatprep.subr.mxu0 0.0
    %2616 = vmatpush1.msra.mxu0 %v213
    %2617 = vmatprep.subr.mxu0 0.0
    %2618 = vmatpush1.msra.mxu0 %v214
    %2619 = vmatprep.subr.mxu0 0.0
    %2620 = vmatpush1.msra.mxu0 %v215
    %2621 = vmatprep.subr.mxu0 0.0
    %2622 = vmatpush1.msra.mxu0 %v216
    %2623 = vmatprep.subr.mxu0 0.0
    %2624 = vmatpush1.msra.mxu0 %v217
    %2625 = vmatprep.subr.mxu0 0.0
    %2626 = vmatpush1.msra.mxu0 %v218
    %2627 = vmatprep.subr.mxu0 0.0
    %2628 = vmatpush1.msra.mxu0 %v219
    %2629 = vmatprep.mubr.f32.mxu0 %v2200
    %2630 = vmatmul.mubr.f32.gmra.mrb[0].mxu0 %v2199
    %v2631 = vpop.f32.mrb[0].mxu0
    %v2632 = vadd.f32 %v2562, %v2631
    %v2633 = vpop.f32.mrb[0].mxu0
    %2634 = vdwg.mxu0
    %2635 = vmatprep.subr.mxu0 0.0
    %2636 = vmatpush1.msra.mxu0 %v220
    %2637 = vmatprep.subr.mxu0 0.0
    %2638 = vmatpush1.msra.mxu0 %v221
    %2639 = vmatprep.subr.mxu0 0.0
    %2640 = vmatpush1.msra.mxu0 %v222
    %2641 = vmatprep.subr.mxu0 0.0
    %2642 = vmatpush1.msra.mxu0 %v223
    %2643 = vmatprep.subr.mxu0 0.0
    %2644 = vmatpush1.msra.mxu0 %v224
    %2645 = vmatprep.subr.mxu0 0.0
    %2646 = vmatpush1.msra.mxu0 %v225
    %2647 = vmatprep.subr.mxu0 0.0
    %2648 = vmatpush1.msra.mxu0 %v226
    %2649 = vmatprep.subr.mxu0 0.0
    %2650 = vmatpush1.msra.mxu0 %v227
    %2651 = vmatprep.subr.mxu0 0.0
    %2652 = vmatpush1.msra.mxu0 %v228
    %2653 = vmatprep.subr.mxu0 0.0
    %2654 = vmatpush1.msra.mxu0 %v229
    %2655 = vmatprep.subr.mxu0 0.0
    %2656 = vmatpush1.msra.mxu0 %v230
    %2657 = vmatprep.subr.mxu0 0.0
    %2658 = vmatpush1.msra.mxu0 %v231
    %2659 = vmatprep.subr.mxu0 0.0
    %2660 = vmatpush1.msra.mxu0 %v366
    %2661 = vmatprep.subr.mxu0 0.0
    %2662 = vmatpush1.msra.mxu0 0.0
    %2663 = vmatprep.subr.mxu0 0.0
    %2664 = vmatpush1.msra.mxu0 0.0
    %2665 = vmatprep.subr.mxu0 0.0
    %2666 = vmatpush1.msra.mxu0 0.0
    %2667 = vmatprep.subr.mxu0 0.0
    %2668 = vmatpush1.msra.mxu0 0.0
    %2669 = vmatprep.subr.mxu0 0.0
    %2670 = vmatpush1.msra.mxu0 0.0
    %2671 = vmatprep.subr.mxu0 0.0
    %2672 = vmatpush1.msra.mxu0 0.0
    %2673 = vmatprep.subr.mxu0 0.0
    %2674 = vmatpush1.msra.mxu0 0.0
    %2675 = vmatprep.subr.mxu0 0.0
    %2676 = vmatpush1.msra.mxu0 0.0
    %2677 = vmatprep.subr.mxu0 0.0
    %2678 = vmatpush1.msra.mxu0 0.0
    %2679 = vmatprep.subr.mxu0 0.0
    %2680 = vmatpush1.msra.mxu0 0.0
    %2681 = vmatprep.subr.mxu0 0.0
    %2682 = vmatpush1.msra.mxu0 0.0
    %2683 = vmatprep.subr.mxu0 0.0
    %2684 = vmatpush1.msra.mxu0 0.0
    %2685 = vmatprep.subr.mxu0 0.0
    %2686 = vmatpush1.msra.mxu0 0.0
    %2687 = vmatprep.subr.mxu0 0.0
    %2688 = vmatpush1.msra.mxu0 0.0
    %2689 = vmatprep.subr.mxu0 0.0
    %2690 = vmatpush1.msra.mxu0 0.0
    %2691 = vmatprep.subr.mxu0 0.0
    %2692 = vmatpush1.msra.mxu0 0.0
    %2693 = vmatprep.subr.mxu0 0.0
    %2694 = vmatpush1.msra.mxu0 0.0
    %2695 = vmatprep.subr.mxu0 0.0
    %2696 = vmatpush1.msra.mxu0 0.0
    %2697 = vmatprep.subr.mxu0 0.0
    %2698 = vmatpush1.msra.mxu0 0.0
    %2699 = vmatprep.mubr.f32.mxu0 0.0
    %2700 = vmatmul.mubr.f32.gmra.mrb[0].mxu0 %v2213
    %v2701 = vpop.f32.mrb[0].mxu0
    %v2702 = vadd.f32 %v2632, %v2701
    %v2703 = vpop.f32.mrb[0].mxu0
    %2704 = vdwg.mxu0
    %s2705 = scalar_lea.vmem %s3, 6
    %2706 = vst [vmem:[%s2705] sm:$0x3] %v2702
    %s2707 = scalar_lea.vmem %s0, 4
    %v2708 = vld [vmem:[%s2707] ss:$8 sm:$0xf]
    %v2709 = vld [vmem:[%s2707] ss:$8 sm:$0xf0]
    %v2710 = vor.u32 %v2708, %v2709
    %s2711 = scalar_lea.vmem %s0, 68
    %v2712 = vld [vmem:[%s2711] ss:$8 sm:$0xf]
    %v2713 = vld [vmem:[%s2711] ss:$8 sm:$0x10]
    %v2714 = vor.u32 %v2712, %v2713
    %s2715 = scalar_lea.vmem %s0, 108
    %v2716 = vld [vmem:[%s2715] ss:$8 sm:$0xf]
    %v2717 = vld [vmem:[%s2715] ss:$8 sm:$0xf0]
    %v2718 = vor.u32 %v2716, %v2717
    %s2719 = scalar_lea.vmem %s0, 172
    %v2720 = vld [vmem:[%s2719] ss:$8 sm:$0xf]
    %v2721 = vld [vmem:[%s2719] ss:$8 sm:$0x10]
    %v2722 = vor.u32 %v2720, %v2721
    %v2727 = vcombine.low %v2710, %v2718
    %v2728 = vcombine.high %v2710, %v2718
    %v2730 = vunpack.c.l.s4 1966171168
    %v2731 = vunpack.c.0.s8 %v2730
    %v2732 = vlaneseq
    %v2733 = vshrl.u32 %v2732, 7
    %v2734 = vsub.s32 %v2731, %v2733
    %v2735 = vrot.slane %v2727, %v2734
    %v2737 = vunpack.c.l.s4 1966171168
    %v2738 = vunpack.c.0.s8 %v2737
    %v2739 = vlaneseq
    %v2740 = vshrl.u32 %v2739, 7
    %v2741 = vsub.s32 %v2738, %v2740
    %v2742 = vrot.slane %v2728, %v2741
    %v2743 = vcombine.high %v2735, %v2735
    %v2744 = vcombine.high %v2742, %v2742
    %v2746 = vunpack.c.l.s4 1966171168
    %v2747 = vunpack.c.0.s8 %v2746
    %v2748 = vlaneseq
    %v2749 = vshrl.u32 %v2748, 7
    %v2750 = vsub.s32 %v2747, %v2749
    %v2751 = vrot.slane %v2735, %v2750
    %v2753 = vunpack.c.l.s4 1966171168
    %v2754 = vunpack.c.0.s8 %v2753
    %v2755 = vlaneseq
    %v2756 = vshrl.u32 %v2755, 7
    %v2757 = vsub.s32 %v2754, %v2756
    %v2758 = vrot.slane %v2742, %v2757
    %v2760 = vunpack.c.l.s4 1966171168
    %v2761 = vunpack.c.0.s8 %v2760
    %v2762 = vlaneseq
    %v2763 = vshrl.u32 %v2762, 7
    %v2764 = vsub.s32 %v2761, %v2763
    %v2765 = vrot.slane %v2743, %v2764
    %v2767 = vunpack.c.l.s4 1966171168
    %v2768 = vunpack.c.0.s8 %v2767
    %v2769 = vlaneseq
    %v2770 = vshrl.u32 %v2769, 7
    %v2771 = vsub.s32 %v2768, %v2770
    %v2772 = vrot.slane %v2744, %v2771
    %v2773 = vcombine.high %v2751, %v2751
    %v2774 = vcombine.high %v2758, %v2758
    %v2775 = vcombine.high %v2765, %v2765
    %v2776 = vcombine.high %v2772, %v2772
    %v2777 = vcombine.low %v2714, %v2722
    %v2778 = vcombine.high %v2714, %v2722
    %v2780 = vunpack.c.l.s4 1966171168
    %v2781 = vunpack.c.0.s8 %v2780
    %v2782 = vlaneseq
    %v2783 = vshrl.u32 %v2782, 7
    %v2784 = vsub.s32 %v2781, %v2783
    %v2785 = vrot.slane %v2777, %v2784
    %v2787 = vunpack.c.l.s4 1966171168
    %v2788 = vunpack.c.0.s8 %v2787
    %v2789 = vlaneseq
    %v2790 = vshrl.u32 %v2789, 7
    %v2791 = vsub.s32 %v2788, %v2790
    %v2792 = vrot.slane %v2778, %v2791
    %v2793 = vcombine.high %v2785, %v2785
    %v2795 = vunpack.c.l.s4 1966171168
    %v2796 = vunpack.c.0.s8 %v2795
    %v2797 = vlaneseq
    %v2798 = vshrl.u32 %v2797, 7
    %v2799 = vsub.s32 %v2796, %v2798
    %v2800 = vrot.slane %v2785, %v2799
    %v2802 = vunpack.c.l.s4 1966171168
    %v2803 = vunpack.c.0.s8 %v2802
    %v2804 = vlaneseq
    %v2805 = vshrl.u32 %v2804, 7
    %v2806 = vsub.s32 %v2803, %v2805
    %v2807 = vrot.slane %v2792, %v2806
    %v2809 = vunpack.c.l.s4 1966171168
    %v2810 = vunpack.c.0.s8 %v2809
    %v2811 = vlaneseq
    %v2812 = vshrl.u32 %v2811, 7
    %v2813 = vsub.s32 %v2810, %v2812
    %v2814 = vrot.slane %v2793, %v2813
    %v2815 = vcombine.high %v2800, %v2800
    %v2816 = vcombine.high %v2814, %v2814
    %v2829 = vsel %vm361, %v2807, 0
    %2831 = vmatprep.subr.mxu0 0.0
    %2832 = vmatpush1.msra.mxu0 %v28
    %2833 = vmatprep.subr.mxu0 0.0
    %2834 = vmatpush1.msra.mxu0 %v29
    %2835 = vmatprep.subr.mxu0 0.0
    %2836 = vmatpush1.msra.mxu0 %v30
    %2837 = vmatprep.subr.mxu0 0.0
    %2838 = vmatpush1.msra.mxu0 %v31
    %2839 = vmatprep.subr.mxu0 0.0
    %2840 = vmatpush1.msra.mxu0 %v32
    %2841 = vmatprep.subr.mxu0 0.0
    %2842 = vmatpush1.msra.mxu0 %v33
    %2843 = vmatprep.subr.mxu0 0.0
    %2844 = vmatpush1.msra.mxu0 %v34
    %2845 = vmatprep.subr.mxu0 0.0
    %2846 = vmatpush1.msra.mxu0 %v35
    %2847 = vmatprep.subr.mxu0 0.0
    %2848 = vmatpush1.msra.mxu0 %v36
    %2849 = vmatprep.subr.mxu0 0.0
    %2850 = vmatpush1.msra.mxu0 %v37
    %2851 = vmatprep.subr.mxu0 0.0
    %2852 = vmatpush1.msra.mxu0 %v38
    %2853 = vmatprep.subr.mxu0 0.0
    %2854 = vmatpush1.msra.mxu0 %v39
    %2855 = vmatprep.subr.mxu0 0.0
    %2856 = vmatpush1.msra.mxu0 %v40
    %2857 = vmatprep.subr.mxu0 0.0
    %2858 = vmatpush1.msra.mxu0 %v41
    %2859 = vmatprep.subr.mxu0 0.0
    %2860 = vmatpush1.msra.mxu0 %v42
    %2861 = vmatprep.subr.mxu0 0.0
    %2862 = vmatpush1.msra.mxu0 %v43
    %2863 = vmatprep.subr.mxu0 0.0
    %2864 = vmatpush1.msra.mxu0 %v44
    %2865 = vmatprep.subr.mxu0 0.0
    %2866 = vmatpush1.msra.mxu0 %v45
    %2867 = vmatprep.subr.mxu0 0.0
    %2868 = vmatpush1.msra.mxu0 %v46
    %2869 = vmatprep.subr.mxu0 0.0
    %2870 = vmatpush1.msra.mxu0 %v47
    %2871 = vmatprep.subr.mxu0 0.0
    %2872 = vmatpush1.msra.mxu0 %v48
    %2873 = vmatprep.subr.mxu0 0.0
    %2874 = vmatpush1.msra.mxu0 %v49
    %2875 = vmatprep.subr.mxu0 0.0
    %2876 = vmatpush1.msra.mxu0 %v50
    %2877 = vmatprep.subr.mxu0 0.0
    %2878 = vmatpush1.msra.mxu0 %v51
    %2879 = vmatprep.subr.mxu0 0.0
    %2880 = vmatpush1.msra.mxu0 %v52
    %2881 = vmatprep.subr.mxu0 0.0
    %2882 = vmatpush1.msra.mxu0 %v53
    %2883 = vmatprep.subr.mxu0 0.0
    %2884 = vmatpush1.msra.mxu0 %v54
    %2885 = vmatprep.subr.mxu0 0.0
    %2886 = vmatpush1.msra.mxu0 %v55
    %2887 = vmatprep.subr.mxu0 0.0
    %2888 = vmatpush1.msra.mxu0 %v56
    %2889 = vmatprep.subr.mxu0 0.0
    %2890 = vmatpush1.msra.mxu0 %v57
    %2891 = vmatprep.subr.mxu0 0.0
    %2892 = vmatpush1.msra.mxu0 %v58
    %2893 = vmatprep.subr.mxu0 0.0
    %2894 = vmatpush1.msra.mxu0 %v59
    %2895 = vmatprep.mubr.f32.mxu0 %v2765
    %2896 = vmatmul.mubr.f32.gmra.mrb[0].mxu0 %v2751
    %v2897 = vpop.f32.mrb[0].mxu0
    %v2898 = vadd.f32 %v253, %v2897
    %v2899 = vpop.f32.mrb[0].mxu0
    %2900 = vdwg.mxu0
    %2901 = vmatprep.subr.mxu0 0.0
    %2902 = vmatpush1.msra.mxu0 %v60
    %2903 = vmatprep.subr.mxu0 0.0
    %2904 = vmatpush1.msra.mxu0 %v61
    %2905 = vmatprep.subr.mxu0 0.0
    %2906 = vmatpush1.msra.mxu0 %v62
    %2907 = vmatprep.subr.mxu0 0.0
    %2908 = vmatpush1.msra.mxu0 %v63
    %2909 = vmatprep.subr.mxu0 0.0
    %2910 = vmatpush1.msra.mxu0 %v64
    %2911 = vmatprep.subr.mxu0 0.0
    %2912 = vmatpush1.msra.mxu0 %v65
    %2913 = vmatprep.subr.mxu0 0.0
    %2914 = vmatpush1.msra.mxu0 %v66
    %2915 = vmatprep.subr.mxu0 0.0
    %2916 = vmatpush1.msra.mxu0 %v67
    %2917 = vmatprep.subr.mxu0 0.0
    %2918 = vmatpush1.msra.mxu0 %v68
    %2919 = vmatprep.subr.mxu0 0.0
    %2920 = vmatpush1.msra.mxu0 %v69
    %2921 = vmatprep.subr.mxu0 0.0
    %2922 = vmatpush1.msra.mxu0 %v70
    %2923 = vmatprep.subr.mxu0 0.0
    %2924 = vmatpush1.msra.mxu0 %v71
    %2925 = vmatprep.subr.mxu0 0.0
    %2926 = vmatpush1.msra.mxu0 %v72
    %2927 = vmatprep.subr.mxu0 0.0
    %2928 = vmatpush1.msra.mxu0 %v73
    %2929 = vmatprep.subr.mxu0 0.0
    %2930 = vmatpush1.msra.mxu0 %v74
    %2931 = vmatprep.subr.mxu0 0.0
    %2932 = vmatpush1.msra.mxu0 %v75
    %2933 = vmatprep.subr.mxu0 0.0
    %2934 = vmatpush1.msra.mxu0 %v76
    %2935 = vmatprep.subr.mxu0 0.0
    %2936 = vmatpush1.msra.mxu0 %v77
    %2937 = vmatprep.subr.mxu0 0.0
    %2938 = vmatpush1.msra.mxu0 %v78
    %2939 = vmatprep.subr.mxu0 0.0
    %2940 = vmatpush1.msra.mxu0 %v79
    %2941 = vmatprep.subr.mxu0 0.0
    %2942 = vmatpush1.msra.mxu0 %v80
    %2943 = vmatprep.subr.mxu0 0.0
    %2944 = vmatpush1.msra.mxu0 %v81
    %2945 = vmatprep.subr.mxu0 0.0
    %2946 = vmatpush1.msra.mxu0 %v82
    %2947 = vmatprep.subr.mxu0 0.0
    %2948 = vmatpush1.msra.mxu0 %v83
    %2949 = vmatprep.subr.mxu0 0.0
    %2950 = vmatpush1.msra.mxu0 %v84
    %2951 = vmatprep.subr.mxu0 0.0
    %2952 = vmatpush1.msra.mxu0 %v85
    %2953 = vmatprep.subr.mxu0 0.0
    %2954 = vmatpush1.msra.mxu0 %v86
    %2955 = vmatprep.subr.mxu0 0.0
    %2956 = vmatpush1.msra.mxu0 %v87
    %2957 = vmatprep.subr.mxu0 0.0
    %2958 = vmatpush1.msra.mxu0 %v88
    %2959 = vmatprep.subr.mxu0 0.0
    %2960 = vmatpush1.msra.mxu0 %v89
    %2961 = vmatprep.subr.mxu0 0.0
    %2962 = vmatpush1.msra.mxu0 %v90
    %2963 = vmatprep.subr.mxu0 0.0
    %2964 = vmatpush1.msra.mxu0 %v91
    %2965 = vmatprep.mubr.f32.mxu0 %v2775
    %2966 = vmatmul.mubr.f32.gmra.mrb[0].mxu0 %v2773
    %v2967 = vpop.f32.mrb[0].mxu0
    %v2968 = vadd.f32 %v2898, %v2967
    %v2969 = vpop.f32.mrb[0].mxu0
    %2970 = vdwg.mxu0
    %2971 = vmatprep.subr.mxu0 0.0
    %2972 = vmatpush1.msra.mxu0 %v92
    %2973 = vmatprep.subr.mxu0 0.0
    %2974 = vmatpush1.msra.mxu0 %v93
    %2975 = vmatprep.subr.mxu0 0.0
    %2976 = vmatpush1.msra.mxu0 %v94
    %2977 = vmatprep.subr.mxu0 0.0
    %2978 = vmatpush1.msra.mxu0 %v95
    %2979 = vmatprep.subr.mxu0 0.0
    %2980 = vmatpush1.msra.mxu0 %v96
    %2981 = vmatprep.subr.mxu0 0.0
    %2982 = vmatpush1.msra.mxu0 %v97
    %2983 = vmatprep.subr.mxu0 0.0
    %2984 = vmatpush1.msra.mxu0 %v98
    %2985 = vmatprep.subr.mxu0 0.0
    %2986 = vmatpush1.msra.mxu0 %v99
    %2987 = vmatprep.subr.mxu0 0.0
    %2988 = vmatpush1.msra.mxu0 %v100
    %2989 = vmatprep.subr.mxu0 0.0
    %2990 = vmatpush1.msra.mxu0 %v101
    %2991 = vmatprep.subr.mxu0 0.0
    %2992 = vmatpush1.msra.mxu0 %v102
    %2993 = vmatprep.subr.mxu0 0.0
    %2994 = vmatpush1.msra.mxu0 %v103
    %2995 = vmatprep.subr.mxu0 0.0
    %2996 = vmatpush1.msra.mxu0 %v104
    %2997 = vmatprep.subr.mxu0 0.0
    %2998 = vmatpush1.msra.mxu0 %v105
    %2999 = vmatprep.subr.mxu0 0.0
    %3000 = vmatpush1.msra.mxu0 %v106
    %3001 = vmatprep.subr.mxu0 0.0
    %3002 = vmatpush1.msra.mxu0 %v107
    %3003 = vmatprep.subr.mxu0 0.0
    %3004 = vmatpush1.msra.mxu0 %v108
    %3005 = vmatprep.subr.mxu0 0.0
    %3006 = vmatpush1.msra.mxu0 %v109
    %3007 = vmatprep.subr.mxu0 0.0
    %3008 = vmatpush1.msra.mxu0 %v110
    %3009 = vmatprep.subr.mxu0 0.0
    %3010 = vmatpush1.msra.mxu0 %v111
    %3011 = vmatprep.subr.mxu0 0.0
    %3012 = vmatpush1.msra.mxu0 %v112
    %3013 = vmatprep.subr.mxu0 0.0
    %3014 = vmatpush1.msra.mxu0 %v113
    %3015 = vmatprep.subr.mxu0 0.0
    %3016 = vmatpush1.msra.mxu0 %v114
    %3017 = vmatprep.subr.mxu0 0.0
    %3018 = vmatpush1.msra.mxu0 %v115
    %3019 = vmatprep.subr.mxu0 0.0
    %3020 = vmatpush1.msra.mxu0 %v116
    %3021 = vmatprep.subr.mxu0 0.0
    %3022 = vmatpush1.msra.mxu0 %v117
    %3023 = vmatprep.subr.mxu0 0.0
    %3024 = vmatpush1.msra.mxu0 %v118
    %3025 = vmatprep.subr.mxu0 0.0
    %3026 = vmatpush1.msra.mxu0 %v119
    %3027 = vmatprep.subr.mxu0 0.0
    %3028 = vmatpush1.msra.mxu0 %v120
    %3029 = vmatprep.subr.mxu0 0.0
    %3030 = vmatpush1.msra.mxu0 %v121
    %3031 = vmatprep.subr.mxu0 0.0
    %3032 = vmatpush1.msra.mxu0 %v122
    %3033 = vmatprep.subr.mxu0 0.0
    %3034 = vmatpush1.msra.mxu0 %v123
    %3035 = vmatprep.mubr.f32.mxu0 %v2772
    %3036 = vmatmul.mubr.f32.gmra.mrb[0].mxu0 %v2758
    %v3037 = vpop.f32.mrb[0].mxu0
    %v3038 = vadd.f32 %v2968, %v3037
    %v3039 = vpop.f32.mrb[0].mxu0
    %3040 = vdwg.mxu0
    %3041 = vmatprep.subr.mxu0 0.0
    %3042 = vmatpush1.msra.mxu0 %v124
    %3043 = vmatprep.subr.mxu0 0.0
    %3044 = vmatpush1.msra.mxu0 %v125
    %3045 = vmatprep.subr.mxu0 0.0
    %3046 = vmatpush1.msra.mxu0 %v126
    %3047 = vmatprep.subr.mxu0 0.0
    %3048 = vmatpush1.msra.mxu0 %v127
    %3049 = vmatprep.subr.mxu0 0.0
    %3050 = vmatpush1.msra.mxu0 %v128
    %3051 = vmatprep.subr.mxu0 0.0
    %3052 = vmatpush1.msra.mxu0 %v129
    %3053 = vmatprep.subr.mxu0 0.0
    %3054 = vmatpush1.msra.mxu0 %v130
    %3055 = vmatprep.subr.mxu0 0.0
    %3056 = vmatpush1.msra.mxu0 %v131
    %3057 = vmatprep.subr.mxu0 0.0
    %3058 = vmatpush1.msra.mxu0 %v132
    %3059 = vmatprep.subr.mxu0 0.0
    %3060 = vmatpush1.msra.mxu0 %v133
    %3061 = vmatprep.subr.mxu0 0.0
    %3062 = vmatpush1.msra.mxu0 %v134
    %3063 = vmatprep.subr.mxu0 0.0
    %3064 = vmatpush1.msra.mxu0 %v135
    %3065 = vmatprep.subr.mxu0 0.0
    %3066 = vmatpush1.msra.mxu0 %v136
    %3067 = vmatprep.subr.mxu0 0.0
    %3068 = vmatpush1.msra.mxu0 %v137
    %3069 = vmatprep.subr.mxu0 0.0
    %3070 = vmatpush1.msra.mxu0 %v138
    %3071 = vmatprep.subr.mxu0 0.0
    %3072 = vmatpush1.msra.mxu0 %v139
    %3073 = vmatprep.subr.mxu0 0.0
    %3074 = vmatpush1.msra.mxu0 %v140
    %3075 = vmatprep.subr.mxu0 0.0
    %3076 = vmatpush1.msra.mxu0 %v141
    %3077 = vmatprep.subr.mxu0 0.0
    %3078 = vmatpush1.msra.mxu0 %v142
    %3079 = vmatprep.subr.mxu0 0.0
    %3080 = vmatpush1.msra.mxu0 %v143
    %3081 = vmatprep.subr.mxu0 0.0
    %3082 = vmatpush1.msra.mxu0 %v144
    %3083 = vmatprep.subr.mxu0 0.0
    %3084 = vmatpush1.msra.mxu0 %v145
    %3085 = vmatprep.subr.mxu0 0.0
    %3086 = vmatpush1.msra.mxu0 %v146
    %3087 = vmatprep.subr.mxu0 0.0
    %3088 = vmatpush1.msra.mxu0 %v147
    %3089 = vmatprep.subr.mxu0 0.0
    %3090 = vmatpush1.msra.mxu0 %v148
    %3091 = vmatprep.subr.mxu0 0.0
    %3092 = vmatpush1.msra.mxu0 %v149
    %3093 = vmatprep.subr.mxu0 0.0
    %3094 = vmatpush1.msra.mxu0 %v150
    %3095 = vmatprep.subr.mxu0 0.0
    %3096 = vmatpush1.msra.mxu0 %v151
    %3097 = vmatprep.subr.mxu0 0.0
    %3098 = vmatpush1.msra.mxu0 %v152
    %3099 = vmatprep.subr.mxu0 0.0
    %3100 = vmatpush1.msra.mxu0 %v153
    %3101 = vmatprep.subr.mxu0 0.0
    %3102 = vmatpush1.msra.mxu0 %v154
    %3103 = vmatprep.subr.mxu0 0.0
    %3104 = vmatpush1.msra.mxu0 %v155
    %3105 = vmatprep.mubr.f32.mxu0 %v2776
    %3106 = vmatmul.mubr.f32.gmra.mrb[0].mxu0 %v2774
    %v3107 = vpop.f32.mrb[0].mxu0
    %v3108 = vadd.f32 %v3038, %v3107
    %v3109 = vpop.f32.mrb[0].mxu0
    %3110 = vdwg.mxu0
    %3111 = vmatprep.subr.mxu0 0.0
    %3112 = vmatpush1.msra.mxu0 %v156
    %3113 = vmatprep.subr.mxu0 0.0
    %3114 = vmatpush1.msra.mxu0 %v157
    %3115 = vmatprep.subr.mxu0 0.0
    %3116 = vmatpush1.msra.mxu0 %v158
    %3117 = vmatprep.subr.mxu0 0.0
    %3118 = vmatpush1.msra.mxu0 %v159
    %3119 = vmatprep.subr.mxu0 0.0
    %3120 = vmatpush1.msra.mxu0 %v160
    %3121 = vmatprep.subr.mxu0 0.0
    %3122 = vmatpush1.msra.mxu0 %v161
    %3123 = vmatprep.subr.mxu0 0.0
    %3124 = vmatpush1.msra.mxu0 %v162
    %3125 = vmatprep.subr.mxu0 0.0
    %3126 = vmatpush1.msra.mxu0 %v163
    %3127 = vmatprep.subr.mxu0 0.0
    %3128 = vmatpush1.msra.mxu0 %v164
    %3129 = vmatprep.subr.mxu0 0.0
    %3130 = vmatpush1.msra.mxu0 %v165
    %3131 = vmatprep.subr.mxu0 0.0
    %3132 = vmatpush1.msra.mxu0 %v166
    %3133 = vmatprep.subr.mxu0 0.0
    %3134 = vmatpush1.msra.mxu0 %v167
    %3135 = vmatprep.subr.mxu0 0.0
    %3136 = vmatpush1.msra.mxu0 %v168
    %3137 = vmatprep.subr.mxu0 0.0
    %3138 = vmatpush1.msra.mxu0 %v169
    %3139 = vmatprep.subr.mxu0 0.0
    %3140 = vmatpush1.msra.mxu0 %v170
    %3141 = vmatprep.subr.mxu0 0.0
    %3142 = vmatpush1.msra.mxu0 %v171
    %3143 = vmatprep.subr.mxu0 0.0
    %3144 = vmatpush1.msra.mxu0 %v172
    %3145 = vmatprep.subr.mxu0 0.0
    %3146 = vmatpush1.msra.mxu0 %v173
    %3147 = vmatprep.subr.mxu0 0.0
    %3148 = vmatpush1.msra.mxu0 %v174
    %3149 = vmatprep.subr.mxu0 0.0
    %3150 = vmatpush1.msra.mxu0 %v175
    %3151 = vmatprep.subr.mxu0 0.0
    %3152 = vmatpush1.msra.mxu0 %v176
    %3153 = vmatprep.subr.mxu0 0.0
    %3154 = vmatpush1.msra.mxu0 %v177
    %3155 = vmatprep.subr.mxu0 0.0
    %3156 = vmatpush1.msra.mxu0 %v178
    %3157 = vmatprep.subr.mxu0 0.0
    %3158 = vmatpush1.msra.mxu0 %v179
    %3159 = vmatprep.subr.mxu0 0.0
    %3160 = vmatpush1.msra.mxu0 %v180
    %3161 = vmatprep.subr.mxu0 0.0
    %3162 = vmatpush1.msra.mxu0 %v181
    %3163 = vmatprep.subr.mxu0 0.0
    %3164 = vmatpush1.msra.mxu0 %v182
    %3165 = vmatprep.subr.mxu0 0.0
    %3166 = vmatpush1.msra.mxu0 %v183
    %3167 = vmatprep.subr.mxu0 0.0
    %3168 = vmatpush1.msra.mxu0 %v184
    %3169 = vmatprep.subr.mxu0 0.0
    %3170 = vmatpush1.msra.mxu0 %v185
    %3171 = vmatprep.subr.mxu0 0.0
    %3172 = vmatpush1.msra.mxu0 %v186
    %3173 = vmatprep.subr.mxu0 0.0
    %3174 = vmatpush1.msra.mxu0 %v187
    %3175 = vmatprep.mubr.f32.mxu0 %v2814
    %3176 = vmatmul.mubr.f32.gmra.mrb[0].mxu0 %v2800
    %v3177 = vpop.f32.mrb[0].mxu0
    %v3178 = vadd.f32 %v3108, %v3177
    %v3179 = vpop.f32.mrb[0].mxu0
    %3180 = vdwg.mxu0
    %3181 = vmatprep.subr.mxu0 0.0
    %3182 = vmatpush1.msra.mxu0 %v188
    %3183 = vmatprep.subr.mxu0 0.0
    %3184 = vmatpush1.msra.mxu0 %v189
    %3185 = vmatprep.subr.mxu0 0.0
    %3186 = vmatpush1.msra.mxu0 %v190
    %3187 = vmatprep.subr.mxu0 0.0
    %3188 = vmatpush1.msra.mxu0 %v191
    %3189 = vmatprep.subr.mxu0 0.0
    %3190 = vmatpush1.msra.mxu0 %v192
    %3191 = vmatprep.subr.mxu0 0.0
    %3192 = vmatpush1.msra.mxu0 %v193
    %3193 = vmatprep.subr.mxu0 0.0
    %3194 = vmatpush1.msra.mxu0 %v194
    %3195 = vmatprep.subr.mxu0 0.0
    %3196 = vmatpush1.msra.mxu0 %v195
    %3197 = vmatprep.subr.mxu0 0.0
    %3198 = vmatpush1.msra.mxu0 %v196
    %3199 = vmatprep.subr.mxu0 0.0
    %3200 = vmatpush1.msra.mxu0 %v197
    %3201 = vmatprep.subr.mxu0 0.0
    %3202 = vmatpush1.msra.mxu0 %v198
    %3203 = vmatprep.subr.mxu0 0.0
    %3204 = vmatpush1.msra.mxu0 %v199
    %3205 = vmatprep.subr.mxu0 0.0
    %3206 = vmatpush1.msra.mxu0 %v200
    %3207 = vmatprep.subr.mxu0 0.0
    %3208 = vmatpush1.msra.mxu0 %v201
    %3209 = vmatprep.subr.mxu0 0.0
    %3210 = vmatpush1.msra.mxu0 %v202
    %3211 = vmatprep.subr.mxu0 0.0
    %3212 = vmatpush1.msra.mxu0 %v203
    %3213 = vmatprep.subr.mxu0 0.0
    %3214 = vmatpush1.msra.mxu0 %v204
    %3215 = vmatprep.subr.mxu0 0.0
    %3216 = vmatpush1.msra.mxu0 %v205
    %3217 = vmatprep.subr.mxu0 0.0
    %3218 = vmatpush1.msra.mxu0 %v206
    %3219 = vmatprep.subr.mxu0 0.0
    %3220 = vmatpush1.msra.mxu0 %v207
    %3221 = vmatprep.subr.mxu0 0.0
    %3222 = vmatpush1.msra.mxu0 %v208
    %3223 = vmatprep.subr.mxu0 0.0
    %3224 = vmatpush1.msra.mxu0 %v209
    %3225 = vmatprep.subr.mxu0 0.0
    %3226 = vmatpush1.msra.mxu0 %v210
    %3227 = vmatprep.subr.mxu0 0.0
    %3228 = vmatpush1.msra.mxu0 %v211
    %3229 = vmatprep.subr.mxu0 0.0
    %3230 = vmatpush1.msra.mxu0 %v212
    %3231 = vmatprep.subr.mxu0 0.0
    %3232 = vmatpush1.msra.mxu0 %v213
    %3233 = vmatprep.subr.mxu0 0.0
    %3234 = vmatpush1.msra.mxu0 %v214
    %3235 = vmatprep.subr.mxu0 0.0
    %3236 = vmatpush1.msra.mxu0 %v215
    %3237 = vmatprep.subr.mxu0 0.0
    %3238 = vmatpush1.msra.mxu0 %v216
    %3239 = vmatprep.subr.mxu0 0.0
    %3240 = vmatpush1.msra.mxu0 %v217
    %3241 = vmatprep.subr.mxu0 0.0
    %3242 = vmatpush1.msra.mxu0 %v218
    %3243 = vmatprep.subr.mxu0 0.0
    %3244 = vmatpush1.msra.mxu0 %v219
    %3245 = vmatprep.mubr.f32.mxu0 %v2816
    %3246 = vmatmul.mubr.f32.gmra.mrb[0].mxu0 %v2815
    %v3247 = vpop.f32.mrb[0].mxu0
    %v3248 = vadd.f32 %v3178, %v3247
    %v3249 = vpop.f32.mrb[0].mxu0
    %3250 = vdwg.mxu0
    %3251 = vmatprep.subr.mxu0 0.0
    %3252 = vmatpush1.msra.mxu0 %v220
    %3253 = vmatprep.subr.mxu0 0.0
    %3254 = vmatpush1.msra.mxu0 %v221
    %3255 = vmatprep.subr.mxu0 0.0
    %3256 = vmatpush1.msra.mxu0 %v222
    %3257 = vmatprep.subr.mxu0 0.0
    %3258 = vmatpush1.msra.mxu0 %v223
    %3259 = vmatprep.subr.mxu0 0.0
    %3260 = vmatpush1.msra.mxu0 %v224
    %3261 = vmatprep.subr.mxu0 0.0
    %3262 = vmatpush1.msra.mxu0 %v225
    %3263 = vmatprep.subr.mxu0 0.0
    %3264 = vmatpush1.msra.mxu0 %v226
    %3265 = vmatprep.subr.mxu0 0.0
    %3266 = vmatpush1.msra.mxu0 %v227
    %3267 = vmatprep.subr.mxu0 0.0
    %3268 = vmatpush1.msra.mxu0 %v228
    %3269 = vmatprep.subr.mxu0 0.0
    %3270 = vmatpush1.msra.mxu0 %v229
    %3271 = vmatprep.subr.mxu0 0.0
    %3272 = vmatpush1.msra.mxu0 %v230
    %3273 = vmatprep.subr.mxu0 0.0
    %3274 = vmatpush1.msra.mxu0 %v231
    %3275 = vmatprep.subr.mxu0 0.0
    %3276 = vmatpush1.msra.mxu0 %v366
    %3277 = vmatprep.subr.mxu0 0.0
    %3278 = vmatpush1.msra.mxu0 0.0
    %3279 = vmatprep.subr.mxu0 0.0
    %3280 = vmatpush1.msra.mxu0 0.0
    %3281 = vmatprep.subr.mxu0 0.0
    %3282 = vmatpush1.msra.mxu0 0.0
    %3283 = vmatprep.subr.mxu0 0.0
    %3284 = vmatpush1.msra.mxu0 0.0
    %3285 = vmatprep.subr.mxu0 0.0
    %3286 = vmatpush1.msra.mxu0 0.0
    %3287 = vmatprep.subr.mxu0 0.0
    %3288 = vmatpush1.msra.mxu0 0.0
    %3289 = vmatprep.subr.mxu0 0.0
    %3290 = vmatpush1.msra.mxu0 0.0
    %3291 = vmatprep.subr.mxu0 0.0
    %3292 = vmatpush1.msra.mxu0 0.0
    %3293 = vmatprep.subr.mxu0 0.0
    %3294 = vmatpush1.msra.mxu0 0.0
    %3295 = vmatprep.subr.mxu0 0.0
    %3296 = vmatpush1.msra.mxu0 0.0
    %3297 = vmatprep.subr.mxu0 0.0
    %3298 = vmatpush1.msra.mxu0 0.0
    %3299 = vmatprep.subr.mxu0 0.0
    %3300 = vmatpush1.msra.mxu0 0.0
    %3301 = vmatprep.subr.mxu0 0.0
    %3302 = vmatpush1.msra.mxu0 0.0
    %3303 = vmatprep.subr.mxu0 0.0
    %3304 = vmatpush1.msra.mxu0 0.0
    %3305 = vmatprep.subr.mxu0 0.0
    %3306 = vmatpush1.msra.mxu0 0.0
    %3307 = vmatprep.subr.mxu0 0.0
    %3308 = vmatpush1.msra.mxu0 0.0
    %3309 = vmatprep.subr.mxu0 0.0
    %3310 = vmatpush1.msra.mxu0 0.0
    %3311 = vmatprep.subr.mxu0 0.0
    %3312 = vmatpush1.msra.mxu0 0.0
    %3313 = vmatprep.subr.mxu0 0.0
    %3314 = vmatpush1.msra.mxu0 0.0
    %3315 = vmatprep.mubr.f32.mxu0 0.0
    %3316 = vmatmul.mubr.f32.gmra.mrb[0].mxu0 %v2829
    %v3317 = vpop.f32.mrb[0].mxu0
    %v3318 = vadd.f32 %v3248, %v3317
    %v3319 = vpop.f32.mrb[0].mxu0
    %3320 = vdwg.mxu0
    %s3321 = scalar_lea.vmem %s3, 8
    %3322 = vst [vmem:[%s3321] sm:$0x3] %v3318
    %s3323 = scalar_lea.vmem %s0, 5
    %v3324 = vld [vmem:[%s3323] ss:$8 sm:$0xf]
    %v3325 = vld [vmem:[%s3323] ss:$8 sm:$0xf0]
    %v3326 = vor.u32 %v3324, %v3325
    %s3327 = scalar_lea.vmem %s0, 69
    %v3328 = vld [vmem:[%s3327] ss:$8 sm:$0xf]
    %v3329 = vld [vmem:[%s3327] ss:$8 sm:$0x10]
    %v3330 = vor.u32 %v3328, %v3329
    %s3331 = scalar_lea.vmem %s0, 109
    %v3332 = vld [vmem:[%s3331] ss:$8 sm:$0xf]
    %v3333 = vld [vmem:[%s3331] ss:$8 sm:$0xf0]
    %v3334 = vor.u32 %v3332, %v3333
    %s3335 = scalar_lea.vmem %s0, 173
    %v3336 = vld [vmem:[%s3335] ss:$8 sm:$0xf]
    %v3337 = vld [vmem:[%s3335] ss:$8 sm:$0x10]
    %v3338 = vor.u32 %v3336, %v3337
    %v3343 = vcombine.low %v3326, %v3334
    %v3344 = vcombine.high %v3326, %v3334
    %v3346 = vunpack.c.l.s4 1966171168
    %v3347 = vunpack.c.0.s8 %v3346
    %v3348 = vlaneseq
    %v3349 = vshrl.u32 %v3348, 7
    %v3350 = vsub.s32 %v3347, %v3349
    %v3351 = vrot.slane %v3343, %v3350
    %v3353 = vunpack.c.l.s4 1966171168
    %v3354 = vunpack.c.0.s8 %v3353
    %v3355 = vlaneseq
    %v3356 = vshrl.u32 %v3355, 7
    %v3357 = vsub.s32 %v3354, %v3356
    %v3358 = vrot.slane %v3344, %v3357
    %v3359 = vcombine.high %v3351, %v3351
    %v3360 = vcombine.high %v3358, %v3358
    %v3362 = vunpack.c.l.s4 1966171168
    %v3363 = vunpack.c.0.s8 %v3362
    %v3364 = vlaneseq
    %v3365 = vshrl.u32 %v3364, 7
    %v3366 = vsub.s32 %v3363, %v3365
    %v3367 = vrot.slane %v3351, %v3366
    %v3369 = vunpack.c.l.s4 1966171168
    %v3370 = vunpack.c.0.s8 %v3369
    %v3371 = vlaneseq
    %v3372 = vshrl.u32 %v3371, 7
    %v3373 = vsub.s32 %v3370, %v3372
    %v3374 = vrot.slane %v3358, %v3373
    %v3376 = vunpack.c.l.s4 1966171168
    %v3377 = vunpack.c.0.s8 %v3376
    %v3378 = vlaneseq
    %v3379 = vshrl.u32 %v3378, 7
    %v3380 = vsub.s32 %v3377, %v3379
    %v3381 = vrot.slane %v3359, %v3380
    %v3383 = vunpack.c.l.s4 1966171168
    %v3384 = vunpack.c.0.s8 %v3383
    %v3385 = vlaneseq
    %v3386 = vshrl.u32 %v3385, 7
    %v3387 = vsub.s32 %v3384, %v3386
    %v3388 = vrot.slane %v3360, %v3387
    %v3389 = vcombine.high %v3367, %v3367
    %v3390 = vcombine.high %v3374, %v3374
    %v3391 = vcombine.high %v3381, %v3381
    %v3392 = vcombine.high %v3388, %v3388
    %v3393 = vcombine.low %v3330, %v3338
    %v3394 = vcombine.high %v3330, %v3338
    %v3396 = vunpack.c.l.s4 1966171168
    %v3397 = vunpack.c.0.s8 %v3396
    %v3398 = vlaneseq
    %v3399 = vshrl.u32 %v3398, 7
    %v3400 = vsub.s32 %v3397, %v3399
    %v3401 = vrot.slane %v3393, %v3400
    %v3403 = vunpack.c.l.s4 1966171168
    %v3404 = vunpack.c.0.s8 %v3403
    %v3405 = vlaneseq
    %v3406 = vshrl.u32 %v3405, 7
    %v3407 = vsub.s32 %v3404, %v3406
    %v3408 = vrot.slane %v3394, %v3407
    %v3409 = vcombine.high %v3401, %v3401
    %v3411 = vunpack.c.l.s4 1966171168
    %v3412 = vunpack.c.0.s8 %v3411
    %v3413 = vlaneseq
    %v3414 = vshrl.u32 %v3413, 7
    %v3415 = vsub.s32 %v3412, %v3414
    %v3416 = vrot.slane %v3401, %v3415
    %v3418 = vunpack.c.l.s4 1966171168
    %v3419 = vunpack.c.0.s8 %v3418
    %v3420 = vlaneseq
    %v3421 = vshrl.u32 %v3420, 7
    %v3422 = vsub.s32 %v3419, %v3421
    %v3423 = vrot.slane %v3408, %v3422
    %v3425 = vunpack.c.l.s4 1966171168
    %v3426 = vunpack.c.0.s8 %v3425
    %v3427 = vlaneseq
    %v3428 = vshrl.u32 %v3427, 7
    %v3429 = vsub.s32 %v3426, %v3428
    %v3430 = vrot.slane %v3409, %v3429
    %v3431 = vcombine.high %v3416, %v3416
    %v3432 = vcombine.high %v3430, %v3430
    %v3445 = vsel %vm361, %v3423, 0
    %3447 = vmatprep.subr.mxu0 0.0
    %3448 = vmatpush1.msra.mxu0 %v28
    %3449 = vmatprep.subr.mxu0 0.0
    %3450 = vmatpush1.msra.mxu0 %v29
    %3451 = vmatprep.subr.mxu0 0.0
    %3452 = vmatpush1.msra.mxu0 %v30
    %3453 = vmatprep.subr.mxu0 0.0
    %3454 = vmatpush1.msra.mxu0 %v31
    %3455 = vmatprep.subr.mxu0 0.0
    %3456 = vmatpush1.msra.mxu0 %v32
    %3457 = vmatprep.subr.mxu0 0.0
    %3458 = vmatpush1.msra.mxu0 %v33
    %3459 = vmatprep.subr.mxu0 0.0
    %3460 = vmatpush1.msra.mxu0 %v34
    %3461 = vmatprep.subr.mxu0 0.0
    %3462 = vmatpush1.msra.mxu0 %v35
    %3463 = vmatprep.subr.mxu0 0.0
    %3464 = vmatpush1.msra.mxu0 %v36
    %3465 = vmatprep.subr.mxu0 0.0
    %3466 = vmatpush1.msra.mxu0 %v37
    %3467 = vmatprep.subr.mxu0 0.0
    %3468 = vmatpush1.msra.mxu0 %v38
    %3469 = vmatprep.subr.mxu0 0.0
    %3470 = vmatpush1.msra.mxu0 %v39
    %3471 = vmatprep.subr.mxu0 0.0
    %3472 = vmatpush1.msra.mxu0 %v40
    %3473 = vmatprep.subr.mxu0 0.0
    %3474 = vmatpush1.msra.mxu0 %v41
    %3475 = vmatprep.subr.mxu0 0.0
    %3476 = vmatpush1.msra.mxu0 %v42
    %3477 = vmatprep.subr.mxu0 0.0
    %3478 = vmatpush1.msra.mxu0 %v43
    %3479 = vmatprep.subr.mxu0 0.0
    %3480 = vmatpush1.msra.mxu0 %v44
    %3481 = vmatprep.subr.mxu0 0.0
    %3482 = vmatpush1.msra.mxu0 %v45
    %3483 = vmatprep.subr.mxu0 0.0
    %3484 = vmatpush1.msra.mxu0 %v46
    %3485 = vmatprep.subr.mxu0 0.0
    %3486 = vmatpush1.msra.mxu0 %v47
    %3487 = vmatprep.subr.mxu0 0.0
    %3488 = vmatpush1.msra.mxu0 %v48
    %3489 = vmatprep.subr.mxu0 0.0
    %3490 = vmatpush1.msra.mxu0 %v49
    %3491 = vmatprep.subr.mxu0 0.0
    %3492 = vmatpush1.msra.mxu0 %v50
    %3493 = vmatprep.subr.mxu0 0.0
    %3494 = vmatpush1.msra.mxu0 %v51
    %3495 = vmatprep.subr.mxu0 0.0
    %3496 = vmatpush1.msra.mxu0 %v52
    %3497 = vmatprep.subr.mxu0 0.0
    %3498 = vmatpush1.msra.mxu0 %v53
    %3499 = vmatprep.subr.mxu0 0.0
    %3500 = vmatpush1.msra.mxu0 %v54
    %3501 = vmatprep.subr.mxu0 0.0
    %3502 = vmatpush1.msra.mxu0 %v55
    %3503 = vmatprep.subr.mxu0 0.0
    %3504 = vmatpush1.msra.mxu0 %v56
    %3505 = vmatprep.subr.mxu0 0.0
    %3506 = vmatpush1.msra.mxu0 %v57
    %3507 = vmatprep.subr.mxu0 0.0
    %3508 = vmatpush1.msra.mxu0 %v58
    %3509 = vmatprep.subr.mxu0 0.0
    %3510 = vmatpush1.msra.mxu0 %v59
    %3511 = vmatprep.mubr.f32.mxu0 %v3381
    %3512 = vmatmul.mubr.f32.gmra.mrb[0].mxu0 %v3367
    %v3513 = vpop.f32.mrb[0].mxu0
    %v3514 = vadd.f32 %v253, %v3513
    %v3515 = vpop.f32.mrb[0].mxu0
    %3516 = vdwg.mxu0
    %3517 = vmatprep.subr.mxu0 0.0
    %3518 = vmatpush1.msra.mxu0 %v60
    %3519 = vmatprep.subr.mxu0 0.0
    %3520 = vmatpush1.msra.mxu0 %v61
    %3521 = vmatprep.subr.mxu0 0.0
    %3522 = vmatpush1.msra.mxu0 %v62
    %3523 = vmatprep.subr.mxu0 0.0
    %3524 = vmatpush1.msra.mxu0 %v63
    %3525 = vmatprep.subr.mxu0 0.0
    %3526 = vmatpush1.msra.mxu0 %v64
    %3527 = vmatprep.subr.mxu0 0.0
    %3528 = vmatpush1.msra.mxu0 %v65
    %3529 = vmatprep.subr.mxu0 0.0
    %3530 = vmatpush1.msra.mxu0 %v66
    %3531 = vmatprep.subr.mxu0 0.0
    %3532 = vmatpush1.msra.mxu0 %v67
    %3533 = vmatprep.subr.mxu0 0.0
    %3534 = vmatpush1.msra.mxu0 %v68
    %3535 = vmatprep.subr.mxu0 0.0
    %3536 = vmatpush1.msra.mxu0 %v69
    %3537 = vmatprep.subr.mxu0 0.0
    %3538 = vmatpush1.msra.mxu0 %v70
    %3539 = vmatprep.subr.mxu0 0.0
    %3540 = vmatpush1.msra.mxu0 %v71
    %3541 = vmatprep.subr.mxu0 0.0
    %3542 = vmatpush1.msra.mxu0 %v72
    %3543 = vmatprep.subr.mxu0 0.0
    %3544 = vmatpush1.msra.mxu0 %v73
    %3545 = vmatprep.subr.mxu0 0.0
    %3546 = vmatpush1.msra.mxu0 %v74
    %3547 = vmatprep.subr.mxu0 0.0
    %3548 = vmatpush1.msra.mxu0 %v75
    %3549 = vmatprep.subr.mxu0 0.0
    %3550 = vmatpush1.msra.mxu0 %v76
    %3551 = vmatprep.subr.mxu0 0.0
    %3552 = vmatpush1.msra.mxu0 %v77
    %3553 = vmatprep.subr.mxu0 0.0
    %3554 = vmatpush1.msra.mxu0 %v78
    %3555 = vmatprep.subr.mxu0 0.0
    %3556 = vmatpush1.msra.mxu0 %v79
    %3557 = vmatprep.subr.mxu0 0.0
    %3558 = vmatpush1.msra.mxu0 %v80
    %3559 = vmatprep.subr.mxu0 0.0
    %3560 = vmatpush1.msra.mxu0 %v81
    %3561 = vmatprep.subr.mxu0 0.0
    %3562 = vmatpush1.msra.mxu0 %v82
    %3563 = vmatprep.subr.mxu0 0.0
    %3564 = vmatpush1.msra.mxu0 %v83
    %3565 = vmatprep.subr.mxu0 0.0
    %3566 = vmatpush1.msra.mxu0 %v84
    %3567 = vmatprep.subr.mxu0 0.0
    %3568 = vmatpush1.msra.mxu0 %v85
    %3569 = vmatprep.subr.mxu0 0.0
    %3570 = vmatpush1.msra.mxu0 %v86
    %3571 = vmatprep.subr.mxu0 0.0
    %3572 = vmatpush1.msra.mxu0 %v87
    %3573 = vmatprep.subr.mxu0 0.0
    %3574 = vmatpush1.msra.mxu0 %v88
    %3575 = vmatprep.subr.mxu0 0.0
    %3576 = vmatpush1.msra.mxu0 %v89
    %3577 = vmatprep.subr.mxu0 0.0
    %3578 = vmatpush1.msra.mxu0 %v90
    %3579 = vmatprep.subr.mxu0 0.0
    %3580 = vmatpush1.msra.mxu0 %v91
    %3581 = vmatprep.mubr.f32.mxu0 %v3391
    %3582 = vmatmul.mubr.f32.gmra.mrb[0].mxu0 %v3389
    %v3583 = vpop.f32.mrb[0].mxu0
    %v3584 = vadd.f32 %v3514, %v3583
    %v3585 = vpop.f32.mrb[0].mxu0
    %3586 = vdwg.mxu0
    %3587 = vmatprep.subr.mxu0 0.0
    %3588 = vmatpush1.msra.mxu0 %v92
    %3589 = vmatprep.subr.mxu0 0.0
    %3590 = vmatpush1.msra.mxu0 %v93
    %3591 = vmatprep.subr.mxu0 0.0
    %3592 = vmatpush1.msra.mxu0 %v94
    %3593 = vmatprep.subr.mxu0 0.0
    %3594 = vmatpush1.msra.mxu0 %v95
    %3595 = vmatprep.subr.mxu0 0.0
    %3596 = vmatpush1.msra.mxu0 %v96
    %3597 = vmatprep.subr.mxu0 0.0
    %3598 = vmatpush1.msra.mxu0 %v97
    %3599 = vmatprep.subr.mxu0 0.0
    %3600 = vmatpush1.msra.mxu0 %v98
    %3601 = vmatprep.subr.mxu0 0.0
    %3602 = vmatpush1.msra.mxu0 %v99
    %3603 = vmatprep.subr.mxu0 0.0
    %3604 = vmatpush1.msra.mxu0 %v100
    %3605 = vmatprep.subr.mxu0 0.0
    %3606 = vmatpush1.msra.mxu0 %v101
    %3607 = vmatprep.subr.mxu0 0.0
    %3608 = vmatpush1.msra.mxu0 %v102
    %3609 = vmatprep.subr.mxu0 0.0
    %3610 = vmatpush1.msra.mxu0 %v103
    %3611 = vmatprep.subr.mxu0 0.0
    %3612 = vmatpush1.msra.mxu0 %v104
    %3613 = vmatprep.subr.mxu0 0.0
    %3614 = vmatpush1.msra.mxu0 %v105
    %3615 = vmatprep.subr.mxu0 0.0
    %3616 = vmatpush1.msra.mxu0 %v106
    %3617 = vmatprep.subr.mxu0 0.0
    %3618 = vmatpush1.msra.mxu0 %v107
    %3619 = vmatprep.subr.mxu0 0.0
    %3620 = vmatpush1.msra.mxu0 %v108
    %3621 = vmatprep.subr.mxu0 0.0
    %3622 = vmatpush1.msra.mxu0 %v109
    %3623 = vmatprep.subr.mxu0 0.0
    %3624 = vmatpush1.msra.mxu0 %v110
    %3625 = vmatprep.subr.mxu0 0.0
    %3626 = vmatpush1.msra.mxu0 %v111
    %3627 = vmatprep.subr.mxu0 0.0
    %3628 = vmatpush1.msra.mxu0 %v112
    %3629 = vmatprep.subr.mxu0 0.0
    %3630 = vmatpush1.msra.mxu0 %v113
    %3631 = vmatprep.subr.mxu0 0.0
    %3632 = vmatpush1.msra.mxu0 %v114
    %3633 = vmatprep.subr.mxu0 0.0
    %3634 = vmatpush1.msra.mxu0 %v115
    %3635 = vmatprep.subr.mxu0 0.0
    %3636 = vmatpush1.msra.mxu0 %v116
    %3637 = vmatprep.subr.mxu0 0.0
    %3638 = vmatpush1.msra.mxu0 %v117
    %3639 = vmatprep.subr.mxu0 0.0
    %3640 = vmatpush1.msra.mxu0 %v118
    %3641 = vmatprep.subr.mxu0 0.0
    %3642 = vmatpush1.msra.mxu0 %v119
    %3643 = vmatprep.subr.mxu0 0.0
    %3644 = vmatpush1.msra.mxu0 %v120
    %3645 = vmatprep.subr.mxu0 0.0
    %3646 = vmatpush1.msra.mxu0 %v121
    %3647 = vmatprep.subr.mxu0 0.0
    %3648 = vmatpush1.msra.mxu0 %v122
    %3649 = vmatprep.subr.mxu0 0.0
    %3650 = vmatpush1.msra.mxu0 %v123
    %3651 = vmatprep.mubr.f32.mxu0 %v3388
    %3652 = vmatmul.mubr.f32.gmra.mrb[0].mxu0 %v3374
    %v3653 = vpop.f32.mrb[0].mxu0
    %v3654 = vadd.f32 %v3584, %v3653
    %v3655 = vpop.f32.mrb[0].mxu0
    %3656 = vdwg.mxu0
    %3657 = vmatprep.subr.mxu0 0.0
    %3658 = vmatpush1.msra.mxu0 %v124
    %3659 = vmatprep.subr.mxu0 0.0
    %3660 = vmatpush1.msra.mxu0 %v125
    %3661 = vmatprep.subr.mxu0 0.0
    %3662 = vmatpush1.msra.mxu0 %v126
    %3663 = vmatprep.subr.mxu0 0.0
    %3664 = vmatpush1.msra.mxu0 %v127
    %3665 = vmatprep.subr.mxu0 0.0
    %3666 = vmatpush1.msra.mxu0 %v128
    %3667 = vmatprep.subr.mxu0 0.0
    %3668 = vmatpush1.msra.mxu0 %v129
    %3669 = vmatprep.subr.mxu0 0.0
    %3670 = vmatpush1.msra.mxu0 %v130
    %3671 = vmatprep.subr.mxu0 0.0
    %3672 = vmatpush1.msra.mxu0 %v131
    %3673 = vmatprep.subr.mxu0 0.0
    %3674 = vmatpush1.msra.mxu0 %v132
    %3675 = vmatprep.subr.mxu0 0.0
    %3676 = vmatpush1.msra.mxu0 %v133
    %3677 = vmatprep.subr.mxu0 0.0
    %3678 = vmatpush1.msra.mxu0 %v134
    %3679 = vmatprep.subr.mxu0 0.0
    %3680 = vmatpush1.msra.mxu0 %v135
    %3681 = vmatprep.subr.mxu0 0.0
    %3682 = vmatpush1.msra.mxu0 %v136
    %3683 = vmatprep.subr.mxu0 0.0
    %3684 = vmatpush1.msra.mxu0 %v137
    %3685 = vmatprep.subr.mxu0 0.0
    %3686 = vmatpush1.msra.mxu0 %v138
    %3687 = vmatprep.subr.mxu0 0.0
    %3688 = vmatpush1.msra.mxu0 %v139
    %3689 = vmatprep.subr.mxu0 0.0
    %3690 = vmatpush1.msra.mxu0 %v140
    %3691 = vmatprep.subr.mxu0 0.0
    %3692 = vmatpush1.msra.mxu0 %v141
    %3693 = vmatprep.subr.mxu0 0.0
    %3694 = vmatpush1.msra.mxu0 %v142
    %3695 = vmatprep.subr.mxu0 0.0
    %3696 = vmatpush1.msra.mxu0 %v143
    %3697 = vmatprep.subr.mxu0 0.0
    %3698 = vmatpush1.msra.mxu0 %v144
    %3699 = vmatprep.subr.mxu0 0.0
    %3700 = vmatpush1.msra.mxu0 %v145
    %3701 = vmatprep.subr.mxu0 0.0
    %3702 = vmatpush1.msra.mxu0 %v146
    %3703 = vmatprep.subr.mxu0 0.0
    %3704 = vmatpush1.msra.mxu0 %v147
    %3705 = vmatprep.subr.mxu0 0.0
    %3706 = vmatpush1.msra.mxu0 %v148
    %3707 = vmatprep.subr.mxu0 0.0
    %3708 = vmatpush1.msra.mxu0 %v149
    %3709 = vmatprep.subr.mxu0 0.0
    %3710 = vmatpush1.msra.mxu0 %v150
    %3711 = vmatprep.subr.mxu0 0.0
    %3712 = vmatpush1.msra.mxu0 %v151
    %3713 = vmatprep.subr.mxu0 0.0
    %3714 = vmatpush1.msra.mxu0 %v152
    %3715 = vmatprep.subr.mxu0 0.0
    %3716 = vmatpush1.msra.mxu0 %v153
    %3717 = vmatprep.subr.mxu0 0.0
    %3718 = vmatpush1.msra.mxu0 %v154
    %3719 = vmatprep.subr.mxu0 0.0
    %3720 = vmatpush1.msra.mxu0 %v155
    %3721 = vmatprep.mubr.f32.mxu0 %v3392
    %3722 = vmatmul.mubr.f32.gmra.mrb[0].mxu0 %v3390
    %v3723 = vpop.f32.mrb[0].mxu0
    %v3724 = vadd.f32 %v3654, %v3723
    %v3725 = vpop.f32.mrb[0].mxu0
    %3726 = vdwg.mxu0
    %3727 = vmatprep.subr.mxu0 0.0
    %3728 = vmatpush1.msra.mxu0 %v156
    %3729 = vmatprep.subr.mxu0 0.0
    %3730 = vmatpush1.msra.mxu0 %v157
    %3731 = vmatprep.subr.mxu0 0.0
    %3732 = vmatpush1.msra.mxu0 %v158
    %3733 = vmatprep.subr.mxu0 0.0
    %3734 = vmatpush1.msra.mxu0 %v159
    %3735 = vmatprep.subr.mxu0 0.0
    %3736 = vmatpush1.msra.mxu0 %v160
    %3737 = vmatprep.subr.mxu0 0.0
    %3738 = vmatpush1.msra.mxu0 %v161
    %3739 = vmatprep.subr.mxu0 0.0
    %3740 = vmatpush1.msra.mxu0 %v162
    %3741 = vmatprep.subr.mxu0 0.0
    %3742 = vmatpush1.msra.mxu0 %v163
    %3743 = vmatprep.subr.mxu0 0.0
    %3744 = vmatpush1.msra.mxu0 %v164
    %3745 = vmatprep.subr.mxu0 0.0
    %3746 = vmatpush1.msra.mxu0 %v165
    %3747 = vmatprep.subr.mxu0 0.0
    %3748 = vmatpush1.msra.mxu0 %v166
    %3749 = vmatprep.subr.mxu0 0.0
    %3750 = vmatpush1.msra.mxu0 %v167
    %3751 = vmatprep.subr.mxu0 0.0
    %3752 = vmatpush1.msra.mxu0 %v168
    %3753 = vmatprep.subr.mxu0 0.0
    %3754 = vmatpush1.msra.mxu0 %v169
    %3755 = vmatprep.subr.mxu0 0.0
    %3756 = vmatpush1.msra.mxu0 %v170
    %3757 = vmatprep.subr.mxu0 0.0
    %3758 = vmatpush1.msra.mxu0 %v171
    %3759 = vmatprep.subr.mxu0 0.0
    %3760 = vmatpush1.msra.mxu0 %v172
    %3761 = vmatprep.subr.mxu0 0.0
    %3762 = vmatpush1.msra.mxu0 %v173
    %3763 = vmatprep.subr.mxu0 0.0
    %3764 = vmatpush1.msra.mxu0 %v174
    %3765 = vmatprep.subr.mxu0 0.0
    %3766 = vmatpush1.msra.mxu0 %v175
    %3767 = vmatprep.subr.mxu0 0.0
    %3768 = vmatpush1.msra.mxu0 %v176
    %3769 = vmatprep.subr.mxu0 0.0
    %3770 = vmatpush1.msra.mxu0 %v177
    %3771 = vmatprep.subr.mxu0 0.0
    %3772 = vmatpush1.msra.mxu0 %v178
    %3773 = vmatprep.subr.mxu0 0.0
    %3774 = vmatpush1.msra.mxu0 %v179
    %3775 = vmatprep.subr.mxu0 0.0
    %3776 = vmatpush1.msra.mxu0 %v180
    %3777 = vmatprep.subr.mxu0 0.0
    %3778 = vmatpush1.msra.mxu0 %v181
    %3779 = vmatprep.subr.mxu0 0.0
    %3780 = vmatpush1.msra.mxu0 %v182
    %3781 = vmatprep.subr.mxu0 0.0
    %3782 = vmatpush1.msra.mxu0 %v183
    %3783 = vmatprep.subr.mxu0 0.0
    %3784 = vmatpush1.msra.mxu0 %v184
    %3785 = vmatprep.subr.mxu0 0.0
    %3786 = vmatpush1.msra.mxu0 %v185
    %3787 = vmatprep.subr.mxu0 0.0
    %3788 = vmatpush1.msra.mxu0 %v186
    %3789 = vmatprep.subr.mxu0 0.0
    %3790 = vmatpush1.msra.mxu0 %v187
    %3791 = vmatprep.mubr.f32.mxu0 %v3430
    %3792 = vmatmul.mubr.f32.gmra.mrb[0].mxu0 %v3416
    %v3793 = vpop.f32.mrb[0].mxu0
    %v3794 = vadd.f32 %v3724, %v3793
    %v3795 = vpop.f32.mrb[0].mxu0
    %3796 = vdwg.mxu0
    %3797 = vmatprep.subr.mxu0 0.0
    %3798 = vmatpush1.msra.mxu0 %v188
    %3799 = vmatprep.subr.mxu0 0.0
    %3800 = vmatpush1.msra.mxu0 %v189
    %3801 = vmatprep.subr.mxu0 0.0
    %3802 = vmatpush1.msra.mxu0 %v190
    %3803 = vmatprep.subr.mxu0 0.0
    %3804 = vmatpush1.msra.mxu0 %v191
    %3805 = vmatprep.subr.mxu0 0.0
    %3806 = vmatpush1.msra.mxu0 %v192
    %3807 = vmatprep.subr.mxu0 0.0
    %3808 = vmatpush1.msra.mxu0 %v193
    %3809 = vmatprep.subr.mxu0 0.0
    %3810 = vmatpush1.msra.mxu0 %v194
    %3811 = vmatprep.subr.mxu0 0.0
    %3812 = vmatpush1.msra.mxu0 %v195
    %3813 = vmatprep.subr.mxu0 0.0
    %3814 = vmatpush1.msra.mxu0 %v196
    %3815 = vmatprep.subr.mxu0 0.0
    %3816 = vmatpush1.msra.mxu0 %v197
    %3817 = vmatprep.subr.mxu0 0.0
    %3818 = vmatpush1.msra.mxu0 %v198
    %3819 = vmatprep.subr.mxu0 0.0
    %3820 = vmatpush1.msra.mxu0 %v199
    %3821 = vmatprep.subr.mxu0 0.0
    %3822 = vmatpush1.msra.mxu0 %v200
    %3823 = vmatprep.subr.mxu0 0.0
    %3824 = vmatpush1.msra.mxu0 %v201
    %3825 = vmatprep.subr.mxu0 0.0
    %3826 = vmatpush1.msra.mxu0 %v202
    %3827 = vmatprep.subr.mxu0 0.0
    %3828 = vmatpush1.msra.mxu0 %v203
    %3829 = vmatprep.subr.mxu0 0.0
    %3830 = vmatpush1.msra.mxu0 %v204
    %3831 = vmatprep.subr.mxu0 0.0
    %3832 = vmatpush1.msra.mxu0 %v205
    %3833 = vmatprep.subr.mxu0 0.0
    %3834 = vmatpush1.msra.mxu0 %v206
    %3835 = vmatprep.subr.mxu0 0.0
    %3836 = vmatpush1.msra.mxu0 %v207
    %3837 = vmatprep.subr.mxu0 0.0
    %3838 = vmatpush1.msra.mxu0 %v208
    %3839 = vmatprep.subr.mxu0 0.0
    %3840 = vmatpush1.msra.mxu0 %v209
    %3841 = vmatprep.subr.mxu0 0.0
    %3842 = vmatpush1.msra.mxu0 %v210
    %3843 = vmatprep.subr.mxu0 0.0
    %3844 = vmatpush1.msra.mxu0 %v211
    %3845 = vmatprep.subr.mxu0 0.0
    %3846 = vmatpush1.msra.mxu0 %v212
    %3847 = vmatprep.subr.mxu0 0.0
    %3848 = vmatpush1.msra.mxu0 %v213
    %3849 = vmatprep.subr.mxu0 0.0
    %3850 = vmatpush1.msra.mxu0 %v214
    %3851 = vmatprep.subr.mxu0 0.0
    %3852 = vmatpush1.msra.mxu0 %v215
    %3853 = vmatprep.subr.mxu0 0.0
    %3854 = vmatpush1.msra.mxu0 %v216
    %3855 = vmatprep.subr.mxu0 0.0
    %3856 = vmatpush1.msra.mxu0 %v217
    %3857 = vmatprep.subr.mxu0 0.0
    %3858 = vmatpush1.msra.mxu0 %v218
    %3859 = vmatprep.subr.mxu0 0.0
    %3860 = vmatpush1.msra.mxu0 %v219
    %3861 = vmatprep.mubr.f32.mxu0 %v3432
    %3862 = vmatmul.mubr.f32.gmra.mrb[0].mxu0 %v3431
    %v3863 = vpop.f32.mrb[0].mxu0
    %v3864 = vadd.f32 %v3794, %v3863
    %v3865 = vpop.f32.mrb[0].mxu0
    %3866 = vdwg.mxu0
    %3867 = vmatprep.subr.mxu0 0.0
    %3868 = vmatpush1.msra.mxu0 %v220
    %3869 = vmatprep.subr.mxu0 0.0
    %3870 = vmatpush1.msra.mxu0 %v221
    %3871 = vmatprep.subr.mxu0 0.0
    %3872 = vmatpush1.msra.mxu0 %v222
    %3873 = vmatprep.subr.mxu0 0.0
    %3874 = vmatpush1.msra.mxu0 %v223
    %3875 = vmatprep.subr.mxu0 0.0
    %3876 = vmatpush1.msra.mxu0 %v224
    %3877 = vmatprep.subr.mxu0 0.0
    %3878 = vmatpush1.msra.mxu0 %v225
    %3879 = vmatprep.subr.mxu0 0.0
    %3880 = vmatpush1.msra.mxu0 %v226
    %3881 = vmatprep.subr.mxu0 0.0
    %3882 = vmatpush1.msra.mxu0 %v227
    %3883 = vmatprep.subr.mxu0 0.0
    %3884 = vmatpush1.msra.mxu0 %v228
    %3885 = vmatprep.subr.mxu0 0.0
    %3886 = vmatpush1.msra.mxu0 %v229
    %3887 = vmatprep.subr.mxu0 0.0
    %3888 = vmatpush1.msra.mxu0 %v230
    %3889 = vmatprep.subr.mxu0 0.0
    %3890 = vmatpush1.msra.mxu0 %v231
    %3891 = vmatprep.subr.mxu0 0.0
    %3892 = vmatpush1.msra.mxu0 %v366
    %3893 = vmatprep.subr.mxu0 0.0
    %3894 = vmatpush1.msra.mxu0 0.0
    %3895 = vmatprep.subr.mxu0 0.0
    %3896 = vmatpush1.msra.mxu0 0.0
    %3897 = vmatprep.subr.mxu0 0.0
    %3898 = vmatpush1.msra.mxu0 0.0
    %3899 = vmatprep.subr.mxu0 0.0
    %3900 = vmatpush1.msra.mxu0 0.0
    %3901 = vmatprep.subr.mxu0 0.0
    %3902 = vmatpush1.msra.mxu0 0.0
    %3903 = vmatprep.subr.mxu0 0.0
    %3904 = vmatpush1.msra.mxu0 0.0
    %3905 = vmatprep.subr.mxu0 0.0
    %3906 = vmatpush1.msra.mxu0 0.0
    %3907 = vmatprep.subr.mxu0 0.0
    %3908 = vmatpush1.msra.mxu0 0.0
    %3909 = vmatprep.subr.mxu0 0.0
    %3910 = vmatpush1.msra.mxu0 0.0
    %3911 = vmatprep.subr.mxu0 0.0
    %3912 = vmatpush1.msra.mxu0 0.0
    %3913 = vmatprep.subr.mxu0 0.0
    %3914 = vmatpush1.msra.mxu0 0.0
    %3915 = vmatprep.subr.mxu0 0.0
    %3916 = vmatpush1.msra.mxu0 0.0
    %3917 = vmatprep.subr.mxu0 0.0
    %3918 = vmatpush1.msra.mxu0 0.0
    %3919 = vmatprep.subr.mxu0 0.0
    %3920 = vmatpush1.msra.mxu0 0.0
    %3921 = vmatprep.subr.mxu0 0.0
    %3922 = vmatpush1.msra.mxu0 0.0
    %3923 = vmatprep.subr.mxu0 0.0
    %3924 = vmatpush1.msra.mxu0 0.0
    %3925 = vmatprep.subr.mxu0 0.0
    %3926 = vmatpush1.msra.mxu0 0.0
    %3927 = vmatprep.subr.mxu0 0.0
    %3928 = vmatpush1.msra.mxu0 0.0
    %3929 = vmatprep.subr.mxu0 0.0
    %3930 = vmatpush1.msra.mxu0 0.0
    %3931 = vmatprep.mubr.f32.mxu0 0.0
    %3932 = vmatmul.mubr.f32.gmra.mrb[0].mxu0 %v3445
    %v3933 = vpop.f32.mrb[0].mxu0
    %v3934 = vadd.f32 %v3864, %v3933
    %v3935 = vpop.f32.mrb[0].mxu0
    %3936 = vdwg.mxu0
    %s3937 = scalar_lea.vmem %s3, 10
    %3938 = vst [vmem:[%s3937] sm:$0x3] %v3934
    %s3939 = scalar_lea.vmem %s0, 6
    %v3940 = vld [vmem:[%s3939] ss:$8 sm:$0xf]
    %v3941 = vld [vmem:[%s3939] ss:$8 sm:$0xf0]
    %v3942 = vor.u32 %v3940, %v3941
    %s3943 = scalar_lea.vmem %s0, 70
    %v3944 = vld [vmem:[%s3943] ss:$8 sm:$0xf]
    %v3945 = vld [vmem:[%s3943] ss:$8 sm:$0x10]
    %v3946 = vor.u32 %v3944, %v3945
    %s3947 = scalar_lea.vmem %s0, 110
    %v3948 = vld [vmem:[%s3947] ss:$8 sm:$0xf]
    %v3949 = vld [vmem:[%s3947] ss:$8 sm:$0xf0]
    %v3950 = vor.u32 %v3948, %v3949
    %s3951 = scalar_lea.vmem %s0, 174
    %v3952 = vld [vmem:[%s3951] ss:$8 sm:$0xf]
    %v3953 = vld [vmem:[%s3951] ss:$8 sm:$0x10]
    %v3954 = vor.u32 %v3952, %v3953
    %v3959 = vcombine.low %v3942, %v3950
    %v3960 = vcombine.high %v3942, %v3950
    %v3962 = vunpack.c.l.s4 1966171168
    %v3963 = vunpack.c.0.s8 %v3962
    %v3964 = vlaneseq
    %v3965 = vshrl.u32 %v3964, 7
    %v3966 = vsub.s32 %v3963, %v3965
    %v3967 = vrot.slane %v3959, %v3966
    %v3969 = vunpack.c.l.s4 1966171168
    %v3970 = vunpack.c.0.s8 %v3969
    %v3971 = vlaneseq
    %v3972 = vshrl.u32 %v3971, 7
    %v3973 = vsub.s32 %v3970, %v3972
    %v3974 = vrot.slane %v3960, %v3973
    %v3975 = vcombine.high %v3967, %v3967
    %v3976 = vcombine.high %v3974, %v3974
    %v3978 = vunpack.c.l.s4 1966171168
    %v3979 = vunpack.c.0.s8 %v3978
    %v3980 = vlaneseq
    %v3981 = vshrl.u32 %v3980, 7
    %v3982 = vsub.s32 %v3979, %v3981
    %v3983 = vrot.slane %v3967, %v3982
    %v3985 = vunpack.c.l.s4 1966171168
    %v3986 = vunpack.c.0.s8 %v3985
    %v3987 = vlaneseq
    %v3988 = vshrl.u32 %v3987, 7
    %v3989 = vsub.s32 %v3986, %v3988
    %v3990 = vrot.slane %v3974, %v3989
    %v3992 = vunpack.c.l.s4 1966171168
    %v3993 = vunpack.c.0.s8 %v3992
    %v3994 = vlaneseq
    %v3995 = vshrl.u32 %v3994, 7
    %v3996 = vsub.s32 %v3993, %v3995
    %v3997 = vrot.slane %v3975, %v3996
    %v3999 = vunpack.c.l.s4 1966171168
    %v4000 = vunpack.c.0.s8 %v3999
    %v4001 = vlaneseq
    %v4002 = vshrl.u32 %v4001, 7
    %v4003 = vsub.s32 %v4000, %v4002
    %v4004 = vrot.slane %v3976, %v4003
    %v4005 = vcombine.high %v3983, %v3983
    %v4006 = vcombine.high %v3990, %v3990
    %v4007 = vcombine.high %v3997, %v3997
    %v4008 = vcombine.high %v4004, %v4004
    %v4009 = vcombine.low %v3946, %v3954
    %v4010 = vcombine.high %v3946, %v3954
    %v4012 = vunpack.c.l.s4 1966171168
    %v4013 = vunpack.c.0.s8 %v4012
    %v4014 = vlaneseq
    %v4015 = vshrl.u32 %v4014, 7
    %v4016 = vsub.s32 %v4013, %v4015
    %v4017 = vrot.slane %v4009, %v4016
    %v4019 = vunpack.c.l.s4 1966171168
    %v4020 = vunpack.c.0.s8 %v4019
    %v4021 = vlaneseq
    %v4022 = vshrl.u32 %v4021, 7
    %v4023 = vsub.s32 %v4020, %v4022
    %v4024 = vrot.slane %v4010, %v4023
    %v4025 = vcombine.high %v4017, %v4017
    %v4027 = vunpack.c.l.s4 1966171168
    %v4028 = vunpack.c.0.s8 %v4027
    %v4029 = vlaneseq
    %v4030 = vshrl.u32 %v4029, 7
    %v4031 = vsub.s32 %v4028, %v4030
    %v4032 = vrot.slane %v4017, %v4031
    %v4034 = vunpack.c.l.s4 1966171168
    %v4035 = vunpack.c.0.s8 %v4034
    %v4036 = vlaneseq
    %v4037 = vshrl.u32 %v4036, 7
    %v4038 = vsub.s32 %v4035, %v4037
    %v4039 = vrot.slane %v4024, %v4038
    %v4041 = vunpack.c.l.s4 1966171168
    %v4042 = vunpack.c.0.s8 %v4041
    %v4043 = vlaneseq
    %v4044 = vshrl.u32 %v4043, 7
    %v4045 = vsub.s32 %v4042, %v4044
    %v4046 = vrot.slane %v4025, %v4045
    %v4047 = vcombine.high %v4032, %v4032
    %v4048 = vcombine.high %v4046, %v4046
    %v4061 = vsel %vm361, %v4039, 0
    %4063 = vmatprep.subr.mxu0 0.0
    %4064 = vmatpush1.msra.mxu0 %v28
    %4065 = vmatprep.subr.mxu0 0.0
    %4066 = vmatpush1.msra.mxu0 %v29
    %4067 = vmatprep.subr.mxu0 0.0
    %4068 = vmatpush1.msra.mxu0 %v30
    %4069 = vmatprep.subr.mxu0 0.0
    %4070 = vmatpush1.msra.mxu0 %v31
    %4071 = vmatprep.subr.mxu0 0.0
    %4072 = vmatpush1.msra.mxu0 %v32
    %4073 = vmatprep.subr.mxu0 0.0
    %4074 = vmatpush1.msra.mxu0 %v33
    %4075 = vmatprep.subr.mxu0 0.0
    %4076 = vmatpush1.msra.mxu0 %v34
    %4077 = vmatprep.subr.mxu0 0.0
    %4078 = vmatpush1.msra.mxu0 %v35
    %4079 = vmatprep.subr.mxu0 0.0
    %4080 = vmatpush1.msra.mxu0 %v36
    %4081 = vmatprep.subr.mxu0 0.0
    %4082 = vmatpush1.msra.mxu0 %v37
    %4083 = vmatprep.subr.mxu0 0.0
    %4084 = vmatpush1.msra.mxu0 %v38
    %4085 = vmatprep.subr.mxu0 0.0
    %4086 = vmatpush1.msra.mxu0 %v39
    %4087 = vmatprep.subr.mxu0 0.0
    %4088 = vmatpush1.msra.mxu0 %v40
    %4089 = vmatprep.subr.mxu0 0.0
    %4090 = vmatpush1.msra.mxu0 %v41
    %4091 = vmatprep.subr.mxu0 0.0
    %4092 = vmatpush1.msra.mxu0 %v42
    %4093 = vmatprep.subr.mxu0 0.0
    %4094 = vmatpush1.msra.mxu0 %v43
    %4095 = vmatprep.subr.mxu0 0.0
    %4096 = vmatpush1.msra.mxu0 %v44
    %4097 = vmatprep.subr.mxu0 0.0
    %4098 = vmatpush1.msra.mxu0 %v45
    %4099 = vmatprep.subr.mxu0 0.0
    %4100 = vmatpush1.msra.mxu0 %v46
    %4101 = vmatprep.subr.mxu0 0.0
    %4102 = vmatpush1.msra.mxu0 %v47
    %4103 = vmatprep.subr.mxu0 0.0
    %4104 = vmatpush1.msra.mxu0 %v48
    %4105 = vmatprep.subr.mxu0 0.0
    %4106 = vmatpush1.msra.mxu0 %v49
    %4107 = vmatprep.subr.mxu0 0.0
    %4108 = vmatpush1.msra.mxu0 %v50
    %4109 = vmatprep.subr.mxu0 0.0
    %4110 = vmatpush1.msra.mxu0 %v51
    %4111 = vmatprep.subr.mxu0 0.0
    %4112 = vmatpush1.msra.mxu0 %v52
    %4113 = vmatprep.subr.mxu0 0.0
    %4114 = vmatpush1.msra.mxu0 %v53
    %4115 = vmatprep.subr.mxu0 0.0
    %4116 = vmatpush1.msra.mxu0 %v54
    %4117 = vmatprep.subr.mxu0 0.0
    %4118 = vmatpush1.msra.mxu0 %v55
    %4119 = vmatprep.subr.mxu0 0.0
    %4120 = vmatpush1.msra.mxu0 %v56
    %4121 = vmatprep.subr.mxu0 0.0
    %4122 = vmatpush1.msra.mxu0 %v57
    %4123 = vmatprep.subr.mxu0 0.0
    %4124 = vmatpush1.msra.mxu0 %v58
    %4125 = vmatprep.subr.mxu0 0.0
    %4126 = vmatpush1.msra.mxu0 %v59
    %4127 = vmatprep.mubr.f32.mxu0 %v3997
    %4128 = vmatmul.mubr.f32.gmra.mrb[0].mxu0 %v3983
    %v4129 = vpop.f32.mrb[0].mxu0
    %v4130 = vadd.f32 %v253, %v4129
    %v4131 = vpop.f32.mrb[0].mxu0
    %4132 = vdwg.mxu0
    %4133 = vmatprep.subr.mxu0 0.0
    %4134 = vmatpush1.msra.mxu0 %v60
    %4135 = vmatprep.subr.mxu0 0.0
    %4136 = vmatpush1.msra.mxu0 %v61
    %4137 = vmatprep.subr.mxu0 0.0
    %4138 = vmatpush1.msra.mxu0 %v62
    %4139 = vmatprep.subr.mxu0 0.0
    %4140 = vmatpush1.msra.mxu0 %v63
    %4141 = vmatprep.subr.mxu0 0.0
    %4142 = vmatpush1.msra.mxu0 %v64
    %4143 = vmatprep.subr.mxu0 0.0
    %4144 = vmatpush1.msra.mxu0 %v65
    %4145 = vmatprep.subr.mxu0 0.0
    %4146 = vmatpush1.msra.mxu0 %v66
    %4147 = vmatprep.subr.mxu0 0.0
    %4148 = vmatpush1.msra.mxu0 %v67
    %4149 = vmatprep.subr.mxu0 0.0
    %4150 = vmatpush1.msra.mxu0 %v68
    %4151 = vmatprep.subr.mxu0 0.0
    %4152 = vmatpush1.msra.mxu0 %v69
    %4153 = vmatprep.subr.mxu0 0.0
    %4154 = vmatpush1.msra.mxu0 %v70
    %4155 = vmatprep.subr.mxu0 0.0
    %4156 = vmatpush1.msra.mxu0 %v71
    %4157 = vmatprep.subr.mxu0 0.0
    %4158 = vmatpush1.msra.mxu0 %v72
    %4159 = vmatprep.subr.mxu0 0.0
    %4160 = vmatpush1.msra.mxu0 %v73
    %4161 = vmatprep.subr.mxu0 0.0
    %4162 = vmatpush1.msra.mxu0 %v74
    %4163 = vmatprep.subr.mxu0 0.0
    %4164 = vmatpush1.msra.mxu0 %v75
    %4165 = vmatprep.subr.mxu0 0.0
    %4166 = vmatpush1.msra.mxu0 %v76
    %4167 = vmatprep.subr.mxu0 0.0
    %4168 = vmatpush1.msra.mxu0 %v77
    %4169 = vmatprep.subr.mxu0 0.0
    %4170 = vmatpush1.msra.mxu0 %v78
    %4171 = vmatprep.subr.mxu0 0.0
    %4172 = vmatpush1.msra.mxu0 %v79
    %4173 = vmatprep.subr.mxu0 0.0
    %4174 = vmatpush1.msra.mxu0 %v80
    %4175 = vmatprep.subr.mxu0 0.0
    %4176 = vmatpush1.msra.mxu0 %v81
    %4177 = vmatprep.subr.mxu0 0.0
    %4178 = vmatpush1.msra.mxu0 %v82
    %4179 = vmatprep.subr.mxu0 0.0
    %4180 = vmatpush1.msra.mxu0 %v83
    %4181 = vmatprep.subr.mxu0 0.0
    %4182 = vmatpush1.msra.mxu0 %v84
    %4183 = vmatprep.subr.mxu0 0.0
    %4184 = vmatpush1.msra.mxu0 %v85
    %4185 = vmatprep.subr.mxu0 0.0
    %4186 = vmatpush1.msra.mxu0 %v86
    %4187 = vmatprep.subr.mxu0 0.0
    %4188 = vmatpush1.msra.mxu0 %v87
    %4189 = vmatprep.subr.mxu0 0.0
    %4190 = vmatpush1.msra.mxu0 %v88
    %4191 = vmatprep.subr.mxu0 0.0
    %4192 = vmatpush1.msra.mxu0 %v89
    %4193 = vmatprep.subr.mxu0 0.0
    %4194 = vmatpush1.msra.mxu0 %v90
    %4195 = vmatprep.subr.mxu0 0.0
    %4196 = vmatpush1.msra.mxu0 %v91
    %4197 = vmatprep.mubr.f32.mxu0 %v4007
    %4198 = vmatmul.mubr.f32.gmra.mrb[0].mxu0 %v4005
    %v4199 = vpop.f32.mrb[0].mxu0
    %v4200 = vadd.f32 %v4130, %v4199
    %v4201 = vpop.f32.mrb[0].mxu0
    %4202 = vdwg.mxu0
    %4203 = vmatprep.subr.mxu0 0.0
    %4204 = vmatpush1.msra.mxu0 %v92
    %4205 = vmatprep.subr.mxu0 0.0
    %4206 = vmatpush1.msra.mxu0 %v93
    %4207 = vmatprep.subr.mxu0 0.0
    %4208 = vmatpush1.msra.mxu0 %v94
    %4209 = vmatprep.subr.mxu0 0.0
    %4210 = vmatpush1.msra.mxu0 %v95
    %4211 = vmatprep.subr.mxu0 0.0
    %4212 = vmatpush1.msra.mxu0 %v96
    %4213 = vmatprep.subr.mxu0 0.0
    %4214 = vmatpush1.msra.mxu0 %v97
    %4215 = vmatprep.subr.mxu0 0.0
    %4216 = vmatpush1.msra.mxu0 %v98
    %4217 = vmatprep.subr.mxu0 0.0
    %4218 = vmatpush1.msra.mxu0 %v99
    %4219 = vmatprep.subr.mxu0 0.0
    %4220 = vmatpush1.msra.mxu0 %v100
    %4221 = vmatprep.subr.mxu0 0.0
    %4222 = vmatpush1.msra.mxu0 %v101
    %4223 = vmatprep.subr.mxu0 0.0
    %4224 = vmatpush1.msra.mxu0 %v102
    %4225 = vmatprep.subr.mxu0 0.0
    %4226 = vmatpush1.msra.mxu0 %v103
    %4227 = vmatprep.subr.mxu0 0.0
    %4228 = vmatpush1.msra.mxu0 %v104
    %4229 = vmatprep.subr.mxu0 0.0
    %4230 = vmatpush1.msra.mxu0 %v105
    %4231 = vmatprep.subr.mxu0 0.0
    %4232 = vmatpush1.msra.mxu0 %v106
    %4233 = vmatprep.subr.mxu0 0.0
    %4234 = vmatpush1.msra.mxu0 %v107
    %4235 = vmatprep.subr.mxu0 0.0
    %4236 = vmatpush1.msra.mxu0 %v108
    %4237 = vmatprep.subr.mxu0 0.0
    %4238 = vmatpush1.msra.mxu0 %v109
    %4239 = vmatprep.subr.mxu0 0.0
    %4240 = vmatpush1.msra.mxu0 %v110
    %4241 = vmatprep.subr.mxu0 0.0
    %4242 = vmatpush1.msra.mxu0 %v111
    %4243 = vmatprep.subr.mxu0 0.0
    %4244 = vmatpush1.msra.mxu0 %v112
    %4245 = vmatprep.subr.mxu0 0.0
    %4246 = vmatpush1.msra.mxu0 %v113
    %4247 = vmatprep.subr.mxu0 0.0
    %4248 = vmatpush1.msra.mxu0 %v114
    %4249 = vmatprep.subr.mxu0 0.0
    %4250 = vmatpush1.msra.mxu0 %v115
    %4251 = vmatprep.subr.mxu0 0.0
    %4252 = vmatpush1.msra.mxu0 %v116
    %4253 = vmatprep.subr.mxu0 0.0
    %4254 = vmatpush1.msra.mxu0 %v117
    %4255 = vmatprep.subr.mxu0 0.0
    %4256 = vmatpush1.msra.mxu0 %v118
    %4257 = vmatprep.subr.mxu0 0.0
    %4258 = vmatpush1.msra.mxu0 %v119
    %4259 = vmatprep.subr.mxu0 0.0
    %4260 = vmatpush1.msra.mxu0 %v120
    %4261 = vmatprep.subr.mxu0 0.0
    %4262 = vmatpush1.msra.mxu0 %v121
    %4263 = vmatprep.subr.mxu0 0.0
    %4264 = vmatpush1.msra.mxu0 %v122
    %4265 = vmatprep.subr.mxu0 0.0
    %4266 = vmatpush1.msra.mxu0 %v123
    %4267 = vmatprep.mubr.f32.mxu0 %v4004
    %4268 = vmatmul.mubr.f32.gmra.mrb[0].mxu0 %v3990
    %v4269 = vpop.f32.mrb[0].mxu0
    %v4270 = vadd.f32 %v4200, %v4269
    %v4271 = vpop.f32.mrb[0].mxu0
    %4272 = vdwg.mxu0
    %4273 = vmatprep.subr.mxu0 0.0
    %4274 = vmatpush1.msra.mxu0 %v124
    %4275 = vmatprep.subr.mxu0 0.0
    %4276 = vmatpush1.msra.mxu0 %v125
    %4277 = vmatprep.subr.mxu0 0.0
    %4278 = vmatpush1.msra.mxu0 %v126
    %4279 = vmatprep.subr.mxu0 0.0
    %4280 = vmatpush1.msra.mxu0 %v127
    %4281 = vmatprep.subr.mxu0 0.0
    %4282 = vmatpush1.msra.mxu0 %v128
    %4283 = vmatprep.subr.mxu0 0.0
    %4284 = vmatpush1.msra.mxu0 %v129
    %4285 = vmatprep.subr.mxu0 0.0
    %4286 = vmatpush1.msra.mxu0 %v130
    %4287 = vmatprep.subr.mxu0 0.0
    %4288 = vmatpush1.msra.mxu0 %v131
    %4289 = vmatprep.subr.mxu0 0.0
    %4290 = vmatpush1.msra.mxu0 %v132
    %4291 = vmatprep.subr.mxu0 0.0
    %4292 = vmatpush1.msra.mxu0 %v133
    %4293 = vmatprep.subr.mxu0 0.0
    %4294 = vmatpush1.msra.mxu0 %v134
    %4295 = vmatprep.subr.mxu0 0.0
    %4296 = vmatpush1.msra.mxu0 %v135
    %4297 = vmatprep.subr.mxu0 0.0
    %4298 = vmatpush1.msra.mxu0 %v136
    %4299 = vmatprep.subr.mxu0 0.0
    %4300 = vmatpush1.msra.mxu0 %v137
    %4301 = vmatprep.subr.mxu0 0.0
    %4302 = vmatpush1.msra.mxu0 %v138
    %4303 = vmatprep.subr.mxu0 0.0
    %4304 = vmatpush1.msra.mxu0 %v139
    %4305 = vmatprep.subr.mxu0 0.0
    %4306 = vmatpush1.msra.mxu0 %v140
    %4307 = vmatprep.subr.mxu0 0.0
    %4308 = vmatpush1.msra.mxu0 %v141
    %4309 = vmatprep.subr.mxu0 0.0
    %4310 = vmatpush1.msra.mxu0 %v142
    %4311 = vmatprep.subr.mxu0 0.0
    %4312 = vmatpush1.msra.mxu0 %v143
    %4313 = vmatprep.subr.mxu0 0.0
    %4314 = vmatpush1.msra.mxu0 %v144
    %4315 = vmatprep.subr.mxu0 0.0
    %4316 = vmatpush1.msra.mxu0 %v145
    %4317 = vmatprep.subr.mxu0 0.0
    %4318 = vmatpush1.msra.mxu0 %v146
    %4319 = vmatprep.subr.mxu0 0.0
    %4320 = vmatpush1.msra.mxu0 %v147
    %4321 = vmatprep.subr.mxu0 0.0
    %4322 = vmatpush1.msra.mxu0 %v148
    %4323 = vmatprep.subr.mxu0 0.0
    %4324 = vmatpush1.msra.mxu0 %v149
    %4325 = vmatprep.subr.mxu0 0.0
    %4326 = vmatpush1.msra.mxu0 %v150
    %4327 = vmatprep.subr.mxu0 0.0
    %4328 = vmatpush1.msra.mxu0 %v151
    %4329 = vmatprep.subr.mxu0 0.0
    %4330 = vmatpush1.msra.mxu0 %v152
    %4331 = vmatprep.subr.mxu0 0.0
    %4332 = vmatpush1.msra.mxu0 %v153
    %4333 = vmatprep.subr.mxu0 0.0
    %4334 = vmatpush1.msra.mxu0 %v154
    %4335 = vmatprep.subr.mxu0 0.0
    %4336 = vmatpush1.msra.mxu0 %v155
    %4337 = vmatprep.mubr.f32.mxu0 %v4008
    %4338 = vmatmul.mubr.f32.gmra.mrb[0].mxu0 %v4006
    %v4339 = vpop.f32.mrb[0].mxu0
    %v4340 = vadd.f32 %v4270, %v4339
    %v4341 = vpop.f32.mrb[0].mxu0
    %4342 = vdwg.mxu0
    %4343 = vmatprep.subr.mxu0 0.0
    %4344 = vmatpush1.msra.mxu0 %v156
    %4345 = vmatprep.subr.mxu0 0.0
    %4346 = vmatpush1.msra.mxu0 %v157
    %4347 = vmatprep.subr.mxu0 0.0
    %4348 = vmatpush1.msra.mxu0 %v158
    %4349 = vmatprep.subr.mxu0 0.0
    %4350 = vmatpush1.msra.mxu0 %v159
    %4351 = vmatprep.subr.mxu0 0.0
    %4352 = vmatpush1.msra.mxu0 %v160
    %4353 = vmatprep.subr.mxu0 0.0
    %4354 = vmatpush1.msra.mxu0 %v161
    %4355 = vmatprep.subr.mxu0 0.0
    %4356 = vmatpush1.msra.mxu0 %v162
    %4357 = vmatprep.subr.mxu0 0.0
    %4358 = vmatpush1.msra.mxu0 %v163
    %4359 = vmatprep.subr.mxu0 0.0
    %4360 = vmatpush1.msra.mxu0 %v164
    %4361 = vmatprep.subr.mxu0 0.0
    %4362 = vmatpush1.msra.mxu0 %v165
    %4363 = vmatprep.subr.mxu0 0.0
    %4364 = vmatpush1.msra.mxu0 %v166
    %4365 = vmatprep.subr.mxu0 0.0
    %4366 = vmatpush1.msra.mxu0 %v167
    %4367 = vmatprep.subr.mxu0 0.0
    %4368 = vmatpush1.msra.mxu0 %v168
    %4369 = vmatprep.subr.mxu0 0.0
    %4370 = vmatpush1.msra.mxu0 %v169
    %4371 = vmatprep.subr.mxu0 0.0
    %4372 = vmatpush1.msra.mxu0 %v170
    %4373 = vmatprep.subr.mxu0 0.0
    %4374 = vmatpush1.msra.mxu0 %v171
    %4375 = vmatprep.subr.mxu0 0.0
    %4376 = vmatpush1.msra.mxu0 %v172
    %4377 = vmatprep.subr.mxu0 0.0
    %4378 = vmatpush1.msra.mxu0 %v173
    %4379 = vmatprep.subr.mxu0 0.0
    %4380 = vmatpush1.msra.mxu0 %v174
    %4381 = vmatprep.subr.mxu0 0.0
    %4382 = vmatpush1.msra.mxu0 %v175
    %4383 = vmatprep.subr.mxu0 0.0
    %4384 = vmatpush1.msra.mxu0 %v176
    %4385 = vmatprep.subr.mxu0 0.0
    %4386 = vmatpush1.msra.mxu0 %v177
    %4387 = vmatprep.subr.mxu0 0.0
    %4388 = vmatpush1.msra.mxu0 %v178
    %4389 = vmatprep.subr.mxu0 0.0
    %4390 = vmatpush1.msra.mxu0 %v179
    %4391 = vmatprep.subr.mxu0 0.0
    %4392 = vmatpush1.msra.mxu0 %v180
    %4393 = vmatprep.subr.mxu0 0.0
    %4394 = vmatpush1.msra.mxu0 %v181
    %4395 = vmatprep.subr.mxu0 0.0
    %4396 = vmatpush1.msra.mxu0 %v182
    %4397 = vmatprep.subr.mxu0 0.0
    %4398 = vmatpush1.msra.mxu0 %v183
    %4399 = vmatprep.subr.mxu0 0.0
    %4400 = vmatpush1.msra.mxu0 %v184
    %4401 = vmatprep.subr.mxu0 0.0
    %4402 = vmatpush1.msra.mxu0 %v185
    %4403 = vmatprep.subr.mxu0 0.0
    %4404 = vmatpush1.msra.mxu0 %v186
    %4405 = vmatprep.subr.mxu0 0.0
    %4406 = vmatpush1.msra.mxu0 %v187
    %4407 = vmatprep.mubr.f32.mxu0 %v4046
    %4408 = vmatmul.mubr.f32.gmra.mrb[0].mxu0 %v4032
    %v4409 = vpop.f32.mrb[0].mxu0
    %v4410 = vadd.f32 %v4340, %v4409
    %v4411 = vpop.f32.mrb[0].mxu0
    %4412 = vdwg.mxu0
    %4413 = vmatprep.subr.mxu0 0.0
    %4414 = vmatpush1.msra.mxu0 %v188
    %4415 = vmatprep.subr.mxu0 0.0
    %4416 = vmatpush1.msra.mxu0 %v189
    %4417 = vmatprep.subr.mxu0 0.0
    %4418 = vmatpush1.msra.mxu0 %v190
    %4419 = vmatprep.subr.mxu0 0.0
    %4420 = vmatpush1.msra.mxu0 %v191
    %4421 = vmatprep.subr.mxu0 0.0
    %4422 = vmatpush1.msra.mxu0 %v192
    %4423 = vmatprep.subr.mxu0 0.0
    %4424 = vmatpush1.msra.mxu0 %v193
    %4425 = vmatprep.subr.mxu0 0.0
    %4426 = vmatpush1.msra.mxu0 %v194
    %4427 = vmatprep.subr.mxu0 0.0
    %4428 = vmatpush1.msra.mxu0 %v195
    %4429 = vmatprep.subr.mxu0 0.0
    %4430 = vmatpush1.msra.mxu0 %v196
    %4431 = vmatprep.subr.mxu0 0.0
    %4432 = vmatpush1.msra.mxu0 %v197
    %4433 = vmatprep.subr.mxu0 0.0
    %4434 = vmatpush1.msra.mxu0 %v198
    %4435 = vmatprep.subr.mxu0 0.0
    %4436 = vmatpush1.msra.mxu0 %v199
    %4437 = vmatprep.subr.mxu0 0.0
    %4438 = vmatpush1.msra.mxu0 %v200
    %4439 = vmatprep.subr.mxu0 0.0
    %4440 = vmatpush1.msra.mxu0 %v201
    %4441 = vmatprep.subr.mxu0 0.0
    %4442 = vmatpush1.msra.mxu0 %v202
    %4443 = vmatprep.subr.mxu0 0.0
    %4444 = vmatpush1.msra.mxu0 %v203
    %4445 = vmatprep.subr.mxu0 0.0
    %4446 = vmatpush1.msra.mxu0 %v204
    %4447 = vmatprep.subr.mxu0 0.0
    %4448 = vmatpush1.msra.mxu0 %v205
    %4449 = vmatprep.subr.mxu0 0.0
    %4450 = vmatpush1.msra.mxu0 %v206
    %4451 = vmatprep.subr.mxu0 0.0
    %4452 = vmatpush1.msra.mxu0 %v207
    %4453 = vmatprep.subr.mxu0 0.0
    %4454 = vmatpush1.msra.mxu0 %v208
    %4455 = vmatprep.subr.mxu0 0.0
    %4456 = vmatpush1.msra.mxu0 %v209
    %4457 = vmatprep.subr.mxu0 0.0
    %4458 = vmatpush1.msra.mxu0 %v210
    %4459 = vmatprep.subr.mxu0 0.0
    %4460 = vmatpush1.msra.mxu0 %v211
    %4461 = vmatprep.subr.mxu0 0.0
    %4462 = vmatpush1.msra.mxu0 %v212
    %4463 = vmatprep.subr.mxu0 0.0
    %4464 = vmatpush1.msra.mxu0 %v213
    %4465 = vmatprep.subr.mxu0 0.0
    %4466 = vmatpush1.msra.mxu0 %v214
    %4467 = vmatprep.subr.mxu0 0.0
    %4468 = vmatpush1.msra.mxu0 %v215
    %4469 = vmatprep.subr.mxu0 0.0
    %4470 = vmatpush1.msra.mxu0 %v216
    %4471 = vmatprep.subr.mxu0 0.0
    %4472 = vmatpush1.msra.mxu0 %v217
    %4473 = vmatprep.subr.mxu0 0.0
    %4474 = vmatpush1.msra.mxu0 %v218
    %4475 = vmatprep.subr.mxu0 0.0
    %4476 = vmatpush1.msra.mxu0 %v219
    %4477 = vmatprep.mubr.f32.mxu0 %v4048
    %4478 = vmatmul.mubr.f32.gmra.mrb[0].mxu0 %v4047
    %v4479 = vpop.f32.mrb[0].mxu0
    %v4480 = vadd.f32 %v4410, %v4479
    %v4481 = vpop.f32.mrb[0].mxu0
    %4482 = vdwg.mxu0
    %4483 = vmatprep.subr.mxu0 0.0
    %4484 = vmatpush1.msra.mxu0 %v220
    %4485 = vmatprep.subr.mxu0 0.0
    %4486 = vmatpush1.msra.mxu0 %v221
    %4487 = vmatprep.subr.mxu0 0.0
    %4488 = vmatpush1.msra.mxu0 %v222
    %4489 = vmatprep.subr.mxu0 0.0
    %4490 = vmatpush1.msra.mxu0 %v223
    %4491 = vmatprep.subr.mxu0 0.0
    %4492 = vmatpush1.msra.mxu0 %v224
    %4493 = vmatprep.subr.mxu0 0.0
    %4494 = vmatpush1.msra.mxu0 %v225
    %4495 = vmatprep.subr.mxu0 0.0
    %4496 = vmatpush1.msra.mxu0 %v226
    %4497 = vmatprep.subr.mxu0 0.0
    %4498 = vmatpush1.msra.mxu0 %v227
    %4499 = vmatprep.subr.mxu0 0.0
    %4500 = vmatpush1.msra.mxu0 %v228
    %4501 = vmatprep.subr.mxu0 0.0
    %4502 = vmatpush1.msra.mxu0 %v229
    %4503 = vmatprep.subr.mxu0 0.0
    %4504 = vmatpush1.msra.mxu0 %v230
    %4505 = vmatprep.subr.mxu0 0.0
    %4506 = vmatpush1.msra.mxu0 %v231
    %4507 = vmatprep.subr.mxu0 0.0
    %4508 = vmatpush1.msra.mxu0 %v366
    %4509 = vmatprep.subr.mxu0 0.0
    %4510 = vmatpush1.msra.mxu0 0.0
    %4511 = vmatprep.subr.mxu0 0.0
    %4512 = vmatpush1.msra.mxu0 0.0
    %4513 = vmatprep.subr.mxu0 0.0
    %4514 = vmatpush1.msra.mxu0 0.0
    %4515 = vmatprep.subr.mxu0 0.0
    %4516 = vmatpush1.msra.mxu0 0.0
    %4517 = vmatprep.subr.mxu0 0.0
    %4518 = vmatpush1.msra.mxu0 0.0
    %4519 = vmatprep.subr.mxu0 0.0
    %4520 = vmatpush1.msra.mxu0 0.0
    %4521 = vmatprep.subr.mxu0 0.0
    %4522 = vmatpush1.msra.mxu0 0.0
    %4523 = vmatprep.subr.mxu0 0.0
    %4524 = vmatpush1.msra.mxu0 0.0
    %4525 = vmatprep.subr.mxu0 0.0
    %4526 = vmatpush1.msra.mxu0 0.0
    %4527 = vmatprep.subr.mxu0 0.0
    %4528 = vmatpush1.msra.mxu0 0.0
    %4529 = vmatprep.subr.mxu0 0.0
    %4530 = vmatpush1.msra.mxu0 0.0
    %4531 = vmatprep.subr.mxu0 0.0
    %4532 = vmatpush1.msra.mxu0 0.0
    %4533 = vmatprep.subr.mxu0 0.0
    %4534 = vmatpush1.msra.mxu0 0.0
    %4535 = vmatprep.subr.mxu0 0.0
    %4536 = vmatpush1.msra.mxu0 0.0
    %4537 = vmatprep.subr.mxu0 0.0
    %4538 = vmatpush1.msra.mxu0 0.0
    %4539 = vmatprep.subr.mxu0 0.0
    %4540 = vmatpush1.msra.mxu0 0.0
    %4541 = vmatprep.subr.mxu0 0.0
    %4542 = vmatpush1.msra.mxu0 0.0
    %4543 = vmatprep.subr.mxu0 0.0
    %4544 = vmatpush1.msra.mxu0 0.0
    %4545 = vmatprep.subr.mxu0 0.0
    %4546 = vmatpush1.msra.mxu0 0.0
    %4547 = vmatprep.mubr.f32.mxu0 0.0
    %4548 = vmatmul.mubr.f32.gmra.mrb[0].mxu0 %v4061
    %v4549 = vpop.f32.mrb[0].mxu0
    %v4550 = vadd.f32 %v4480, %v4549
    %v4551 = vpop.f32.mrb[0].mxu0
    %4552 = vdwg.mxu0
    %s4553 = scalar_lea.vmem %s3, 12
    %4554 = vst [vmem:[%s4553] sm:$0x3] %v4550
    %s4555 = scalar_lea.vmem %s0, 7
    %v4556 = vld [vmem:[%s4555] ss:$8 sm:$0xf]
    %v4557 = vld [vmem:[%s4555] ss:$8 sm:$0xf0]
    %v4558 = vor.u32 %v4556, %v4557
    %s4559 = scalar_lea.vmem %s0, 71
    %v4560 = vld [vmem:[%s4559] ss:$8 sm:$0xf]
    %v4561 = vld [vmem:[%s4559] ss:$8 sm:$0x10]
    %v4562 = vor.u32 %v4560, %v4561
    %s4563 = scalar_lea.vmem %s0, 111
    %v4564 = vld [vmem:[%s4563] ss:$8 sm:$0xf]
    %v4565 = vld [vmem:[%s4563] ss:$8 sm:$0xf0]
    %v4566 = vor.u32 %v4564, %v4565
    %s4567 = scalar_lea.vmem %s0, 175
    %v4568 = vld [vmem:[%s4567] ss:$8 sm:$0xf]
    %v4569 = vld [vmem:[%s4567] ss:$8 sm:$0x10]
    %v4570 = vor.u32 %v4568, %v4569
    %v4575 = vcombine.low %v4558, %v4566
    %v4576 = vcombine.high %v4558, %v4566
    %v4578 = vunpack.c.l.s4 1966171168
    %v4579 = vunpack.c.0.s8 %v4578
    %v4580 = vlaneseq
    %v4581 = vshrl.u32 %v4580, 7
    %v4582 = vsub.s32 %v4579, %v4581
    %v4583 = vrot.slane %v4575, %v4582
    %v4585 = vunpack.c.l.s4 1966171168
    %v4586 = vunpack.c.0.s8 %v4585
    %v4587 = vlaneseq
    %v4588 = vshrl.u32 %v4587, 7
    %v4589 = vsub.s32 %v4586, %v4588
    %v4590 = vrot.slane %v4576, %v4589
    %v4591 = vcombine.high %v4583, %v4583
    %v4592 = vcombine.high %v4590, %v4590
    %v4594 = vunpack.c.l.s4 1966171168
    %v4595 = vunpack.c.0.s8 %v4594
    %v4596 = vlaneseq
    %v4597 = vshrl.u32 %v4596, 7
    %v4598 = vsub.s32 %v4595, %v4597
    %v4599 = vrot.slane %v4583, %v4598
    %v4601 = vunpack.c.l.s4 1966171168
    %v4602 = vunpack.c.0.s8 %v4601
    %v4603 = vlaneseq
    %v4604 = vshrl.u32 %v4603, 7
    %v4605 = vsub.s32 %v4602, %v4604
    %v4606 = vrot.slane %v4590, %v4605
    %v4608 = vunpack.c.l.s4 1966171168
    %v4609 = vunpack.c.0.s8 %v4608
    %v4610 = vlaneseq
    %v4611 = vshrl.u32 %v4610, 7
    %v4612 = vsub.s32 %v4609, %v4611
    %v4613 = vrot.slane %v4591, %v4612
    %v4615 = vunpack.c.l.s4 1966171168
    %v4616 = vunpack.c.0.s8 %v4615
    %v4617 = vlaneseq
    %v4618 = vshrl.u32 %v4617, 7
    %v4619 = vsub.s32 %v4616, %v4618
    %v4620 = vrot.slane %v4592, %v4619
    %v4621 = vcombine.high %v4599, %v4599
    %v4622 = vcombine.high %v4606, %v4606
    %v4623 = vcombine.high %v4613, %v4613
    %v4624 = vcombine.high %v4620, %v4620
    %v4625 = vcombine.low %v4562, %v4570
    %v4626 = vcombine.high %v4562, %v4570
    %v4628 = vunpack.c.l.s4 1966171168
    %v4629 = vunpack.c.0.s8 %v4628
    %v4630 = vlaneseq
    %v4631 = vshrl.u32 %v4630, 7
    %v4632 = vsub.s32 %v4629, %v4631
    %v4633 = vrot.slane %v4625, %v4632
    %v4635 = vunpack.c.l.s4 1966171168
    %v4636 = vunpack.c.0.s8 %v4635
    %v4637 = vlaneseq
    %v4638 = vshrl.u32 %v4637, 7
    %v4639 = vsub.s32 %v4636, %v4638
    %v4640 = vrot.slane %v4626, %v4639
    %v4641 = vcombine.high %v4633, %v4633
    %v4643 = vunpack.c.l.s4 1966171168
    %v4644 = vunpack.c.0.s8 %v4643
    %v4645 = vlaneseq
    %v4646 = vshrl.u32 %v4645, 7
    %v4647 = vsub.s32 %v4644, %v4646
    %v4648 = vrot.slane %v4633, %v4647
    %v4650 = vunpack.c.l.s4 1966171168
    %v4651 = vunpack.c.0.s8 %v4650
    %v4652 = vlaneseq
    %v4653 = vshrl.u32 %v4652, 7
    %v4654 = vsub.s32 %v4651, %v4653
    %v4655 = vrot.slane %v4640, %v4654
    %v4657 = vunpack.c.l.s4 1966171168
    %v4658 = vunpack.c.0.s8 %v4657
    %v4659 = vlaneseq
    %v4660 = vshrl.u32 %v4659, 7
    %v4661 = vsub.s32 %v4658, %v4660
    %v4662 = vrot.slane %v4641, %v4661
    %v4663 = vcombine.high %v4648, %v4648
    %v4664 = vcombine.high %v4662, %v4662
    %v4677 = vsel %vm361, %v4655, 0
    %4679 = vmatprep.subr.mxu0 0.0
    %4680 = vmatpush1.msra.mxu0 %v28
    %4681 = vmatprep.subr.mxu0 0.0
    %4682 = vmatpush1.msra.mxu0 %v29
    %4683 = vmatprep.subr.mxu0 0.0
    %4684 = vmatpush1.msra.mxu0 %v30
    %4685 = vmatprep.subr.mxu0 0.0
    %4686 = vmatpush1.msra.mxu0 %v31
    %4687 = vmatprep.subr.mxu0 0.0
    %4688 = vmatpush1.msra.mxu0 %v32
    %4689 = vmatprep.subr.mxu0 0.0
    %4690 = vmatpush1.msra.mxu0 %v33
    %4691 = vmatprep.subr.mxu0 0.0
    %4692 = vmatpush1.msra.mxu0 %v34
    %4693 = vmatprep.subr.mxu0 0.0
    %4694 = vmatpush1.msra.mxu0 %v35
    %4695 = vmatprep.subr.mxu0 0.0
    %4696 = vmatpush1.msra.mxu0 %v36
    %4697 = vmatprep.subr.mxu0 0.0
    %4698 = vmatpush1.msra.mxu0 %v37
    %4699 = vmatprep.subr.mxu0 0.0
    %4700 = vmatpush1.msra.mxu0 %v38
    %4701 = vmatprep.subr.mxu0 0.0
    %4702 = vmatpush1.msra.mxu0 %v39
    %4703 = vmatprep.subr.mxu0 0.0
    %4704 = vmatpush1.msra.mxu0 %v40
    %4705 = vmatprep.subr.mxu0 0.0
    %4706 = vmatpush1.msra.mxu0 %v41
    %4707 = vmatprep.subr.mxu0 0.0
    %4708 = vmatpush1.msra.mxu0 %v42
    %4709 = vmatprep.subr.mxu0 0.0
    %4710 = vmatpush1.msra.mxu0 %v43
    %4711 = vmatprep.subr.mxu0 0.0
    %4712 = vmatpush1.msra.mxu0 %v44
    %4713 = vmatprep.subr.mxu0 0.0
    %4714 = vmatpush1.msra.mxu0 %v45
    %4715 = vmatprep.subr.mxu0 0.0
    %4716 = vmatpush1.msra.mxu0 %v46
    %4717 = vmatprep.subr.mxu0 0.0
    %4718 = vmatpush1.msra.mxu0 %v47
    %4719 = vmatprep.subr.mxu0 0.0
    %4720 = vmatpush1.msra.mxu0 %v48
    %4721 = vmatprep.subr.mxu0 0.0
    %4722 = vmatpush1.msra.mxu0 %v49
    %4723 = vmatprep.subr.mxu0 0.0
    %4724 = vmatpush1.msra.mxu0 %v50
    %4725 = vmatprep.subr.mxu0 0.0
    %4726 = vmatpush1.msra.mxu0 %v51
    %4727 = vmatprep.subr.mxu0 0.0
    %4728 = vmatpush1.msra.mxu0 %v52
    %4729 = vmatprep.subr.mxu0 0.0
    %4730 = vmatpush1.msra.mxu0 %v53
    %4731 = vmatprep.subr.mxu0 0.0
    %4732 = vmatpush1.msra.mxu0 %v54
    %4733 = vmatprep.subr.mxu0 0.0
    %4734 = vmatpush1.msra.mxu0 %v55
    %4735 = vmatprep.subr.mxu0 0.0
    %4736 = vmatpush1.msra.mxu0 %v56
    %4737 = vmatprep.subr.mxu0 0.0
    %4738 = vmatpush1.msra.mxu0 %v57
    %4739 = vmatprep.subr.mxu0 0.0
    %4740 = vmatpush1.msra.mxu0 %v58
    %4741 = vmatprep.subr.mxu0 0.0
    %4742 = vmatpush1.msra.mxu0 %v59
    %4743 = vmatprep.mubr.f32.mxu0 %v4613
    %4744 = vmatmul.mubr.f32.gmra.mrb[0].mxu0 %v4599
    %v4745 = vpop.f32.mrb[0].mxu0
    %v4746 = vadd.f32 %v253, %v4745
    %v4747 = vpop.f32.mrb[0].mxu0
    %4748 = vdwg.mxu0
    %4749 = vmatprep.subr.mxu0 0.0
    %4750 = vmatpush1.msra.mxu0 %v60
    %4751 = vmatprep.subr.mxu0 0.0
    %4752 = vmatpush1.msra.mxu0 %v61
    %4753 = vmatprep.subr.mxu0 0.0
    %4754 = vmatpush1.msra.mxu0 %v62
    %4755 = vmatprep.subr.mxu0 0.0
    %4756 = vmatpush1.msra.mxu0 %v63
    %4757 = vmatprep.subr.mxu0 0.0
    %4758 = vmatpush1.msra.mxu0 %v64
    %4759 = vmatprep.subr.mxu0 0.0
    %4760 = vmatpush1.msra.mxu0 %v65
    %4761 = vmatprep.subr.mxu0 0.0
    %4762 = vmatpush1.msra.mxu0 %v66
    %4763 = vmatprep.subr.mxu0 0.0
    %4764 = vmatpush1.msra.mxu0 %v67
    %4765 = vmatprep.subr.mxu0 0.0
    %4766 = vmatpush1.msra.mxu0 %v68
    %4767 = vmatprep.subr.mxu0 0.0
    %4768 = vmatpush1.msra.mxu0 %v69
    %4769 = vmatprep.subr.mxu0 0.0
    %4770 = vmatpush1.msra.mxu0 %v70
    %4771 = vmatprep.subr.mxu0 0.0
    %4772 = vmatpush1.msra.mxu0 %v71
    %4773 = vmatprep.subr.mxu0 0.0
    %4774 = vmatpush1.msra.mxu0 %v72
    %4775 = vmatprep.subr.mxu0 0.0
    %4776 = vmatpush1.msra.mxu0 %v73
    %4777 = vmatprep.subr.mxu0 0.0
    %4778 = vmatpush1.msra.mxu0 %v74
    %4779 = vmatprep.subr.mxu0 0.0
    %4780 = vmatpush1.msra.mxu0 %v75
    %4781 = vmatprep.subr.mxu0 0.0
    %4782 = vmatpush1.msra.mxu0 %v76
    %4783 = vmatprep.subr.mxu0 0.0
    %4784 = vmatpush1.msra.mxu0 %v77
    %4785 = vmatprep.subr.mxu0 0.0
    %4786 = vmatpush1.msra.mxu0 %v78
    %4787 = vmatprep.subr.mxu0 0.0
    %4788 = vmatpush1.msra.mxu0 %v79
    %4789 = vmatprep.subr.mxu0 0.0
    %4790 = vmatpush1.msra.mxu0 %v80
    %4791 = vmatprep.subr.mxu0 0.0
    %4792 = vmatpush1.msra.mxu0 %v81
    %4793 = vmatprep.subr.mxu0 0.0
    %4794 = vmatpush1.msra.mxu0 %v82
    %4795 = vmatprep.subr.mxu0 0.0
    %4796 = vmatpush1.msra.mxu0 %v83
    %4797 = vmatprep.subr.mxu0 0.0
    %4798 = vmatpush1.msra.mxu0 %v84
    %4799 = vmatprep.subr.mxu0 0.0
    %4800 = vmatpush1.msra.mxu0 %v85
    %4801 = vmatprep.subr.mxu0 0.0
    %4802 = vmatpush1.msra.mxu0 %v86
    %4803 = vmatprep.subr.mxu0 0.0
    %4804 = vmatpush1.msra.mxu0 %v87
    %4805 = vmatprep.subr.mxu0 0.0
    %4806 = vmatpush1.msra.mxu0 %v88
    %4807 = vmatprep.subr.mxu0 0.0
    %4808 = vmatpush1.msra.mxu0 %v89
    %4809 = vmatprep.subr.mxu0 0.0
    %4810 = vmatpush1.msra.mxu0 %v90
    %4811 = vmatprep.subr.mxu0 0.0
    %4812 = vmatpush1.msra.mxu0 %v91
    %4813 = vmatprep.mubr.f32.mxu0 %v4623
    %4814 = vmatmul.mubr.f32.gmra.mrb[0].mxu0 %v4621
    %v4815 = vpop.f32.mrb[0].mxu0
    %v4816 = vadd.f32 %v4746, %v4815
    %v4817 = vpop.f32.mrb[0].mxu0
    %4818 = vdwg.mxu0
    %4819 = vmatprep.subr.mxu0 0.0
    %4820 = vmatpush1.msra.mxu0 %v92
    %4821 = vmatprep.subr.mxu0 0.0
    %4822 = vmatpush1.msra.mxu0 %v93
    %4823 = vmatprep.subr.mxu0 0.0
    %4824 = vmatpush1.msra.mxu0 %v94
    %4825 = vmatprep.subr.mxu0 0.0
    %4826 = vmatpush1.msra.mxu0 %v95
    %4827 = vmatprep.subr.mxu0 0.0
    %4828 = vmatpush1.msra.mxu0 %v96
    %4829 = vmatprep.subr.mxu0 0.0
    %4830 = vmatpush1.msra.mxu0 %v97
    %4831 = vmatprep.subr.mxu0 0.0
    %4832 = vmatpush1.msra.mxu0 %v98
    %4833 = vmatprep.subr.mxu0 0.0
    %4834 = vmatpush1.msra.mxu0 %v99
    %4835 = vmatprep.subr.mxu0 0.0
    %4836 = vmatpush1.msra.mxu0 %v100
    %4837 = vmatprep.subr.mxu0 0.0
    %4838 = vmatpush1.msra.mxu0 %v101
    %4839 = vmatprep.subr.mxu0 0.0
    %4840 = vmatpush1.msra.mxu0 %v102
    %4841 = vmatprep.subr.mxu0 0.0
    %4842 = vmatpush1.msra.mxu0 %v103
    %4843 = vmatprep.subr.mxu0 0.0
    %4844 = vmatpush1.msra.mxu0 %v104
    %4845 = vmatprep.subr.mxu0 0.0
    %4846 = vmatpush1.msra.mxu0 %v105
    %4847 = vmatprep.subr.mxu0 0.0
    %4848 = vmatpush1.msra.mxu0 %v106
    %4849 = vmatprep.subr.mxu0 0.0
    %4850 = vmatpush1.msra.mxu0 %v107
    %4851 = vmatprep.subr.mxu0 0.0
    %4852 = vmatpush1.msra.mxu0 %v108
    %4853 = vmatprep.subr.mxu0 0.0
    %4854 = vmatpush1.msra.mxu0 %v109
    %4855 = vmatprep.subr.mxu0 0.0
    %4856 = vmatpush1.msra.mxu0 %v110
    %4857 = vmatprep.subr.mxu0 0.0
    %4858 = vmatpush1.msra.mxu0 %v111
    %4859 = vmatprep.subr.mxu0 0.0
    %4860 = vmatpush1.msra.mxu0 %v112
    %4861 = vmatprep.subr.mxu0 0.0
    %4862 = vmatpush1.msra.mxu0 %v113
    %4863 = vmatprep.subr.mxu0 0.0
    %4864 = vmatpush1.msra.mxu0 %v114
    %4865 = vmatprep.subr.mxu0 0.0
    %4866 = vmatpush1.msra.mxu0 %v115
    %4867 = vmatprep.subr.mxu0 0.0
    %4868 = vmatpush1.msra.mxu0 %v116
    %4869 = vmatprep.subr.mxu0 0.0
    %4870 = vmatpush1.msra.mxu0 %v117
    %4871 = vmatprep.subr.mxu0 0.0
    %4872 = vmatpush1.msra.mxu0 %v118
    %4873 = vmatprep.subr.mxu0 0.0
    %4874 = vmatpush1.msra.mxu0 %v119
    %4875 = vmatprep.subr.mxu0 0.0
    %4876 = vmatpush1.msra.mxu0 %v120
    %4877 = vmatprep.subr.mxu0 0.0
    %4878 = vmatpush1.msra.mxu0 %v121
    %4879 = vmatprep.subr.mxu0 0.0
    %4880 = vmatpush1.msra.mxu0 %v122
    %4881 = vmatprep.subr.mxu0 0.0
    %4882 = vmatpush1.msra.mxu0 %v123
    %4883 = vmatprep.mubr.f32.mxu0 %v4620
    %4884 = vmatmul.mubr.f32.gmra.mrb[0].mxu0 %v4606
    %v4885 = vpop.f32.mrb[0].mxu0
    %v4886 = vadd.f32 %v4816, %v4885
    %v4887 = vpop.f32.mrb[0].mxu0
    %4888 = vdwg.mxu0
    %4889 = vmatprep.subr.mxu0 0.0
    %4890 = vmatpush1.msra.mxu0 %v124
    %4891 = vmatprep.subr.mxu0 0.0
    %4892 = vmatpush1.msra.mxu0 %v125
    %4893 = vmatprep.subr.mxu0 0.0
    %4894 = vmatpush1.msra.mxu0 %v126
    %4895 = vmatprep.subr.mxu0 0.0
    %4896 = vmatpush1.msra.mxu0 %v127
    %4897 = vmatprep.subr.mxu0 0.0
    %4898 = vmatpush1.msra.mxu0 %v128
    %4899 = vmatprep.subr.mxu0 0.0
    %4900 = vmatpush1.msra.mxu0 %v129
    %4901 = vmatprep.subr.mxu0 0.0
    %4902 = vmatpush1.msra.mxu0 %v130
    %4903 = vmatprep.subr.mxu0 0.0
    %4904 = vmatpush1.msra.mxu0 %v131
    %4905 = vmatprep.subr.mxu0 0.0
    %4906 = vmatpush1.msra.mxu0 %v132
    %4907 = vmatprep.subr.mxu0 0.0
    %4908 = vmatpush1.msra.mxu0 %v133
    %4909 = vmatprep.subr.mxu0 0.0
    %4910 = vmatpush1.msra.mxu0 %v134
    %4911 = vmatprep.subr.mxu0 0.0
    %4912 = vmatpush1.msra.mxu0 %v135
    %4913 = vmatprep.subr.mxu0 0.0
    %4914 = vmatpush1.msra.mxu0 %v136
    %4915 = vmatprep.subr.mxu0 0.0
    %4916 = vmatpush1.msra.mxu0 %v137
    %4917 = vmatprep.subr.mxu0 0.0
    %4918 = vmatpush1.msra.mxu0 %v138
    %4919 = vmatprep.subr.mxu0 0.0
    %4920 = vmatpush1.msra.mxu0 %v139
    %4921 = vmatprep.subr.mxu0 0.0
    %4922 = vmatpush1.msra.mxu0 %v140
    %4923 = vmatprep.subr.mxu0 0.0
    %4924 = vmatpush1.msra.mxu0 %v141
    %4925 = vmatprep.subr.mxu0 0.0
    %4926 = vmatpush1.msra.mxu0 %v142
    %4927 = vmatprep.subr.mxu0 0.0
    %4928 = vmatpush1.msra.mxu0 %v143
    %4929 = vmatprep.subr.mxu0 0.0
    %4930 = vmatpush1.msra.mxu0 %v144
    %4931 = vmatprep.subr.mxu0 0.0
    %4932 = vmatpush1.msra.mxu0 %v145
    %4933 = vmatprep.subr.mxu0 0.0
    %4934 = vmatpush1.msra.mxu0 %v146
    %4935 = vmatprep.subr.mxu0 0.0
    %4936 = vmatpush1.msra.mxu0 %v147
    %4937 = vmatprep.subr.mxu0 0.0
    %4938 = vmatpush1.msra.mxu0 %v148
    %4939 = vmatprep.subr.mxu0 0.0
    %4940 = vmatpush1.msra.mxu0 %v149
    %4941 = vmatprep.subr.mxu0 0.0
    %4942 = vmatpush1.msra.mxu0 %v150
    %4943 = vmatprep.subr.mxu0 0.0
    %4944 = vmatpush1.msra.mxu0 %v151
    %4945 = vmatprep.subr.mxu0 0.0
    %4946 = vmatpush1.msra.mxu0 %v152
    %4947 = vmatprep.subr.mxu0 0.0
    %4948 = vmatpush1.msra.mxu0 %v153
    %4949 = vmatprep.subr.mxu0 0.0
    %4950 = vmatpush1.msra.mxu0 %v154
    %4951 = vmatprep.subr.mxu0 0.0
    %4952 = vmatpush1.msra.mxu0 %v155
    %4953 = vmatprep.mubr.f32.mxu0 %v4624
    %4954 = vmatmul.mubr.f32.gmra.mrb[0].mxu0 %v4622
    %v4955 = vpop.f32.mrb[0].mxu0
    %v4956 = vadd.f32 %v4886, %v4955
    %v4957 = vpop.f32.mrb[0].mxu0
    %4958 = vdwg.mxu0
    %4959 = vmatprep.subr.mxu0 0.0
    %4960 = vmatpush1.msra.mxu0 %v156
    %4961 = vmatprep.subr.mxu0 0.0
    %4962 = vmatpush1.msra.mxu0 %v157
    %4963 = vmatprep.subr.mxu0 0.0
    %4964 = vmatpush1.msra.mxu0 %v158
    %4965 = vmatprep.subr.mxu0 0.0
    %4966 = vmatpush1.msra.mxu0 %v159
    %4967 = vmatprep.subr.mxu0 0.0
    %4968 = vmatpush1.msra.mxu0 %v160
    %4969 = vmatprep.subr.mxu0 0.0
    %4970 = vmatpush1.msra.mxu0 %v161
    %4971 = vmatprep.subr.mxu0 0.0
    %4972 = vmatpush1.msra.mxu0 %v162
    %4973 = vmatprep.subr.mxu0 0.0
    %4974 = vmatpush1.msra.mxu0 %v163
    %4975 = vmatprep.subr.mxu0 0.0
    %4976 = vmatpush1.msra.mxu0 %v164
    %4977 = vmatprep.subr.mxu0 0.0
    %4978 = vmatpush1.msra.mxu0 %v165
    %4979 = vmatprep.subr.mxu0 0.0
    %4980 = vmatpush1.msra.mxu0 %v166
    %4981 = vmatprep.subr.mxu0 0.0
    %4982 = vmatpush1.msra.mxu0 %v167
    %4983 = vmatprep.subr.mxu0 0.0
    %4984 = vmatpush1.msra.mxu0 %v168
    %4985 = vmatprep.subr.mxu0 0.0
    %4986 = vmatpush1.msra.mxu0 %v169
    %4987 = vmatprep.subr.mxu0 0.0
    %4988 = vmatpush1.msra.mxu0 %v170
    %4989 = vmatprep.subr.mxu0 0.0
    %4990 = vmatpush1.msra.mxu0 %v171
    %4991 = vmatprep.subr.mxu0 0.0
    %4992 = vmatpush1.msra.mxu0 %v172
    %4993 = vmatprep.subr.mxu0 0.0
    %4994 = vmatpush1.msra.mxu0 %v173
    %4995 = vmatprep.subr.mxu0 0.0
    %4996 = vmatpush1.msra.mxu0 %v174
    %4997 = vmatprep.subr.mxu0 0.0
    %4998 = vmatpush1.msra.mxu0 %v175
    %4999 = vmatprep.subr.mxu0 0.0
    %5000 = vmatpush1.msra.mxu0 %v176
    %5001 = vmatprep.subr.mxu0 0.0
    %5002 = vmatpush1.msra.mxu0 %v177
    %5003 = vmatprep.subr.mxu0 0.0
    %5004 = vmatpush1.msra.mxu0 %v178
    %5005 = vmatprep.subr.mxu0 0.0
    %5006 = vmatpush1.msra.mxu0 %v179
    %5007 = vmatprep.subr.mxu0 0.0
    %5008 = vmatpush1.msra.mxu0 %v180
    %5009 = vmatprep.subr.mxu0 0.0
    %5010 = vmatpush1.msra.mxu0 %v181
    %5011 = vmatprep.subr.mxu0 0.0
    %5012 = vmatpush1.msra.mxu0 %v182
    %5013 = vmatprep.subr.mxu0 0.0
    %5014 = vmatpush1.msra.mxu0 %v183
    %5015 = vmatprep.subr.mxu0 0.0
    %5016 = vmatpush1.msra.mxu0 %v184
    %5017 = vmatprep.subr.mxu0 0.0
    %5018 = vmatpush1.msra.mxu0 %v185
    %5019 = vmatprep.subr.mxu0 0.0
    %5020 = vmatpush1.msra.mxu0 %v186
    %5021 = vmatprep.subr.mxu0 0.0
    %5022 = vmatpush1.msra.mxu0 %v187
    %5023 = vmatprep.mubr.f32.mxu0 %v4662
    %5024 = vmatmul.mubr.f32.gmra.mrb[0].mxu0 %v4648
    %v5025 = vpop.f32.mrb[0].mxu0
    %v5026 = vadd.f32 %v4956, %v5025
    %v5027 = vpop.f32.mrb[0].mxu0
    %5028 = vdwg.mxu0
    %5029 = vmatprep.subr.mxu0 0.0
    %5030 = vmatpush1.msra.mxu0 %v188
    %5031 = vmatprep.subr.mxu0 0.0
    %5032 = vmatpush1.msra.mxu0 %v189
    %5033 = vmatprep.subr.mxu0 0.0
    %5034 = vmatpush1.msra.mxu0 %v190
    %5035 = vmatprep.subr.mxu0 0.0
    %5036 = vmatpush1.msra.mxu0 %v191
    %5037 = vmatprep.subr.mxu0 0.0
    %5038 = vmatpush1.msra.mxu0 %v192
    %5039 = vmatprep.subr.mxu0 0.0
    %5040 = vmatpush1.msra.mxu0 %v193
    %5041 = vmatprep.subr.mxu0 0.0
    %5042 = vmatpush1.msra.mxu0 %v194
    %5043 = vmatprep.subr.mxu0 0.0
    %5044 = vmatpush1.msra.mxu0 %v195
    %5045 = vmatprep.subr.mxu0 0.0
    %5046 = vmatpush1.msra.mxu0 %v196
    %5047 = vmatprep.subr.mxu0 0.0
    %5048 = vmatpush1.msra.mxu0 %v197
    %5049 = vmatprep.subr.mxu0 0.0
    %5050 = vmatpush1.msra.mxu0 %v198
    %5051 = vmatprep.subr.mxu0 0.0
    %5052 = vmatpush1.msra.mxu0 %v199
    %5053 = vmatprep.subr.mxu0 0.0
    %5054 = vmatpush1.msra.mxu0 %v200
    %5055 = vmatprep.subr.mxu0 0.0
    %5056 = vmatpush1.msra.mxu0 %v201
    %5057 = vmatprep.subr.mxu0 0.0
    %5058 = vmatpush1.msra.mxu0 %v202
    %5059 = vmatprep.subr.mxu0 0.0
    %5060 = vmatpush1.msra.mxu0 %v203
    %5061 = vmatprep.subr.mxu0 0.0
    %5062 = vmatpush1.msra.mxu0 %v204
    %5063 = vmatprep.subr.mxu0 0.0
    %5064 = vmatpush1.msra.mxu0 %v205
    %5065 = vmatprep.subr.mxu0 0.0
    %5066 = vmatpush1.msra.mxu0 %v206
    %5067 = vmatprep.subr.mxu0 0.0
    %5068 = vmatpush1.msra.mxu0 %v207
    %5069 = vmatprep.subr.mxu0 0.0
    %5070 = vmatpush1.msra.mxu0 %v208
    %5071 = vmatprep.subr.mxu0 0.0
    %5072 = vmatpush1.msra.mxu0 %v209
    %5073 = vmatprep.subr.mxu0 0.0
    %5074 = vmatpush1.msra.mxu0 %v210
    %5075 = vmatprep.subr.mxu0 0.0
    %5076 = vmatpush1.msra.mxu0 %v211
    %5077 = vmatprep.subr.mxu0 0.0
    %5078 = vmatpush1.msra.mxu0 %v212
    %5079 = vmatprep.subr.mxu0 0.0
    %5080 = vmatpush1.msra.mxu0 %v213
    %5081 = vmatprep.subr.mxu0 0.0
    %5082 = vmatpush1.msra.mxu0 %v214
    %5083 = vmatprep.subr.mxu0 0.0
    %5084 = vmatpush1.msra.mxu0 %v215
    %5085 = vmatprep.subr.mxu0 0.0
    %5086 = vmatpush1.msra.mxu0 %v216
    %5087 = vmatprep.subr.mxu0 0.0
    %5088 = vmatpush1.msra.mxu0 %v217
    %5089 = vmatprep.subr.mxu0 0.0
    %5090 = vmatpush1.msra.mxu0 %v218
    %5091 = vmatprep.subr.mxu0 0.0
    %5092 = vmatpush1.msra.mxu0 %v219
    %5093 = vmatprep.mubr.f32.mxu0 %v4664
    %5094 = vmatmul.mubr.f32.gmra.mrb[0].mxu0 %v4663
    %v5095 = vpop.f32.mrb[0].mxu0
    %v5096 = vadd.f32 %v5026, %v5095
    %v5097 = vpop.f32.mrb[0].mxu0
    %5098 = vdwg.mxu0
    %5099 = vmatprep.subr.mxu0 0.0
    %5100 = vmatpush1.msra.mxu0 %v220
    %5101 = vmatprep.subr.mxu0 0.0
    %5102 = vmatpush1.msra.mxu0 %v221
    %5103 = vmatprep.subr.mxu0 0.0
    %5104 = vmatpush1.msra.mxu0 %v222
    %5105 = vmatprep.subr.mxu0 0.0
    %5106 = vmatpush1.msra.mxu0 %v223
    %5107 = vmatprep.subr.mxu0 0.0
    %5108 = vmatpush1.msra.mxu0 %v224
    %5109 = vmatprep.subr.mxu0 0.0
    %5110 = vmatpush1.msra.mxu0 %v225
    %5111 = vmatprep.subr.mxu0 0.0
    %5112 = vmatpush1.msra.mxu0 %v226
    %5113 = vmatprep.subr.mxu0 0.0
    %5114 = vmatpush1.msra.mxu0 %v227
    %5115 = vmatprep.subr.mxu0 0.0
    %5116 = vmatpush1.msra.mxu0 %v228
    %5117 = vmatprep.subr.mxu0 0.0
    %5118 = vmatpush1.msra.mxu0 %v229
    %5119 = vmatprep.subr.mxu0 0.0
    %5120 = vmatpush1.msra.mxu0 %v230
    %5121 = vmatprep.subr.mxu0 0.0
    %5122 = vmatpush1.msra.mxu0 %v231
    %5123 = vmatprep.subr.mxu0 0.0
    %5124 = vmatpush1.msra.mxu0 %v366
    %5125 = vmatprep.subr.mxu0 0.0
    %5126 = vmatpush1.msra.mxu0 0.0
    %5127 = vmatprep.subr.mxu0 0.0
    %5128 = vmatpush1.msra.mxu0 0.0
    %5129 = vmatprep.subr.mxu0 0.0
    %5130 = vmatpush1.msra.mxu0 0.0
    %5131 = vmatprep.subr.mxu0 0.0
    %5132 = vmatpush1.msra.mxu0 0.0
    %5133 = vmatprep.subr.mxu0 0.0
    %5134 = vmatpush1.msra.mxu0 0.0
    %5135 = vmatprep.subr.mxu0 0.0
    %5136 = vmatpush1.msra.mxu0 0.0
    %5137 = vmatprep.subr.mxu0 0.0
    %5138 = vmatpush1.msra.mxu0 0.0
    %5139 = vmatprep.subr.mxu0 0.0
    %5140 = vmatpush1.msra.mxu0 0.0
    %5141 = vmatprep.subr.mxu0 0.0
    %5142 = vmatpush1.msra.mxu0 0.0
    %5143 = vmatprep.subr.mxu0 0.0
    %5144 = vmatpush1.msra.mxu0 0.0
    %5145 = vmatprep.subr.mxu0 0.0
    %5146 = vmatpush1.msra.mxu0 0.0
    %5147 = vmatprep.subr.mxu0 0.0
    %5148 = vmatpush1.msra.mxu0 0.0
    %5149 = vmatprep.subr.mxu0 0.0
    %5150 = vmatpush1.msra.mxu0 0.0
    %5151 = vmatprep.subr.mxu0 0.0
    %5152 = vmatpush1.msra.mxu0 0.0
    %5153 = vmatprep.subr.mxu0 0.0
    %5154 = vmatpush1.msra.mxu0 0.0
    %5155 = vmatprep.subr.mxu0 0.0
    %5156 = vmatpush1.msra.mxu0 0.0
    %5157 = vmatprep.subr.mxu0 0.0
    %5158 = vmatpush1.msra.mxu0 0.0
    %5159 = vmatprep.subr.mxu0 0.0
    %5160 = vmatpush1.msra.mxu0 0.0
    %5161 = vmatprep.subr.mxu0 0.0
    %5162 = vmatpush1.msra.mxu0 0.0
    %5163 = vmatprep.mubr.f32.mxu0 0.0
    %5164 = vmatmul.mubr.f32.gmra.mrb[0].mxu0 %v4677
    %v5165 = vpop.f32.mrb[0].mxu0
    %v5166 = vadd.f32 %v5096, %v5165
    %v5167 = vpop.f32.mrb[0].mxu0
    %5168 = vdwg.mxu0
    %s5169 = scalar_lea.vmem %s3, 14
    %5170 = vst [vmem:[%s5169] sm:$0x3] %v5166
    // Predicated region
    $region18: #{lstm_nn_vision_forward.2} parent=1 // pred_check
      _
    $region19: #{lstm_nn_vision_forward.2} parent=1 // pred_check_branch
      %5172 = sbr.rel (0) target = $region21
    $region20: #{lstm_nn_vision_forward.2} parent=1 // pred_region
      _
    $region21: #{lstm_nn_vision_forward.2} parent=1 // pred_fallthru
      _
    // Predicated region
    $region22: #{lstm_nn_vision_forward.2} parent=1 // pred_check
      _
    $region23: #{lstm_nn_vision_forward.2} parent=1 // pred_check_branch
      %5174 = sbr.rel (0) target = $region25
    $region24: #{lstm_nn_vision_forward.2} parent=1 // pred_region
      _
    $region25: #{lstm_nn_vision_forward.2} parent=1 // pred_fallthru
      _
    %5175 = vsyncpa [#allocation3], 1

</llo_original>
